<compile_context>
chip_gen: v6e
topology: v6e:2x2x1
jax: 0.10.0
libtpu: 0.0.40
codegen_flags: <defaults>
</compile_context>

<pallas_src>
import functools

import jax
import jax.numpy as jnp
from jax.experimental import pallas as pl
from jax.experimental.pallas import tpu as pltpu


def _mha_kernel(x_ref, wqkv_ref, wp_ref, bias_ref, o_ref, *, num_heads, head_size):
    """One grid step: `batch_block` batch elements, all heads fused.

    x_ref    : (BB, T, C)  input block (f32)
    wqkv_ref : (C, 3*C)    fused [Wq*scale | Wk | Wv] projection weights (bf16)
    wp_ref   : (C, C)      output projection (= torch Wp.T) (bf16)
    bias_ref : (1, C)      output projection bias (f32)
    o_ref    : (BB, T, C)  output block
    """
    BB, T, C = x_ref.shape

    # Fused Q/K/V projection over the whole (BB*T, C) slab: one lane-dense
    # matmul with M = BB*T rows (fills MXU rows better than per-batch T rows).
    # The 1/sqrt(hs) scale is already folded into the Q weight columns.
    x2d = x_ref[...].reshape(BB * T, C).astype(jnp.bfloat16)
    qkv = jnp.dot(x2d, wqkv_ref[...], preferred_element_type=jnp.float32)  # (BB*T, 3C)
    # Single lane-dense bf16 cast; all q/k/v slices below come from this.
    qkv_bf = qkv.astype(jnp.bfloat16)

    # Causal mask, built once and shared across all (batch, head) pairs.
    rowi = jax.lax.broadcasted_iota(jnp.int32, (T, T), 0)
    coli = jax.lax.broadcasted_iota(jnp.int32, (T, T), 1)
    causal = coli <= rowi

    bias = bias_ref[...]                                                   # (1, C)

    for b in range(BB):                         # static unroll (BB is tiny)
        r0 = b * T
        acc = None                              # f32 (T, C) output accumulator
        for h in range(num_heads):              # static unroll (H is small)
            lo = h * head_size
            hi = lo + head_size
            q = qkv_bf[r0:r0 + T, lo:hi]                    # (T, hs) bf16
            k = qkv_bf[r0:r0 + T, C + lo:C + hi]            # (T, hs) bf16
            v = qkv_bf[r0:r0 + T, 2 * C + lo:2 * C + hi]    # (T, hs) bf16

            # q @ k^T: contract the head_size axis directly (no explicit k.T).
            wei = jax.lax.dot_general(
                q, k, dimension_numbers=(((1,), (1,)), ((), ())),
                preferred_element_type=jnp.float32)                        # (T, T)

            wei = jnp.where(causal, wei, -jnp.inf)

            # Numerically stable softmax in f32 (diagonal never masked -> no NaN).
            m = jnp.max(wei, axis=-1, keepdims=True)
            e = jnp.exp(wei - m)
            p = e * pl.reciprocal(jnp.sum(e, axis=-1, keepdims=True), approx=False)

            # NOTE: dropout on `p` is identity in eval mode.

            pv = jnp.dot(p.astype(jnp.bfloat16), v,
                         preferred_element_type=jnp.float32)               # (T, hs)

            # Per-head project-and-accumulate: pv_h @ Wp.T[h*hs:(h+1)*hs, :].
            # Avoids the 64-lane-wide concatenate and its vreg-pressure spike.
            contrib = jnp.dot(pv.astype(jnp.bfloat16), wp_ref[lo:hi, :],
                              preferred_element_type=jnp.float32)          # (T, C)
            acc = contrib if acc is None else acc + contrib

        o_ref[b] = (acc + bias).astype(o_ref.dtype)                        # (T, C)


def prepare_mha_weights(wk, wq, wv, wp_t, bias):
    """One-time weight plumbing (hoisted out of the per-call hot path).

    wk/wq/wv : (H, C, hs)  per-head projection weights (already (in, out))
    wp_t     : (H, hs, C)  torch Wp.T, sliced per head
    bias     : (C,)
    Returns (w_qkv bf16 (C,3C), wp_full bf16 (C,C), bias2d f32 (1,C)).
    """
    H, C, hs = wq.shape
    scale = jnp.float32(hs) ** -0.5       # 1/8 for hs=64 -> exact in bf16
    # Heads concatenated along the last (lane) dim; fold softmax scale into Wq.
    wq_full = jnp.transpose(wq, (1, 0, 2)).reshape(C, C) * scale
    wk_full = jnp.transpose(wk, (1, 0, 2)).reshape(C, C)
    wv_full = jnp.transpose(wv, (1, 0, 2)).reshape(C, C)
    w_qkv = jnp.concatenate([wq_full, wk_full, wv_full], axis=-1).astype(jnp.bfloat16)
    wp_full = wp_t.reshape(C, C).astype(jnp.bfloat16)        # = torch Wp.T
    bias2d = bias.reshape(1, C).astype(jnp.float32)
    return w_qkv, wp_full, bias2d


def _choose_batch_block(batch_size):
    """Single-TC v5e/v6e: fold all of B into the matmul M dim (one grid step).
    v7x (2 TCs/chip): keep one batch element per grid step so the 'parallel'
    batch axis feeds both TensorCores."""
    try:
        kind = jax.devices()[0].device_kind.lower()
    except Exception:
        kind = ""
    if ("v7" in kind or "7x" in kind) and batch_size >= 2:
        return 1
    return batch_size


@functools.partial(jax.jit, static_argnames=("num_heads", "head_size", "batch_block"))
def multi_head_attention(x, w_qkv, wp_full, bias2d, *, num_heads, head_size,
                         batch_block):
    """x: (B, T, C); w_qkv: (C, 3C) bf16; wp_full: (C, C) bf16; bias2d: (1, C)."""
    B, T, C = x.shape
    assert num_heads * head_size == C
    assert B % batch_block == 0
    grid = (B // batch_block,)

    H = num_heads
    hs = head_size
    flops = (2 * B * T * C * (3 * C)        # qkv projection
             + 4 * B * H * T * T * hs       # scores + p@v
             + 2 * B * T * C * C)           # output projection (per-head accum)
    bytes_accessed = ((x.size + B * T * C) * 4
                      + w_qkv.size * 2 + wp_full.size * 2 + C * 4)

    kernel = functools.partial(_mha_kernel, num_heads=H, head_size=hs)

    return pl.pallas_call(
        kernel,
        out_shape=jax.ShapeDtypeStruct((B, T, C), x.dtype),
        grid_spec=pltpu.PrefetchScalarGridSpec(
            num_scalar_prefetch=0,
            grid=grid,
            in_specs=[
                pl.BlockSpec((batch_block, T, C), lambda g: (g, 0, 0)),   # x
                pl.BlockSpec((C, 3 * C), lambda g: (0, 0)),               # fused Wqkv
                pl.BlockSpec((C, C), lambda g: (0, 0)),                   # Wp.T
                pl.BlockSpec((1, C), lambda g: (0, 0)),                   # bias
            ],
            out_specs=pl.BlockSpec((batch_block, T, C), lambda g: (g, 0, 0)),
        ),
        compiler_params=pltpu.CompilerParams(
            dimension_semantics=("parallel",)),
        cost_estimate=pl.CostEstimate(
            flops=flops,
            transcendentals=B * H * T * T,
            bytes_accessed=bytes_accessed),
    )(x, w_qkv, wp_full, bias2d)


def _reference(x, wk, wq, wv, wp_t, bias):
    """Pure-JAX f32 reference matching the PyTorch forward (eval mode)."""
    B, T, C = x.shape
    H, _, hs = wk.shape
    outs = []
    for h in range(H):
        k = x @ wk[h]                                   # (B, T, hs)
        q = x @ wq[h]
        v = x @ wv[h]
        wei = (q @ jnp.swapaxes(k, -2, -1)) * (hs ** -0.5)
        mask = jnp.tril(jnp.ones((T, T), bool))
        wei = jnp.where(mask, wei, -jnp.inf)
        wei = jax.nn.softmax(wei, axis=-1)
        outs.append(wei @ v)
    cat = jnp.concatenate(outs, axis=-1)                # (B, T, C)
    wp = jnp.concatenate([wp_t[h] for h in range(H)], axis=0)  # (C, C) = Wp.T
    return cat @ wp + bias


if __name__ == "__main__":
    # Small shapes consistent with the module (n_embd = num_heads * head_size = 384).
    B, T = 2, 64
    num_heads, head_size = 6, 64
    n_embd = num_heads * head_size  # 384

    key = jax.random.PRNGKey(0)
    k_x, k_wk, k_wq, k_wv, k_wp, k_b = jax.random.split(key, 6)

    x = jax.random.normal(k_x, (B, T, n_embd), dtype=jnp.float32)

    scale = 0.02
    # Per-head key/query/value weights, already transposed to (H, C, hs).
    wk = scale * jax.random.normal(k_wk, (num_heads, n_embd, head_size), jnp.float32)
    wq = scale * jax.random.normal(k_wq, (num_heads, n_embd, head_size), jnp.float32)
    wv = scale * jax.random.normal(k_wv, (num_heads, n_embd, head_size), jnp.float32)
    # Output projection: torch Wp is (C, C) applied as out @ Wp.T + b;
    # we pass Wp.T sliced per head: (H, hs, C).
    wp_t = scale * jax.random.normal(k_wp, (num_heads, head_size, n_embd), jnp.float32)
    bias = scale * jax.random.normal(k_b, (n_embd,), jnp.float32)

    # One-time weight fusion (hoisted out of the per-call path).
    w_qkv, wp_full, bias2d = jax.block_until_ready(
        prepare_mha_weights(wk, wq, wv, wp_t, bias))

    batch_block = _choose_batch_block(B)

    out = multi_head_attention(x, w_qkv, wp_full, bias2d,
                               num_heads=num_heads, head_size=head_size,
                               batch_block=batch_block)
    out = jax.block_until_ready(out)

    ref = _reference(x, wk, wq, wv, wp_t, bias)
    assert out.shape == (B, T, n_embd)
    # bf16 MXU operands (f32 accumulate) -> slightly relaxed tolerance vs f32 ref.
    assert jnp.allclose(out, ref, atol=2e-2, rtol=2e-2), "mismatch vs reference"

    print("KERNEL_OK")
</pallas_src>

<mosaic_0001>
module attributes {stable_mosaic.version = 11 : i64} {
  func.func @_mha_kernel(%arg0: i32, %arg1: memref<2x64x384xf32, #tpu.memory_space<vmem>>, %arg2: memref<384x1152xbf16, #tpu.memory_space<vmem>>, %arg3: memref<384x384xbf16, #tpu.memory_space<vmem>>, %arg4: memref<1x384xf32, #tpu.memory_space<vmem>>, %arg5: memref<2x64x384xf32, #tpu.memory_space<vmem>>) attributes {dimension_semantics = [#tpu.dimension_semantics<parallel>], iteration_bounds = array<i64: 1>, scalar_prefetch = 0 : i64, scratch_operands = 0 : i64, tpu.core_type = #tpu.core_type<tc>, window_params = [{transform_indices = @transform_0, window_bounds = array<i64: 2, 64, 384>}, {pipeline_mode = #tpu.pipeline_mode<synchronous>, transform_indices = @transform_1, window_bounds = array<i64: 384, 1152>}, {pipeline_mode = #tpu.pipeline_mode<synchronous>, transform_indices = @transform_2, window_bounds = array<i64: 384, 384>}, {pipeline_mode = #tpu.pipeline_mode<synchronous>, transform_indices = @transform_3, window_bounds = array<i64: 1, 384>}, {transform_indices = @transform_4, window_bounds = array<i64: 2, 64, 384>}]} {
    %c0 = arith.constant 0 : index
    %c0_0 = arith.constant 0 : index
    %c0_1 = arith.constant 0 : index
    %0 = vector.load %arg1[%c0, %c0_0, %c0_1] : memref<2x64x384xf32, #tpu.memory_space<vmem>>, vector<2x64x384xf32>
    %1 = vector.shape_cast %0 : vector<2x64x384xf32> to vector<128x384xf32>
    %2 = arith.truncf %1 : vector<128x384xf32> to vector<128x384xbf16>
    %c0_2 = arith.constant 0 : index
    %c0_3 = arith.constant 0 : index
    %3 = vector.load %arg2[%c0_2, %c0_3] : memref<384x1152xbf16, #tpu.memory_space<vmem>>, vector<384x1152xbf16>
    %cst = arith.constant dense<0.000000e+00> : vector<128x1152xf32>
    %4 = tpu.matmul %2, %3, %cst {dimension_numbers = #tpu.dot_dimension_numbers<[1], [0], [0], [1], [0, 0, 1, 1], [], []>} : vector<128x384xbf16>, vector<384x1152xbf16>, vector<128x1152xf32> -> vector<128x1152xf32>
    %5 = arith.truncf %4 : vector<128x1152xf32> to vector<128x1152xbf16>
    %6 = tpu.iota {dimensions = array<i32: 0>} : vector<64x64xi32>
    %7 = tpu.iota {dimensions = array<i32: 1>} : vector<64x64xi32>
    %8 = arith.cmpi sle, %7, %6 : vector<64x64xi32>
    %c0_4 = arith.constant 0 : index
    %c0_5 = arith.constant 0 : index
    %9 = vector.load %arg4[%c0_4, %c0_5] : memref<1x384xf32, #tpu.memory_space<vmem>>, vector<1x384xf32>
    %10 = vector.extract_strided_slice %5 {offsets = [0, 0], sizes = [64, 64], strides = [1, 1]} : vector<128x1152xbf16> to vector<64x64xbf16>
    %11 = vector.extract_strided_slice %5 {offsets = [0, 384], sizes = [64, 64], strides = [1, 1]} : vector<128x1152xbf16> to vector<64x64xbf16>
    %12 = vector.extract_strided_slice %5 {offsets = [0, 768], sizes = [64, 64], strides = [1, 1]} : vector<128x1152xbf16> to vector<64x64xbf16>
    %cst_6 = arith.constant dense<0.000000e+00> : vector<64x64xf32>
    %13 = tpu.matmul %10, %11, %cst_6 {dimension_numbers = #tpu.dot_dimension_numbers<[1], [1], [0], [0], [0, 0, 1, 0], [], []>} : vector<64x64xbf16>, vector<64x64xbf16>, vector<64x64xf32> -> vector<64x64xf32>
    %cst_7 = arith.constant 0xFF800000 : f32
    %14 = vector.broadcast %cst_7 : f32 to vector<64x64xf32>
    %15 = arith.select %8, %13, %14 : vector<64x64xi1>, vector<64x64xf32>
    %cst_8 = arith.constant dense<0xFF800000> : vector<64xf32>
    %16 = vector.multi_reduction <maximumf>, %15, %cst_8 [1] : vector<64x64xf32> to vector<64xf32>
    %17 = vector.shape_cast %16 : vector<64xf32> to vector<64x1xf32>
    %18 = vector.broadcast %17 : vector<64x1xf32> to vector<64x64xf32>
    %19 = arith.subf %15, %18 : vector<64x64xf32>
    %20 = math.exp %19 : vector<64x64xf32>
    %cst_9 = arith.constant dense<0.000000e+00> : vector<64xf32>
    %21 = vector.multi_reduction <add>, %20, %cst_9 [1] : vector<64x64xf32> to vector<64xf32>
    %22 = vector.shape_cast %21 : vector<64xf32> to vector<64x1xf32>
    %23 = tpu.reciprocal %22 : vector<64x1xf32> -> vector<64x1xf32>
    %24 = vector.broadcast %23 : vector<64x1xf32> to vector<64x64xf32>
    %25 = arith.mulf %20, %24 : vector<64x64xf32>
    %26 = arith.truncf %25 : vector<64x64xf32> to vector<64x64xbf16>
    %cst_10 = arith.constant dense<0.000000e+00> : vector<64x64xf32>
    %27 = tpu.matmul %26, %12, %cst_10 {dimension_numbers = #tpu.dot_dimension_numbers<[1], [0], [0], [1], [0, 0, 1, 1], [], []>} : vector<64x64xbf16>, vector<64x64xbf16>, vector<64x64xf32> -> vector<64x64xf32>
    %28 = arith.truncf %27 : vector<64x64xf32> to vector<64x64xbf16>
    %c0_11 = arith.constant 0 : index
    %c0_12 = arith.constant 0 : index
    %29 = vector.load %arg3[%c0_11, %c0_12] : memref<384x384xbf16, #tpu.memory_space<vmem>>, vector<64x384xbf16>
    %cst_13 = arith.constant dense<0.000000e+00> : vector<64x384xf32>
    %30 = tpu.matmul %28, %29, %cst_13 {dimension_numbers = #tpu.dot_dimension_numbers<[1], [0], [0], [1], [0, 0, 1, 1], [], []>} : vector<64x64xbf16>, vector<64x384xbf16>, vector<64x384xf32> -> vector<64x384xf32>
    %31 = vector.extract_strided_slice %5 {offsets = [0, 64], sizes = [64, 64], strides = [1, 1]} : vector<128x1152xbf16> to vector<64x64xbf16>
    %32 = vector.extract_strided_slice %5 {offsets = [0, 448], sizes = [64, 64], strides = [1, 1]} : vector<128x1152xbf16> to vector<64x64xbf16>
    %33 = vector.extract_strided_slice %5 {offsets = [0, 832], sizes = [64, 64], strides = [1, 1]} : vector<128x1152xbf16> to vector<64x64xbf16>
    %cst_14 = arith.constant dense<0.000000e+00> : vector<64x64xf32>
    %34 = tpu.matmul %31, %32, %cst_14 {dimension_numbers = #tpu.dot_dimension_numbers<[1], [1], [0], [0], [0, 0, 1, 0], [], []>} : vector<64x64xbf16>, vector<64x64xbf16>, vector<64x64xf32> -> vector<64x64xf32>
    %cst_15 = arith.constant 0xFF800000 : f32
    %35 = vector.broadcast %cst_15 : f32 to vector<64x64xf32>
    %36 = arith.select %8, %34, %35 : vector<64x64xi1>, vector<64x64xf32>
    %cst_16 = arith.constant dense<0xFF800000> : vector<64xf32>
    %37 = vector.multi_reduction <maximumf>, %36, %cst_16 [1] : vector<64x64xf32> to vector<64xf32>
    %38 = vector.shape_cast %37 : vector<64xf32> to vector<64x1xf32>
    %39 = vector.broadcast %38 : vector<64x1xf32> to vector<64x64xf32>
    %40 = arith.subf %36, %39 : vector<64x64xf32>
    %41 = math.exp %40 : vector<64x64xf32>
    %cst_17 = arith.constant dense<0.000000e+00> : vector<64xf32>
    %42 = vector.multi_reduction <add>, %41, %cst_17 [1] : vector<64x64xf32> to vector<64xf32>
    %43 = vector.shape_cast %42 : vector<64xf32> to vector<64x1xf32>
    %44 = tpu.reciprocal %43 : vector<64x1xf32> -> vector<64x1xf32>
    %45 = vector.broadcast %44 : vector<64x1xf32> to vector<64x64xf32>
    %46 = arith.mulf %41, %45 : vector<64x64xf32>
    %47 = arith.truncf %46 : vector<64x64xf32> to vector<64x64xbf16>
    %cst_18 = arith.constant dense<0.000000e+00> : vector<64x64xf32>
    %48 = tpu.matmul %47, %33, %cst_18 {dimension_numbers = #tpu.dot_dimension_numbers<[1], [0], [0], [1], [0, 0, 1, 1], [], []>} : vector<64x64xbf16>, vector<64x64xbf16>, vector<64x64xf32> -> vector<64x64xf32>
    %49 = arith.truncf %48 : vector<64x64xf32> to vector<64x64xbf16>
    %c64 = arith.constant 64 : index
    %c0_19 = arith.constant 0 : index
    %50 = vector.load %arg3[%c64, %c0_19] : memref<384x384xbf16, #tpu.memory_space<vmem>>, vector<64x384xbf16>
    %cst_20 = arith.constant dense<0.000000e+00> : vector<64x384xf32>
    %51 = tpu.matmul %49, %50, %cst_20 {dimension_numbers = #tpu.dot_dimension_numbers<[1], [0], [0], [1], [0, 0, 1, 1], [], []>} : vector<64x64xbf16>, vector<64x384xbf16>, vector<64x384xf32> -> vector<64x384xf32>
    %52 = arith.addf %30, %51 : vector<64x384xf32>
    %53 = vector.extract_strided_slice %5 {offsets = [0, 128], sizes = [64, 64], strides = [1, 1]} : vector<128x1152xbf16> to vector<64x64xbf16>
    %54 = vector.extract_strided_slice %5 {offsets = [0, 512], sizes = [64, 64], strides = [1, 1]} : vector<128x1152xbf16> to vector<64x64xbf16>
    %55 = vector.extract_strided_slice %5 {offsets = [0, 896], sizes = [64, 64], strides = [1, 1]} : vector<128x1152xbf16> to vector<64x64xbf16>
    %cst_21 = arith.constant dense<0.000000e+00> : vector<64x64xf32>
    %56 = tpu.matmul %53, %54, %cst_21 {dimension_numbers = #tpu.dot_dimension_numbers<[1], [1], [0], [0], [0, 0, 1, 0], [], []>} : vector<64x64xbf16>, vector<64x64xbf16>, vector<64x64xf32> -> vector<64x64xf32>
    %cst_22 = arith.constant 0xFF800000 : f32
    %57 = vector.broadcast %cst_22 : f32 to vector<64x64xf32>
    %58 = arith.select %8, %56, %57 : vector<64x64xi1>, vector<64x64xf32>
    %cst_23 = arith.constant dense<0xFF800000> : vector<64xf32>
    %59 = vector.multi_reduction <maximumf>, %58, %cst_23 [1] : vector<64x64xf32> to vector<64xf32>
    %60 = vector.shape_cast %59 : vector<64xf32> to vector<64x1xf32>
    %61 = vector.broadcast %60 : vector<64x1xf32> to vector<64x64xf32>
    %62 = arith.subf %58, %61 : vector<64x64xf32>
    %63 = math.exp %62 : vector<64x64xf32>
    %cst_24 = arith.constant dense<0.000000e+00> : vector<64xf32>
    %64 = vector.multi_reduction <add>, %63, %cst_24 [1] : vector<64x64xf32> to vector<64xf32>
    %65 = vector.shape_cast %64 : vector<64xf32> to vector<64x1xf32>
    %66 = tpu.reciprocal %65 : vector<64x1xf32> -> vector<64x1xf32>
    %67 = vector.broadcast %66 : vector<64x1xf32> to vector<64x64xf32>
    %68 = arith.mulf %63, %67 : vector<64x64xf32>
    %69 = arith.truncf %68 : vector<64x64xf32> to vector<64x64xbf16>
    %cst_25 = arith.constant dense<0.000000e+00> : vector<64x64xf32>
    %70 = tpu.matmul %69, %55, %cst_25 {dimension_numbers = #tpu.dot_dimension_numbers<[1], [0], [0], [1], [0, 0, 1, 1], [], []>} : vector<64x64xbf16>, vector<64x64xbf16>, vector<64x64xf32> -> vector<64x64xf32>
    %71 = arith.truncf %70 : vector<64x64xf32> to vector<64x64xbf16>
    %c128 = arith.constant 128 : index
    %c0_26 = arith.constant 0 : index
    %72 = vector.load %arg3[%c128, %c0_26] : memref<384x384xbf16, #tpu.memory_space<vmem>>, vector<64x384xbf16>
    %cst_27 = arith.constant dense<0.000000e+00> : vector<64x384xf32>
    %73 = tpu.matmul %71, %72, %cst_27 {dimension_numbers = #tpu.dot_dimension_numbers<[1], [0], [0], [1], [0, 0, 1, 1], [], []>} : vector<64x64xbf16>, vector<64x384xbf16>, vector<64x384xf32> -> vector<64x384xf32>
    %74 = arith.addf %52, %73 : vector<64x384xf32>
    %75 = vector.extract_strided_slice %5 {offsets = [0, 192], sizes = [64, 64], strides = [1, 1]} : vector<128x1152xbf16> to vector<64x64xbf16>
    %76 = vector.extract_strided_slice %5 {offsets = [0, 576], sizes = [64, 64], strides = [1, 1]} : vector<128x1152xbf16> to vector<64x64xbf16>
    %77 = vector.extract_strided_slice %5 {offsets = [0, 960], sizes = [64, 64], strides = [1, 1]} : vector<128x1152xbf16> to vector<64x64xbf16>
    %cst_28 = arith.constant dense<0.000000e+00> : vector<64x64xf32>
    %78 = tpu.matmul %75, %76, %cst_28 {dimension_numbers = #tpu.dot_dimension_numbers<[1], [1], [0], [0], [0, 0, 1, 0], [], []>} : vector<64x64xbf16>, vector<64x64xbf16>, vector<64x64xf32> -> vector<64x64xf32>
    %cst_29 = arith.constant 0xFF800000 : f32
    %79 = vector.broadcast %cst_29 : f32 to vector<64x64xf32>
    %80 = arith.select %8, %78, %79 : vector<64x64xi1>, vector<64x64xf32>
    %cst_30 = arith.constant dense<0xFF800000> : vector<64xf32>
    %81 = vector.multi_reduction <maximumf>, %80, %cst_30 [1] : vector<64x64xf32> to vector<64xf32>
    %82 = vector.shape_cast %81 : vector<64xf32> to vector<64x1xf32>
    %83 = vector.broadcast %82 : vector<64x1xf32> to vector<64x64xf32>
    %84 = arith.subf %80, %83 : vector<64x64xf32>
    %85 = math.exp %84 : vector<64x64xf32>
    %cst_31 = arith.constant dense<0.000000e+00> : vector<64xf32>
    %86 = vector.multi_reduction <add>, %85, %cst_31 [1] : vector<64x64xf32> to vector<64xf32>
    %87 = vector.shape_cast %86 : vector<64xf32> to vector<64x1xf32>
    %88 = tpu.reciprocal %87 : vector<64x1xf32> -> vector<64x1xf32>
    %89 = vector.broadcast %88 : vector<64x1xf32> to vector<64x64xf32>
    %90 = arith.mulf %85, %89 : vector<64x64xf32>
    %91 = arith.truncf %90 : vector<64x64xf32> to vector<64x64xbf16>
    %cst_32 = arith.constant dense<0.000000e+00> : vector<64x64xf32>
    %92 = tpu.matmul %91, %77, %cst_32 {dimension_numbers = #tpu.dot_dimension_numbers<[1], [0], [0], [1], [0, 0, 1, 1], [], []>} : vector<64x64xbf16>, vector<64x64xbf16>, vector<64x64xf32> -> vector<64x64xf32>
    %93 = arith.truncf %92 : vector<64x64xf32> to vector<64x64xbf16>
    %c192 = arith.constant 192 : index
    %c0_33 = arith.constant 0 : index
    %94 = vector.load %arg3[%c192, %c0_33] : memref<384x384xbf16, #tpu.memory_space<vmem>>, vector<64x384xbf16>
    %cst_34 = arith.constant dense<0.000000e+00> : vector<64x384xf32>
    %95 = tpu.matmul %93, %94, %cst_34 {dimension_numbers = #tpu.dot_dimension_numbers<[1], [0], [0], [1], [0, 0, 1, 1], [], []>} : vector<64x64xbf16>, vector<64x384xbf16>, vector<64x384xf32> -> vector<64x384xf32>
    %96 = arith.addf %74, %95 : vector<64x384xf32>
    %97 = vector.extract_strided_slice %5 {offsets = [0, 256], sizes = [64, 64], strides = [1, 1]} : vector<128x1152xbf16> to vector<64x64xbf16>
    %98 = vector.extract_strided_slice %5 {offsets = [0, 640], sizes = [64, 64], strides = [1, 1]} : vector<128x1152xbf16> to vector<64x64xbf16>
    %99 = vector.extract_strided_slice %5 {offsets = [0, 1024], sizes = [64, 64], strides = [1, 1]} : vector<128x1152xbf16> to vector<64x64xbf16>
    %cst_35 = arith.constant dense<0.000000e+00> : vector<64x64xf32>
    %100 = tpu.matmul %97, %98, %cst_35 {dimension_numbers = #tpu.dot_dimension_numbers<[1], [1], [0], [0], [0, 0, 1, 0], [], []>} : vector<64x64xbf16>, vector<64x64xbf16>, vector<64x64xf32> -> vector<64x64xf32>
    %cst_36 = arith.constant 0xFF800000 : f32
    %101 = vector.broadcast %cst_36 : f32 to vector<64x64xf32>
    %102 = arith.select %8, %100, %101 : vector<64x64xi1>, vector<64x64xf32>
    %cst_37 = arith.constant dense<0xFF800000> : vector<64xf32>
    %103 = vector.multi_reduction <maximumf>, %102, %cst_37 [1] : vector<64x64xf32> to vector<64xf32>
    %104 = vector.shape_cast %103 : vector<64xf32> to vector<64x1xf32>
    %105 = vector.broadcast %104 : vector<64x1xf32> to vector<64x64xf32>
    %106 = arith.subf %102, %105 : vector<64x64xf32>
    %107 = math.exp %106 : vector<64x64xf32>
    %cst_38 = arith.constant dense<0.000000e+00> : vector<64xf32>
    %108 = vector.multi_reduction <add>, %107, %cst_38 [1] : vector<64x64xf32> to vector<64xf32>
    %109 = vector.shape_cast %108 : vector<64xf32> to vector<64x1xf32>
    %110 = tpu.reciprocal %109 : vector<64x1xf32> -> vector<64x1xf32>
    %111 = vector.broadcast %110 : vector<64x1xf32> to vector<64x64xf32>
    %112 = arith.mulf %107, %111 : vector<64x64xf32>
    %113 = arith.truncf %112 : vector<64x64xf32> to vector<64x64xbf16>
    %cst_39 = arith.constant dense<0.000000e+00> : vector<64x64xf32>
    %114 = tpu.matmul %113, %99, %cst_39 {dimension_numbers = #tpu.dot_dimension_numbers<[1], [0], [0], [1], [0, 0, 1, 1], [], []>} : vector<64x64xbf16>, vector<64x64xbf16>, vector<64x64xf32> -> vector<64x64xf32>
    %115 = arith.truncf %114 : vector<64x64xf32> to vector<64x64xbf16>
    %c256 = arith.constant 256 : index
    %c0_40 = arith.constant 0 : index
    %116 = vector.load %arg3[%c256, %c0_40] : memref<384x384xbf16, #tpu.memory_space<vmem>>, vector<64x384xbf16>
    %cst_41 = arith.constant dense<0.000000e+00> : vector<64x384xf32>
    %117 = tpu.matmul %115, %116, %cst_41 {dimension_numbers = #tpu.dot_dimension_numbers<[1], [0], [0], [1], [0, 0, 1, 1], [], []>} : vector<64x64xbf16>, vector<64x384xbf16>, vector<64x384xf32> -> vector<64x384xf32>
    %118 = arith.addf %96, %117 : vector<64x384xf32>
    %119 = vector.extract_strided_slice %5 {offsets = [0, 320], sizes = [64, 64], strides = [1, 1]} : vector<128x1152xbf16> to vector<64x64xbf16>
    %120 = vector.extract_strided_slice %5 {offsets = [0, 704], sizes = [64, 64], strides = [1, 1]} : vector<128x1152xbf16> to vector<64x64xbf16>
    %121 = vector.extract_strided_slice %5 {offsets = [0, 1088], sizes = [64, 64], strides = [1, 1]} : vector<128x1152xbf16> to vector<64x64xbf16>
    %cst_42 = arith.constant dense<0.000000e+00> : vector<64x64xf32>
    %122 = tpu.matmul %119, %120, %cst_42 {dimension_numbers = #tpu.dot_dimension_numbers<[1], [1], [0], [0], [0, 0, 1, 0], [], []>} : vector<64x64xbf16>, vector<64x64xbf16>, vector<64x64xf32> -> vector<64x64xf32>
    %cst_43 = arith.constant 0xFF800000 : f32
    %123 = vector.broadcast %cst_43 : f32 to vector<64x64xf32>
    %124 = arith.select %8, %122, %123 : vector<64x64xi1>, vector<64x64xf32>
    %cst_44 = arith.constant dense<0xFF800000> : vector<64xf32>
    %125 = vector.multi_reduction <maximumf>, %124, %cst_44 [1] : vector<64x64xf32> to vector<64xf32>
    %126 = vector.shape_cast %125 : vector<64xf32> to vector<64x1xf32>
    %127 = vector.broadcast %126 : vector<64x1xf32> to vector<64x64xf32>
    %128 = arith.subf %124, %127 : vector<64x64xf32>
    %129 = math.exp %128 : vector<64x64xf32>
    %cst_45 = arith.constant dense<0.000000e+00> : vector<64xf32>
    %130 = vector.multi_reduction <add>, %129, %cst_45 [1] : vector<64x64xf32> to vector<64xf32>
    %131 = vector.shape_cast %130 : vector<64xf32> to vector<64x1xf32>
    %132 = tpu.reciprocal %131 : vector<64x1xf32> -> vector<64x1xf32>
    %133 = vector.broadcast %132 : vector<64x1xf32> to vector<64x64xf32>
    %134 = arith.mulf %129, %133 : vector<64x64xf32>
    %135 = arith.truncf %134 : vector<64x64xf32> to vector<64x64xbf16>
    %cst_46 = arith.constant dense<0.000000e+00> : vector<64x64xf32>
    %136 = tpu.matmul %135, %121, %cst_46 {dimension_numbers = #tpu.dot_dimension_numbers<[1], [0], [0], [1], [0, 0, 1, 1], [], []>} : vector<64x64xbf16>, vector<64x64xbf16>, vector<64x64xf32> -> vector<64x64xf32>
    %137 = arith.truncf %136 : vector<64x64xf32> to vector<64x64xbf16>
    %c320 = arith.constant 320 : index
    %c0_47 = arith.constant 0 : index
    %138 = vector.load %arg3[%c320, %c0_47] : memref<384x384xbf16, #tpu.memory_space<vmem>>, vector<64x384xbf16>
    %cst_48 = arith.constant dense<0.000000e+00> : vector<64x384xf32>
    %139 = tpu.matmul %137, %138, %cst_48 {dimension_numbers = #tpu.dot_dimension_numbers<[1], [0], [0], [1], [0, 0, 1, 1], [], []>} : vector<64x64xbf16>, vector<64x384xbf16>, vector<64x384xf32> -> vector<64x384xf32>
    %140 = arith.addf %118, %139 : vector<64x384xf32>
    %141 = vector.broadcast %9 : vector<1x384xf32> to vector<64x384xf32>
    %142 = arith.addf %140, %141 : vector<64x384xf32>
    %c0_49 = arith.constant 0 : index
    %c0_50 = arith.constant 0 : index
    %c0_51 = arith.constant 0 : index
    %143 = vector.load %arg5[%c0_49, %c0_50, %c0_51] : memref<2x64x384xf32, #tpu.memory_space<vmem>>, vector<1x64x384xf32>
    %144 = vector.shape_cast %143 : vector<1x64x384xf32> to vector<64x384xf32>
    %145 = vector.shape_cast %142 : vector<64x384xf32> to vector<1x64x384xf32>
    tpu.vector_store %arg5[%c0_49, %c0_50, %c0_51], %145 {strides = array<i32>} : memref<2x64x384xf32, #tpu.memory_space<vmem>>, vector<1x64x384xf32>,
    %146 = vector.extract_strided_slice %5 {offsets = [64, 0], sizes = [64, 64], strides = [1, 1]} : vector<128x1152xbf16> to vector<64x64xbf16>
    %147 = vector.extract_strided_slice %5 {offsets = [64, 384], sizes = [64, 64], strides = [1, 1]} : vector<128x1152xbf16> to vector<64x64xbf16>
    %148 = vector.extract_strided_slice %5 {offsets = [64, 768], sizes = [64, 64], strides = [1, 1]} : vector<128x1152xbf16> to vector<64x64xbf16>
    %cst_52 = arith.constant dense<0.000000e+00> : vector<64x64xf32>
    %149 = tpu.matmul %146, %147, %cst_52 {dimension_numbers = #tpu.dot_dimension_numbers<[1], [1], [0], [0], [0, 0, 1, 0], [], []>} : vector<64x64xbf16>, vector<64x64xbf16>, vector<64x64xf32> -> vector<64x64xf32>
    %cst_53 = arith.constant 0xFF800000 : f32
    %150 = vector.broadcast %cst_53 : f32 to vector<64x64xf32>
    %151 = arith.select %8, %149, %150 : vector<64x64xi1>, vector<64x64xf32>
    %cst_54 = arith.constant dense<0xFF800000> : vector<64xf32>
    %152 = vector.multi_reduction <maximumf>, %151, %cst_54 [1] : vector<64x64xf32> to vector<64xf32>
    %153 = vector.shape_cast %152 : vector<64xf32> to vector<64x1xf32>
    %154 = vector.broadcast %153 : vector<64x1xf32> to vector<64x64xf32>
    %155 = arith.subf %151, %154 : vector<64x64xf32>
    %156 = math.exp %155 : vector<64x64xf32>
    %cst_55 = arith.constant dense<0.000000e+00> : vector<64xf32>
    %157 = vector.multi_reduction <add>, %156, %cst_55 [1] : vector<64x64xf32> to vector<64xf32>
    %158 = vector.shape_cast %157 : vector<64xf32> to vector<64x1xf32>
    %159 = tpu.reciprocal %158 : vector<64x1xf32> -> vector<64x1xf32>
    %160 = vector.broadcast %159 : vector<64x1xf32> to vector<64x64xf32>
    %161 = arith.mulf %156, %160 : vector<64x64xf32>
    %162 = arith.truncf %161 : vector<64x64xf32> to vector<64x64xbf16>
    %cst_56 = arith.constant dense<0.000000e+00> : vector<64x64xf32>
    %163 = tpu.matmul %162, %148, %cst_56 {dimension_numbers = #tpu.dot_dimension_numbers<[1], [0], [0], [1], [0, 0, 1, 1], [], []>} : vector<64x64xbf16>, vector<64x64xbf16>, vector<64x64xf32> -> vector<64x64xf32>
    %164 = arith.truncf %163 : vector<64x64xf32> to vector<64x64xbf16>
    %c0_57 = arith.constant 0 : index
    %c0_58 = arith.constant 0 : index
    %165 = vector.load %arg3[%c0_57, %c0_58] : memref<384x384xbf16, #tpu.memory_space<vmem>>, vector<64x384xbf16>
    %cst_59 = arith.constant dense<0.000000e+00> : vector<64x384xf32>
    %166 = tpu.matmul %164, %165, %cst_59 {dimension_numbers = #tpu.dot_dimension_numbers<[1], [0], [0], [1], [0, 0, 1, 1], [], []>} : vector<64x64xbf16>, vector<64x384xbf16>, vector<64x384xf32> -> vector<64x384xf32>
    %167 = vector.extract_strided_slice %5 {offsets = [64, 64], sizes = [64, 64], strides = [1, 1]} : vector<128x1152xbf16> to vector<64x64xbf16>
    %168 = vector.extract_strided_slice %5 {offsets = [64, 448], sizes = [64, 64], strides = [1, 1]} : vector<128x1152xbf16> to vector<64x64xbf16>
    %169 = vector.extract_strided_slice %5 {offsets = [64, 832], sizes = [64, 64], strides = [1, 1]} : vector<128x1152xbf16> to vector<64x64xbf16>
    %cst_60 = arith.constant dense<0.000000e+00> : vector<64x64xf32>
    %170 = tpu.matmul %167, %168, %cst_60 {dimension_numbers = #tpu.dot_dimension_numbers<[1], [1], [0], [0], [0, 0, 1, 0], [], []>} : vector<64x64xbf16>, vector<64x64xbf16>, vector<64x64xf32> -> vector<64x64xf32>
    %cst_61 = arith.constant 0xFF800000 : f32
    %171 = vector.broadcast %cst_61 : f32 to vector<64x64xf32>
    %172 = arith.select %8, %170, %171 : vector<64x64xi1>, vector<64x64xf32>
    %cst_62 = arith.constant dense<0xFF800000> : vector<64xf32>
    %173 = vector.multi_reduction <maximumf>, %172, %cst_62 [1] : vector<64x64xf32> to vector<64xf32>
    %174 = vector.shape_cast %173 : vector<64xf32> to vector<64x1xf32>
    %175 = vector.broadcast %174 : vector<64x1xf32> to vector<64x64xf32>
    %176 = arith.subf %172, %175 : vector<64x64xf32>
    %177 = math.exp %176 : vector<64x64xf32>
    %cst_63 = arith.constant dense<0.000000e+00> : vector<64xf32>
    %178 = vector.multi_reduction <add>, %177, %cst_63 [1] : vector<64x64xf32> to vector<64xf32>
    %179 = vector.shape_cast %178 : vector<64xf32> to vector<64x1xf32>
    %180 = tpu.reciprocal %179 : vector<64x1xf32> -> vector<64x1xf32>
    %181 = vector.broadcast %180 : vector<64x1xf32> to vector<64x64xf32>
    %182 = arith.mulf %177, %181 : vector<64x64xf32>
    %183 = arith.truncf %182 : vector<64x64xf32> to vector<64x64xbf16>
    %cst_64 = arith.constant dense<0.000000e+00> : vector<64x64xf32>
    %184 = tpu.matmul %183, %169, %cst_64 {dimension_numbers = #tpu.dot_dimension_numbers<[1], [0], [0], [1], [0, 0, 1, 1], [], []>} : vector<64x64xbf16>, vector<64x64xbf16>, vector<64x64xf32> -> vector<64x64xf32>
    %185 = arith.truncf %184 : vector<64x64xf32> to vector<64x64xbf16>
    %c64_65 = arith.constant 64 : index
    %c0_66 = arith.constant 0 : index
    %186 = vector.load %arg3[%c64_65, %c0_66] : memref<384x384xbf16, #tpu.memory_space<vmem>>, vector<64x384xbf16>
    %cst_67 = arith.constant dense<0.000000e+00> : vector<64x384xf32>
    %187 = tpu.matmul %185, %186, %cst_67 {dimension_numbers = #tpu.dot_dimension_numbers<[1], [0], [0], [1], [0, 0, 1, 1], [], []>} : vector<64x64xbf16>, vector<64x384xbf16>, vector<64x384xf32> -> vector<64x384xf32>
    %188 = arith.addf %166, %187 : vector<64x384xf32>
    %189 = vector.extract_strided_slice %5 {offsets = [64, 128], sizes = [64, 64], strides = [1, 1]} : vector<128x1152xbf16> to vector<64x64xbf16>
    %190 = vector.extract_strided_slice %5 {offsets = [64, 512], sizes = [64, 64], strides = [1, 1]} : vector<128x1152xbf16> to vector<64x64xbf16>
    %191 = vector.extract_strided_slice %5 {offsets = [64, 896], sizes = [64, 64], strides = [1, 1]} : vector<128x1152xbf16> to vector<64x64xbf16>
    %cst_68 = arith.constant dense<0.000000e+00> : vector<64x64xf32>
    %192 = tpu.matmul %189, %190, %cst_68 {dimension_numbers = #tpu.dot_dimension_numbers<[1], [1], [0], [0], [0, 0, 1, 0], [], []>} : vector<64x64xbf16>, vector<64x64xbf16>, vector<64x64xf32> -> vector<64x64xf32>
    %cst_69 = arith.constant 0xFF800000 : f32
    %193 = vector.broadcast %cst_69 : f32 to vector<64x64xf32>
    %194 = arith.select %8, %192, %193 : vector<64x64xi1>, vector<64x64xf32>
    %cst_70 = arith.constant dense<0xFF800000> : vector<64xf32>
    %195 = vector.multi_reduction <maximumf>, %194, %cst_70 [1] : vector<64x64xf32> to vector<64xf32>
    %196 = vector.shape_cast %195 : vector<64xf32> to vector<64x1xf32>
    %197 = vector.broadcast %196 : vector<64x1xf32> to vector<64x64xf32>
    %198 = arith.subf %194, %197 : vector<64x64xf32>
    %199 = math.exp %198 : vector<64x64xf32>
    %cst_71 = arith.constant dense<0.000000e+00> : vector<64xf32>
    %200 = vector.multi_reduction <add>, %199, %cst_71 [1] : vector<64x64xf32> to vector<64xf32>
    %201 = vector.shape_cast %200 : vector<64xf32> to vector<64x1xf32>
    %202 = tpu.reciprocal %201 : vector<64x1xf32> -> vector<64x1xf32>
    %203 = vector.broadcast %202 : vector<64x1xf32> to vector<64x64xf32>
    %204 = arith.mulf %199, %203 : vector<64x64xf32>
    %205 = arith.truncf %204 : vector<64x64xf32> to vector<64x64xbf16>
    %cst_72 = arith.constant dense<0.000000e+00> : vector<64x64xf32>
    %206 = tpu.matmul %205, %191, %cst_72 {dimension_numbers = #tpu.dot_dimension_numbers<[1], [0], [0], [1], [0, 0, 1, 1], [], []>} : vector<64x64xbf16>, vector<64x64xbf16>, vector<64x64xf32> -> vector<64x64xf32>
    %207 = arith.truncf %206 : vector<64x64xf32> to vector<64x64xbf16>
    %c128_73 = arith.constant 128 : index
    %c0_74 = arith.constant 0 : index
    %208 = vector.load %arg3[%c128_73, %c0_74] : memref<384x384xbf16, #tpu.memory_space<vmem>>, vector<64x384xbf16>
    %cst_75 = arith.constant dense<0.000000e+00> : vector<64x384xf32>
    %209 = tpu.matmul %207, %208, %cst_75 {dimension_numbers = #tpu.dot_dimension_numbers<[1], [0], [0], [1], [0, 0, 1, 1], [], []>} : vector<64x64xbf16>, vector<64x384xbf16>, vector<64x384xf32> -> vector<64x384xf32>
    %210 = arith.addf %188, %209 : vector<64x384xf32>
    %211 = vector.extract_strided_slice %5 {offsets = [64, 192], sizes = [64, 64], strides = [1, 1]} : vector<128x1152xbf16> to vector<64x64xbf16>
    %212 = vector.extract_strided_slice %5 {offsets = [64, 576], sizes = [64, 64], strides = [1, 1]} : vector<128x1152xbf16> to vector<64x64xbf16>
    %213 = vector.extract_strided_slice %5 {offsets = [64, 960], sizes = [64, 64], strides = [1, 1]} : vector<128x1152xbf16> to vector<64x64xbf16>
    %cst_76 = arith.constant dense<0.000000e+00> : vector<64x64xf32>
    %214 = tpu.matmul %211, %212, %cst_76 {dimension_numbers = #tpu.dot_dimension_numbers<[1], [1], [0], [0], [0, 0, 1, 0], [], []>} : vector<64x64xbf16>, vector<64x64xbf16>, vector<64x64xf32> -> vector<64x64xf32>
    %cst_77 = arith.constant 0xFF800000 : f32
    %215 = vector.broadcast %cst_77 : f32 to vector<64x64xf32>
    %216 = arith.select %8, %214, %215 : vector<64x64xi1>, vector<64x64xf32>
    %cst_78 = arith.constant dense<0xFF800000> : vector<64xf32>
    %217 = vector.multi_reduction <maximumf>, %216, %cst_78 [1] : vector<64x64xf32> to vector<64xf32>
    %218 = vector.shape_cast %217 : vector<64xf32> to vector<64x1xf32>
    %219 = vector.broadcast %218 : vector<64x1xf32> to vector<64x64xf32>
    %220 = arith.subf %216, %219 : vector<64x64xf32>
    %221 = math.exp %220 : vector<64x64xf32>
    %cst_79 = arith.constant dense<0.000000e+00> : vector<64xf32>
    %222 = vector.multi_reduction <add>, %221, %cst_79 [1] : vector<64x64xf32> to vector<64xf32>
    %223 = vector.shape_cast %222 : vector<64xf32> to vector<64x1xf32>
    %224 = tpu.reciprocal %223 : vector<64x1xf32> -> vector<64x1xf32>
    %225 = vector.broadcast %224 : vector<64x1xf32> to vector<64x64xf32>
    %226 = arith.mulf %221, %225 : vector<64x64xf32>
    %227 = arith.truncf %226 : vector<64x64xf32> to vector<64x64xbf16>
    %cst_80 = arith.constant dense<0.000000e+00> : vector<64x64xf32>
    %228 = tpu.matmul %227, %213, %cst_80 {dimension_numbers = #tpu.dot_dimension_numbers<[1], [0], [0], [1], [0, 0, 1, 1], [], []>} : vector<64x64xbf16>, vector<64x64xbf16>, vector<64x64xf32> -> vector<64x64xf32>
    %229 = arith.truncf %228 : vector<64x64xf32> to vector<64x64xbf16>
    %c192_81 = arith.constant 192 : index
    %c0_82 = arith.constant 0 : index
    %230 = vector.load %arg3[%c192_81, %c0_82] : memref<384x384xbf16, #tpu.memory_space<vmem>>, vector<64x384xbf16>
    %cst_83 = arith.constant dense<0.000000e+00> : vector<64x384xf32>
    %231 = tpu.matmul %229, %230, %cst_83 {dimension_numbers = #tpu.dot_dimension_numbers<[1], [0], [0], [1], [0, 0, 1, 1], [], []>} : vector<64x64xbf16>, vector<64x384xbf16>, vector<64x384xf32> -> vector<64x384xf32>
    %232 = arith.addf %210, %231 : vector<64x384xf32>
    %233 = vector.extract_strided_slice %5 {offsets = [64, 256], sizes = [64, 64], strides = [1, 1]} : vector<128x1152xbf16> to vector<64x64xbf16>
    %234 = vector.extract_strided_slice %5 {offsets = [64, 640], sizes = [64, 64], strides = [1, 1]} : vector<128x1152xbf16> to vector<64x64xbf16>
    %235 = vector.extract_strided_slice %5 {offsets = [64, 1024], sizes = [64, 64], strides = [1, 1]} : vector<128x1152xbf16> to vector<64x64xbf16>
    %cst_84 = arith.constant dense<0.000000e+00> : vector<64x64xf32>
    %236 = tpu.matmul %233, %234, %cst_84 {dimension_numbers = #tpu.dot_dimension_numbers<[1], [1], [0], [0], [0, 0, 1, 0], [], []>} : vector<64x64xbf16>, vector<64x64xbf16>, vector<64x64xf32> -> vector<64x64xf32>
    %cst_85 = arith.constant 0xFF800000 : f32
    %237 = vector.broadcast %cst_85 : f32 to vector<64x64xf32>
    %238 = arith.select %8, %236, %237 : vector<64x64xi1>, vector<64x64xf32>
    %cst_86 = arith.constant dense<0xFF800000> : vector<64xf32>
    %239 = vector.multi_reduction <maximumf>, %238, %cst_86 [1] : vector<64x64xf32> to vector<64xf32>
    %240 = vector.shape_cast %239 : vector<64xf32> to vector<64x1xf32>
    %241 = vector.broadcast %240 : vector<64x1xf32> to vector<64x64xf32>
    %242 = arith.subf %238, %241 : vector<64x64xf32>
    %243 = math.exp %242 : vector<64x64xf32>
    %cst_87 = arith.constant dense<0.000000e+00> : vector<64xf32>
    %244 = vector.multi_reduction <add>, %243, %cst_87 [1] : vector<64x64xf32> to vector<64xf32>
    %245 = vector.shape_cast %244 : vector<64xf32> to vector<64x1xf32>
    %246 = tpu.reciprocal %245 : vector<64x1xf32> -> vector<64x1xf32>
    %247 = vector.broadcast %246 : vector<64x1xf32> to vector<64x64xf32>
    %248 = arith.mulf %243, %247 : vector<64x64xf32>
    %249 = arith.truncf %248 : vector<64x64xf32> to vector<64x64xbf16>
    %cst_88 = arith.constant dense<0.000000e+00> : vector<64x64xf32>
    %250 = tpu.matmul %249, %235, %cst_88 {dimension_numbers = #tpu.dot_dimension_numbers<[1], [0], [0], [1], [0, 0, 1, 1], [], []>} : vector<64x64xbf16>, vector<64x64xbf16>, vector<64x64xf32> -> vector<64x64xf32>
    %251 = arith.truncf %250 : vector<64x64xf32> to vector<64x64xbf16>
    %c256_89 = arith.constant 256 : index
    %c0_90 = arith.constant 0 : index
    %252 = vector.load %arg3[%c256_89, %c0_90] : memref<384x384xbf16, #tpu.memory_space<vmem>>, vector<64x384xbf16>
    %cst_91 = arith.constant dense<0.000000e+00> : vector<64x384xf32>
    %253 = tpu.matmul %251, %252, %cst_91 {dimension_numbers = #tpu.dot_dimension_numbers<[1], [0], [0], [1], [0, 0, 1, 1], [], []>} : vector<64x64xbf16>, vector<64x384xbf16>, vector<64x384xf32> -> vector<64x384xf32>
    %254 = arith.addf %232, %253 : vector<64x384xf32>
    %255 = vector.extract_strided_slice %5 {offsets = [64, 320], sizes = [64, 64], strides = [1, 1]} : vector<128x1152xbf16> to vector<64x64xbf16>
    %256 = vector.extract_strided_slice %5 {offsets = [64, 704], sizes = [64, 64], strides = [1, 1]} : vector<128x1152xbf16> to vector<64x64xbf16>
    %257 = vector.extract_strided_slice %5 {offsets = [64, 1088], sizes = [64, 64], strides = [1, 1]} : vector<128x1152xbf16> to vector<64x64xbf16>
    %cst_92 = arith.constant dense<0.000000e+00> : vector<64x64xf32>
    %258 = tpu.matmul %255, %256, %cst_92 {dimension_numbers = #tpu.dot_dimension_numbers<[1], [1], [0], [0], [0, 0, 1, 0], [], []>} : vector<64x64xbf16>, vector<64x64xbf16>, vector<64x64xf32> -> vector<64x64xf32>
    %cst_93 = arith.constant 0xFF800000 : f32
    %259 = vector.broadcast %cst_93 : f32 to vector<64x64xf32>
    %260 = arith.select %8, %258, %259 : vector<64x64xi1>, vector<64x64xf32>
    %cst_94 = arith.constant dense<0xFF800000> : vector<64xf32>
    %261 = vector.multi_reduction <maximumf>, %260, %cst_94 [1] : vector<64x64xf32> to vector<64xf32>
    %262 = vector.shape_cast %261 : vector<64xf32> to vector<64x1xf32>
    %263 = vector.broadcast %262 : vector<64x1xf32> to vector<64x64xf32>
    %264 = arith.subf %260, %263 : vector<64x64xf32>
    %265 = math.exp %264 : vector<64x64xf32>
    %cst_95 = arith.constant dense<0.000000e+00> : vector<64xf32>
    %266 = vector.multi_reduction <add>, %265, %cst_95 [1] : vector<64x64xf32> to vector<64xf32>
    %267 = vector.shape_cast %266 : vector<64xf32> to vector<64x1xf32>
    %268 = tpu.reciprocal %267 : vector<64x1xf32> -> vector<64x1xf32>
    %269 = vector.broadcast %268 : vector<64x1xf32> to vector<64x64xf32>
    %270 = arith.mulf %265, %269 : vector<64x64xf32>
    %271 = arith.truncf %270 : vector<64x64xf32> to vector<64x64xbf16>
    %cst_96 = arith.constant dense<0.000000e+00> : vector<64x64xf32>
    %272 = tpu.matmul %271, %257, %cst_96 {dimension_numbers = #tpu.dot_dimension_numbers<[1], [0], [0], [1], [0, 0, 1, 1], [], []>} : vector<64x64xbf16>, vector<64x64xbf16>, vector<64x64xf32> -> vector<64x64xf32>
    %273 = arith.truncf %272 : vector<64x64xf32> to vector<64x64xbf16>
    %c320_97 = arith.constant 320 : index
    %c0_98 = arith.constant 0 : index
    %274 = vector.load %arg3[%c320_97, %c0_98] : memref<384x384xbf16, #tpu.memory_space<vmem>>, vector<64x384xbf16>
    %cst_99 = arith.constant dense<0.000000e+00> : vector<64x384xf32>
    %275 = tpu.matmul %273, %274, %cst_99 {dimension_numbers = #tpu.dot_dimension_numbers<[1], [0], [0], [1], [0, 0, 1, 1], [], []>} : vector<64x64xbf16>, vector<64x384xbf16>, vector<64x384xf32> -> vector<64x384xf32>
    %276 = arith.addf %254, %275 : vector<64x384xf32>
    %277 = vector.broadcast %9 : vector<1x384xf32> to vector<64x384xf32>
    %278 = arith.addf %276, %277 : vector<64x384xf32>
    %c1 = arith.constant 1 : index
    %c0_100 = arith.constant 0 : index
    %c0_101 = arith.constant 0 : index
    %279 = vector.load %arg5[%c1, %c0_100, %c0_101] : memref<2x64x384xf32, #tpu.memory_space<vmem>>, vector<1x64x384xf32>
    %280 = vector.shape_cast %279 : vector<1x64x384xf32> to vector<64x384xf32>
    %281 = vector.shape_cast %278 : vector<64x384xf32> to vector<1x64x384xf32>
    tpu.vector_store %arg5[%c1, %c0_100, %c0_101], %281 {strides = array<i32>} : memref<2x64x384xf32, #tpu.memory_space<vmem>>, vector<1x64x384xf32>,
    return
  }
  func.func @transform_0(%arg0: i32) -> (i32, i32, i32) {
    %c0_i32 = arith.constant 0 : i32
    %c0_i32_0 = arith.constant 0 : i32
    %c0_i32_1 = arith.constant 0 : i32
    return %arg0, %c0_i32, %c0_i32_0 : i32, i32, i32
  }
  func.func @transform_1(%arg0: i32) -> (i32, i32) {
    %c0_i32 = arith.constant 0 : i32
    %c0_i32_0 = arith.constant 0 : i32
    %c0_i32_1 = arith.constant 0 : i32
    return %c0_i32, %c0_i32_0 : i32, i32
  }
  func.func @transform_2(%arg0: i32) -> (i32, i32) {
    %c0_i32 = arith.constant 0 : i32
    %c0_i32_0 = arith.constant 0 : i32
    %c0_i32_1 = arith.constant 0 : i32
    return %c0_i32, %c0_i32_0 : i32, i32
  }
  func.func @transform_3(%arg0: i32) -> (i32, i32) {
    %c0_i32 = arith.constant 0 : i32
    %c0_i32_0 = arith.constant 0 : i32
    %c0_i32_1 = arith.constant 0 : i32
    return %c0_i32, %c0_i32_0 : i32, i32
  }
  func.func @transform_4(%arg0: i32) -> (i32, i32, i32) {
    %c0_i32 = arith.constant 0 : i32
    %c0_i32_0 = arith.constant 0 : i32
    %c0_i32_1 = arith.constant 0 : i32
    return %arg0, %c0_i32, %c0_i32_0 : i32, i32, i32
  }
}

</mosaic_0001>

<llo_original>
// kernel: multi_head_attention.1
$region0: #{multi_head_attention.1}
  #allocation0 [shape = 'u32[]', space=smem, size = 0x4, offset = 0x4, fixed_abs, tag = 'smem constant byte address 0x4 - core index']
  #allocation1 [shape = 'u32[144,128]{1,0:T(1,128)}', space=vmem, size = 0x12000, scoped, tag = 'internal scratch']
  %s0 = inlined_call_operand.hbm [shape: f32[2,64,384], index: 0, kind: input, shape index: {}]
  %s1 = inlined_call_operand.hbm [shape: bf16[384,1152], index: 1, kind: input, shape index: {}]
  %s2 = inlined_call_operand.hbm [shape: bf16[384,384], index: 2, kind: input, shape index: {}]
  %s3 = inlined_call_operand.vmem [shape: f32[1,384], index: 3, kind: input, shape index: {}]
  %s4 = inlined_call_operand.hbm [shape: f32[2,64,384], index: 4, kind: output, shape index: {}]
  %s5 = sld [smem:[#allocation0]]
  $region38: #{multi_head_attention.1} parent=0
    _
  %s7 = ssub.s32 1, %s5
  %s8 = scalar_select 0, %s7, %s5
  $region1: #{multi_head_attention.1} parent=0
    #allocation2 [shape = 'u8[196608]{0}', space=vmem, size = 0x30000, scoped, tag = 'input window, operand 0, single buffered']
    #allocation3 [shape = 's32[1]{0}', space=sflag, size = 0x4, scoped, tag = 'scoped memory for multi_head_attention.1']
    #allocation4 [shape = 's32[1]{0}', space=sflag, size = 0x4, scoped, tag = 'scoped memory for multi_head_attention.1']
    #allocation5 [shape = 'u8[884736]{0}', space=vmem, size = 0xd8000, scoped, tag = 'input window, operand 1, single buffered']
    #allocation6 [shape = 's32[1]{0}', space=sflag, size = 0x4, scoped, tag = 'scoped memory for multi_head_attention.1']
    #allocation7 [shape = 'u8[294912]{0}', space=vmem, size = 0x48000, scoped, tag = 'input window, operand 2, single buffered']
    #allocation8 [shape = 'u8[196608]{0}', space=vmem, size = 0x30000, scoped, tag = 'output window, operand 0, single buffered']
    %9 = vsyncpa [#allocation3], 0
    %10 = vsyncpa [#allocation6], 0
    %11 = vsyncpa [#allocation4], 0
    // Predicated region
    $region2: #{multi_head_attention.1} parent=1 // pred_check
      _
    $region3: #{multi_head_attention.1} parent=1 // pred_check_branch
      %13 = sbr.rel (0) target = $region5
    $region4: #{multi_head_attention.1} parent=1 // pred_region
      %s15 = ssub.s32 6144, 6144
      %16 = vsyncadd [#allocation3], %s15
      %s17 = sshll.u32 [#allocation2], 4
      %s18 = int_to_ptr.vmem [resolvable:$true] %s17
      %23 = dma.hbm_to_vmem [thread:$0]  %s0, 6144, %s18, [#allocation3], 384, 384, 24
    $region5: #{multi_head_attention.1} parent=1 // pred_fallthru
      _
    // Predicated region
    $region6: #{multi_head_attention.1} parent=1 // pred_check
      _
    $region7: #{multi_head_attention.1} parent=1 // pred_check_branch
      %25 = sbr.rel (0) target = $region9
    $region8: #{multi_head_attention.1} parent=1 // pred_region
      %s27 = ssub.s32 27648, 27648
      %28 = vsyncadd [#allocation6], %s27
      %s29 = sshll.u32 [#allocation5], 4
      %s30 = int_to_ptr.vmem [resolvable:$true] %s29
      %35 = dma.hbm_to_vmem [thread:$0]  %s1, 27648, %s30, [#allocation6], 576, 576, 36
    $region9: #{multi_head_attention.1} parent=1 // pred_fallthru
      _
    // Predicated region
    $region10: #{multi_head_attention.1} parent=1 // pred_check
      _
    $region11: #{multi_head_attention.1} parent=1 // pred_check_branch
      %37 = sbr.rel (0) target = $region13
    $region12: #{multi_head_attention.1} parent=1 // pred_region
      %s39 = ssub.s32 9216, 9216
      %40 = vsyncadd [#allocation6], %s39
      %s41 = sshll.u32 [#allocation7], 4
      %s42 = int_to_ptr.vmem [resolvable:$true] %s41
      %47 = dma.hbm_to_vmem [thread:$0]  %s2, 9216, %s42, [#allocation6], 192, 192, 12
    $region13: #{multi_head_attention.1} parent=1 // pred_fallthru
      _
    // Predicated region
    $region14: #{multi_head_attention.1} parent=1 // pred_check
      _
    $region15: #{multi_head_attention.1} parent=1 // pred_check_branch
      %49 = sbr.rel (0) target = $region17
    $region16: #{multi_head_attention.1} parent=1 // pred_region
      _
    $region17: #{multi_head_attention.1} parent=1 // pred_fallthru
      _
    // Predicated region
    $region18: #{multi_head_attention.1} parent=1 // pred_check
      _
    $region19: #{multi_head_attention.1} parent=1 // pred_check_branch
      %51 = sbr.rel (0) target = $region21
    $region20: #{multi_head_attention.1} parent=1 // pred_region
      %52 = dma.done [#allocation3], 6144
    $region21: #{multi_head_attention.1} parent=1 // pred_fallthru
      _
    // Predicated region
    $region22: #{multi_head_attention.1} parent=1 // pred_check
      _
    $region23: #{multi_head_attention.1} parent=1 // pred_check_branch
      %54 = sbr.rel (0) target = $region25
    $region24: #{multi_head_attention.1} parent=1 // pred_region
      %55 = dma.done [#allocation6], 27648
    $region25: #{multi_head_attention.1} parent=1 // pred_fallthru
      _
    // Predicated region
    $region26: #{multi_head_attention.1} parent=1 // pred_check
      _
    $region27: #{multi_head_attention.1} parent=1 // pred_check_branch
      %57 = sbr.rel (0) target = $region29
    $region28: #{multi_head_attention.1} parent=1 // pred_region
      %58 = dma.done [#allocation6], 9216
    $region29: #{multi_head_attention.1} parent=1 // pred_fallthru
      _
    %v60 = vld [vmem:[#allocation2] sm:$0xff]
    %v61 = vld [vmem:[#allocation2 + $0x8] sm:$0xff]
    %v62 = vld [vmem:[#allocation2 + $0x10] sm:$0xff]
    %v63 = vld [vmem:[#allocation2 + $0x18] sm:$0xff]
    %v64 = vld [vmem:[#allocation2 + $0x20] sm:$0xff]
    %v65 = vld [vmem:[#allocation2 + $0x28] sm:$0xff]
    %v66 = vld [vmem:[#allocation2 + $0x30] sm:$0xff]
    %v67 = vld [vmem:[#allocation2 + $0x38] sm:$0xff]
    %v68 = vld [vmem:[#allocation2 + $0x40] sm:$0xff]
    %v69 = vld [vmem:[#allocation2 + $0x48] sm:$0xff]
    %v70 = vld [vmem:[#allocation2 + $0x50] sm:$0xff]
    %v71 = vld [vmem:[#allocation2 + $0x58] sm:$0xff]
    %v72 = vld [vmem:[#allocation2 + $0x60] sm:$0xff]
    %v73 = vld [vmem:[#allocation2 + $0x68] sm:$0xff]
    %v74 = vld [vmem:[#allocation2 + $0x70] sm:$0xff]
    %v75 = vld [vmem:[#allocation2 + $0x78] sm:$0xff]
    %v76 = vld [vmem:[#allocation2 + $0x80] sm:$0xff]
    %v77 = vld [vmem:[#allocation2 + $0x88] sm:$0xff]
    %v78 = vld [vmem:[#allocation2 + $0x90] sm:$0xff]
    %v79 = vld [vmem:[#allocation2 + $0x98] sm:$0xff]
    %v80 = vld [vmem:[#allocation2 + $0xa0] sm:$0xff]
    %v81 = vld [vmem:[#allocation2 + $0xa8] sm:$0xff]
    %v82 = vld [vmem:[#allocation2 + $0xb0] sm:$0xff]
    %v83 = vld [vmem:[#allocation2 + $0xb8] sm:$0xff]
    %v84 = vld [vmem:[#allocation2 + $0xc0] sm:$0xff]
    %v85 = vld [vmem:[#allocation2 + $0xc8] sm:$0xff]
    %v86 = vld [vmem:[#allocation2 + $0xd0] sm:$0xff]
    %v87 = vld [vmem:[#allocation2 + $0xd8] sm:$0xff]
    %v88 = vld [vmem:[#allocation2 + $0xe0] sm:$0xff]
    %v89 = vld [vmem:[#allocation2 + $0xe8] sm:$0xff]
    %v90 = vld [vmem:[#allocation2 + $0xf0] sm:$0xff]
    %v91 = vld [vmem:[#allocation2 + $0xf8] sm:$0xff]
    %v92 = vld [vmem:[#allocation2 + $0x100] sm:$0xff]
    %v93 = vld [vmem:[#allocation2 + $0x108] sm:$0xff]
    %v94 = vld [vmem:[#allocation2 + $0x110] sm:$0xff]
    %v95 = vld [vmem:[#allocation2 + $0x118] sm:$0xff]
    %v96 = vld [vmem:[#allocation2 + $0x120] sm:$0xff]
    %v97 = vld [vmem:[#allocation2 + $0x128] sm:$0xff]
    %v98 = vld [vmem:[#allocation2 + $0x130] sm:$0xff]
    %v99 = vld [vmem:[#allocation2 + $0x138] sm:$0xff]
    %v100 = vld [vmem:[#allocation2 + $0x140] sm:$0xff]
    %v101 = vld [vmem:[#allocation2 + $0x148] sm:$0xff]
    %v102 = vld [vmem:[#allocation2 + $0x150] sm:$0xff]
    %v103 = vld [vmem:[#allocation2 + $0x158] sm:$0xff]
    %v104 = vld [vmem:[#allocation2 + $0x160] sm:$0xff]
    %v105 = vld [vmem:[#allocation2 + $0x168] sm:$0xff]
    %v106 = vld [vmem:[#allocation2 + $0x170] sm:$0xff]
    %v107 = vld [vmem:[#allocation2 + $0x178] sm:$0xff]
    %v108 = vpack.c.bf16 %v63, %v60
    %v109 = vpack.c.bf16 %v64, %v61
    %v110 = vpack.c.bf16 %v65, %v62
    %v111 = vpack.c.bf16 %v69, %v66
    %v112 = vpack.c.bf16 %v70, %v67
    %v113 = vpack.c.bf16 %v71, %v68
    %v114 = vpack.c.bf16 %v75, %v72
    %v115 = vpack.c.bf16 %v76, %v73
    %v116 = vpack.c.bf16 %v77, %v74
    %v117 = vpack.c.bf16 %v81, %v78
    %v118 = vpack.c.bf16 %v82, %v79
    %v119 = vpack.c.bf16 %v83, %v80
    %v120 = vpack.c.bf16 %v87, %v84
    %v121 = vpack.c.bf16 %v88, %v85
    %v122 = vpack.c.bf16 %v89, %v86
    %v123 = vpack.c.bf16 %v93, %v90
    %v124 = vpack.c.bf16 %v94, %v91
    %v125 = vpack.c.bf16 %v95, %v92
    %v126 = vpack.c.bf16 %v99, %v96
    %v127 = vpack.c.bf16 %v100, %v97
    %v128 = vpack.c.bf16 %v101, %v98
    %v129 = vpack.c.bf16 %v105, %v102
    %v130 = vpack.c.bf16 %v106, %v103
    %v131 = vpack.c.bf16 %v107, %v104
    %v132 = vld [vmem:[#allocation5] sm:$0xff]
    %v133 = vld [vmem:[#allocation5 + $0x8] sm:$0xff]
    %v134 = vld [vmem:[#allocation5 + $0x10] sm:$0xff]
    %v135 = vld [vmem:[#allocation5 + $0x18] sm:$0xff]
    %v136 = vld [vmem:[#allocation5 + $0x20] sm:$0xf]
    %v137 = vld [vmem:[#allocation5 + $0x24] sm:$0xff]
    %v138 = vld [vmem:[#allocation5 + $0x2c] sm:$0xff]
    %v139 = vld [vmem:[#allocation5 + $0x34] sm:$0xff]
    %v140 = vld [vmem:[#allocation5 + $0x3c] sm:$0xff]
    %v141 = vld [vmem:[#allocation5 + $0x44] sm:$0xf]
    %v142 = vld [vmem:[#allocation5 + $0x48] sm:$0xff]
    %v143 = vld [vmem:[#allocation5 + $0x50] sm:$0xff]
    %v144 = vld [vmem:[#allocation5 + $0x58] sm:$0xff]
    %v145 = vld [vmem:[#allocation5 + $0x60] sm:$0xff]
    %v146 = vld [vmem:[#allocation5 + $0x68] sm:$0xf]
    %v147 = vld [vmem:[#allocation5 + $0x6c] sm:$0xff]
    %v148 = vld [vmem:[#allocation5 + $0x74] sm:$0xff]
    %v149 = vld [vmem:[#allocation5 + $0x7c] sm:$0xff]
    %v150 = vld [vmem:[#allocation5 + $0x84] sm:$0xff]
    %v151 = vld [vmem:[#allocation5 + $0x8c] sm:$0xf]
    %v152 = vld [vmem:[#allocation5 + $0x90] sm:$0xff]
    %v153 = vld [vmem:[#allocation5 + $0x98] sm:$0xff]
    %v154 = vld [vmem:[#allocation5 + $0xa0] sm:$0xff]
    %v155 = vld [vmem:[#allocation5 + $0xa8] sm:$0xff]
    %v156 = vld [vmem:[#allocation5 + $0xb0] sm:$0xf]
    %v157 = vld [vmem:[#allocation5 + $0xb4] sm:$0xff]
    %v158 = vld [vmem:[#allocation5 + $0xbc] sm:$0xff]
    %v159 = vld [vmem:[#allocation5 + $0xc4] sm:$0xff]
    %v160 = vld [vmem:[#allocation5 + $0xcc] sm:$0xff]
    %v161 = vld [vmem:[#allocation5 + $0xd4] sm:$0xf]
    %v162 = vld [vmem:[#allocation5 + $0xd8] sm:$0xff]
    %v163 = vld [vmem:[#allocation5 + $0xe0] sm:$0xff]
    %v164 = vld [vmem:[#allocation5 + $0xe8] sm:$0xff]
    %v165 = vld [vmem:[#allocation5 + $0xf0] sm:$0xff]
    %v166 = vld [vmem:[#allocation5 + $0xf8] sm:$0xf]
    %v167 = vld [vmem:[#allocation5 + $0xfc] sm:$0xff]
    %v168 = vld [vmem:[#allocation5 + $0x104] sm:$0xff]
    %v169 = vld [vmem:[#allocation5 + $0x10c] sm:$0xff]
    %v170 = vld [vmem:[#allocation5 + $0x114] sm:$0xff]
    %v171 = vld [vmem:[#allocation5 + $0x11c] sm:$0xf]
    %v172 = vld [vmem:[#allocation5 + $0x120] sm:$0xff]
    %v173 = vld [vmem:[#allocation5 + $0x128] sm:$0xff]
    %v174 = vld [vmem:[#allocation5 + $0x130] sm:$0xff]
    %v175 = vld [vmem:[#allocation5 + $0x138] sm:$0xff]
    %v176 = vld [vmem:[#allocation5 + $0x140] sm:$0xf]
    %v177 = vld [vmem:[#allocation5 + $0x144] sm:$0xff]
    %v178 = vld [vmem:[#allocation5 + $0x14c] sm:$0xff]
    %v179 = vld [vmem:[#allocation5 + $0x154] sm:$0xff]
    %v180 = vld [vmem:[#allocation5 + $0x15c] sm:$0xff]
    %v181 = vld [vmem:[#allocation5 + $0x164] sm:$0xf]
    %v182 = vld [vmem:[#allocation5 + $0x168] sm:$0xff]
    %v183 = vld [vmem:[#allocation5 + $0x170] sm:$0xff]
    %v184 = vld [vmem:[#allocation5 + $0x178] sm:$0xff]
    %v185 = vld [vmem:[#allocation5 + $0x180] sm:$0xff]
    %v186 = vld [vmem:[#allocation5 + $0x188] sm:$0xf]
    %v187 = vld [vmem:[#allocation5 + $0x18c] sm:$0xff]
    %v188 = vld [vmem:[#allocation5 + $0x194] sm:$0xff]
    %v189 = vld [vmem:[#allocation5 + $0x19c] sm:$0xff]
    %v190 = vld [vmem:[#allocation5 + $0x1a4] sm:$0xff]
    %v191 = vld [vmem:[#allocation5 + $0x1ac] sm:$0xf]
    %v192 = vld [vmem:[#allocation5 + $0x1b0] sm:$0xff]
    %v193 = vld [vmem:[#allocation5 + $0x1b8] sm:$0xff]
    %v194 = vld [vmem:[#allocation5 + $0x1c0] sm:$0xff]
    %v195 = vld [vmem:[#allocation5 + $0x1c8] sm:$0xff]
    %v196 = vld [vmem:[#allocation5 + $0x1d0] sm:$0xf]
    %v197 = vld [vmem:[#allocation5 + $0x1d4] sm:$0xff]
    %v198 = vld [vmem:[#allocation5 + $0x1dc] sm:$0xff]
    %v199 = vld [vmem:[#allocation5 + $0x1e4] sm:$0xff]
    %v200 = vld [vmem:[#allocation5 + $0x1ec] sm:$0xff]
    %v201 = vld [vmem:[#allocation5 + $0x1f4] sm:$0xf]
    %v202 = vld [vmem:[#allocation5 + $0x1f8] sm:$0xff]
    %v203 = vld [vmem:[#allocation5 + $0x200] sm:$0xff]
    %v204 = vld [vmem:[#allocation5 + $0x208] sm:$0xff]
    %v205 = vld [vmem:[#allocation5 + $0x210] sm:$0xff]
    %v206 = vld [vmem:[#allocation5 + $0x218] sm:$0xf]
    %v207 = vld [vmem:[#allocation5 + $0x21c] sm:$0xff]
    %v208 = vld [vmem:[#allocation5 + $0x224] sm:$0xff]
    %v209 = vld [vmem:[#allocation5 + $0x22c] sm:$0xff]
    %v210 = vld [vmem:[#allocation5 + $0x234] sm:$0xff]
    %v211 = vld [vmem:[#allocation5 + $0x23c] sm:$0xf]
    %v212 = vld [vmem:[#allocation5 + $0x240] sm:$0xff]
    %v213 = vld [vmem:[#allocation5 + $0x248] sm:$0xff]
    %v214 = vld [vmem:[#allocation5 + $0x250] sm:$0xff]
    %v215 = vld [vmem:[#allocation5 + $0x258] sm:$0xff]
    %v216 = vld [vmem:[#allocation5 + $0x260] sm:$0xf]
    %v217 = vld [vmem:[#allocation5 + $0x264] sm:$0xff]
    %v218 = vld [vmem:[#allocation5 + $0x26c] sm:$0xff]
    %v219 = vld [vmem:[#allocation5 + $0x274] sm:$0xff]
    %v220 = vld [vmem:[#allocation5 + $0x27c] sm:$0xff]
    %v221 = vld [vmem:[#allocation5 + $0x284] sm:$0xf]
    %v222 = vld [vmem:[#allocation5 + $0x288] sm:$0xff]
    %v223 = vld [vmem:[#allocation5 + $0x290] sm:$0xff]
    %v224 = vld [vmem:[#allocation5 + $0x298] sm:$0xff]
    %v225 = vld [vmem:[#allocation5 + $0x2a0] sm:$0xff]
    %v226 = vld [vmem:[#allocation5 + $0x2a8] sm:$0xf]
    %v227 = vld [vmem:[#allocation5 + $0x2ac] sm:$0xff]
    %v228 = vld [vmem:[#allocation5 + $0x2b4] sm:$0xff]
    %v229 = vld [vmem:[#allocation5 + $0x2bc] sm:$0xff]
    %v230 = vld [vmem:[#allocation5 + $0x2c4] sm:$0xff]
    %v231 = vld [vmem:[#allocation5 + $0x2cc] sm:$0xf]
    %v232 = vld [vmem:[#allocation5 + $0x2d0] sm:$0xff]
    %v233 = vld [vmem:[#allocation5 + $0x2d8] sm:$0xff]
    %v234 = vld [vmem:[#allocation5 + $0x2e0] sm:$0xff]
    %v235 = vld [vmem:[#allocation5 + $0x2e8] sm:$0xff]
    %v236 = vld [vmem:[#allocation5 + $0x2f0] sm:$0xf]
    %v237 = vld [vmem:[#allocation5 + $0x2f4] sm:$0xff]
    %v238 = vld [vmem:[#allocation5 + $0x2fc] sm:$0xff]
    %v239 = vld [vmem:[#allocation5 + $0x304] sm:$0xff]
    %v240 = vld [vmem:[#allocation5 + $0x30c] sm:$0xff]
    %v241 = vld [vmem:[#allocation5 + $0x314] sm:$0xf]
    %v242 = vld [vmem:[#allocation5 + $0x318] sm:$0xff]
    %v243 = vld [vmem:[#allocation5 + $0x320] sm:$0xff]
    %v244 = vld [vmem:[#allocation5 + $0x328] sm:$0xff]
    %v245 = vld [vmem:[#allocation5 + $0x330] sm:$0xff]
    %v246 = vld [vmem:[#allocation5 + $0x338] sm:$0xf]
    %v247 = vld [vmem:[#allocation5 + $0x33c] sm:$0xff]
    %v248 = vld [vmem:[#allocation5 + $0x344] sm:$0xff]
    %v249 = vld [vmem:[#allocation5 + $0x34c] sm:$0xff]
    %v250 = vld [vmem:[#allocation5 + $0x354] sm:$0xff]
    %v251 = vld [vmem:[#allocation5 + $0x35c] sm:$0xf]
    %v252 = vld [vmem:[#allocation5 + $0x360] sm:$0xff]
    %v253 = vld [vmem:[#allocation5 + $0x368] sm:$0xff]
    %v254 = vld [vmem:[#allocation5 + $0x370] sm:$0xff]
    %v255 = vld [vmem:[#allocation5 + $0x378] sm:$0xff]
    %v256 = vld [vmem:[#allocation5 + $0x380] sm:$0xf]
    %v257 = vld [vmem:[#allocation5 + $0x384] sm:$0xff]
    %v258 = vld [vmem:[#allocation5 + $0x38c] sm:$0xff]
    %v259 = vld [vmem:[#allocation5 + $0x394] sm:$0xff]
    %v260 = vld [vmem:[#allocation5 + $0x39c] sm:$0xff]
    %v261 = vld [vmem:[#allocation5 + $0x3a4] sm:$0xf]
    %v262 = vld [vmem:[#allocation5 + $0x3a8] sm:$0xff]
    %v263 = vld [vmem:[#allocation5 + $0x3b0] sm:$0xff]
    %v264 = vld [vmem:[#allocation5 + $0x3b8] sm:$0xff]
    %v265 = vld [vmem:[#allocation5 + $0x3c0] sm:$0xff]
    %v266 = vld [vmem:[#allocation5 + $0x3c8] sm:$0xf]
    %v267 = vld [vmem:[#allocation5 + $0x3cc] sm:$0xff]
    %v268 = vld [vmem:[#allocation5 + $0x3d4] sm:$0xff]
    %v269 = vld [vmem:[#allocation5 + $0x3dc] sm:$0xff]
    %v270 = vld [vmem:[#allocation5 + $0x3e4] sm:$0xff]
    %v271 = vld [vmem:[#allocation5 + $0x3ec] sm:$0xf]
    %v272 = vld [vmem:[#allocation5 + $0x3f0] sm:$0xff]
    %v273 = vld [vmem:[#allocation5 + $0x3f8] sm:$0xff]
    %v274 = vld [vmem:[#allocation5 + $0x400] sm:$0xff]
    %v275 = vld [vmem:[#allocation5 + $0x408] sm:$0xff]
    %v276 = vld [vmem:[#allocation5 + $0x410] sm:$0xf]
    %v277 = vld [vmem:[#allocation5 + $0x414] sm:$0xff]
    %v278 = vld [vmem:[#allocation5 + $0x41c] sm:$0xff]
    %v279 = vld [vmem:[#allocation5 + $0x424] sm:$0xff]
    %v280 = vld [vmem:[#allocation5 + $0x42c] sm:$0xff]
    %v281 = vld [vmem:[#allocation5 + $0x434] sm:$0xf]
    %v282 = vld [vmem:[#allocation5 + $0x438] sm:$0xff]
    %v283 = vld [vmem:[#allocation5 + $0x440] sm:$0xff]
    %v284 = vld [vmem:[#allocation5 + $0x448] sm:$0xff]
    %v285 = vld [vmem:[#allocation5 + $0x450] sm:$0xff]
    %v286 = vld [vmem:[#allocation5 + $0x458] sm:$0xf]
    %v287 = vld [vmem:[#allocation5 + $0x45c] sm:$0xff]
    %v288 = vld [vmem:[#allocation5 + $0x464] sm:$0xff]
    %v289 = vld [vmem:[#allocation5 + $0x46c] sm:$0xff]
    %v290 = vld [vmem:[#allocation5 + $0x474] sm:$0xff]
    %v291 = vld [vmem:[#allocation5 + $0x47c] sm:$0xf]
    %v292 = vld [vmem:[#allocation5 + $0x480] sm:$0xff]
    %v293 = vld [vmem:[#allocation5 + $0x488] sm:$0xff]
    %v294 = vld [vmem:[#allocation5 + $0x490] sm:$0xff]
    %v295 = vld [vmem:[#allocation5 + $0x498] sm:$0xff]
    %v296 = vld [vmem:[#allocation5 + $0x4a0] sm:$0xf]
    %v297 = vld [vmem:[#allocation5 + $0x4a4] sm:$0xff]
    %v298 = vld [vmem:[#allocation5 + $0x4ac] sm:$0xff]
    %v299 = vld [vmem:[#allocation5 + $0x4b4] sm:$0xff]
    %v300 = vld [vmem:[#allocation5 + $0x4bc] sm:$0xff]
    %v301 = vld [vmem:[#allocation5 + $0x4c4] sm:$0xf]
    %v302 = vld [vmem:[#allocation5 + $0x4c8] sm:$0xff]
    %v303 = vld [vmem:[#allocation5 + $0x4d0] sm:$0xff]
    %v304 = vld [vmem:[#allocation5 + $0x4d8] sm:$0xff]
    %v305 = vld [vmem:[#allocation5 + $0x4e0] sm:$0xff]
    %v306 = vld [vmem:[#allocation5 + $0x4e8] sm:$0xf]
    %v307 = vld [vmem:[#allocation5 + $0x4ec] sm:$0xff]
    %v308 = vld [vmem:[#allocation5 + $0x4f4] sm:$0xff]
    %v309 = vld [vmem:[#allocation5 + $0x4fc] sm:$0xff]
    %v310 = vld [vmem:[#allocation5 + $0x504] sm:$0xff]
    %v311 = vld [vmem:[#allocation5 + $0x50c] sm:$0xf]
    %v312 = vld [vmem:[#allocation5 + $0x510] sm:$0xff]
    %v313 = vld [vmem:[#allocation5 + $0x518] sm:$0xff]
    %v314 = vld [vmem:[#allocation5 + $0x520] sm:$0xff]
    %v315 = vld [vmem:[#allocation5 + $0x528] sm:$0xff]
    %v316 = vld [vmem:[#allocation5 + $0x530] sm:$0xf]
    %v317 = vld [vmem:[#allocation5 + $0x534] sm:$0xff]
    %v318 = vld [vmem:[#allocation5 + $0x53c] sm:$0xff]
    %v319 = vld [vmem:[#allocation5 + $0x544] sm:$0xff]
    %v320 = vld [vmem:[#allocation5 + $0x54c] sm:$0xff]
    %v321 = vld [vmem:[#allocation5 + $0x554] sm:$0xf]
    %v322 = vld [vmem:[#allocation5 + $0x558] sm:$0xff]
    %v323 = vld [vmem:[#allocation5 + $0x560] sm:$0xff]
    %v324 = vld [vmem:[#allocation5 + $0x568] sm:$0xff]
    %v325 = vld [vmem:[#allocation5 + $0x570] sm:$0xff]
    %v326 = vld [vmem:[#allocation5 + $0x578] sm:$0xf]
    %v327 = vld [vmem:[#allocation5 + $0x57c] sm:$0xff]
    %v328 = vld [vmem:[#allocation5 + $0x584] sm:$0xff]
    %v329 = vld [vmem:[#allocation5 + $0x58c] sm:$0xff]
    %v330 = vld [vmem:[#allocation5 + $0x594] sm:$0xff]
    %v331 = vld [vmem:[#allocation5 + $0x59c] sm:$0xf]
    %v332 = vld [vmem:[#allocation5 + $0x5a0] sm:$0xff]
    %v333 = vld [vmem:[#allocation5 + $0x5a8] sm:$0xff]
    %v334 = vld [vmem:[#allocation5 + $0x5b0] sm:$0xff]
    %v335 = vld [vmem:[#allocation5 + $0x5b8] sm:$0xff]
    %v336 = vld [vmem:[#allocation5 + $0x5c0] sm:$0xf]
    %v337 = vld [vmem:[#allocation5 + $0x5c4] sm:$0xff]
    %v338 = vld [vmem:[#allocation5 + $0x5cc] sm:$0xff]
    %v339 = vld [vmem:[#allocation5 + $0x5d4] sm:$0xff]
    %v340 = vld [vmem:[#allocation5 + $0x5dc] sm:$0xff]
    %v341 = vld [vmem:[#allocation5 + $0x5e4] sm:$0xf]
    %v342 = vld [vmem:[#allocation5 + $0x5e8] sm:$0xff]
    %v343 = vld [vmem:[#allocation5 + $0x5f0] sm:$0xff]
    %v344 = vld [vmem:[#allocation5 + $0x5f8] sm:$0xff]
    %v345 = vld [vmem:[#allocation5 + $0x600] sm:$0xff]
    %v346 = vld [vmem:[#allocation5 + $0x608] sm:$0xf]
    %v347 = vld [vmem:[#allocation5 + $0x60c] sm:$0xff]
    %v348 = vld [vmem:[#allocation5 + $0x614] sm:$0xff]
    %v349 = vld [vmem:[#allocation5 + $0x61c] sm:$0xff]
    %v350 = vld [vmem:[#allocation5 + $0x624] sm:$0xff]
    %v351 = vld [vmem:[#allocation5 + $0x62c] sm:$0xf]
    %v352 = vld [vmem:[#allocation5 + $0x630] sm:$0xff]
    %v353 = vld [vmem:[#allocation5 + $0x638] sm:$0xff]
    %v354 = vld [vmem:[#allocation5 + $0x640] sm:$0xff]
    %v355 = vld [vmem:[#allocation5 + $0x648] sm:$0xff]
    %v356 = vld [vmem:[#allocation5 + $0x650] sm:$0xf]
    %v357 = vld [vmem:[#allocation5 + $0x654] sm:$0xff]
    %v358 = vld [vmem:[#allocation5 + $0x65c] sm:$0xff]
    %v359 = vld [vmem:[#allocation5 + $0x664] sm:$0xff]
    %v360 = vld [vmem:[#allocation5 + $0x66c] sm:$0xff]
    %v361 = vld [vmem:[#allocation5 + $0x674] sm:$0xf]
    %v362 = vld [vmem:[#allocation5 + $0x678] sm:$0xff]
    %v363 = vld [vmem:[#allocation5 + $0x680] sm:$0xff]
    %v364 = vld [vmem:[#allocation5 + $0x688] sm:$0xff]
    %v365 = vld [vmem:[#allocation5 + $0x690] sm:$0xff]
    %v366 = vld [vmem:[#allocation5 + $0x698] sm:$0xf]
    %v367 = vld [vmem:[#allocation5 + $0x69c] sm:$0xff]
    %v368 = vld [vmem:[#allocation5 + $0x6a4] sm:$0xff]
    %v369 = vld [vmem:[#allocation5 + $0x6ac] sm:$0xff]
    %v370 = vld [vmem:[#allocation5 + $0x6b4] sm:$0xff]
    %v371 = vld [vmem:[#allocation5 + $0x6bc] sm:$0xf]
    %v612 = vunpack.c.l.b16 %v132
    %v613 = vunpack.c.h.b16 %v132
    %v614 = vunpack.c.l.b16 %v133
    %v615 = vunpack.c.h.b16 %v133
    %v616 = vunpack.c.l.b16 %v134
    %v617 = vunpack.c.h.b16 %v134
    %v618 = vunpack.c.l.b16 %v135
    %v619 = vunpack.c.h.b16 %v135
    %v620 = vunpack.c.l.b16 %v136
    %v621 = vunpack.c.l.b16 %v137
    %v622 = vunpack.c.h.b16 %v137
    %v623 = vunpack.c.l.b16 %v138
    %v624 = vunpack.c.h.b16 %v138
    %v625 = vunpack.c.l.b16 %v139
    %v626 = vunpack.c.h.b16 %v139
    %v627 = vunpack.c.l.b16 %v140
    %v628 = vunpack.c.h.b16 %v140
    %v629 = vunpack.c.l.b16 %v141
    %v630 = vunpack.c.l.b16 %v142
    %v631 = vunpack.c.h.b16 %v142
    %v632 = vunpack.c.l.b16 %v143
    %v633 = vunpack.c.h.b16 %v143
    %v634 = vunpack.c.l.b16 %v144
    %v635 = vunpack.c.h.b16 %v144
    %v636 = vunpack.c.l.b16 %v145
    %v637 = vunpack.c.h.b16 %v145
    %v638 = vunpack.c.l.b16 %v146
    %v639 = vunpack.c.l.b16 %v147
    %v640 = vunpack.c.h.b16 %v147
    %v641 = vunpack.c.l.b16 %v148
    %v642 = vunpack.c.h.b16 %v148
    %v643 = vunpack.c.l.b16 %v149
    %v644 = vunpack.c.h.b16 %v149
    %v645 = vunpack.c.l.b16 %v150
    %v646 = vunpack.c.h.b16 %v150
    %v647 = vunpack.c.l.b16 %v151
    %v648 = vunpack.c.l.b16 %v152
    %v649 = vunpack.c.h.b16 %v152
    %v650 = vunpack.c.l.b16 %v153
    %v651 = vunpack.c.h.b16 %v153
    %v652 = vunpack.c.l.b16 %v154
    %v653 = vunpack.c.h.b16 %v154
    %v654 = vunpack.c.l.b16 %v155
    %v655 = vunpack.c.h.b16 %v155
    %v656 = vunpack.c.l.b16 %v156
    %v657 = vunpack.c.l.b16 %v157
    %v658 = vunpack.c.h.b16 %v157
    %v659 = vunpack.c.l.b16 %v158
    %v660 = vunpack.c.h.b16 %v158
    %v661 = vunpack.c.l.b16 %v159
    %v662 = vunpack.c.h.b16 %v159
    %v663 = vunpack.c.l.b16 %v160
    %v664 = vunpack.c.h.b16 %v160
    %v665 = vunpack.c.l.b16 %v161
    %v666 = vunpack.c.l.b16 %v162
    %v667 = vunpack.c.h.b16 %v162
    %v668 = vunpack.c.l.b16 %v163
    %v669 = vunpack.c.h.b16 %v163
    %v670 = vunpack.c.l.b16 %v164
    %v671 = vunpack.c.h.b16 %v164
    %v672 = vunpack.c.l.b16 %v165
    %v673 = vunpack.c.h.b16 %v165
    %v674 = vunpack.c.l.b16 %v166
    %v675 = vunpack.c.l.b16 %v167
    %v676 = vunpack.c.h.b16 %v167
    %v677 = vunpack.c.l.b16 %v168
    %v678 = vunpack.c.h.b16 %v168
    %v679 = vunpack.c.l.b16 %v169
    %v680 = vunpack.c.h.b16 %v169
    %v681 = vunpack.c.l.b16 %v170
    %v682 = vunpack.c.h.b16 %v170
    %v683 = vunpack.c.l.b16 %v171
    %v684 = vunpack.c.l.b16 %v172
    %v685 = vunpack.c.h.b16 %v172
    %v686 = vunpack.c.l.b16 %v173
    %v687 = vunpack.c.h.b16 %v173
    %v688 = vunpack.c.l.b16 %v174
    %v689 = vunpack.c.h.b16 %v174
    %v690 = vunpack.c.l.b16 %v175
    %v691 = vunpack.c.h.b16 %v175
    %v692 = vunpack.c.l.b16 %v176
    %v693 = vunpack.c.l.b16 %v177
    %v694 = vunpack.c.h.b16 %v177
    %v695 = vunpack.c.l.b16 %v178
    %v696 = vunpack.c.h.b16 %v178
    %v697 = vunpack.c.l.b16 %v179
    %v698 = vunpack.c.h.b16 %v179
    %v699 = vunpack.c.l.b16 %v180
    %v700 = vunpack.c.h.b16 %v180
    %v701 = vunpack.c.l.b16 %v181
    %v702 = vunpack.c.l.b16 %v182
    %v703 = vunpack.c.h.b16 %v182
    %v704 = vunpack.c.l.b16 %v183
    %v705 = vunpack.c.h.b16 %v183
    %v706 = vunpack.c.l.b16 %v184
    %v707 = vunpack.c.h.b16 %v184
    %v708 = vunpack.c.l.b16 %v185
    %v709 = vunpack.c.h.b16 %v185
    %v710 = vunpack.c.l.b16 %v186
    %v711 = vunpack.c.l.b16 %v187
    %v712 = vunpack.c.h.b16 %v187
    %v713 = vunpack.c.l.b16 %v188
    %v714 = vunpack.c.h.b16 %v188
    %v715 = vunpack.c.l.b16 %v189
    %v716 = vunpack.c.h.b16 %v189
    %v717 = vunpack.c.l.b16 %v190
    %v718 = vunpack.c.h.b16 %v190
    %v719 = vunpack.c.l.b16 %v191
    %v720 = vunpack.c.l.b16 %v192
    %v721 = vunpack.c.h.b16 %v192
    %v722 = vunpack.c.l.b16 %v193
    %v723 = vunpack.c.h.b16 %v193
    %v724 = vunpack.c.l.b16 %v194
    %v725 = vunpack.c.h.b16 %v194
    %v726 = vunpack.c.l.b16 %v195
    %v727 = vunpack.c.h.b16 %v195
    %v728 = vunpack.c.l.b16 %v196
    %v729 = vunpack.c.l.b16 %v197
    %v730 = vunpack.c.h.b16 %v197
    %v731 = vunpack.c.l.b16 %v198
    %v732 = vunpack.c.h.b16 %v198
    %v733 = vunpack.c.l.b16 %v199
    %v734 = vunpack.c.h.b16 %v199
    %v735 = vunpack.c.l.b16 %v200
    %v736 = vunpack.c.h.b16 %v200
    %v737 = vunpack.c.l.b16 %v201
    %v738 = vunpack.c.l.b16 %v202
    %v739 = vunpack.c.h.b16 %v202
    %v740 = vunpack.c.l.b16 %v203
    %v741 = vunpack.c.h.b16 %v203
    %v742 = vunpack.c.l.b16 %v204
    %v743 = vunpack.c.h.b16 %v204
    %v744 = vunpack.c.l.b16 %v205
    %v745 = vunpack.c.h.b16 %v205
    %v746 = vunpack.c.l.b16 %v206
    %v747 = vunpack.c.l.b16 %v207
    %v748 = vunpack.c.h.b16 %v207
    %v749 = vunpack.c.l.b16 %v208
    %v750 = vunpack.c.h.b16 %v208
    %v751 = vunpack.c.l.b16 %v209
    %v752 = vunpack.c.h.b16 %v209
    %v753 = vunpack.c.l.b16 %v210
    %v754 = vunpack.c.h.b16 %v210
    %v755 = vunpack.c.l.b16 %v211
    %v756 = vunpack.c.l.b16 %v212
    %v757 = vunpack.c.h.b16 %v212
    %v758 = vunpack.c.l.b16 %v213
    %v759 = vunpack.c.h.b16 %v213
    %v760 = vunpack.c.l.b16 %v214
    %v761 = vunpack.c.h.b16 %v214
    %v762 = vunpack.c.l.b16 %v215
    %v763 = vunpack.c.h.b16 %v215
    %v764 = vunpack.c.l.b16 %v216
    %v765 = vunpack.c.l.b16 %v217
    %v766 = vunpack.c.h.b16 %v217
    %v767 = vunpack.c.l.b16 %v218
    %v768 = vunpack.c.h.b16 %v218
    %v769 = vunpack.c.l.b16 %v219
    %v770 = vunpack.c.h.b16 %v219
    %v771 = vunpack.c.l.b16 %v220
    %v772 = vunpack.c.h.b16 %v220
    %v773 = vunpack.c.l.b16 %v221
    %v774 = vunpack.c.l.b16 %v222
    %v775 = vunpack.c.h.b16 %v222
    %v776 = vunpack.c.l.b16 %v223
    %v777 = vunpack.c.h.b16 %v223
    %v778 = vunpack.c.l.b16 %v224
    %v779 = vunpack.c.h.b16 %v224
    %v780 = vunpack.c.l.b16 %v225
    %v781 = vunpack.c.h.b16 %v225
    %v782 = vunpack.c.l.b16 %v226
    %v783 = vunpack.c.l.b16 %v227
    %v784 = vunpack.c.h.b16 %v227
    %v785 = vunpack.c.l.b16 %v228
    %v786 = vunpack.c.h.b16 %v228
    %v787 = vunpack.c.l.b16 %v229
    %v788 = vunpack.c.h.b16 %v229
    %v789 = vunpack.c.l.b16 %v230
    %v790 = vunpack.c.h.b16 %v230
    %v791 = vunpack.c.l.b16 %v231
    %v792 = vunpack.c.l.b16 %v232
    %v793 = vunpack.c.h.b16 %v232
    %v794 = vunpack.c.l.b16 %v233
    %v795 = vunpack.c.h.b16 %v233
    %v796 = vunpack.c.l.b16 %v234
    %v797 = vunpack.c.h.b16 %v234
    %v798 = vunpack.c.l.b16 %v235
    %v799 = vunpack.c.h.b16 %v235
    %v800 = vunpack.c.l.b16 %v236
    %v801 = vunpack.c.l.b16 %v237
    %v802 = vunpack.c.h.b16 %v237
    %v803 = vunpack.c.l.b16 %v238
    %v804 = vunpack.c.h.b16 %v238
    %v805 = vunpack.c.l.b16 %v239
    %v806 = vunpack.c.h.b16 %v239
    %v807 = vunpack.c.l.b16 %v240
    %v808 = vunpack.c.h.b16 %v240
    %v809 = vunpack.c.l.b16 %v241
    %v810 = vunpack.c.l.b16 %v242
    %v811 = vunpack.c.h.b16 %v242
    %v812 = vunpack.c.l.b16 %v243
    %v813 = vunpack.c.h.b16 %v243
    %v814 = vunpack.c.l.b16 %v244
    %v815 = vunpack.c.h.b16 %v244
    %v816 = vunpack.c.l.b16 %v245
    %v817 = vunpack.c.h.b16 %v245
    %v818 = vunpack.c.l.b16 %v246
    %v819 = vunpack.c.l.b16 %v247
    %v820 = vunpack.c.h.b16 %v247
    %v821 = vunpack.c.l.b16 %v248
    %v822 = vunpack.c.h.b16 %v248
    %v823 = vunpack.c.l.b16 %v249
    %v824 = vunpack.c.h.b16 %v249
    %v825 = vunpack.c.l.b16 %v250
    %v826 = vunpack.c.h.b16 %v250
    %v827 = vunpack.c.l.b16 %v251
    %v828 = vunpack.c.l.b16 %v252
    %v829 = vunpack.c.h.b16 %v252
    %v830 = vunpack.c.l.b16 %v253
    %v831 = vunpack.c.h.b16 %v253
    %v832 = vunpack.c.l.b16 %v254
    %v833 = vunpack.c.h.b16 %v254
    %v834 = vunpack.c.l.b16 %v255
    %v835 = vunpack.c.h.b16 %v255
    %v836 = vunpack.c.l.b16 %v256
    %v837 = vunpack.c.l.b16 %v257
    %v838 = vunpack.c.h.b16 %v257
    %v839 = vunpack.c.l.b16 %v258
    %v840 = vunpack.c.h.b16 %v258
    %v841 = vunpack.c.l.b16 %v259
    %v842 = vunpack.c.h.b16 %v259
    %v843 = vunpack.c.l.b16 %v260
    %v844 = vunpack.c.h.b16 %v260
    %v845 = vunpack.c.l.b16 %v261
    %v846 = vunpack.c.l.b16 %v262
    %v847 = vunpack.c.h.b16 %v262
    %v848 = vunpack.c.l.b16 %v263
    %v849 = vunpack.c.h.b16 %v263
    %v850 = vunpack.c.l.b16 %v264
    %v851 = vunpack.c.h.b16 %v264
    %v852 = vunpack.c.l.b16 %v265
    %v853 = vunpack.c.h.b16 %v265
    %v854 = vunpack.c.l.b16 %v266
    %v855 = vunpack.c.l.b16 %v267
    %v856 = vunpack.c.h.b16 %v267
    %v857 = vunpack.c.l.b16 %v268
    %v858 = vunpack.c.h.b16 %v268
    %v859 = vunpack.c.l.b16 %v269
    %v860 = vunpack.c.h.b16 %v269
    %v861 = vunpack.c.l.b16 %v270
    %v862 = vunpack.c.h.b16 %v270
    %v863 = vunpack.c.l.b16 %v271
    %v864 = vunpack.c.l.b16 %v272
    %v865 = vunpack.c.h.b16 %v272
    %v866 = vunpack.c.l.b16 %v273
    %v867 = vunpack.c.h.b16 %v273
    %v868 = vunpack.c.l.b16 %v274
    %v869 = vunpack.c.h.b16 %v274
    %v870 = vunpack.c.l.b16 %v275
    %v871 = vunpack.c.h.b16 %v275
    %v872 = vunpack.c.l.b16 %v276
    %v873 = vunpack.c.l.b16 %v277
    %v874 = vunpack.c.h.b16 %v277
    %v875 = vunpack.c.l.b16 %v278
    %v876 = vunpack.c.h.b16 %v278
    %v877 = vunpack.c.l.b16 %v279
    %v878 = vunpack.c.h.b16 %v279
    %v879 = vunpack.c.l.b16 %v280
    %v880 = vunpack.c.h.b16 %v280
    %v881 = vunpack.c.l.b16 %v281
    %v882 = vunpack.c.l.b16 %v282
    %v883 = vunpack.c.h.b16 %v282
    %v884 = vunpack.c.l.b16 %v283
    %v885 = vunpack.c.h.b16 %v283
    %v886 = vunpack.c.l.b16 %v284
    %v887 = vunpack.c.h.b16 %v284
    %v888 = vunpack.c.l.b16 %v285
    %v889 = vunpack.c.h.b16 %v285
    %v890 = vunpack.c.l.b16 %v286
    %v891 = vunpack.c.l.b16 %v287
    %v892 = vunpack.c.h.b16 %v287
    %v893 = vunpack.c.l.b16 %v288
    %v894 = vunpack.c.h.b16 %v288
    %v895 = vunpack.c.l.b16 %v289
    %v896 = vunpack.c.h.b16 %v289
    %v897 = vunpack.c.l.b16 %v290
    %v898 = vunpack.c.h.b16 %v290
    %v899 = vunpack.c.l.b16 %v291
    %v900 = vunpack.c.l.b16 %v292
    %v901 = vunpack.c.h.b16 %v292
    %v902 = vunpack.c.l.b16 %v293
    %v903 = vunpack.c.h.b16 %v293
    %v904 = vunpack.c.l.b16 %v294
    %v905 = vunpack.c.h.b16 %v294
    %v906 = vunpack.c.l.b16 %v295
    %v907 = vunpack.c.h.b16 %v295
    %v908 = vunpack.c.l.b16 %v296
    %v909 = vunpack.c.l.b16 %v297
    %v910 = vunpack.c.h.b16 %v297
    %v911 = vunpack.c.l.b16 %v298
    %v912 = vunpack.c.h.b16 %v298
    %v913 = vunpack.c.l.b16 %v299
    %v914 = vunpack.c.h.b16 %v299
    %v915 = vunpack.c.l.b16 %v300
    %v916 = vunpack.c.h.b16 %v300
    %v917 = vunpack.c.l.b16 %v301
    %v918 = vunpack.c.l.b16 %v302
    %v919 = vunpack.c.h.b16 %v302
    %v920 = vunpack.c.l.b16 %v303
    %v921 = vunpack.c.h.b16 %v303
    %v922 = vunpack.c.l.b16 %v304
    %v923 = vunpack.c.h.b16 %v304
    %v924 = vunpack.c.l.b16 %v305
    %v925 = vunpack.c.h.b16 %v305
    %v926 = vunpack.c.l.b16 %v306
    %v927 = vunpack.c.l.b16 %v307
    %v928 = vunpack.c.h.b16 %v307
    %v929 = vunpack.c.l.b16 %v308
    %v930 = vunpack.c.h.b16 %v308
    %v931 = vunpack.c.l.b16 %v309
    %v932 = vunpack.c.h.b16 %v309
    %v933 = vunpack.c.l.b16 %v310
    %v934 = vunpack.c.h.b16 %v310
    %v935 = vunpack.c.l.b16 %v311
    %v936 = vunpack.c.l.b16 %v312
    %v937 = vunpack.c.h.b16 %v312
    %v938 = vunpack.c.l.b16 %v313
    %v939 = vunpack.c.h.b16 %v313
    %v940 = vunpack.c.l.b16 %v314
    %v941 = vunpack.c.h.b16 %v314
    %v942 = vunpack.c.l.b16 %v315
    %v943 = vunpack.c.h.b16 %v315
    %v944 = vunpack.c.l.b16 %v316
    %v945 = vunpack.c.l.b16 %v317
    %v946 = vunpack.c.h.b16 %v317
    %v947 = vunpack.c.l.b16 %v318
    %v948 = vunpack.c.h.b16 %v318
    %v949 = vunpack.c.l.b16 %v319
    %v950 = vunpack.c.h.b16 %v319
    %v951 = vunpack.c.l.b16 %v320
    %v952 = vunpack.c.h.b16 %v320
    %v953 = vunpack.c.l.b16 %v321
    %v954 = vunpack.c.l.b16 %v322
    %v955 = vunpack.c.h.b16 %v322
    %v956 = vunpack.c.l.b16 %v323
    %v957 = vunpack.c.h.b16 %v323
    %v958 = vunpack.c.l.b16 %v324
    %v959 = vunpack.c.h.b16 %v324
    %v960 = vunpack.c.l.b16 %v325
    %v961 = vunpack.c.h.b16 %v325
    %v962 = vunpack.c.l.b16 %v326
    %v963 = vunpack.c.l.b16 %v327
    %v964 = vunpack.c.h.b16 %v327
    %v965 = vunpack.c.l.b16 %v328
    %v966 = vunpack.c.h.b16 %v328
    %v967 = vunpack.c.l.b16 %v329
    %v968 = vunpack.c.h.b16 %v329
    %v969 = vunpack.c.l.b16 %v330
    %v970 = vunpack.c.h.b16 %v330
    %v971 = vunpack.c.l.b16 %v331
    %v972 = vunpack.c.l.b16 %v332
    %v973 = vunpack.c.h.b16 %v332
    %v974 = vunpack.c.l.b16 %v333
    %v975 = vunpack.c.h.b16 %v333
    %v976 = vunpack.c.l.b16 %v334
    %v977 = vunpack.c.h.b16 %v334
    %v978 = vunpack.c.l.b16 %v335
    %v979 = vunpack.c.h.b16 %v335
    %v980 = vunpack.c.l.b16 %v336
    %v981 = vunpack.c.l.b16 %v337
    %v982 = vunpack.c.h.b16 %v337
    %v983 = vunpack.c.l.b16 %v338
    %v984 = vunpack.c.h.b16 %v338
    %v985 = vunpack.c.l.b16 %v339
    %v986 = vunpack.c.h.b16 %v339
    %v987 = vunpack.c.l.b16 %v340
    %v988 = vunpack.c.h.b16 %v340
    %v989 = vunpack.c.l.b16 %v341
    %v990 = vunpack.c.l.b16 %v342
    %v991 = vunpack.c.h.b16 %v342
    %v992 = vunpack.c.l.b16 %v343
    %v993 = vunpack.c.h.b16 %v343
    %v994 = vunpack.c.l.b16 %v344
    %v995 = vunpack.c.h.b16 %v344
    %v996 = vunpack.c.l.b16 %v345
    %v997 = vunpack.c.h.b16 %v345
    %v998 = vunpack.c.l.b16 %v346
    %v999 = vunpack.c.l.b16 %v347
    %v1000 = vunpack.c.h.b16 %v347
    %v1001 = vunpack.c.l.b16 %v348
    %v1002 = vunpack.c.h.b16 %v348
    %v1003 = vunpack.c.l.b16 %v349
    %v1004 = vunpack.c.h.b16 %v349
    %v1005 = vunpack.c.l.b16 %v350
    %v1006 = vunpack.c.h.b16 %v350
    %v1007 = vunpack.c.l.b16 %v351
    %v1008 = vunpack.c.l.b16 %v352
    %v1009 = vunpack.c.h.b16 %v352
    %v1010 = vunpack.c.l.b16 %v353
    %v1011 = vunpack.c.h.b16 %v353
    %v1012 = vunpack.c.l.b16 %v354
    %v1013 = vunpack.c.h.b16 %v354
    %v1014 = vunpack.c.l.b16 %v355
    %v1015 = vunpack.c.h.b16 %v355
    %v1016 = vunpack.c.l.b16 %v356
    %v1017 = vunpack.c.l.b16 %v357
    %v1018 = vunpack.c.h.b16 %v357
    %v1019 = vunpack.c.l.b16 %v358
    %v1020 = vunpack.c.h.b16 %v358
    %v1021 = vunpack.c.l.b16 %v359
    %v1022 = vunpack.c.h.b16 %v359
    %v1023 = vunpack.c.l.b16 %v360
    %v1024 = vunpack.c.h.b16 %v360
    %v1025 = vunpack.c.l.b16 %v361
    %v1026 = vunpack.c.l.b16 %v362
    %v1027 = vunpack.c.h.b16 %v362
    %v1028 = vunpack.c.l.b16 %v363
    %v1029 = vunpack.c.h.b16 %v363
    %v1030 = vunpack.c.l.b16 %v364
    %v1031 = vunpack.c.h.b16 %v364
    %v1032 = vunpack.c.l.b16 %v365
    %v1033 = vunpack.c.h.b16 %v365
    %v1034 = vunpack.c.l.b16 %v366
    %v1035 = vunpack.c.l.b16 %v367
    %v1036 = vunpack.c.h.b16 %v367
    %v1037 = vunpack.c.l.b16 %v368
    %v1038 = vunpack.c.h.b16 %v368
    %v1039 = vunpack.c.l.b16 %v369
    %v1040 = vunpack.c.h.b16 %v369
    %v1041 = vunpack.c.l.b16 %v370
    %v1042 = vunpack.c.h.b16 %v370
    %v1043 = vunpack.c.l.b16 %v371
    %v1044 = vpack.c.b16 %v621, %v612
    %v1045 = vpack.c.b16 %v622, %v613
    %v1046 = vpack.c.b16 %v623, %v614
    %v1047 = vpack.c.b16 %v624, %v615
    %v1048 = vpack.c.b16 %v625, %v616
    %v1049 = vpack.c.b16 %v626, %v617
    %v1050 = vpack.c.b16 %v627, %v618
    %v1051 = vpack.c.b16 %v628, %v619
    %v1052 = vpack.c.b16 %v629, %v620
    %v1053 = vpack.c.b16 %v639, %v630
    %v1054 = vpack.c.b16 %v640, %v631
    %v1055 = vpack.c.b16 %v641, %v632
    %v1056 = vpack.c.b16 %v642, %v633
    %v1057 = vpack.c.b16 %v643, %v634
    %v1058 = vpack.c.b16 %v644, %v635
    %v1059 = vpack.c.b16 %v645, %v636
    %v1060 = vpack.c.b16 %v646, %v637
    %v1061 = vpack.c.b16 %v647, %v638
    %v1062 = vpack.c.b16 %v657, %v648
    %v1063 = vpack.c.b16 %v658, %v649
    %v1064 = vpack.c.b16 %v659, %v650
    %v1065 = vpack.c.b16 %v660, %v651
    %v1066 = vpack.c.b16 %v661, %v652
    %v1067 = vpack.c.b16 %v662, %v653
    %v1068 = vpack.c.b16 %v663, %v654
    %v1069 = vpack.c.b16 %v664, %v655
    %v1070 = vpack.c.b16 %v665, %v656
    %v1071 = vpack.c.b16 %v675, %v666
    %v1072 = vpack.c.b16 %v676, %v667
    %v1073 = vpack.c.b16 %v677, %v668
    %v1074 = vpack.c.b16 %v678, %v669
    %v1075 = vpack.c.b16 %v679, %v670
    %v1076 = vpack.c.b16 %v680, %v671
    %v1077 = vpack.c.b16 %v681, %v672
    %v1078 = vpack.c.b16 %v682, %v673
    %v1079 = vpack.c.b16 %v683, %v674
    %v1080 = vpack.c.b16 %v693, %v684
    %v1081 = vpack.c.b16 %v694, %v685
    %v1082 = vpack.c.b16 %v695, %v686
    %v1083 = vpack.c.b16 %v696, %v687
    %v1084 = vpack.c.b16 %v697, %v688
    %v1085 = vpack.c.b16 %v698, %v689
    %v1086 = vpack.c.b16 %v699, %v690
    %v1087 = vpack.c.b16 %v700, %v691
    %v1088 = vpack.c.b16 %v701, %v692
    %v1089 = vpack.c.b16 %v711, %v702
    %v1090 = vpack.c.b16 %v712, %v703
    %v1091 = vpack.c.b16 %v713, %v704
    %v1092 = vpack.c.b16 %v714, %v705
    %v1093 = vpack.c.b16 %v715, %v706
    %v1094 = vpack.c.b16 %v716, %v707
    %v1095 = vpack.c.b16 %v717, %v708
    %v1096 = vpack.c.b16 %v718, %v709
    %v1097 = vpack.c.b16 %v719, %v710
    %v1098 = vpack.c.b16 %v729, %v720
    %v1099 = vpack.c.b16 %v730, %v721
    %v1100 = vpack.c.b16 %v731, %v722
    %v1101 = vpack.c.b16 %v732, %v723
    %v1102 = vpack.c.b16 %v733, %v724
    %v1103 = vpack.c.b16 %v734, %v725
    %v1104 = vpack.c.b16 %v735, %v726
    %v1105 = vpack.c.b16 %v736, %v727
    %v1106 = vpack.c.b16 %v737, %v728
    %v1107 = vpack.c.b16 %v747, %v738
    %v1108 = vpack.c.b16 %v748, %v739
    %v1109 = vpack.c.b16 %v749, %v740
    %v1110 = vpack.c.b16 %v750, %v741
    %v1111 = vpack.c.b16 %v751, %v742
    %v1112 = vpack.c.b16 %v752, %v743
    %v1113 = vpack.c.b16 %v753, %v744
    %v1114 = vpack.c.b16 %v754, %v745
    %v1115 = vpack.c.b16 %v755, %v746
    %v1116 = vpack.c.b16 %v765, %v756
    %v1117 = vpack.c.b16 %v766, %v757
    %v1118 = vpack.c.b16 %v767, %v758
    %v1119 = vpack.c.b16 %v768, %v759
    %v1120 = vpack.c.b16 %v769, %v760
    %v1121 = vpack.c.b16 %v770, %v761
    %v1122 = vpack.c.b16 %v771, %v762
    %v1123 = vpack.c.b16 %v772, %v763
    %v1124 = vpack.c.b16 %v773, %v764
    %v1125 = vpack.c.b16 %v783, %v774
    %v1126 = vpack.c.b16 %v784, %v775
    %v1127 = vpack.c.b16 %v785, %v776
    %v1128 = vpack.c.b16 %v786, %v777
    %v1129 = vpack.c.b16 %v787, %v778
    %v1130 = vpack.c.b16 %v788, %v779
    %v1131 = vpack.c.b16 %v789, %v780
    %v1132 = vpack.c.b16 %v790, %v781
    %v1133 = vpack.c.b16 %v791, %v782
    %v1134 = vpack.c.b16 %v801, %v792
    %v1135 = vpack.c.b16 %v802, %v793
    %v1136 = vpack.c.b16 %v803, %v794
    %v1137 = vpack.c.b16 %v804, %v795
    %v1138 = vpack.c.b16 %v805, %v796
    %v1139 = vpack.c.b16 %v806, %v797
    %v1140 = vpack.c.b16 %v807, %v798
    %v1141 = vpack.c.b16 %v808, %v799
    %v1142 = vpack.c.b16 %v809, %v800
    %v1143 = vpack.c.b16 %v819, %v810
    %v1144 = vpack.c.b16 %v820, %v811
    %v1145 = vpack.c.b16 %v821, %v812
    %v1146 = vpack.c.b16 %v822, %v813
    %v1147 = vpack.c.b16 %v823, %v814
    %v1148 = vpack.c.b16 %v824, %v815
    %v1149 = vpack.c.b16 %v825, %v816
    %v1150 = vpack.c.b16 %v826, %v817
    %v1151 = vpack.c.b16 %v827, %v818
    %v1152 = vpack.c.b16 %v837, %v828
    %v1153 = vpack.c.b16 %v838, %v829
    %v1154 = vpack.c.b16 %v839, %v830
    %v1155 = vpack.c.b16 %v840, %v831
    %v1156 = vpack.c.b16 %v841, %v832
    %v1157 = vpack.c.b16 %v842, %v833
    %v1158 = vpack.c.b16 %v843, %v834
    %v1159 = vpack.c.b16 %v844, %v835
    %v1160 = vpack.c.b16 %v845, %v836
    %v1161 = vpack.c.b16 %v855, %v846
    %v1162 = vpack.c.b16 %v856, %v847
    %v1163 = vpack.c.b16 %v857, %v848
    %v1164 = vpack.c.b16 %v858, %v849
    %v1165 = vpack.c.b16 %v859, %v850
    %v1166 = vpack.c.b16 %v860, %v851
    %v1167 = vpack.c.b16 %v861, %v852
    %v1168 = vpack.c.b16 %v862, %v853
    %v1169 = vpack.c.b16 %v863, %v854
    %v1170 = vpack.c.b16 %v873, %v864
    %v1171 = vpack.c.b16 %v874, %v865
    %v1172 = vpack.c.b16 %v875, %v866
    %v1173 = vpack.c.b16 %v876, %v867
    %v1174 = vpack.c.b16 %v877, %v868
    %v1175 = vpack.c.b16 %v878, %v869
    %v1176 = vpack.c.b16 %v879, %v870
    %v1177 = vpack.c.b16 %v880, %v871
    %v1178 = vpack.c.b16 %v881, %v872
    %v1179 = vpack.c.b16 %v891, %v882
    %v1180 = vpack.c.b16 %v892, %v883
    %v1181 = vpack.c.b16 %v893, %v884
    %v1182 = vpack.c.b16 %v894, %v885
    %v1183 = vpack.c.b16 %v895, %v886
    %v1184 = vpack.c.b16 %v896, %v887
    %v1185 = vpack.c.b16 %v897, %v888
    %v1186 = vpack.c.b16 %v898, %v889
    %v1187 = vpack.c.b16 %v899, %v890
    %v1188 = vpack.c.b16 %v909, %v900
    %v1189 = vpack.c.b16 %v910, %v901
    %v1190 = vpack.c.b16 %v911, %v902
    %v1191 = vpack.c.b16 %v912, %v903
    %v1192 = vpack.c.b16 %v913, %v904
    %v1193 = vpack.c.b16 %v914, %v905
    %v1194 = vpack.c.b16 %v915, %v906
    %v1195 = vpack.c.b16 %v916, %v907
    %v1196 = vpack.c.b16 %v917, %v908
    %v1197 = vpack.c.b16 %v927, %v918
    %v1198 = vpack.c.b16 %v928, %v919
    %v1199 = vpack.c.b16 %v929, %v920
    %v1200 = vpack.c.b16 %v930, %v921
    %v1201 = vpack.c.b16 %v931, %v922
    %v1202 = vpack.c.b16 %v932, %v923
    %v1203 = vpack.c.b16 %v933, %v924
    %v1204 = vpack.c.b16 %v934, %v925
    %v1205 = vpack.c.b16 %v935, %v926
    %v1206 = vpack.c.b16 %v945, %v936
    %v1207 = vpack.c.b16 %v946, %v937
    %v1208 = vpack.c.b16 %v947, %v938
    %v1209 = vpack.c.b16 %v948, %v939
    %v1210 = vpack.c.b16 %v949, %v940
    %v1211 = vpack.c.b16 %v950, %v941
    %v1212 = vpack.c.b16 %v951, %v942
    %v1213 = vpack.c.b16 %v952, %v943
    %v1214 = vpack.c.b16 %v953, %v944
    %v1215 = vpack.c.b16 %v963, %v954
    %v1216 = vpack.c.b16 %v964, %v955
    %v1217 = vpack.c.b16 %v965, %v956
    %v1218 = vpack.c.b16 %v966, %v957
    %v1219 = vpack.c.b16 %v967, %v958
    %v1220 = vpack.c.b16 %v968, %v959
    %v1221 = vpack.c.b16 %v969, %v960
    %v1222 = vpack.c.b16 %v970, %v961
    %v1223 = vpack.c.b16 %v971, %v962
    %v1224 = vpack.c.b16 %v981, %v972
    %v1225 = vpack.c.b16 %v982, %v973
    %v1226 = vpack.c.b16 %v983, %v974
    %v1227 = vpack.c.b16 %v984, %v975
    %v1228 = vpack.c.b16 %v985, %v976
    %v1229 = vpack.c.b16 %v986, %v977
    %v1230 = vpack.c.b16 %v987, %v978
    %v1231 = vpack.c.b16 %v988, %v979
    %v1232 = vpack.c.b16 %v989, %v980
    %v1233 = vpack.c.b16 %v999, %v990
    %v1234 = vpack.c.b16 %v1000, %v991
    %v1235 = vpack.c.b16 %v1001, %v992
    %v1236 = vpack.c.b16 %v1002, %v993
    %v1237 = vpack.c.b16 %v1003, %v994
    %v1238 = vpack.c.b16 %v1004, %v995
    %v1239 = vpack.c.b16 %v1005, %v996
    %v1240 = vpack.c.b16 %v1006, %v997
    %v1241 = vpack.c.b16 %v1007, %v998
    %v1242 = vpack.c.b16 %v1017, %v1008
    %v1243 = vpack.c.b16 %v1018, %v1009
    %v1244 = vpack.c.b16 %v1019, %v1010
    %v1245 = vpack.c.b16 %v1020, %v1011
    %v1246 = vpack.c.b16 %v1021, %v1012
    %v1247 = vpack.c.b16 %v1022, %v1013
    %v1248 = vpack.c.b16 %v1023, %v1014
    %v1249 = vpack.c.b16 %v1024, %v1015
    %v1250 = vpack.c.b16 %v1025, %v1016
    %v1251 = vpack.c.b16 %v1035, %v1026
    %v1252 = vpack.c.b16 %v1036, %v1027
    %v1253 = vpack.c.b16 %v1037, %v1028
    %v1254 = vpack.c.b16 %v1038, %v1029
    %v1255 = vpack.c.b16 %v1039, %v1030
    %v1256 = vpack.c.b16 %v1040, %v1031
    %v1257 = vpack.c.b16 %v1041, %v1032
    %v1258 = vpack.c.b16 %v1042, %v1033
    %v1259 = vpack.c.b16 %v1043, %v1034
    %1476 = vmatprep.subr.bf16.mxu0 %v1108
    %1477 = vmatpush1.bf16.msra.mxu0 %v1107
    %1478 = vmatprep.subr.bf16.mxu0 %v1099
    %1479 = vmatpush1.bf16.msra.mxu0 %v1098
    %1480 = vmatprep.subr.bf16.mxu0 %v1090
    %1481 = vmatpush1.bf16.msra.mxu0 %v1089
    %1482 = vmatprep.subr.bf16.mxu0 %v1081
    %1483 = vmatpush1.bf16.msra.mxu0 %v1080
    %1484 = vmatprep.subr.bf16.mxu0 %v1072
    %1485 = vmatpush1.bf16.msra.mxu0 %v1071
    %1486 = vmatprep.subr.bf16.mxu0 %v1063
    %1487 = vmatpush1.bf16.msra.mxu0 %v1062
    %1488 = vmatprep.subr.bf16.mxu0 %v1054
    %1489 = vmatpush1.bf16.msra.mxu0 %v1053
    %1490 = vmatprep.subr.bf16.mxu0 %v1045
    %1491 = vmatpush1.bf16.msra.mxu0 %v1044
    %1492 = vmatprep.subr.bf16.mxu0 %v1180
    %1493 = vmatpush2.bf16.msra.mxu0 %v1179
    %1494 = vmatprep.subr.bf16.mxu0 %v1171
    %1495 = vmatpush2.bf16.msra.mxu0 %v1170
    %1496 = vmatprep.subr.bf16.mxu0 %v1162
    %1497 = vmatpush2.bf16.msra.mxu0 %v1161
    %1498 = vmatprep.subr.bf16.mxu0 %v1153
    %1499 = vmatpush2.bf16.msra.mxu0 %v1152
    %1500 = vmatprep.subr.bf16.mxu0 %v1144
    %1501 = vmatpush2.bf16.msra.mxu0 %v1143
    %1502 = vmatprep.subr.bf16.mxu0 %v1135
    %1503 = vmatpush2.bf16.msra.mxu0 %v1134
    %1504 = vmatprep.subr.bf16.mxu0 %v1126
    %1505 = vmatpush2.bf16.msra.mxu0 %v1125
    %1506 = vmatprep.subr.bf16.mxu0 %v1117
    %1507 = vmatpush2.bf16.msra.mxu0 %v1116
    %1508 = vmatprep.mubr.bf16.mxu0 %v109
    %1509 = vmatmul.mubr.bf16.gmra.mxu0 %v108
    %v1510 = vpop.f32.mrf.mxu0
    %v1511 = vadd.f32 0.0, %v1510
    %v1512 = vpop.f32.mrf.mxu0
    %v1513 = vadd.f32 0.0, %v1512
    %v1514 = vpop.f32.mrf.mxu0
    %v1515 = vadd.f32 0.0, %v1514
    %v1516 = vpop.f32.mrf.mxu0
    %v1517 = vadd.f32 0.0, %v1516
    %1518 = vmatprep.mubr.bf16.mxu0 %v112
    %1519 = vmatmul.mubr.bf16.gmra.mxu0 %v111
    %v1520 = vpop.f32.mrf.mxu0
    %v1521 = vadd.f32 0.0, %v1520
    %v1522 = vpop.f32.mrf.mxu0
    %v1523 = vadd.f32 0.0, %v1522
    %v1524 = vpop.f32.mrf.mxu0
    %v1525 = vadd.f32 0.0, %v1524
    %v1526 = vpop.f32.mrf.mxu0
    %v1527 = vadd.f32 0.0, %v1526
    %1528 = vmatprep.mubr.bf16.mxu0 %v115
    %1529 = vmatmul.mubr.bf16.gmra.mxu0 %v114
    %v1530 = vpop.f32.mrf.mxu0
    %v1531 = vadd.f32 0.0, %v1530
    %v1532 = vpop.f32.mrf.mxu0
    %v1533 = vadd.f32 0.0, %v1532
    %v1534 = vpop.f32.mrf.mxu0
    %v1535 = vadd.f32 0.0, %v1534
    %v1536 = vpop.f32.mrf.mxu0
    %v1537 = vadd.f32 0.0, %v1536
    %1538 = vmatprep.mubr.bf16.mxu0 %v118
    %1539 = vmatmul.mubr.bf16.gmra.mxu0 %v117
    %v1540 = vpop.f32.mrf.mxu0
    %v1541 = vadd.f32 0.0, %v1540
    %v1542 = vpop.f32.mrf.mxu0
    %v1543 = vadd.f32 0.0, %v1542
    %v1544 = vpop.f32.mrf.mxu0
    %v1545 = vadd.f32 0.0, %v1544
    %v1546 = vpop.f32.mrf.mxu0
    %v1547 = vadd.f32 0.0, %v1546
    %1548 = vmatprep.mubr.bf16.mxu0 %v121
    %1549 = vmatmul.mubr.bf16.gmra.mxu0 %v120
    %v1550 = vpop.f32.mrf.mxu0
    %v1551 = vadd.f32 0.0, %v1550
    %v1552 = vpop.f32.mrf.mxu0
    %v1553 = vadd.f32 0.0, %v1552
    %v1554 = vpop.f32.mrf.mxu0
    %v1555 = vadd.f32 0.0, %v1554
    %v1556 = vpop.f32.mrf.mxu0
    %v1557 = vadd.f32 0.0, %v1556
    %1558 = vmatprep.mubr.bf16.mxu0 %v124
    %1559 = vmatmul.mubr.bf16.gmra.mxu0 %v123
    %v1560 = vpop.f32.mrf.mxu0
    %v1561 = vadd.f32 0.0, %v1560
    %v1562 = vpop.f32.mrf.mxu0
    %v1563 = vadd.f32 0.0, %v1562
    %v1564 = vpop.f32.mrf.mxu0
    %v1565 = vadd.f32 0.0, %v1564
    %v1566 = vpop.f32.mrf.mxu0
    %v1567 = vadd.f32 0.0, %v1566
    %1568 = vmatprep.mubr.bf16.mxu0 %v127
    %1569 = vmatmul.mubr.bf16.gmra.mxu0 %v126
    %v1570 = vpop.f32.mrf.mxu0
    %v1571 = vadd.f32 0.0, %v1570
    %v1572 = vpop.f32.mrf.mxu0
    %v1573 = vadd.f32 0.0, %v1572
    %v1574 = vpop.f32.mrf.mxu0
    %v1575 = vadd.f32 0.0, %v1574
    %v1576 = vpop.f32.mrf.mxu0
    %v1577 = vadd.f32 0.0, %v1576
    %1578 = vmatprep.mubr.bf16.mxu0 %v130
    %1579 = vmatmul.mubr.bf16.gmra.mxu0 %v129
    %v1580 = vpop.f32.mrf.mxu0
    %v1581 = vadd.f32 0.0, %v1580
    %v1582 = vpop.f32.mrf.mxu0
    %v1583 = vadd.f32 0.0, %v1582
    %v1584 = vpop.f32.mrf.mxu0
    %v1585 = vadd.f32 0.0, %v1584
    %v1586 = vpop.f32.mrf.mxu0
    %v1587 = vadd.f32 0.0, %v1586
    %1588 = vdwg.mxu0
    %1589 = vmatprep.subr.bf16.mxu0 %v1252
    %1590 = vmatpush1.bf16.msra.mxu0 %v1251
    %1591 = vmatprep.subr.bf16.mxu0 %v1243
    %1592 = vmatpush1.bf16.msra.mxu0 %v1242
    %1593 = vmatprep.subr.bf16.mxu0 %v1234
    %1594 = vmatpush1.bf16.msra.mxu0 %v1233
    %1595 = vmatprep.subr.bf16.mxu0 %v1225
    %1596 = vmatpush1.bf16.msra.mxu0 %v1224
    %1597 = vmatprep.subr.bf16.mxu0 %v1216
    %1598 = vmatpush1.bf16.msra.mxu0 %v1215
    %1599 = vmatprep.subr.bf16.mxu0 %v1207
    %1600 = vmatpush1.bf16.msra.mxu0 %v1206
    %1601 = vmatprep.subr.bf16.mxu0 %v1198
    %1602 = vmatpush1.bf16.msra.mxu0 %v1197
    %1603 = vmatprep.subr.bf16.mxu0 %v1189
    %1604 = vmatpush1.bf16.msra.mxu0 %v1188
    %1605 = vmatprep.subr.bf16.mxu0 0
    %1606 = vmatpush2.bf16.msra.mxu0 0
    %1607 = vmatprep.subr.bf16.mxu0 0
    %1608 = vmatpush2.bf16.msra.mxu0 0
    %1609 = vmatprep.subr.bf16.mxu0 0
    %1610 = vmatpush2.bf16.msra.mxu0 0
    %1611 = vmatprep.subr.bf16.mxu0 0
    %1612 = vmatpush2.bf16.msra.mxu0 0
    %1613 = vmatprep.subr.bf16.mxu0 0
    %1614 = vmatpush2.bf16.msra.mxu0 0
    %1615 = vmatprep.subr.bf16.mxu0 0
    %1616 = vmatpush2.bf16.msra.mxu0 0
    %1617 = vmatprep.subr.bf16.mxu0 0
    %1618 = vmatpush2.bf16.msra.mxu0 0
    %1619 = vmatprep.subr.bf16.mxu0 0
    %1620 = vmatpush2.bf16.msra.mxu0 0
    %1621 = vmatprep.mubr.bf16.mxu0 0
    %1622 = vmatmul.mubr.bf16.gmra.mxu0 %v110
    %v1623 = vpop.f32.mrf.mxu0
    %v1624 = vadd.f32 %v1511, %v1623
    %v1625 = vpop.f32.mrf.mxu0
    %v1626 = vadd.f32 %v1513, %v1625
    %v1627 = vpop.f32.mrf.mxu0
    %v1628 = vadd.f32 %v1515, %v1627
    %v1629 = vpop.f32.mrf.mxu0
    %v1630 = vadd.f32 %v1517, %v1629
    %1631 = vmatprep.mubr.bf16.mxu0 0
    %1632 = vmatmul.mubr.bf16.gmra.mxu0 %v113
    %v1633 = vpop.f32.mrf.mxu0
    %v1634 = vadd.f32 %v1521, %v1633
    %v1635 = vpop.f32.mrf.mxu0
    %v1636 = vadd.f32 %v1523, %v1635
    %v1637 = vpop.f32.mrf.mxu0
    %v1638 = vadd.f32 %v1525, %v1637
    %v1639 = vpop.f32.mrf.mxu0
    %v1640 = vadd.f32 %v1527, %v1639
    %1641 = vmatprep.mubr.bf16.mxu0 0
    %1642 = vmatmul.mubr.bf16.gmra.mxu0 %v116
    %v1643 = vpop.f32.mrf.mxu0
    %v1644 = vadd.f32 %v1531, %v1643
    %v1645 = vpop.f32.mrf.mxu0
    %v1646 = vadd.f32 %v1533, %v1645
    %v1647 = vpop.f32.mrf.mxu0
    %v1648 = vadd.f32 %v1535, %v1647
    %v1649 = vpop.f32.mrf.mxu0
    %v1650 = vadd.f32 %v1537, %v1649
    %1651 = vmatprep.mubr.bf16.mxu0 0
    %1652 = vmatmul.mubr.bf16.gmra.mxu0 %v119
    %v1653 = vpop.f32.mrf.mxu0
    %v1654 = vadd.f32 %v1541, %v1653
    %v1655 = vpop.f32.mrf.mxu0
    %v1656 = vadd.f32 %v1543, %v1655
    %v1657 = vpop.f32.mrf.mxu0
    %v1658 = vadd.f32 %v1545, %v1657
    %v1659 = vpop.f32.mrf.mxu0
    %v1660 = vadd.f32 %v1547, %v1659
    %1661 = vmatprep.mubr.bf16.mxu0 0
    %1662 = vmatmul.mubr.bf16.gmra.mxu0 %v122
    %v1663 = vpop.f32.mrf.mxu0
    %v1664 = vadd.f32 %v1551, %v1663
    %v1665 = vpop.f32.mrf.mxu0
    %v1666 = vadd.f32 %v1553, %v1665
    %v1667 = vpop.f32.mrf.mxu0
    %v1668 = vadd.f32 %v1555, %v1667
    %v1669 = vpop.f32.mrf.mxu0
    %v1670 = vadd.f32 %v1557, %v1669
    %1671 = vmatprep.mubr.bf16.mxu0 0
    %1672 = vmatmul.mubr.bf16.gmra.mxu0 %v125
    %v1673 = vpop.f32.mrf.mxu0
    %v1674 = vadd.f32 %v1561, %v1673
    %v1675 = vpop.f32.mrf.mxu0
    %v1676 = vadd.f32 %v1563, %v1675
    %v1677 = vpop.f32.mrf.mxu0
    %v1678 = vadd.f32 %v1565, %v1677
    %v1679 = vpop.f32.mrf.mxu0
    %v1680 = vadd.f32 %v1567, %v1679
    %1681 = vmatprep.mubr.bf16.mxu0 0
    %1682 = vmatmul.mubr.bf16.gmra.mxu0 %v128
    %v1683 = vpop.f32.mrf.mxu0
    %v1684 = vadd.f32 %v1571, %v1683
    %v1685 = vpop.f32.mrf.mxu0
    %v1686 = vadd.f32 %v1573, %v1685
    %v1687 = vpop.f32.mrf.mxu0
    %v1688 = vadd.f32 %v1575, %v1687
    %v1689 = vpop.f32.mrf.mxu0
    %v1690 = vadd.f32 %v1577, %v1689
    %1691 = vmatprep.mubr.bf16.mxu0 0
    %1692 = vmatmul.mubr.bf16.gmra.mxu0 %v131
    %v1693 = vpop.f32.mrf.mxu0
    %v1694 = vadd.f32 %v1581, %v1693
    %v1695 = vpop.f32.mrf.mxu0
    %v1696 = vadd.f32 %v1583, %v1695
    %v1697 = vpop.f32.mrf.mxu0
    %v1698 = vadd.f32 %v1585, %v1697
    %v1699 = vpop.f32.mrf.mxu0
    %v1700 = vadd.f32 %v1587, %v1699
    %1701 = vdwg.mxu0
    %1702 = vmatprep.subr.bf16.mxu0 %v1110
    %1703 = vmatpush1.bf16.msra.mxu0 %v1109
    %1704 = vmatprep.subr.bf16.mxu0 %v1101
    %1705 = vmatpush1.bf16.msra.mxu0 %v1100
    %1706 = vmatprep.subr.bf16.mxu0 %v1092
    %1707 = vmatpush1.bf16.msra.mxu0 %v1091
    %1708 = vmatprep.subr.bf16.mxu0 %v1083
    %1709 = vmatpush1.bf16.msra.mxu0 %v1082
    %1710 = vmatprep.subr.bf16.mxu0 %v1074
    %1711 = vmatpush1.bf16.msra.mxu0 %v1073
    %1712 = vmatprep.subr.bf16.mxu0 %v1065
    %1713 = vmatpush1.bf16.msra.mxu0 %v1064
    %1714 = vmatprep.subr.bf16.mxu0 %v1056
    %1715 = vmatpush1.bf16.msra.mxu0 %v1055
    %1716 = vmatprep.subr.bf16.mxu0 %v1047
    %1717 = vmatpush1.bf16.msra.mxu0 %v1046
    %1718 = vmatprep.subr.bf16.mxu0 %v1182
    %1719 = vmatpush2.bf16.msra.mxu0 %v1181
    %1720 = vmatprep.subr.bf16.mxu0 %v1173
    %1721 = vmatpush2.bf16.msra.mxu0 %v1172
    %1722 = vmatprep.subr.bf16.mxu0 %v1164
    %1723 = vmatpush2.bf16.msra.mxu0 %v1163
    %1724 = vmatprep.subr.bf16.mxu0 %v1155
    %1725 = vmatpush2.bf16.msra.mxu0 %v1154
    %1726 = vmatprep.subr.bf16.mxu0 %v1146
    %1727 = vmatpush2.bf16.msra.mxu0 %v1145
    %1728 = vmatprep.subr.bf16.mxu0 %v1137
    %1729 = vmatpush2.bf16.msra.mxu0 %v1136
    %1730 = vmatprep.subr.bf16.mxu0 %v1128
    %1731 = vmatpush2.bf16.msra.mxu0 %v1127
    %1732 = vmatprep.subr.bf16.mxu0 %v1119
    %1733 = vmatpush2.bf16.msra.mxu0 %v1118
    %1734 = vmatprep.mubr.bf16.mxu0 %v109
    %1735 = vmatmul.mubr.bf16.gmra.mxu0 %v108
    %v1736 = vpop.f32.mrf.mxu0
    %v1737 = vadd.f32 0.0, %v1736
    %v1738 = vpop.f32.mrf.mxu0
    %v1739 = vadd.f32 0.0, %v1738
    %v1740 = vpop.f32.mrf.mxu0
    %v1741 = vadd.f32 0.0, %v1740
    %v1742 = vpop.f32.mrf.mxu0
    %v1743 = vadd.f32 0.0, %v1742
    %1744 = vmatprep.mubr.bf16.mxu0 %v112
    %1745 = vmatmul.mubr.bf16.gmra.mxu0 %v111
    %v1746 = vpop.f32.mrf.mxu0
    %v1747 = vadd.f32 0.0, %v1746
    %v1748 = vpop.f32.mrf.mxu0
    %v1749 = vadd.f32 0.0, %v1748
    %v1750 = vpop.f32.mrf.mxu0
    %v1751 = vadd.f32 0.0, %v1750
    %v1752 = vpop.f32.mrf.mxu0
    %v1753 = vadd.f32 0.0, %v1752
    %1754 = vmatprep.mubr.bf16.mxu0 %v115
    %1755 = vmatmul.mubr.bf16.gmra.mxu0 %v114
    %v1756 = vpop.f32.mrf.mxu0
    %v1757 = vadd.f32 0.0, %v1756
    %v1758 = vpop.f32.mrf.mxu0
    %v1759 = vadd.f32 0.0, %v1758
    %v1760 = vpop.f32.mrf.mxu0
    %v1761 = vadd.f32 0.0, %v1760
    %v1762 = vpop.f32.mrf.mxu0
    %v1763 = vadd.f32 0.0, %v1762
    %1764 = vmatprep.mubr.bf16.mxu0 %v118
    %1765 = vmatmul.mubr.bf16.gmra.mxu0 %v117
    %v1766 = vpop.f32.mrf.mxu0
    %v1767 = vadd.f32 0.0, %v1766
    %v1768 = vpop.f32.mrf.mxu0
    %v1769 = vadd.f32 0.0, %v1768
    %v1770 = vpop.f32.mrf.mxu0
    %v1771 = vadd.f32 0.0, %v1770
    %v1772 = vpop.f32.mrf.mxu0
    %v1773 = vadd.f32 0.0, %v1772
    %1774 = vmatprep.mubr.bf16.mxu0 %v121
    %1775 = vmatmul.mubr.bf16.gmra.mxu0 %v120
    %v1776 = vpop.f32.mrf.mxu0
    %v1777 = vadd.f32 0.0, %v1776
    %v1778 = vpop.f32.mrf.mxu0
    %v1779 = vadd.f32 0.0, %v1778
    %v1780 = vpop.f32.mrf.mxu0
    %v1781 = vadd.f32 0.0, %v1780
    %v1782 = vpop.f32.mrf.mxu0
    %v1783 = vadd.f32 0.0, %v1782
    %1784 = vmatprep.mubr.bf16.mxu0 %v124
    %1785 = vmatmul.mubr.bf16.gmra.mxu0 %v123
    %v1786 = vpop.f32.mrf.mxu0
    %v1787 = vadd.f32 0.0, %v1786
    %v1788 = vpop.f32.mrf.mxu0
    %v1789 = vadd.f32 0.0, %v1788
    %v1790 = vpop.f32.mrf.mxu0
    %v1791 = vadd.f32 0.0, %v1790
    %v1792 = vpop.f32.mrf.mxu0
    %v1793 = vadd.f32 0.0, %v1792
    %1794 = vmatprep.mubr.bf16.mxu0 %v127
    %1795 = vmatmul.mubr.bf16.gmra.mxu0 %v126
    %v1796 = vpop.f32.mrf.mxu0
    %v1797 = vadd.f32 0.0, %v1796
    %v1798 = vpop.f32.mrf.mxu0
    %v1799 = vadd.f32 0.0, %v1798
    %v1800 = vpop.f32.mrf.mxu0
    %v1801 = vadd.f32 0.0, %v1800
    %v1802 = vpop.f32.mrf.mxu0
    %v1803 = vadd.f32 0.0, %v1802
    %1804 = vmatprep.mubr.bf16.mxu0 %v130
    %1805 = vmatmul.mubr.bf16.gmra.mxu0 %v129
    %v1806 = vpop.f32.mrf.mxu0
    %v1807 = vadd.f32 0.0, %v1806
    %v1808 = vpop.f32.mrf.mxu0
    %v1809 = vadd.f32 0.0, %v1808
    %v1810 = vpop.f32.mrf.mxu0
    %v1811 = vadd.f32 0.0, %v1810
    %v1812 = vpop.f32.mrf.mxu0
    %v1813 = vadd.f32 0.0, %v1812
    %1814 = vdwg.mxu0
    %1815 = vmatprep.subr.bf16.mxu0 %v1254
    %1816 = vmatpush1.bf16.msra.mxu0 %v1253
    %1817 = vmatprep.subr.bf16.mxu0 %v1245
    %1818 = vmatpush1.bf16.msra.mxu0 %v1244
    %1819 = vmatprep.subr.bf16.mxu0 %v1236
    %1820 = vmatpush1.bf16.msra.mxu0 %v1235
    %1821 = vmatprep.subr.bf16.mxu0 %v1227
    %1822 = vmatpush1.bf16.msra.mxu0 %v1226
    %1823 = vmatprep.subr.bf16.mxu0 %v1218
    %1824 = vmatpush1.bf16.msra.mxu0 %v1217
    %1825 = vmatprep.subr.bf16.mxu0 %v1209
    %1826 = vmatpush1.bf16.msra.mxu0 %v1208
    %1827 = vmatprep.subr.bf16.mxu0 %v1200
    %1828 = vmatpush1.bf16.msra.mxu0 %v1199
    %1829 = vmatprep.subr.bf16.mxu0 %v1191
    %1830 = vmatpush1.bf16.msra.mxu0 %v1190
    %1831 = vmatprep.subr.bf16.mxu0 0
    %1832 = vmatpush2.bf16.msra.mxu0 0
    %1833 = vmatprep.subr.bf16.mxu0 0
    %1834 = vmatpush2.bf16.msra.mxu0 0
    %1835 = vmatprep.subr.bf16.mxu0 0
    %1836 = vmatpush2.bf16.msra.mxu0 0
    %1837 = vmatprep.subr.bf16.mxu0 0
    %1838 = vmatpush2.bf16.msra.mxu0 0
    %1839 = vmatprep.subr.bf16.mxu0 0
    %1840 = vmatpush2.bf16.msra.mxu0 0
    %1841 = vmatprep.subr.bf16.mxu0 0
    %1842 = vmatpush2.bf16.msra.mxu0 0
    %1843 = vmatprep.subr.bf16.mxu0 0
    %1844 = vmatpush2.bf16.msra.mxu0 0
    %1845 = vmatprep.subr.bf16.mxu0 0
    %1846 = vmatpush2.bf16.msra.mxu0 0
    %1847 = vmatprep.mubr.bf16.mxu0 0
    %1848 = vmatmul.mubr.bf16.gmra.mxu0 %v110
    %v1849 = vpop.f32.mrf.mxu0
    %v1850 = vadd.f32 %v1737, %v1849
    %v1851 = vpop.f32.mrf.mxu0
    %v1852 = vadd.f32 %v1739, %v1851
    %v1853 = vpop.f32.mrf.mxu0
    %v1854 = vadd.f32 %v1741, %v1853
    %v1855 = vpop.f32.mrf.mxu0
    %v1856 = vadd.f32 %v1743, %v1855
    %1857 = vmatprep.mubr.bf16.mxu0 0
    %1858 = vmatmul.mubr.bf16.gmra.mxu0 %v113
    %v1859 = vpop.f32.mrf.mxu0
    %v1860 = vadd.f32 %v1747, %v1859
    %v1861 = vpop.f32.mrf.mxu0
    %v1862 = vadd.f32 %v1749, %v1861
    %v1863 = vpop.f32.mrf.mxu0
    %v1864 = vadd.f32 %v1751, %v1863
    %v1865 = vpop.f32.mrf.mxu0
    %v1866 = vadd.f32 %v1753, %v1865
    %1867 = vmatprep.mubr.bf16.mxu0 0
    %1868 = vmatmul.mubr.bf16.gmra.mxu0 %v116
    %v1869 = vpop.f32.mrf.mxu0
    %v1870 = vadd.f32 %v1757, %v1869
    %v1871 = vpop.f32.mrf.mxu0
    %v1872 = vadd.f32 %v1759, %v1871
    %v1873 = vpop.f32.mrf.mxu0
    %v1874 = vadd.f32 %v1761, %v1873
    %v1875 = vpop.f32.mrf.mxu0
    %v1876 = vadd.f32 %v1763, %v1875
    %1877 = vmatprep.mubr.bf16.mxu0 0
    %1878 = vmatmul.mubr.bf16.gmra.mxu0 %v119
    %v1879 = vpop.f32.mrf.mxu0
    %v1880 = vadd.f32 %v1767, %v1879
    %v1881 = vpop.f32.mrf.mxu0
    %v1882 = vadd.f32 %v1769, %v1881
    %v1883 = vpop.f32.mrf.mxu0
    %v1884 = vadd.f32 %v1771, %v1883
    %v1885 = vpop.f32.mrf.mxu0
    %v1886 = vadd.f32 %v1773, %v1885
    %1887 = vmatprep.mubr.bf16.mxu0 0
    %1888 = vmatmul.mubr.bf16.gmra.mxu0 %v122
    %v1889 = vpop.f32.mrf.mxu0
    %v1890 = vadd.f32 %v1777, %v1889
    %v1891 = vpop.f32.mrf.mxu0
    %v1892 = vadd.f32 %v1779, %v1891
    %v1893 = vpop.f32.mrf.mxu0
    %v1894 = vadd.f32 %v1781, %v1893
    %v1895 = vpop.f32.mrf.mxu0
    %v1896 = vadd.f32 %v1783, %v1895
    %1897 = vmatprep.mubr.bf16.mxu0 0
    %1898 = vmatmul.mubr.bf16.gmra.mxu0 %v125
    %v1899 = vpop.f32.mrf.mxu0
    %v1900 = vadd.f32 %v1787, %v1899
    %v1901 = vpop.f32.mrf.mxu0
    %v1902 = vadd.f32 %v1789, %v1901
    %v1903 = vpop.f32.mrf.mxu0
    %v1904 = vadd.f32 %v1791, %v1903
    %v1905 = vpop.f32.mrf.mxu0
    %v1906 = vadd.f32 %v1793, %v1905
    %1907 = vmatprep.mubr.bf16.mxu0 0
    %1908 = vmatmul.mubr.bf16.gmra.mxu0 %v128
    %v1909 = vpop.f32.mrf.mxu0
    %v1910 = vadd.f32 %v1797, %v1909
    %v1911 = vpop.f32.mrf.mxu0
    %v1912 = vadd.f32 %v1799, %v1911
    %v1913 = vpop.f32.mrf.mxu0
    %v1914 = vadd.f32 %v1801, %v1913
    %v1915 = vpop.f32.mrf.mxu0
    %v1916 = vadd.f32 %v1803, %v1915
    %1917 = vmatprep.mubr.bf16.mxu0 0
    %1918 = vmatmul.mubr.bf16.gmra.mxu0 %v131
    %v1919 = vpop.f32.mrf.mxu0
    %v1920 = vadd.f32 %v1807, %v1919
    %v1921 = vpop.f32.mrf.mxu0
    %v1922 = vadd.f32 %v1809, %v1921
    %v1923 = vpop.f32.mrf.mxu0
    %v1924 = vadd.f32 %v1811, %v1923
    %v1925 = vpop.f32.mrf.mxu0
    %v1926 = vadd.f32 %v1813, %v1925
    %1927 = vdwg.mxu0
    %1928 = vmatprep.subr.bf16.mxu0 %v1112
    %1929 = vmatpush1.bf16.msra.mxu0 %v1111
    %1930 = vmatprep.subr.bf16.mxu0 %v1103
    %1931 = vmatpush1.bf16.msra.mxu0 %v1102
    %1932 = vmatprep.subr.bf16.mxu0 %v1094
    %1933 = vmatpush1.bf16.msra.mxu0 %v1093
    %1934 = vmatprep.subr.bf16.mxu0 %v1085
    %1935 = vmatpush1.bf16.msra.mxu0 %v1084
    %1936 = vmatprep.subr.bf16.mxu0 %v1076
    %1937 = vmatpush1.bf16.msra.mxu0 %v1075
    %1938 = vmatprep.subr.bf16.mxu0 %v1067
    %1939 = vmatpush1.bf16.msra.mxu0 %v1066
    %1940 = vmatprep.subr.bf16.mxu0 %v1058
    %1941 = vmatpush1.bf16.msra.mxu0 %v1057
    %1942 = vmatprep.subr.bf16.mxu0 %v1049
    %1943 = vmatpush1.bf16.msra.mxu0 %v1048
    %1944 = vmatprep.subr.bf16.mxu0 %v1184
    %1945 = vmatpush2.bf16.msra.mxu0 %v1183
    %1946 = vmatprep.subr.bf16.mxu0 %v1175
    %1947 = vmatpush2.bf16.msra.mxu0 %v1174
    %1948 = vmatprep.subr.bf16.mxu0 %v1166
    %1949 = vmatpush2.bf16.msra.mxu0 %v1165
    %1950 = vmatprep.subr.bf16.mxu0 %v1157
    %1951 = vmatpush2.bf16.msra.mxu0 %v1156
    %1952 = vmatprep.subr.bf16.mxu0 %v1148
    %1953 = vmatpush2.bf16.msra.mxu0 %v1147
    %1954 = vmatprep.subr.bf16.mxu0 %v1139
    %1955 = vmatpush2.bf16.msra.mxu0 %v1138
    %1956 = vmatprep.subr.bf16.mxu0 %v1130
    %1957 = vmatpush2.bf16.msra.mxu0 %v1129
    %1958 = vmatprep.subr.bf16.mxu0 %v1121
    %1959 = vmatpush2.bf16.msra.mxu0 %v1120
    %1960 = vmatprep.mubr.bf16.mxu0 %v109
    %1961 = vmatmul.mubr.bf16.gmra.mxu0 %v108
    %v1962 = vpop.f32.mrf.mxu0
    %v1963 = vadd.f32 0.0, %v1962
    %v1964 = vpop.f32.mrf.mxu0
    %v1965 = vadd.f32 0.0, %v1964
    %v1966 = vpop.f32.mrf.mxu0
    %v1967 = vadd.f32 0.0, %v1966
    %v1968 = vpop.f32.mrf.mxu0
    %v1969 = vadd.f32 0.0, %v1968
    %1970 = vmatprep.mubr.bf16.mxu0 %v112
    %1971 = vmatmul.mubr.bf16.gmra.mxu0 %v111
    %v1972 = vpop.f32.mrf.mxu0
    %v1973 = vadd.f32 0.0, %v1972
    %v1974 = vpop.f32.mrf.mxu0
    %v1975 = vadd.f32 0.0, %v1974
    %v1976 = vpop.f32.mrf.mxu0
    %v1977 = vadd.f32 0.0, %v1976
    %v1978 = vpop.f32.mrf.mxu0
    %v1979 = vadd.f32 0.0, %v1978
    %1980 = vmatprep.mubr.bf16.mxu0 %v115
    %1981 = vmatmul.mubr.bf16.gmra.mxu0 %v114
    %v1982 = vpop.f32.mrf.mxu0
    %v1983 = vadd.f32 0.0, %v1982
    %v1984 = vpop.f32.mrf.mxu0
    %v1985 = vadd.f32 0.0, %v1984
    %v1986 = vpop.f32.mrf.mxu0
    %v1987 = vadd.f32 0.0, %v1986
    %v1988 = vpop.f32.mrf.mxu0
    %v1989 = vadd.f32 0.0, %v1988
    %1990 = vmatprep.mubr.bf16.mxu0 %v118
    %1991 = vmatmul.mubr.bf16.gmra.mxu0 %v117
    %v1992 = vpop.f32.mrf.mxu0
    %v1993 = vadd.f32 0.0, %v1992
    %v1994 = vpop.f32.mrf.mxu0
    %v1995 = vadd.f32 0.0, %v1994
    %v1996 = vpop.f32.mrf.mxu0
    %v1997 = vadd.f32 0.0, %v1996
    %v1998 = vpop.f32.mrf.mxu0
    %v1999 = vadd.f32 0.0, %v1998
    %2000 = vmatprep.mubr.bf16.mxu0 %v121
    %2001 = vmatmul.mubr.bf16.gmra.mxu0 %v120
    %v2002 = vpop.f32.mrf.mxu0
    %v2003 = vadd.f32 0.0, %v2002
    %v2004 = vpop.f32.mrf.mxu0
    %v2005 = vadd.f32 0.0, %v2004
    %v2006 = vpop.f32.mrf.mxu0
    %v2007 = vadd.f32 0.0, %v2006
    %v2008 = vpop.f32.mrf.mxu0
    %v2009 = vadd.f32 0.0, %v2008
    %2010 = vmatprep.mubr.bf16.mxu0 %v124
    %2011 = vmatmul.mubr.bf16.gmra.mxu0 %v123
    %v2012 = vpop.f32.mrf.mxu0
    %v2013 = vadd.f32 0.0, %v2012
    %v2014 = vpop.f32.mrf.mxu0
    %v2015 = vadd.f32 0.0, %v2014
    %v2016 = vpop.f32.mrf.mxu0
    %v2017 = vadd.f32 0.0, %v2016
    %v2018 = vpop.f32.mrf.mxu0
    %v2019 = vadd.f32 0.0, %v2018
    %2020 = vmatprep.mubr.bf16.mxu0 %v127
    %2021 = vmatmul.mubr.bf16.gmra.mxu0 %v126
    %v2022 = vpop.f32.mrf.mxu0
    %v2023 = vadd.f32 0.0, %v2022
    %v2024 = vpop.f32.mrf.mxu0
    %v2025 = vadd.f32 0.0, %v2024
    %v2026 = vpop.f32.mrf.mxu0
    %v2027 = vadd.f32 0.0, %v2026
    %v2028 = vpop.f32.mrf.mxu0
    %v2029 = vadd.f32 0.0, %v2028
    %2030 = vmatprep.mubr.bf16.mxu0 %v130
    %2031 = vmatmul.mubr.bf16.gmra.mxu0 %v129
    %v2032 = vpop.f32.mrf.mxu0
    %v2033 = vadd.f32 0.0, %v2032
    %v2034 = vpop.f32.mrf.mxu0
    %v2035 = vadd.f32 0.0, %v2034
    %v2036 = vpop.f32.mrf.mxu0
    %v2037 = vadd.f32 0.0, %v2036
    %v2038 = vpop.f32.mrf.mxu0
    %v2039 = vadd.f32 0.0, %v2038
    %2040 = vdwg.mxu0
    %2041 = vmatprep.subr.bf16.mxu0 %v1256
    %2042 = vmatpush1.bf16.msra.mxu0 %v1255
    %2043 = vmatprep.subr.bf16.mxu0 %v1247
    %2044 = vmatpush1.bf16.msra.mxu0 %v1246
    %2045 = vmatprep.subr.bf16.mxu0 %v1238
    %2046 = vmatpush1.bf16.msra.mxu0 %v1237
    %2047 = vmatprep.subr.bf16.mxu0 %v1229
    %2048 = vmatpush1.bf16.msra.mxu0 %v1228
    %2049 = vmatprep.subr.bf16.mxu0 %v1220
    %2050 = vmatpush1.bf16.msra.mxu0 %v1219
    %2051 = vmatprep.subr.bf16.mxu0 %v1211
    %2052 = vmatpush1.bf16.msra.mxu0 %v1210
    %2053 = vmatprep.subr.bf16.mxu0 %v1202
    %2054 = vmatpush1.bf16.msra.mxu0 %v1201
    %2055 = vmatprep.subr.bf16.mxu0 %v1193
    %2056 = vmatpush1.bf16.msra.mxu0 %v1192
    %2057 = vmatprep.subr.bf16.mxu0 0
    %2058 = vmatpush2.bf16.msra.mxu0 0
    %2059 = vmatprep.subr.bf16.mxu0 0
    %2060 = vmatpush2.bf16.msra.mxu0 0
    %2061 = vmatprep.subr.bf16.mxu0 0
    %2062 = vmatpush2.bf16.msra.mxu0 0
    %2063 = vmatprep.subr.bf16.mxu0 0
    %2064 = vmatpush2.bf16.msra.mxu0 0
    %2065 = vmatprep.subr.bf16.mxu0 0
    %2066 = vmatpush2.bf16.msra.mxu0 0
    %2067 = vmatprep.subr.bf16.mxu0 0
    %2068 = vmatpush2.bf16.msra.mxu0 0
    %2069 = vmatprep.subr.bf16.mxu0 0
    %2070 = vmatpush2.bf16.msra.mxu0 0
    %2071 = vmatprep.subr.bf16.mxu0 0
    %2072 = vmatpush2.bf16.msra.mxu0 0
    %2073 = vmatprep.mubr.bf16.mxu0 0
    %2074 = vmatmul.mubr.bf16.gmra.mxu0 %v110
    %v2075 = vpop.f32.mrf.mxu0
    %v2076 = vadd.f32 %v1963, %v2075
    %v2077 = vpop.f32.mrf.mxu0
    %v2078 = vadd.f32 %v1965, %v2077
    %v2079 = vpop.f32.mrf.mxu0
    %v2080 = vadd.f32 %v1967, %v2079
    %v2081 = vpop.f32.mrf.mxu0
    %v2082 = vadd.f32 %v1969, %v2081
    %2083 = vmatprep.mubr.bf16.mxu0 0
    %2084 = vmatmul.mubr.bf16.gmra.mxu0 %v113
    %v2085 = vpop.f32.mrf.mxu0
    %v2086 = vadd.f32 %v1973, %v2085
    %v2087 = vpop.f32.mrf.mxu0
    %v2088 = vadd.f32 %v1975, %v2087
    %v2089 = vpop.f32.mrf.mxu0
    %v2090 = vadd.f32 %v1977, %v2089
    %v2091 = vpop.f32.mrf.mxu0
    %v2092 = vadd.f32 %v1979, %v2091
    %2093 = vmatprep.mubr.bf16.mxu0 0
    %2094 = vmatmul.mubr.bf16.gmra.mxu0 %v116
    %v2095 = vpop.f32.mrf.mxu0
    %v2096 = vadd.f32 %v1983, %v2095
    %v2097 = vpop.f32.mrf.mxu0
    %v2098 = vadd.f32 %v1985, %v2097
    %v2099 = vpop.f32.mrf.mxu0
    %v2100 = vadd.f32 %v1987, %v2099
    %v2101 = vpop.f32.mrf.mxu0
    %v2102 = vadd.f32 %v1989, %v2101
    %2103 = vmatprep.mubr.bf16.mxu0 0
    %2104 = vmatmul.mubr.bf16.gmra.mxu0 %v119
    %v2105 = vpop.f32.mrf.mxu0
    %v2106 = vadd.f32 %v1993, %v2105
    %v2107 = vpop.f32.mrf.mxu0
    %v2108 = vadd.f32 %v1995, %v2107
    %v2109 = vpop.f32.mrf.mxu0
    %v2110 = vadd.f32 %v1997, %v2109
    %v2111 = vpop.f32.mrf.mxu0
    %v2112 = vadd.f32 %v1999, %v2111
    %2113 = vmatprep.mubr.bf16.mxu0 0
    %2114 = vmatmul.mubr.bf16.gmra.mxu0 %v122
    %v2115 = vpop.f32.mrf.mxu0
    %v2116 = vadd.f32 %v2003, %v2115
    %v2117 = vpop.f32.mrf.mxu0
    %v2118 = vadd.f32 %v2005, %v2117
    %v2119 = vpop.f32.mrf.mxu0
    %v2120 = vadd.f32 %v2007, %v2119
    %v2121 = vpop.f32.mrf.mxu0
    %v2122 = vadd.f32 %v2009, %v2121
    %2123 = vmatprep.mubr.bf16.mxu0 0
    %2124 = vmatmul.mubr.bf16.gmra.mxu0 %v125
    %v2125 = vpop.f32.mrf.mxu0
    %v2126 = vadd.f32 %v2013, %v2125
    %v2127 = vpop.f32.mrf.mxu0
    %v2128 = vadd.f32 %v2015, %v2127
    %v2129 = vpop.f32.mrf.mxu0
    %v2130 = vadd.f32 %v2017, %v2129
    %v2131 = vpop.f32.mrf.mxu0
    %v2132 = vadd.f32 %v2019, %v2131
    %2133 = vmatprep.mubr.bf16.mxu0 0
    %2134 = vmatmul.mubr.bf16.gmra.mxu0 %v128
    %v2135 = vpop.f32.mrf.mxu0
    %v2136 = vadd.f32 %v2023, %v2135
    %v2137 = vpop.f32.mrf.mxu0
    %v2138 = vadd.f32 %v2025, %v2137
    %v2139 = vpop.f32.mrf.mxu0
    %v2140 = vadd.f32 %v2027, %v2139
    %v2141 = vpop.f32.mrf.mxu0
    %v2142 = vadd.f32 %v2029, %v2141
    %2143 = vmatprep.mubr.bf16.mxu0 0
    %2144 = vmatmul.mubr.bf16.gmra.mxu0 %v131
    %v2145 = vpop.f32.mrf.mxu0
    %v2146 = vadd.f32 %v2033, %v2145
    %v2147 = vpop.f32.mrf.mxu0
    %v2148 = vadd.f32 %v2035, %v2147
    %v2149 = vpop.f32.mrf.mxu0
    %v2150 = vadd.f32 %v2037, %v2149
    %v2151 = vpop.f32.mrf.mxu0
    %v2152 = vadd.f32 %v2039, %v2151
    %2153 = vdwg.mxu0
    %2154 = vmatprep.subr.bf16.mxu0 %v1114
    %2155 = vmatpush1.bf16.msra.mxu0 %v1113
    %2156 = vmatprep.subr.bf16.mxu0 %v1105
    %2157 = vmatpush1.bf16.msra.mxu0 %v1104
    %2158 = vmatprep.subr.bf16.mxu0 %v1096
    %2159 = vmatpush1.bf16.msra.mxu0 %v1095
    %2160 = vmatprep.subr.bf16.mxu0 %v1087
    %2161 = vmatpush1.bf16.msra.mxu0 %v1086
    %2162 = vmatprep.subr.bf16.mxu0 %v1078
    %2163 = vmatpush1.bf16.msra.mxu0 %v1077
    %2164 = vmatprep.subr.bf16.mxu0 %v1069
    %2165 = vmatpush1.bf16.msra.mxu0 %v1068
    %2166 = vmatprep.subr.bf16.mxu0 %v1060
    %2167 = vmatpush1.bf16.msra.mxu0 %v1059
    %2168 = vmatprep.subr.bf16.mxu0 %v1051
    %2169 = vmatpush1.bf16.msra.mxu0 %v1050
    %2170 = vmatprep.subr.bf16.mxu0 %v1186
    %2171 = vmatpush2.bf16.msra.mxu0 %v1185
    %2172 = vmatprep.subr.bf16.mxu0 %v1177
    %2173 = vmatpush2.bf16.msra.mxu0 %v1176
    %2174 = vmatprep.subr.bf16.mxu0 %v1168
    %2175 = vmatpush2.bf16.msra.mxu0 %v1167
    %2176 = vmatprep.subr.bf16.mxu0 %v1159
    %2177 = vmatpush2.bf16.msra.mxu0 %v1158
    %2178 = vmatprep.subr.bf16.mxu0 %v1150
    %2179 = vmatpush2.bf16.msra.mxu0 %v1149
    %2180 = vmatprep.subr.bf16.mxu0 %v1141
    %2181 = vmatpush2.bf16.msra.mxu0 %v1140
    %2182 = vmatprep.subr.bf16.mxu0 %v1132
    %2183 = vmatpush2.bf16.msra.mxu0 %v1131
    %2184 = vmatprep.subr.bf16.mxu0 %v1123
    %2185 = vmatpush2.bf16.msra.mxu0 %v1122
    %2186 = vmatprep.mubr.bf16.mxu0 %v109
    %2187 = vmatmul.mubr.bf16.gmra.mxu0 %v108
    %v2188 = vpop.f32.mrf.mxu0
    %v2189 = vadd.f32 0.0, %v2188
    %v2190 = vpop.f32.mrf.mxu0
    %v2191 = vadd.f32 0.0, %v2190
    %v2192 = vpop.f32.mrf.mxu0
    %v2193 = vadd.f32 0.0, %v2192
    %v2194 = vpop.f32.mrf.mxu0
    %v2195 = vadd.f32 0.0, %v2194
    %2196 = vmatprep.mubr.bf16.mxu0 %v112
    %2197 = vmatmul.mubr.bf16.gmra.mxu0 %v111
    %v2198 = vpop.f32.mrf.mxu0
    %v2199 = vadd.f32 0.0, %v2198
    %v2200 = vpop.f32.mrf.mxu0
    %v2201 = vadd.f32 0.0, %v2200
    %v2202 = vpop.f32.mrf.mxu0
    %v2203 = vadd.f32 0.0, %v2202
    %v2204 = vpop.f32.mrf.mxu0
    %v2205 = vadd.f32 0.0, %v2204
    %2206 = vmatprep.mubr.bf16.mxu0 %v115
    %2207 = vmatmul.mubr.bf16.gmra.mxu0 %v114
    %v2208 = vpop.f32.mrf.mxu0
    %v2209 = vadd.f32 0.0, %v2208
    %v2210 = vpop.f32.mrf.mxu0
    %v2211 = vadd.f32 0.0, %v2210
    %v2212 = vpop.f32.mrf.mxu0
    %v2213 = vadd.f32 0.0, %v2212
    %v2214 = vpop.f32.mrf.mxu0
    %v2215 = vadd.f32 0.0, %v2214
    %2216 = vmatprep.mubr.bf16.mxu0 %v118
    %2217 = vmatmul.mubr.bf16.gmra.mxu0 %v117
    %v2218 = vpop.f32.mrf.mxu0
    %v2219 = vadd.f32 0.0, %v2218
    %v2220 = vpop.f32.mrf.mxu0
    %v2221 = vadd.f32 0.0, %v2220
    %v2222 = vpop.f32.mrf.mxu0
    %v2223 = vadd.f32 0.0, %v2222
    %v2224 = vpop.f32.mrf.mxu0
    %v2225 = vadd.f32 0.0, %v2224
    %2226 = vmatprep.mubr.bf16.mxu0 %v121
    %2227 = vmatmul.mubr.bf16.gmra.mxu0 %v120
    %v2228 = vpop.f32.mrf.mxu0
    %v2229 = vadd.f32 0.0, %v2228
    %v2230 = vpop.f32.mrf.mxu0
    %v2231 = vadd.f32 0.0, %v2230
    %v2232 = vpop.f32.mrf.mxu0
    %v2233 = vadd.f32 0.0, %v2232
    %v2234 = vpop.f32.mrf.mxu0
    %v2235 = vadd.f32 0.0, %v2234
    %2236 = vmatprep.mubr.bf16.mxu0 %v124
    %2237 = vmatmul.mubr.bf16.gmra.mxu0 %v123
    %v2238 = vpop.f32.mrf.mxu0
    %v2239 = vadd.f32 0.0, %v2238
    %v2240 = vpop.f32.mrf.mxu0
    %v2241 = vadd.f32 0.0, %v2240
    %v2242 = vpop.f32.mrf.mxu0
    %v2243 = vadd.f32 0.0, %v2242
    %v2244 = vpop.f32.mrf.mxu0
    %v2245 = vadd.f32 0.0, %v2244
    %2246 = vmatprep.mubr.bf16.mxu0 %v127
    %2247 = vmatmul.mubr.bf16.gmra.mxu0 %v126
    %v2248 = vpop.f32.mrf.mxu0
    %v2249 = vadd.f32 0.0, %v2248
    %v2250 = vpop.f32.mrf.mxu0
    %v2251 = vadd.f32 0.0, %v2250
    %v2252 = vpop.f32.mrf.mxu0
    %v2253 = vadd.f32 0.0, %v2252
    %v2254 = vpop.f32.mrf.mxu0
    %v2255 = vadd.f32 0.0, %v2254
    %2256 = vmatprep.mubr.bf16.mxu0 %v130
    %2257 = vmatmul.mubr.bf16.gmra.mxu0 %v129
    %v2258 = vpop.f32.mrf.mxu0
    %v2259 = vadd.f32 0.0, %v2258
    %v2260 = vpop.f32.mrf.mxu0
    %v2261 = vadd.f32 0.0, %v2260
    %v2262 = vpop.f32.mrf.mxu0
    %v2263 = vadd.f32 0.0, %v2262
    %v2264 = vpop.f32.mrf.mxu0
    %v2265 = vadd.f32 0.0, %v2264
    %2266 = vdwg.mxu0
    %2267 = vmatprep.subr.bf16.mxu0 %v1258
    %2268 = vmatpush1.bf16.msra.mxu0 %v1257
    %2269 = vmatprep.subr.bf16.mxu0 %v1249
    %2270 = vmatpush1.bf16.msra.mxu0 %v1248
    %2271 = vmatprep.subr.bf16.mxu0 %v1240
    %2272 = vmatpush1.bf16.msra.mxu0 %v1239
    %2273 = vmatprep.subr.bf16.mxu0 %v1231
    %2274 = vmatpush1.bf16.msra.mxu0 %v1230
    %2275 = vmatprep.subr.bf16.mxu0 %v1222
    %2276 = vmatpush1.bf16.msra.mxu0 %v1221
    %2277 = vmatprep.subr.bf16.mxu0 %v1213
    %2278 = vmatpush1.bf16.msra.mxu0 %v1212
    %2279 = vmatprep.subr.bf16.mxu0 %v1204
    %2280 = vmatpush1.bf16.msra.mxu0 %v1203
    %2281 = vmatprep.subr.bf16.mxu0 %v1195
    %2282 = vmatpush1.bf16.msra.mxu0 %v1194
    %2283 = vmatprep.subr.bf16.mxu0 0
    %2284 = vmatpush2.bf16.msra.mxu0 0
    %2285 = vmatprep.subr.bf16.mxu0 0
    %2286 = vmatpush2.bf16.msra.mxu0 0
    %2287 = vmatprep.subr.bf16.mxu0 0
    %2288 = vmatpush2.bf16.msra.mxu0 0
    %2289 = vmatprep.subr.bf16.mxu0 0
    %2290 = vmatpush2.bf16.msra.mxu0 0
    %2291 = vmatprep.subr.bf16.mxu0 0
    %2292 = vmatpush2.bf16.msra.mxu0 0
    %2293 = vmatprep.subr.bf16.mxu0 0
    %2294 = vmatpush2.bf16.msra.mxu0 0
    %2295 = vmatprep.subr.bf16.mxu0 0
    %2296 = vmatpush2.bf16.msra.mxu0 0
    %2297 = vmatprep.subr.bf16.mxu0 0
    %2298 = vmatpush2.bf16.msra.mxu0 0
    %2299 = vmatprep.mubr.bf16.mxu0 0
    %2300 = vmatmul.mubr.bf16.gmra.mxu0 %v110
    %v2301 = vpop.f32.mrf.mxu0
    %v2302 = vadd.f32 %v2189, %v2301
    %v2303 = vpop.f32.mrf.mxu0
    %v2304 = vadd.f32 %v2191, %v2303
    %v2305 = vpop.f32.mrf.mxu0
    %v2306 = vadd.f32 %v2193, %v2305
    %v2307 = vpop.f32.mrf.mxu0
    %v2308 = vadd.f32 %v2195, %v2307
    %2309 = vmatprep.mubr.bf16.mxu0 0
    %2310 = vmatmul.mubr.bf16.gmra.mxu0 %v113
    %v2311 = vpop.f32.mrf.mxu0
    %v2312 = vadd.f32 %v2199, %v2311
    %v2313 = vpop.f32.mrf.mxu0
    %v2314 = vadd.f32 %v2201, %v2313
    %v2315 = vpop.f32.mrf.mxu0
    %v2316 = vadd.f32 %v2203, %v2315
    %v2317 = vpop.f32.mrf.mxu0
    %v2318 = vadd.f32 %v2205, %v2317
    %2319 = vmatprep.mubr.bf16.mxu0 0
    %2320 = vmatmul.mubr.bf16.gmra.mxu0 %v116
    %v2321 = vpop.f32.mrf.mxu0
    %v2322 = vadd.f32 %v2209, %v2321
    %v2323 = vpop.f32.mrf.mxu0
    %v2324 = vadd.f32 %v2211, %v2323
    %v2325 = vpop.f32.mrf.mxu0
    %v2326 = vadd.f32 %v2213, %v2325
    %v2327 = vpop.f32.mrf.mxu0
    %v2328 = vadd.f32 %v2215, %v2327
    %2329 = vmatprep.mubr.bf16.mxu0 0
    %2330 = vmatmul.mubr.bf16.gmra.mxu0 %v119
    %v2331 = vpop.f32.mrf.mxu0
    %v2332 = vadd.f32 %v2219, %v2331
    %v2333 = vpop.f32.mrf.mxu0
    %v2334 = vadd.f32 %v2221, %v2333
    %v2335 = vpop.f32.mrf.mxu0
    %v2336 = vadd.f32 %v2223, %v2335
    %v2337 = vpop.f32.mrf.mxu0
    %v2338 = vadd.f32 %v2225, %v2337
    %2339 = vmatprep.mubr.bf16.mxu0 0
    %2340 = vmatmul.mubr.bf16.gmra.mxu0 %v122
    %v2341 = vpop.f32.mrf.mxu0
    %v2342 = vadd.f32 %v2229, %v2341
    %v2343 = vpop.f32.mrf.mxu0
    %v2344 = vadd.f32 %v2231, %v2343
    %v2345 = vpop.f32.mrf.mxu0
    %v2346 = vadd.f32 %v2233, %v2345
    %v2347 = vpop.f32.mrf.mxu0
    %v2348 = vadd.f32 %v2235, %v2347
    %2349 = vmatprep.mubr.bf16.mxu0 0
    %2350 = vmatmul.mubr.bf16.gmra.mxu0 %v125
    %v2351 = vpop.f32.mrf.mxu0
    %v2352 = vadd.f32 %v2239, %v2351
    %v2353 = vpop.f32.mrf.mxu0
    %v2354 = vadd.f32 %v2241, %v2353
    %v2355 = vpop.f32.mrf.mxu0
    %v2356 = vadd.f32 %v2243, %v2355
    %v2357 = vpop.f32.mrf.mxu0
    %v2358 = vadd.f32 %v2245, %v2357
    %2359 = vmatprep.mubr.bf16.mxu0 0
    %2360 = vmatmul.mubr.bf16.gmra.mxu0 %v128
    %v2361 = vpop.f32.mrf.mxu0
    %v2362 = vadd.f32 %v2249, %v2361
    %v2363 = vpop.f32.mrf.mxu0
    %v2364 = vadd.f32 %v2251, %v2363
    %v2365 = vpop.f32.mrf.mxu0
    %v2366 = vadd.f32 %v2253, %v2365
    %v2367 = vpop.f32.mrf.mxu0
    %v2368 = vadd.f32 %v2255, %v2367
    %2369 = vmatprep.mubr.bf16.mxu0 0
    %2370 = vmatmul.mubr.bf16.gmra.mxu0 %v131
    %v2371 = vpop.f32.mrf.mxu0
    %v2372 = vadd.f32 %v2259, %v2371
    %v2373 = vpop.f32.mrf.mxu0
    %v2374 = vadd.f32 %v2261, %v2373
    %v2375 = vpop.f32.mrf.mxu0
    %v2376 = vadd.f32 %v2263, %v2375
    %v2377 = vpop.f32.mrf.mxu0
    %v2378 = vadd.f32 %v2265, %v2377
    %2379 = vdwg.mxu0
    %2380 = vmatprep.subr.bf16.mxu0 0
    %2381 = vmatpush1.bf16.msra.mxu0 %v1115
    %2382 = vmatprep.subr.bf16.mxu0 0
    %2383 = vmatpush1.bf16.msra.mxu0 %v1106
    %2384 = vmatprep.subr.bf16.mxu0 0
    %2385 = vmatpush1.bf16.msra.mxu0 %v1097
    %2386 = vmatprep.subr.bf16.mxu0 0
    %2387 = vmatpush1.bf16.msra.mxu0 %v1088
    %2388 = vmatprep.subr.bf16.mxu0 0
    %2389 = vmatpush1.bf16.msra.mxu0 %v1079
    %2390 = vmatprep.subr.bf16.mxu0 0
    %2391 = vmatpush1.bf16.msra.mxu0 %v1070
    %2392 = vmatprep.subr.bf16.mxu0 0
    %2393 = vmatpush1.bf16.msra.mxu0 %v1061
    %2394 = vmatprep.subr.bf16.mxu0 0
    %2395 = vmatpush1.bf16.msra.mxu0 %v1052
    %2396 = vmatprep.subr.bf16.mxu0 0
    %2397 = vmatpush2.bf16.msra.mxu0 %v1187
    %2398 = vmatprep.subr.bf16.mxu0 0
    %2399 = vmatpush2.bf16.msra.mxu0 %v1178
    %2400 = vmatprep.subr.bf16.mxu0 0
    %2401 = vmatpush2.bf16.msra.mxu0 %v1169
    %2402 = vmatprep.subr.bf16.mxu0 0
    %2403 = vmatpush2.bf16.msra.mxu0 %v1160
    %2404 = vmatprep.subr.bf16.mxu0 0
    %2405 = vmatpush2.bf16.msra.mxu0 %v1151
    %2406 = vmatprep.subr.bf16.mxu0 0
    %2407 = vmatpush2.bf16.msra.mxu0 %v1142
    %2408 = vmatprep.subr.bf16.mxu0 0
    %2409 = vmatpush2.bf16.msra.mxu0 %v1133
    %2410 = vmatprep.subr.bf16.mxu0 0
    %2411 = vmatpush2.bf16.msra.mxu0 %v1124
    %2412 = vmatprep.mubr.bf16.mxu0 %v109
    %2413 = vmatmul.mubr.bf16.gmra.mxu0 %v108
    %v2414 = vpop.f32.mrf.mxu0
    %v2415 = vadd.f32 0.0, %v2414
    %v2416 = vpop.f32.mrf.mxu0
    %v2417 = vpop.f32.mrf.mxu0
    %v2418 = vadd.f32 0.0, %v2417
    %v2419 = vpop.f32.mrf.mxu0
    %2420 = vmatprep.mubr.bf16.mxu0 %v112
    %2421 = vmatmul.mubr.bf16.gmra.mxu0 %v111
    %v2422 = vpop.f32.mrf.mxu0
    %v2423 = vadd.f32 0.0, %v2422
    %v2424 = vpop.f32.mrf.mxu0
    %v2425 = vpop.f32.mrf.mxu0
    %v2426 = vadd.f32 0.0, %v2425
    %v2427 = vpop.f32.mrf.mxu0
    %2428 = vmatprep.mubr.bf16.mxu0 %v115
    %2429 = vmatmul.mubr.bf16.gmra.mxu0 %v114
    %v2430 = vpop.f32.mrf.mxu0
    %v2431 = vadd.f32 0.0, %v2430
    %v2432 = vpop.f32.mrf.mxu0
    %v2433 = vpop.f32.mrf.mxu0
    %v2434 = vadd.f32 0.0, %v2433
    %v2435 = vpop.f32.mrf.mxu0
    %2436 = vmatprep.mubr.bf16.mxu0 %v118
    %2437 = vmatmul.mubr.bf16.gmra.mxu0 %v117
    %v2438 = vpop.f32.mrf.mxu0
    %v2439 = vadd.f32 0.0, %v2438
    %v2440 = vpop.f32.mrf.mxu0
    %v2441 = vpop.f32.mrf.mxu0
    %v2442 = vadd.f32 0.0, %v2441
    %v2443 = vpop.f32.mrf.mxu0
    %2444 = vmatprep.mubr.bf16.mxu0 %v121
    %2445 = vmatmul.mubr.bf16.gmra.mxu0 %v120
    %v2446 = vpop.f32.mrf.mxu0
    %v2447 = vadd.f32 0.0, %v2446
    %v2448 = vpop.f32.mrf.mxu0
    %v2449 = vpop.f32.mrf.mxu0
    %v2450 = vadd.f32 0.0, %v2449
    %v2451 = vpop.f32.mrf.mxu0
    %2452 = vmatprep.mubr.bf16.mxu0 %v124
    %2453 = vmatmul.mubr.bf16.gmra.mxu0 %v123
    %v2454 = vpop.f32.mrf.mxu0
    %v2455 = vadd.f32 0.0, %v2454
    %v2456 = vpop.f32.mrf.mxu0
    %v2457 = vpop.f32.mrf.mxu0
    %v2458 = vadd.f32 0.0, %v2457
    %v2459 = vpop.f32.mrf.mxu0
    %2460 = vmatprep.mubr.bf16.mxu0 %v127
    %2461 = vmatmul.mubr.bf16.gmra.mxu0 %v126
    %v2462 = vpop.f32.mrf.mxu0
    %v2463 = vadd.f32 0.0, %v2462
    %v2464 = vpop.f32.mrf.mxu0
    %v2465 = vpop.f32.mrf.mxu0
    %v2466 = vadd.f32 0.0, %v2465
    %v2467 = vpop.f32.mrf.mxu0
    %2468 = vmatprep.mubr.bf16.mxu0 %v130
    %2469 = vmatmul.mubr.bf16.gmra.mxu0 %v129
    %v2470 = vpop.f32.mrf.mxu0
    %v2471 = vadd.f32 0.0, %v2470
    %v2472 = vpop.f32.mrf.mxu0
    %v2473 = vpop.f32.mrf.mxu0
    %v2474 = vadd.f32 0.0, %v2473
    %v2475 = vpop.f32.mrf.mxu0
    %2476 = vdwg.mxu0
    %2477 = vmatprep.subr.bf16.mxu0 0
    %2478 = vmatpush1.bf16.msra.mxu0 %v1259
    %2479 = vmatprep.subr.bf16.mxu0 0
    %2480 = vmatpush1.bf16.msra.mxu0 %v1250
    %2481 = vmatprep.subr.bf16.mxu0 0
    %2482 = vmatpush1.bf16.msra.mxu0 %v1241
    %2483 = vmatprep.subr.bf16.mxu0 0
    %2484 = vmatpush1.bf16.msra.mxu0 %v1232
    %2485 = vmatprep.subr.bf16.mxu0 0
    %2486 = vmatpush1.bf16.msra.mxu0 %v1223
    %2487 = vmatprep.subr.bf16.mxu0 0
    %2488 = vmatpush1.bf16.msra.mxu0 %v1214
    %2489 = vmatprep.subr.bf16.mxu0 0
    %2490 = vmatpush1.bf16.msra.mxu0 %v1205
    %2491 = vmatprep.subr.bf16.mxu0 0
    %2492 = vmatpush1.bf16.msra.mxu0 %v1196
    %2493 = vmatprep.subr.bf16.mxu0 0
    %2494 = vmatpush2.bf16.msra.mxu0 0
    %2495 = vmatprep.subr.bf16.mxu0 0
    %2496 = vmatpush2.bf16.msra.mxu0 0
    %2497 = vmatprep.subr.bf16.mxu0 0
    %2498 = vmatpush2.bf16.msra.mxu0 0
    %2499 = vmatprep.subr.bf16.mxu0 0
    %2500 = vmatpush2.bf16.msra.mxu0 0
    %2501 = vmatprep.subr.bf16.mxu0 0
    %2502 = vmatpush2.bf16.msra.mxu0 0
    %2503 = vmatprep.subr.bf16.mxu0 0
    %2504 = vmatpush2.bf16.msra.mxu0 0
    %2505 = vmatprep.subr.bf16.mxu0 0
    %2506 = vmatpush2.bf16.msra.mxu0 0
    %2507 = vmatprep.subr.bf16.mxu0 0
    %2508 = vmatpush2.bf16.msra.mxu0 0
    %2509 = vmatprep.mubr.bf16.mxu0 0
    %2510 = vmatmul.mubr.bf16.gmra.mxu0 %v110
    %v2511 = vpop.f32.mrf.mxu0
    %v2512 = vadd.f32 %v2415, %v2511
    %v2513 = vpop.f32.mrf.mxu0
    %v2514 = vpop.f32.mrf.mxu0
    %v2515 = vadd.f32 %v2418, %v2514
    %v2516 = vpop.f32.mrf.mxu0
    %2517 = vmatprep.mubr.bf16.mxu0 0
    %2518 = vmatmul.mubr.bf16.gmra.mxu0 %v113
    %v2519 = vpop.f32.mrf.mxu0
    %v2520 = vadd.f32 %v2423, %v2519
    %v2521 = vpop.f32.mrf.mxu0
    %v2522 = vpop.f32.mrf.mxu0
    %v2523 = vadd.f32 %v2426, %v2522
    %v2524 = vpop.f32.mrf.mxu0
    %2525 = vmatprep.mubr.bf16.mxu0 0
    %2526 = vmatmul.mubr.bf16.gmra.mxu0 %v116
    %v2527 = vpop.f32.mrf.mxu0
    %v2528 = vadd.f32 %v2431, %v2527
    %v2529 = vpop.f32.mrf.mxu0
    %v2530 = vpop.f32.mrf.mxu0
    %v2531 = vadd.f32 %v2434, %v2530
    %v2532 = vpop.f32.mrf.mxu0
    %2533 = vmatprep.mubr.bf16.mxu0 0
    %2534 = vmatmul.mubr.bf16.gmra.mxu0 %v119
    %v2535 = vpop.f32.mrf.mxu0
    %v2536 = vadd.f32 %v2439, %v2535
    %v2537 = vpop.f32.mrf.mxu0
    %v2538 = vpop.f32.mrf.mxu0
    %v2539 = vadd.f32 %v2442, %v2538
    %v2540 = vpop.f32.mrf.mxu0
    %2541 = vmatprep.mubr.bf16.mxu0 0
    %2542 = vmatmul.mubr.bf16.gmra.mxu0 %v122
    %v2543 = vpop.f32.mrf.mxu0
    %v2544 = vadd.f32 %v2447, %v2543
    %v2545 = vpop.f32.mrf.mxu0
    %v2546 = vpop.f32.mrf.mxu0
    %v2547 = vadd.f32 %v2450, %v2546
    %v2548 = vpop.f32.mrf.mxu0
    %2549 = vmatprep.mubr.bf16.mxu0 0
    %2550 = vmatmul.mubr.bf16.gmra.mxu0 %v125
    %v2551 = vpop.f32.mrf.mxu0
    %v2552 = vadd.f32 %v2455, %v2551
    %v2553 = vpop.f32.mrf.mxu0
    %v2554 = vpop.f32.mrf.mxu0
    %v2555 = vadd.f32 %v2458, %v2554
    %v2556 = vpop.f32.mrf.mxu0
    %2557 = vmatprep.mubr.bf16.mxu0 0
    %2558 = vmatmul.mubr.bf16.gmra.mxu0 %v128
    %v2559 = vpop.f32.mrf.mxu0
    %v2560 = vadd.f32 %v2463, %v2559
    %v2561 = vpop.f32.mrf.mxu0
    %v2562 = vpop.f32.mrf.mxu0
    %v2563 = vadd.f32 %v2466, %v2562
    %v2564 = vpop.f32.mrf.mxu0
    %2565 = vmatprep.mubr.bf16.mxu0 0
    %2566 = vmatmul.mubr.bf16.gmra.mxu0 %v131
    %v2567 = vpop.f32.mrf.mxu0
    %v2568 = vadd.f32 %v2471, %v2567
    %v2569 = vpop.f32.mrf.mxu0
    %v2570 = vpop.f32.mrf.mxu0
    %v2571 = vadd.f32 %v2474, %v2570
    %v2572 = vpop.f32.mrf.mxu0
    %2573 = vdwg.mxu0
    %v2574 = vpack.c.bf16 %v1628, %v1624
    %v2575 = vpack.c.bf16 %v1630, %v1626
    %v2576 = vpack.c.bf16 %v1854, %v1850
    %v2577 = vpack.c.bf16 %v1856, %v1852
    %v2578 = vpack.c.bf16 %v2080, %v2076
    %v2579 = vpack.c.bf16 %v2082, %v2078
    %v2580 = vpack.c.bf16 %v2306, %v2302
    %v2581 = vpack.c.bf16 %v2308, %v2304
    %v2582 = vpack.c.bf16 %v2515, %v2512
    %v2583 = vpack.c.bf16 %v1638, %v1634
    %v2584 = vpack.c.bf16 %v1640, %v1636
    %v2585 = vpack.c.bf16 %v1864, %v1860
    %v2586 = vpack.c.bf16 %v1866, %v1862
    %v2587 = vpack.c.bf16 %v2090, %v2086
    %v2588 = vpack.c.bf16 %v2092, %v2088
    %v2589 = vpack.c.bf16 %v2316, %v2312
    %v2590 = vpack.c.bf16 %v2318, %v2314
    %v2591 = vpack.c.bf16 %v2523, %v2520
    %v2592 = vpack.c.bf16 %v1648, %v1644
    %v2593 = vpack.c.bf16 %v1650, %v1646
    %v2594 = vpack.c.bf16 %v1874, %v1870
    %v2595 = vpack.c.bf16 %v1876, %v1872
    %v2596 = vpack.c.bf16 %v2100, %v2096
    %v2597 = vpack.c.bf16 %v2102, %v2098
    %v2598 = vpack.c.bf16 %v2326, %v2322
    %v2599 = vpack.c.bf16 %v2328, %v2324
    %v2600 = vpack.c.bf16 %v2531, %v2528
    %v2601 = vpack.c.bf16 %v1658, %v1654
    %v2602 = vpack.c.bf16 %v1660, %v1656
    %v2603 = vpack.c.bf16 %v1884, %v1880
    %v2604 = vpack.c.bf16 %v1886, %v1882
    %v2605 = vpack.c.bf16 %v2110, %v2106
    %v2606 = vpack.c.bf16 %v2112, %v2108
    %v2607 = vpack.c.bf16 %v2336, %v2332
    %v2608 = vpack.c.bf16 %v2338, %v2334
    %v2609 = vpack.c.bf16 %v2539, %v2536
    %v2610 = vpack.c.bf16 %v1668, %v1664
    %v2611 = vpack.c.bf16 %v1670, %v1666
    %v2612 = vpack.c.bf16 %v1894, %v1890
    %v2613 = vpack.c.bf16 %v1896, %v1892
    %v2614 = vpack.c.bf16 %v2120, %v2116
    %v2615 = vpack.c.bf16 %v2122, %v2118
    %v2616 = vpack.c.bf16 %v2346, %v2342
    %v2617 = vpack.c.bf16 %v2348, %v2344
    %v2618 = vpack.c.bf16 %v2547, %v2544
    %v2619 = vpack.c.bf16 %v1678, %v1674
    %v2620 = vpack.c.bf16 %v1680, %v1676
    %v2621 = vpack.c.bf16 %v1904, %v1900
    %v2622 = vpack.c.bf16 %v1906, %v1902
    %v2623 = vpack.c.bf16 %v2130, %v2126
    %v2624 = vpack.c.bf16 %v2132, %v2128
    %v2625 = vpack.c.bf16 %v2356, %v2352
    %v2626 = vpack.c.bf16 %v2358, %v2354
    %v2627 = vpack.c.bf16 %v2555, %v2552
    %v2628 = vpack.c.bf16 %v1688, %v1684
    %v2629 = vpack.c.bf16 %v1690, %v1686
    %v2630 = vpack.c.bf16 %v1914, %v1910
    %v2631 = vpack.c.bf16 %v1916, %v1912
    %v2632 = vpack.c.bf16 %v2140, %v2136
    %v2633 = vpack.c.bf16 %v2142, %v2138
    %v2634 = vpack.c.bf16 %v2366, %v2362
    %v2635 = vpack.c.bf16 %v2368, %v2364
    %v2636 = vpack.c.bf16 %v2563, %v2560
    %v2637 = vpack.c.bf16 %v1698, %v1694
    %v2638 = vpack.c.bf16 %v1700, %v1696
    %v2639 = vpack.c.bf16 %v1924, %v1920
    %v2640 = vpack.c.bf16 %v1926, %v1922
    %v2641 = vpack.c.bf16 %v2150, %v2146
    %v2642 = vpack.c.bf16 %v2152, %v2148
    %v2643 = vpack.c.bf16 %v2376, %v2372
    %v2644 = vpack.c.bf16 %v2378, %v2374
    %v2645 = vpack.c.bf16 %v2571, %v2568
    %v2646 = vlaneseq
    %v2647 = vshrl.u32 %v2646, 7
    %v2648 = vadd.s32 %v2647, 8
    %v2649 = vadd.s32 %v2647, 16
    %v2650 = vadd.s32 %v2647, 24
    %v2651 = vadd.s32 %v2647, 32
    %v2652 = vadd.s32 %v2647, 40
    %v2653 = vadd.s32 %v2647, 48
    %v2654 = vadd.s32 %v2647, 56
    %v2655 = vlaneseq
    %v2656 = vand.u32 %v2655, 127
    %vm2657 = vcmp.le.s32.totalorder %v2656, %v2647
    %vm2658 = vcmp.le.s32.totalorder %v2656, %v2648
    %vm2659 = vcmp.le.s32.totalorder %v2656, %v2649
    %vm2660 = vcmp.le.s32.totalorder %v2656, %v2650
    %vm2661 = vcmp.le.s32.totalorder %v2656, %v2651
    %vm2662 = vcmp.le.s32.totalorder %v2656, %v2652
    %vm2663 = vcmp.le.s32.totalorder %v2656, %v2653
    %vm2664 = vcmp.le.s32.totalorder %v2656, %v2654
    %v2665 = vld [vmem:[%s3] sm:$0x7]
    %vm2666 = vcmask 523264
    %v2668 = vsel %vm2666, %v2574, 0
    %v2671 = vsel %vm2666, %v2583, 0
    %v2674 = vsel %vm2666, %v2592, 0
    %v2677 = vsel %vm2666, %v2601, 0
    %v2680 = vsel %vm2666, %v2577, 0
    %v2683 = vsel %vm2666, %v2586, 0
    %v2686 = vsel %vm2666, %v2595, 0
    %v2689 = vsel %vm2666, %v2604, 0
    %2691 = vmatprep.subr.bf16.mxu0 0
    %2692 = vmatpush1.bf16.xpose.msra.mxu0 0
    %2693 = vmatprep.subr.bf16.mxu0 0
    %2694 = vmatpush1.bf16.xpose.msra.mxu0 0
    %2695 = vmatprep.subr.bf16.mxu0 0
    %2696 = vmatpush1.bf16.xpose.msra.mxu0 0
    %2697 = vmatprep.subr.bf16.mxu0 0
    %2698 = vmatpush1.bf16.xpose.msra.mxu0 0
    %2699 = vmatprep.subr.bf16.mxu0 0
    %2700 = vmatpush1.bf16.xpose.msra.mxu0 %v2689
    %2701 = vmatprep.subr.bf16.mxu0 0
    %2702 = vmatpush1.bf16.xpose.msra.mxu0 %v2686
    %2703 = vmatprep.subr.bf16.mxu0 0
    %2704 = vmatpush1.bf16.xpose.msra.mxu0 %v2683
    %2705 = vmatprep.subr.bf16.mxu0 0
    %2706 = vmatpush1.bf16.xpose.msra.mxu0 %v2680
    %2707 = vmatprep.subr.bf16.mxu0 0
    %2708 = vmatpush2.bf16.xpose.msra.mxu0 0
    %2709 = vmatprep.subr.bf16.mxu0 0
    %2710 = vmatpush2.bf16.xpose.msra.mxu0 0
    %2711 = vmatprep.subr.bf16.mxu0 0
    %2712 = vmatpush2.bf16.xpose.msra.mxu0 0
    %2713 = vmatprep.subr.bf16.mxu0 0
    %2714 = vmatpush2.bf16.xpose.msra.mxu0 0
    %2715 = vmatprep.subr.bf16.mxu0 0
    %2716 = vmatpush2.bf16.xpose.msra.mxu0 0
    %2717 = vmatprep.subr.bf16.mxu0 0
    %2718 = vmatpush2.bf16.xpose.msra.mxu0 0
    %2719 = vmatprep.subr.bf16.mxu0 0
    %2720 = vmatpush2.bf16.xpose.msra.mxu0 0
    %2721 = vmatprep.subr.bf16.mxu0 0
    %2722 = vmatpush2.bf16.xpose.msra.mxu0 0
    %2723 = vmatprep.mubr.bf16.mxu0 0
    %2724 = vmatmul.mubr.bf16.gmra.mxu0 %v2668
    %v2725 = vpop.f32.mrf.mxu0
    %v2726 = vadd.f32 0.0, %v2725
    %v2727 = vpop.f32.mrf.mxu0
    %v2728 = vpop.f32.mrf.mxu0
    %v2729 = vadd.f32 0.0, %v2728
    %v2730 = vpop.f32.mrf.mxu0
    %2731 = vmatprep.mubr.bf16.mxu0 0
    %2732 = vmatmul.mubr.bf16.gmra.mxu0 %v2671
    %v2733 = vpop.f32.mrf.mxu0
    %v2734 = vadd.f32 0.0, %v2733
    %v2735 = vpop.f32.mrf.mxu0
    %v2736 = vpop.f32.mrf.mxu0
    %v2737 = vadd.f32 0.0, %v2736
    %v2738 = vpop.f32.mrf.mxu0
    %2739 = vmatprep.mubr.bf16.mxu0 0
    %2740 = vmatmul.mubr.bf16.gmra.mxu0 %v2674
    %v2741 = vpop.f32.mrf.mxu0
    %v2742 = vadd.f32 0.0, %v2741
    %v2743 = vpop.f32.mrf.mxu0
    %v2744 = vpop.f32.mrf.mxu0
    %v2745 = vadd.f32 0.0, %v2744
    %v2746 = vpop.f32.mrf.mxu0
    %2747 = vmatprep.mubr.bf16.mxu0 0
    %2748 = vmatmul.mubr.bf16.gmra.mxu0 %v2677
    %v2749 = vpop.f32.mrf.mxu0
    %v2750 = vadd.f32 0.0, %v2749
    %v2751 = vpop.f32.mrf.mxu0
    %v2752 = vpop.f32.mrf.mxu0
    %v2753 = vadd.f32 0.0, %v2752
    %v2754 = vpop.f32.mrf.mxu0
    %2755 = vdwg.mxu0
    %v2756 = vsel %vm2657, %v2726, -inf
    %v2757 = vsel %vm2658, %v2729, -inf
    %v2758 = vsel %vm2659, %v2734, -inf
    %v2759 = vsel %vm2660, %v2737, -inf
    %v2760 = vsel %vm2661, %v2742, -inf
    %v2761 = vsel %vm2662, %v2745, -inf
    %v2762 = vsel %vm2663, %v2750, -inf
    %v2763 = vsel %vm2664, %v2753, -inf
    %v2764 = vsel %vm2666, %v2756, -inf
    %2765 = vmax.xlane.f32.xlu0 %v2764
    %v2766 = vpop.xlane.xlu0 %2765
    %v2767 = vsel %vm2666, %v2757, -inf
    %2768 = vmax.xlane.f32.xlu0 %v2767
    %v2769 = vpop.xlane.xlu0 %2768
    %v2770 = vsel %vm2666, %v2758, -inf
    %2771 = vmax.xlane.f32.xlu0 %v2770
    %v2772 = vpop.xlane.xlu0 %2771
    %v2773 = vsel %vm2666, %v2759, -inf
    %2774 = vmax.xlane.f32.xlu0 %v2773
    %v2775 = vpop.xlane.xlu0 %2774
    %v2776 = vsel %vm2666, %v2760, -inf
    %2777 = vmax.xlane.f32.xlu0 %v2776
    %v2778 = vpop.xlane.xlu0 %2777
    %v2779 = vsel %vm2666, %v2761, -inf
    %2780 = vmax.xlane.f32.xlu0 %v2779
    %v2781 = vpop.xlane.xlu0 %2780
    %v2782 = vsel %vm2666, %v2762, -inf
    %2783 = vmax.xlane.f32.xlu0 %v2782
    %v2784 = vpop.xlane.xlu0 %2783
    %v2785 = vsel %vm2666, %v2763, -inf
    %2786 = vmax.xlane.f32.xlu0 %v2785
    %v2787 = vpop.xlane.xlu0 %2786
    %v2788 = vsub.f32 %v2756, %v2766
    %v2789 = vsub.f32 %v2757, %v2769
    %v2790 = vsub.f32 %v2758, %v2772
    %v2791 = vsub.f32 %v2759, %v2775
    %v2792 = vsub.f32 %v2760, %v2778
    %v2793 = vsub.f32 %v2761, %v2781
    %v2794 = vsub.f32 %v2762, %v2784
    %v2795 = vsub.f32 %v2763, %v2787
    %v2796 = vmul.f32 %v2788, 1.442695
    %v2797 = vpow.pop %v2796
    %v2798 = vmul.f32 %v2789, 1.442695
    %v2799 = vpow.pop %v2798
    %v2800 = vmul.f32 %v2790, 1.442695
    %v2801 = vpow.pop %v2800
    %v2802 = vmul.f32 %v2791, 1.442695
    %v2803 = vpow.pop %v2802
    %v2804 = vmul.f32 %v2792, 1.442695
    %v2805 = vpow.pop %v2804
    %v2806 = vmul.f32 %v2793, 1.442695
    %v2807 = vpow.pop %v2806
    %v2808 = vmul.f32 %v2794, 1.442695
    %v2809 = vpow.pop %v2808
    %v2810 = vmul.f32 %v2795, 1.442695
    %v2811 = vpow.pop %v2810
    %v2812 = vsel %vm2666, %v2797, 0.0
    %2813 = vadd.xlane.f32.xlu0 %v2812
    %v2814 = vpop.xlane.xlu0 %2813
    %v2815 = vsel %vm2666, %v2799, 0.0
    %2816 = vadd.xlane.f32.xlu0 %v2815
    %v2817 = vpop.xlane.xlu0 %2816
    %v2818 = vsel %vm2666, %v2801, 0.0
    %2819 = vadd.xlane.f32.xlu0 %v2818
    %v2820 = vpop.xlane.xlu0 %2819
    %v2821 = vsel %vm2666, %v2803, 0.0
    %2822 = vadd.xlane.f32.xlu0 %v2821
    %v2823 = vpop.xlane.xlu0 %2822
    %v2824 = vsel %vm2666, %v2805, 0.0
    %2825 = vadd.xlane.f32.xlu0 %v2824
    %v2826 = vpop.xlane.xlu0 %2825
    %v2827 = vsel %vm2666, %v2807, 0.0
    %2828 = vadd.xlane.f32.xlu0 %v2827
    %v2829 = vpop.xlane.xlu0 %2828
    %v2830 = vsel %vm2666, %v2809, 0.0
    %2831 = vadd.xlane.f32.xlu0 %v2830
    %v2832 = vpop.xlane.xlu0 %2831
    %v2833 = vsel %vm2666, %v2811, 0.0
    %2834 = vadd.xlane.f32.xlu0 %v2833
    %v2835 = vpop.xlane.xlu0 %2834
    %v2836 = vrcp.pop %v2814
    %v2837 = vrcp.pop %v2817
    %v2838 = vrcp.pop %v2820
    %v2839 = vrcp.pop %v2823
    %v2840 = vrcp.pop %v2826
    %v2841 = vrcp.pop %v2829
    %v2842 = vrcp.pop %v2832
    %v2843 = vrcp.pop %v2835
    %v2844 = vmul.f32 %v2797, %v2836
    %v2845 = vmul.f32 %v2799, %v2837
    %v2846 = vmul.f32 %v2801, %v2838
    %v2847 = vmul.f32 %v2803, %v2839
    %v2848 = vmul.f32 %v2805, %v2840
    %v2849 = vmul.f32 %v2807, %v2841
    %v2850 = vmul.f32 %v2809, %v2842
    %v2851 = vmul.f32 %v2811, %v2843
    %v2852 = vpack.c.bf16 %v2845, %v2844
    %v2853 = vpack.c.bf16 %v2847, %v2846
    %v2854 = vpack.c.bf16 %v2849, %v2848
    %v2855 = vpack.c.bf16 %v2851, %v2850
    %v2857 = vsel %vm2666, %v2852, 0
    %v2860 = vsel %vm2666, %v2853, 0
    %v2863 = vsel %vm2666, %v2854, 0
    %v2866 = vsel %vm2666, %v2855, 0
    %2868 = vmatprep.subr.bf16.mxu0 0
    %2869 = vmatpush1.bf16.msra.mxu0 0
    %2870 = vmatprep.subr.bf16.mxu0 0
    %2871 = vmatpush1.bf16.msra.mxu0 0
    %2872 = vmatprep.subr.bf16.mxu0 0
    %2873 = vmatpush1.bf16.msra.mxu0 0
    %2874 = vmatprep.subr.bf16.mxu0 0
    %2875 = vmatpush1.bf16.msra.mxu0 0
    %2876 = vmatprep.subr.bf16.mxu0 0
    %2877 = vmatpush1.bf16.msra.mxu0 %v2607
    %2878 = vmatprep.subr.bf16.mxu0 0
    %2879 = vmatpush1.bf16.msra.mxu0 %v2598
    %2880 = vmatprep.subr.bf16.mxu0 0
    %2881 = vmatpush1.bf16.msra.mxu0 %v2589
    %2882 = vmatprep.subr.bf16.mxu0 0
    %2883 = vmatpush1.bf16.msra.mxu0 %v2580
    %2884 = vmatprep.subr.bf16.mxu0 0
    %2885 = vmatpush2.bf16.msra.mxu0 0
    %2886 = vmatprep.subr.bf16.mxu0 0
    %2887 = vmatpush2.bf16.msra.mxu0 0
    %2888 = vmatprep.subr.bf16.mxu0 0
    %2889 = vmatpush2.bf16.msra.mxu0 0
    %2890 = vmatprep.subr.bf16.mxu0 0
    %2891 = vmatpush2.bf16.msra.mxu0 0
    %2892 = vmatprep.subr.bf16.mxu0 0
    %2893 = vmatpush2.bf16.msra.mxu0 0
    %2894 = vmatprep.subr.bf16.mxu0 0
    %2895 = vmatpush2.bf16.msra.mxu0 0
    %2896 = vmatprep.subr.bf16.mxu0 0
    %2897 = vmatpush2.bf16.msra.mxu0 0
    %2898 = vmatprep.subr.bf16.mxu0 0
    %2899 = vmatpush2.bf16.msra.mxu0 0
    %2900 = vmatprep.mubr.bf16.mxu0 0
    %2901 = vmatmul.mubr.bf16.gmra.mxu0 %v2857
    %v2902 = vpop.f32.mrf.mxu0
    %v2903 = vadd.f32 0.0, %v2902
    %v2904 = vpop.f32.mrf.mxu0
    %v2905 = vpop.f32.mrf.mxu0
    %v2906 = vadd.f32 0.0, %v2905
    %v2907 = vpop.f32.mrf.mxu0
    %2908 = vmatprep.mubr.bf16.mxu0 0
    %2909 = vmatmul.mubr.bf16.gmra.mxu0 %v2860
    %v2910 = vpop.f32.mrf.mxu0
    %v2911 = vadd.f32 0.0, %v2910
    %v2912 = vpop.f32.mrf.mxu0
    %v2913 = vpop.f32.mrf.mxu0
    %v2914 = vadd.f32 0.0, %v2913
    %v2915 = vpop.f32.mrf.mxu0
    %2916 = vmatprep.mubr.bf16.mxu0 0
    %2917 = vmatmul.mubr.bf16.gmra.mxu0 %v2863
    %v2918 = vpop.f32.mrf.mxu0
    %v2919 = vadd.f32 0.0, %v2918
    %v2920 = vpop.f32.mrf.mxu0
    %v2921 = vpop.f32.mrf.mxu0
    %v2922 = vadd.f32 0.0, %v2921
    %v2923 = vpop.f32.mrf.mxu0
    %2924 = vmatprep.mubr.bf16.mxu0 0
    %2925 = vmatmul.mubr.bf16.gmra.mxu0 %v2866
    %v2926 = vpop.f32.mrf.mxu0
    %v2927 = vadd.f32 0.0, %v2926
    %v2928 = vpop.f32.mrf.mxu0
    %v2929 = vpop.f32.mrf.mxu0
    %v2930 = vadd.f32 0.0, %v2929
    %v2931 = vpop.f32.mrf.mxu0
    %2932 = vdwg.mxu0
    %v2933 = vpack.c.bf16 %v2906, %v2903
    %v2934 = vpack.c.bf16 %v2914, %v2911
    %v2935 = vpack.c.bf16 %v2922, %v2919
    %v2936 = vpack.c.bf16 %v2930, %v2927
    %v2937 = vld [vmem:[#allocation7] sm:$0xff]
    %v2938 = vld [vmem:[#allocation7 + $0x8] sm:$0xf]
    %v2939 = vld [vmem:[#allocation7 + $0xc] sm:$0xff]
    %v2940 = vld [vmem:[#allocation7 + $0x14] sm:$0xf]
    %v2941 = vld [vmem:[#allocation7 + $0x18] sm:$0xff]
    %v2942 = vld [vmem:[#allocation7 + $0x20] sm:$0xf]
    %v2943 = vld [vmem:[#allocation7 + $0x24] sm:$0xff]
    %v2944 = vld [vmem:[#allocation7 + $0x2c] sm:$0xf]
    %v2945 = vld [vmem:[#allocation7 + $0x30] sm:$0xff]
    %v2946 = vld [vmem:[#allocation7 + $0x38] sm:$0xf]
    %v2947 = vld [vmem:[#allocation7 + $0x3c] sm:$0xff]
    %v2948 = vld [vmem:[#allocation7 + $0x44] sm:$0xf]
    %v2949 = vld [vmem:[#allocation7 + $0x48] sm:$0xff]
    %v2950 = vld [vmem:[#allocation7 + $0x50] sm:$0xf]
    %v2951 = vld [vmem:[#allocation7 + $0x54] sm:$0xff]
    %v2952 = vld [vmem:[#allocation7 + $0x5c] sm:$0xf]
    %2957 = vrot.lane.b32.xlu0 %v2574, 64
    %v2958 = vpop.permute.xlu0 %2957
    %2959 = vrot.lane.b32.xlu0 %v2583, 64
    %v2960 = vpop.permute.xlu0 %2959
    %2961 = vrot.lane.b32.xlu0 %v2592, 64
    %v2962 = vpop.permute.xlu0 %2961
    %2963 = vrot.lane.b32.xlu0 %v2601, 64
    %v2964 = vpop.permute.xlu0 %2963
    %2969 = vrot.lane.b32.xlu0 %v2577, 64
    %v2970 = vpop.permute.xlu0 %2969
    %2971 = vrot.lane.b32.xlu0 %v2586, 64
    %v2972 = vpop.permute.xlu0 %2971
    %2973 = vrot.lane.b32.xlu0 %v2595, 64
    %v2974 = vpop.permute.xlu0 %2973
    %2975 = vrot.lane.b32.xlu0 %v2604, 64
    %v2976 = vpop.permute.xlu0 %2975
    %v2978 = vsel %vm2666, %v2958, 0
    %v2981 = vsel %vm2666, %v2960, 0
    %v2984 = vsel %vm2666, %v2962, 0
    %v2987 = vsel %vm2666, %v2964, 0
    %v2990 = vsel %vm2666, %v2970, 0
    %v2993 = vsel %vm2666, %v2972, 0
    %v2996 = vsel %vm2666, %v2974, 0
    %v2999 = vsel %vm2666, %v2976, 0
    %3001 = vmatprep.subr.bf16.mxu0 0
    %3002 = vmatpush1.bf16.xpose.msra.mxu0 0
    %3003 = vmatprep.subr.bf16.mxu0 0
    %3004 = vmatpush1.bf16.xpose.msra.mxu0 0
    %3005 = vmatprep.subr.bf16.mxu0 0
    %3006 = vmatpush1.bf16.xpose.msra.mxu0 0
    %3007 = vmatprep.subr.bf16.mxu0 0
    %3008 = vmatpush1.bf16.xpose.msra.mxu0 0
    %3009 = vmatprep.subr.bf16.mxu0 0
    %3010 = vmatpush1.bf16.xpose.msra.mxu0 %v2999
    %3011 = vmatprep.subr.bf16.mxu0 0
    %3012 = vmatpush1.bf16.xpose.msra.mxu0 %v2996
    %3013 = vmatprep.subr.bf16.mxu0 0
    %3014 = vmatpush1.bf16.xpose.msra.mxu0 %v2993
    %3015 = vmatprep.subr.bf16.mxu0 0
    %3016 = vmatpush1.bf16.xpose.msra.mxu0 %v2990
    %3017 = vmatprep.subr.bf16.mxu0 0
    %3018 = vmatpush2.bf16.xpose.msra.mxu0 0
    %3019 = vmatprep.subr.bf16.mxu0 0
    %3020 = vmatpush2.bf16.xpose.msra.mxu0 0
    %3021 = vmatprep.subr.bf16.mxu0 0
    %3022 = vmatpush2.bf16.xpose.msra.mxu0 0
    %3023 = vmatprep.subr.bf16.mxu0 0
    %3024 = vmatpush2.bf16.xpose.msra.mxu0 0
    %3025 = vmatprep.subr.bf16.mxu0 0
    %3026 = vmatpush2.bf16.xpose.msra.mxu0 0
    %3027 = vmatprep.subr.bf16.mxu0 0
    %3028 = vmatpush2.bf16.xpose.msra.mxu0 0
    %3029 = vmatprep.subr.bf16.mxu0 0
    %3030 = vmatpush2.bf16.xpose.msra.mxu0 0
    %3031 = vmatprep.subr.bf16.mxu0 0
    %3032 = vmatpush2.bf16.xpose.msra.mxu0 0
    %3033 = vmatprep.mubr.bf16.mxu0 0
    %3034 = vmatmul.mubr.bf16.gmra.mxu0 %v2978
    %v3035 = vpop.f32.mrf.mxu0
    %v3036 = vadd.f32 0.0, %v3035
    %v3037 = vpop.f32.mrf.mxu0
    %v3038 = vpop.f32.mrf.mxu0
    %v3039 = vadd.f32 0.0, %v3038
    %v3040 = vpop.f32.mrf.mxu0
    %3041 = vmatprep.mubr.bf16.mxu0 0
    %3042 = vmatmul.mubr.bf16.gmra.mxu0 %v2981
    %v3043 = vpop.f32.mrf.mxu0
    %v3044 = vadd.f32 0.0, %v3043
    %v3045 = vpop.f32.mrf.mxu0
    %v3046 = vpop.f32.mrf.mxu0
    %v3047 = vadd.f32 0.0, %v3046
    %v3048 = vpop.f32.mrf.mxu0
    %3049 = vmatprep.mubr.bf16.mxu0 0
    %3050 = vmatmul.mubr.bf16.gmra.mxu0 %v2984
    %v3051 = vpop.f32.mrf.mxu0
    %v3052 = vadd.f32 0.0, %v3051
    %v3053 = vpop.f32.mrf.mxu0
    %v3054 = vpop.f32.mrf.mxu0
    %v3055 = vadd.f32 0.0, %v3054
    %v3056 = vpop.f32.mrf.mxu0
    %3057 = vmatprep.mubr.bf16.mxu0 0
    %3058 = vmatmul.mubr.bf16.gmra.mxu0 %v2987
    %v3059 = vpop.f32.mrf.mxu0
    %v3060 = vadd.f32 0.0, %v3059
    %v3061 = vpop.f32.mrf.mxu0
    %v3062 = vpop.f32.mrf.mxu0
    %v3063 = vadd.f32 0.0, %v3062
    %v3064 = vpop.f32.mrf.mxu0
    %3065 = vdwg.mxu0
    %v3066 = vsel %vm2657, %v3036, -inf
    %v3067 = vsel %vm2658, %v3039, -inf
    %v3068 = vsel %vm2659, %v3044, -inf
    %v3069 = vsel %vm2660, %v3047, -inf
    %v3070 = vsel %vm2661, %v3052, -inf
    %v3071 = vsel %vm2662, %v3055, -inf
    %v3072 = vsel %vm2663, %v3060, -inf
    %v3073 = vsel %vm2664, %v3063, -inf
    %v3074 = vsel %vm2666, %v3066, -inf
    %3075 = vmax.xlane.f32.xlu0 %v3074
    %v3076 = vpop.xlane.xlu0 %3075
    %v3077 = vsel %vm2666, %v3067, -inf
    %3078 = vmax.xlane.f32.xlu0 %v3077
    %v3079 = vpop.xlane.xlu0 %3078
    %v3080 = vsel %vm2666, %v3068, -inf
    %3081 = vmax.xlane.f32.xlu0 %v3080
    %v3082 = vpop.xlane.xlu0 %3081
    %v3083 = vsel %vm2666, %v3069, -inf
    %3084 = vmax.xlane.f32.xlu0 %v3083
    %v3085 = vpop.xlane.xlu0 %3084
    %v3086 = vsel %vm2666, %v3070, -inf
    %3087 = vmax.xlane.f32.xlu0 %v3086
    %v3088 = vpop.xlane.xlu0 %3087
    %v3089 = vsel %vm2666, %v3071, -inf
    %3090 = vmax.xlane.f32.xlu0 %v3089
    %v3091 = vpop.xlane.xlu0 %3090
    %v3092 = vsel %vm2666, %v3072, -inf
    %3093 = vmax.xlane.f32.xlu0 %v3092
    %v3094 = vpop.xlane.xlu0 %3093
    %v3095 = vsel %vm2666, %v3073, -inf
    %3096 = vmax.xlane.f32.xlu0 %v3095
    %v3097 = vpop.xlane.xlu0 %3096
    %v3098 = vsub.f32 %v3066, %v3076
    %v3099 = vsub.f32 %v3067, %v3079
    %v3100 = vsub.f32 %v3068, %v3082
    %v3101 = vsub.f32 %v3069, %v3085
    %v3102 = vsub.f32 %v3070, %v3088
    %v3103 = vsub.f32 %v3071, %v3091
    %v3104 = vsub.f32 %v3072, %v3094
    %v3105 = vsub.f32 %v3073, %v3097
    %v3106 = vmul.f32 %v3098, 1.442695
    %v3107 = vpow.pop %v3106
    %v3108 = vmul.f32 %v3099, 1.442695
    %v3109 = vpow.pop %v3108
    %v3110 = vmul.f32 %v3100, 1.442695
    %v3111 = vpow.pop %v3110
    %v3112 = vmul.f32 %v3101, 1.442695
    %v3113 = vpow.pop %v3112
    %v3114 = vmul.f32 %v3102, 1.442695
    %v3115 = vpow.pop %v3114
    %v3116 = vmul.f32 %v3103, 1.442695
    %v3117 = vpow.pop %v3116
    %v3118 = vmul.f32 %v3104, 1.442695
    %v3119 = vpow.pop %v3118
    %v3120 = vmul.f32 %v3105, 1.442695
    %v3121 = vpow.pop %v3120
    %v3122 = vsel %vm2666, %v3107, 0.0
    %3123 = vadd.xlane.f32.xlu0 %v3122
    %v3124 = vpop.xlane.xlu0 %3123
    %v3125 = vsel %vm2666, %v3109, 0.0
    %3126 = vadd.xlane.f32.xlu0 %v3125
    %v3127 = vpop.xlane.xlu0 %3126
    %v3128 = vsel %vm2666, %v3111, 0.0
    %3129 = vadd.xlane.f32.xlu0 %v3128
    %v3130 = vpop.xlane.xlu0 %3129
    %v3131 = vsel %vm2666, %v3113, 0.0
    %3132 = vadd.xlane.f32.xlu0 %v3131
    %v3133 = vpop.xlane.xlu0 %3132
    %v3134 = vsel %vm2666, %v3115, 0.0
    %3135 = vadd.xlane.f32.xlu0 %v3134
    %v3136 = vpop.xlane.xlu0 %3135
    %v3137 = vsel %vm2666, %v3117, 0.0
    %3138 = vadd.xlane.f32.xlu0 %v3137
    %v3139 = vpop.xlane.xlu0 %3138
    %v3140 = vsel %vm2666, %v3119, 0.0
    %3141 = vadd.xlane.f32.xlu0 %v3140
    %v3142 = vpop.xlane.xlu0 %3141
    %v3143 = vsel %vm2666, %v3121, 0.0
    %3144 = vadd.xlane.f32.xlu0 %v3143
    %v3145 = vpop.xlane.xlu0 %3144
    %v3146 = vrcp.pop %v3124
    %v3147 = vrcp.pop %v3127
    %v3148 = vrcp.pop %v3130
    %v3149 = vrcp.pop %v3133
    %v3150 = vrcp.pop %v3136
    %v3151 = vrcp.pop %v3139
    %v3152 = vrcp.pop %v3142
    %v3153 = vrcp.pop %v3145
    %v3154 = vmul.f32 %v3107, %v3146
    %v3155 = vmul.f32 %v3109, %v3147
    %v3156 = vmul.f32 %v3111, %v3148
    %v3157 = vmul.f32 %v3113, %v3149
    %v3158 = vmul.f32 %v3115, %v3150
    %v3159 = vmul.f32 %v3117, %v3151
    %v3160 = vmul.f32 %v3119, %v3152
    %v3161 = vmul.f32 %v3121, %v3153
    %v3162 = vpack.c.bf16 %v3155, %v3154
    %v3163 = vpack.c.bf16 %v3157, %v3156
    %v3164 = vpack.c.bf16 %v3159, %v3158
    %v3165 = vpack.c.bf16 %v3161, %v3160
    %3170 = vrot.lane.b32.xlu0 %v2580, 64
    %v3171 = vpop.permute.xlu0 %3170
    %3172 = vrot.lane.b32.xlu0 %v2589, 64
    %v3173 = vpop.permute.xlu0 %3172
    %3174 = vrot.lane.b32.xlu0 %v2598, 64
    %v3175 = vpop.permute.xlu0 %3174
    %3176 = vrot.lane.b32.xlu0 %v2607, 64
    %v3177 = vpop.permute.xlu0 %3176
    %v3183 = vsel %vm2666, %v3162, 0
    %v3186 = vsel %vm2666, %v3163, 0
    %v3189 = vsel %vm2666, %v3164, 0
    %v3192 = vsel %vm2666, %v3165, 0
    %3194 = vmatprep.subr.bf16.mxu0 0
    %3195 = vmatpush1.bf16.msra.mxu0 0
    %3196 = vmatprep.subr.bf16.mxu0 0
    %3197 = vmatpush1.bf16.msra.mxu0 0
    %3198 = vmatprep.subr.bf16.mxu0 0
    %3199 = vmatpush1.bf16.msra.mxu0 0
    %3200 = vmatprep.subr.bf16.mxu0 0
    %3201 = vmatpush1.bf16.msra.mxu0 0
    %3202 = vmatprep.subr.bf16.mxu0 0
    %3203 = vmatpush1.bf16.msra.mxu0 %v3177
    %3204 = vmatprep.subr.bf16.mxu0 0
    %3205 = vmatpush1.bf16.msra.mxu0 %v3175
    %3206 = vmatprep.subr.bf16.mxu0 0
    %3207 = vmatpush1.bf16.msra.mxu0 %v3173
    %3208 = vmatprep.subr.bf16.mxu0 0
    %3209 = vmatpush1.bf16.msra.mxu0 %v3171
    %3210 = vmatprep.subr.bf16.mxu0 0
    %3211 = vmatpush2.bf16.msra.mxu0 0
    %3212 = vmatprep.subr.bf16.mxu0 0
    %3213 = vmatpush2.bf16.msra.mxu0 0
    %3214 = vmatprep.subr.bf16.mxu0 0
    %3215 = vmatpush2.bf16.msra.mxu0 0
    %3216 = vmatprep.subr.bf16.mxu0 0
    %3217 = vmatpush2.bf16.msra.mxu0 0
    %3218 = vmatprep.subr.bf16.mxu0 0
    %3219 = vmatpush2.bf16.msra.mxu0 0
    %3220 = vmatprep.subr.bf16.mxu0 0
    %3221 = vmatpush2.bf16.msra.mxu0 0
    %3222 = vmatprep.subr.bf16.mxu0 0
    %3223 = vmatpush2.bf16.msra.mxu0 0
    %3224 = vmatprep.subr.bf16.mxu0 0
    %3225 = vmatpush2.bf16.msra.mxu0 0
    %3226 = vmatprep.mubr.bf16.mxu0 0
    %3227 = vmatmul.mubr.bf16.gmra.mxu0 %v3183
    %v3228 = vpop.f32.mrf.mxu0
    %v3229 = vadd.f32 0.0, %v3228
    %v3230 = vpop.f32.mrf.mxu0
    %v3231 = vpop.f32.mrf.mxu0
    %v3232 = vadd.f32 0.0, %v3231
    %v3233 = vpop.f32.mrf.mxu0
    %3234 = vmatprep.mubr.bf16.mxu0 0
    %3235 = vmatmul.mubr.bf16.gmra.mxu0 %v3186
    %v3236 = vpop.f32.mrf.mxu0
    %v3237 = vadd.f32 0.0, %v3236
    %v3238 = vpop.f32.mrf.mxu0
    %v3239 = vpop.f32.mrf.mxu0
    %v3240 = vadd.f32 0.0, %v3239
    %v3241 = vpop.f32.mrf.mxu0
    %3242 = vmatprep.mubr.bf16.mxu0 0
    %3243 = vmatmul.mubr.bf16.gmra.mxu0 %v3189
    %v3244 = vpop.f32.mrf.mxu0
    %v3245 = vadd.f32 0.0, %v3244
    %v3246 = vpop.f32.mrf.mxu0
    %v3247 = vpop.f32.mrf.mxu0
    %v3248 = vadd.f32 0.0, %v3247
    %v3249 = vpop.f32.mrf.mxu0
    %3250 = vmatprep.mubr.bf16.mxu0 0
    %3251 = vmatmul.mubr.bf16.gmra.mxu0 %v3192
    %v3252 = vpop.f32.mrf.mxu0
    %v3253 = vadd.f32 0.0, %v3252
    %v3254 = vpop.f32.mrf.mxu0
    %v3255 = vpop.f32.mrf.mxu0
    %v3256 = vadd.f32 0.0, %v3255
    %v3257 = vpop.f32.mrf.mxu0
    %3258 = vdwg.mxu0
    %v3259 = vpack.c.bf16 %v3232, %v3229
    %v3260 = vpack.c.bf16 %v3240, %v3237
    %v3261 = vpack.c.bf16 %v3248, %v3245
    %v3262 = vpack.c.bf16 %v3256, %v3253
    %v3263 = vld [vmem:[#allocation7 + $0x60] sm:$0xff]
    %v3264 = vld [vmem:[#allocation7 + $0x68] sm:$0xf]
    %v3265 = vld [vmem:[#allocation7 + $0x6c] sm:$0xff]
    %v3266 = vld [vmem:[#allocation7 + $0x74] sm:$0xf]
    %v3267 = vld [vmem:[#allocation7 + $0x78] sm:$0xff]
    %v3268 = vld [vmem:[#allocation7 + $0x80] sm:$0xf]
    %v3269 = vld [vmem:[#allocation7 + $0x84] sm:$0xff]
    %v3270 = vld [vmem:[#allocation7 + $0x8c] sm:$0xf]
    %v3271 = vld [vmem:[#allocation7 + $0x90] sm:$0xff]
    %v3272 = vld [vmem:[#allocation7 + $0x98] sm:$0xf]
    %v3273 = vld [vmem:[#allocation7 + $0x9c] sm:$0xff]
    %v3274 = vld [vmem:[#allocation7 + $0xa4] sm:$0xf]
    %v3275 = vld [vmem:[#allocation7 + $0xa8] sm:$0xff]
    %v3276 = vld [vmem:[#allocation7 + $0xb0] sm:$0xf]
    %v3277 = vld [vmem:[#allocation7 + $0xb4] sm:$0xff]
    %v3278 = vld [vmem:[#allocation7 + $0xbc] sm:$0xf]
    %v3295 = vunpack.c.l.b16 %v3263
    %v3296 = vunpack.c.h.b16 %v3263
    %v3297 = vunpack.c.l.b16 %v3264
    %v3298 = vunpack.c.l.b16 %v3265
    %v3299 = vunpack.c.h.b16 %v3265
    %v3300 = vunpack.c.l.b16 %v3266
    %v3301 = vunpack.c.l.b16 %v3267
    %v3302 = vunpack.c.h.b16 %v3267
    %v3303 = vunpack.c.l.b16 %v3268
    %v3304 = vunpack.c.l.b16 %v3269
    %v3305 = vunpack.c.h.b16 %v3269
    %v3306 = vunpack.c.l.b16 %v3270
    %v3307 = vunpack.c.l.b16 %v3271
    %v3308 = vunpack.c.h.b16 %v3271
    %v3309 = vunpack.c.l.b16 %v3272
    %v3310 = vunpack.c.l.b16 %v3273
    %v3311 = vunpack.c.h.b16 %v3273
    %v3312 = vunpack.c.l.b16 %v3274
    %v3313 = vunpack.c.l.b16 %v3275
    %v3314 = vunpack.c.h.b16 %v3275
    %v3315 = vunpack.c.l.b16 %v3276
    %v3316 = vunpack.c.l.b16 %v3277
    %v3317 = vunpack.c.h.b16 %v3277
    %v3318 = vunpack.c.l.b16 %v3278
    %v3319 = vpack.c.b16 %v3298, %v3295
    %v3320 = vpack.c.b16 %v3299, %v3296
    %v3321 = vpack.c.b16 %v3300, %v3297
    %v3322 = vpack.c.b16 %v3304, %v3301
    %v3323 = vpack.c.b16 %v3305, %v3302
    %v3324 = vpack.c.b16 %v3306, %v3303
    %v3325 = vpack.c.b16 %v3310, %v3307
    %v3326 = vpack.c.b16 %v3311, %v3308
    %v3327 = vpack.c.b16 %v3312, %v3309
    %v3328 = vpack.c.b16 %v3316, %v3313
    %v3329 = vpack.c.b16 %v3317, %v3314
    %v3330 = vpack.c.b16 %v3318, %v3315
    %v3344 = vsel %vm2666, %v3259, 0
    %v3347 = vsel %vm2666, %v3260, 0
    %v3350 = vsel %vm2666, %v3261, 0
    %v3353 = vsel %vm2666, %v3262, 0
    %3355 = vmatprep.subr.bf16.mxu0 0
    %3356 = vmatpush1.bf16.msra.mxu0 0
    %3357 = vmatprep.subr.bf16.mxu0 0
    %3358 = vmatpush1.bf16.msra.mxu0 0
    %3359 = vmatprep.subr.bf16.mxu0 0
    %3360 = vmatpush1.bf16.msra.mxu0 0
    %3361 = vmatprep.subr.bf16.mxu0 0
    %3362 = vmatpush1.bf16.msra.mxu0 0
    %3363 = vmatprep.subr.bf16.mxu0 %v3329
    %3364 = vmatpush1.bf16.msra.mxu0 %v3328
    %3365 = vmatprep.subr.bf16.mxu0 %v3326
    %3366 = vmatpush1.bf16.msra.mxu0 %v3325
    %3367 = vmatprep.subr.bf16.mxu0 %v3323
    %3368 = vmatpush1.bf16.msra.mxu0 %v3322
    %3369 = vmatprep.subr.bf16.mxu0 %v3320
    %3370 = vmatpush1.bf16.msra.mxu0 %v3319
    %3371 = vmatprep.subr.bf16.mxu0 0
    %3372 = vmatpush2.bf16.msra.mxu0 0
    %3373 = vmatprep.subr.bf16.mxu0 0
    %3374 = vmatpush2.bf16.msra.mxu0 0
    %3375 = vmatprep.subr.bf16.mxu0 0
    %3376 = vmatpush2.bf16.msra.mxu0 0
    %3377 = vmatprep.subr.bf16.mxu0 0
    %3378 = vmatpush2.bf16.msra.mxu0 0
    %3379 = vmatprep.subr.bf16.mxu0 0
    %3380 = vmatpush2.bf16.msra.mxu0 0
    %3381 = vmatprep.subr.bf16.mxu0 0
    %3382 = vmatpush2.bf16.msra.mxu0 0
    %3383 = vmatprep.subr.bf16.mxu0 0
    %3384 = vmatpush2.bf16.msra.mxu0 0
    %3385 = vmatprep.subr.bf16.mxu0 0
    %3386 = vmatpush2.bf16.msra.mxu0 0
    %3387 = vmatprep.mubr.bf16.mxu0 0
    %3388 = vmatmul.mubr.bf16.gmra.mxu0 %v3344
    %v3389 = vpop.f32.mrf.mxu0
    %v3390 = vadd.f32 0.0, %v3389
    %v3391 = vpop.f32.mrf.mxu0
    %v3392 = vadd.f32 0.0, %v3391
    %v3393 = vpop.f32.mrf.mxu0
    %v3394 = vadd.f32 0.0, %v3393
    %v3395 = vpop.f32.mrf.mxu0
    %v3396 = vadd.f32 0.0, %v3395
    %3397 = vmatprep.mubr.bf16.mxu0 0
    %3398 = vmatmul.mubr.bf16.gmra.mxu0 %v3347
    %v3399 = vpop.f32.mrf.mxu0
    %v3400 = vadd.f32 0.0, %v3399
    %v3401 = vpop.f32.mrf.mxu0
    %v3402 = vadd.f32 0.0, %v3401
    %v3403 = vpop.f32.mrf.mxu0
    %v3404 = vadd.f32 0.0, %v3403
    %v3405 = vpop.f32.mrf.mxu0
    %v3406 = vadd.f32 0.0, %v3405
    %3407 = vmatprep.mubr.bf16.mxu0 0
    %3408 = vmatmul.mubr.bf16.gmra.mxu0 %v3350
    %v3409 = vpop.f32.mrf.mxu0
    %v3410 = vadd.f32 0.0, %v3409
    %v3411 = vpop.f32.mrf.mxu0
    %v3412 = vadd.f32 0.0, %v3411
    %v3413 = vpop.f32.mrf.mxu0
    %v3414 = vadd.f32 0.0, %v3413
    %v3415 = vpop.f32.mrf.mxu0
    %v3416 = vadd.f32 0.0, %v3415
    %3417 = vmatprep.mubr.bf16.mxu0 0
    %3418 = vmatmul.mubr.bf16.gmra.mxu0 %v3353
    %v3419 = vpop.f32.mrf.mxu0
    %v3420 = vadd.f32 0.0, %v3419
    %v3421 = vpop.f32.mrf.mxu0
    %v3422 = vadd.f32 0.0, %v3421
    %v3423 = vpop.f32.mrf.mxu0
    %v3424 = vadd.f32 0.0, %v3423
    %v3425 = vpop.f32.mrf.mxu0
    %v3426 = vadd.f32 0.0, %v3425
    %3427 = vdwg.mxu0
    %3428 = vmatprep.subr.bf16.mxu0 0
    %3429 = vmatpush1.bf16.msra.mxu0 0
    %3430 = vmatprep.subr.bf16.mxu0 0
    %3431 = vmatpush1.bf16.msra.mxu0 0
    %3432 = vmatprep.subr.bf16.mxu0 0
    %3433 = vmatpush1.bf16.msra.mxu0 0
    %3434 = vmatprep.subr.bf16.mxu0 0
    %3435 = vmatpush1.bf16.msra.mxu0 0
    %3436 = vmatprep.subr.bf16.mxu0 0
    %3437 = vmatpush1.bf16.msra.mxu0 %v3330
    %3438 = vmatprep.subr.bf16.mxu0 0
    %3439 = vmatpush1.bf16.msra.mxu0 %v3327
    %3440 = vmatprep.subr.bf16.mxu0 0
    %3441 = vmatpush1.bf16.msra.mxu0 %v3324
    %3442 = vmatprep.subr.bf16.mxu0 0
    %3443 = vmatpush1.bf16.msra.mxu0 %v3321
    %3444 = vmatprep.subr.bf16.mxu0 0
    %3445 = vmatpush2.bf16.msra.mxu0 0
    %3446 = vmatprep.subr.bf16.mxu0 0
    %3447 = vmatpush2.bf16.msra.mxu0 0
    %3448 = vmatprep.subr.bf16.mxu0 0
    %3449 = vmatpush2.bf16.msra.mxu0 0
    %3450 = vmatprep.subr.bf16.mxu0 0
    %3451 = vmatpush2.bf16.msra.mxu0 0
    %3452 = vmatprep.subr.bf16.mxu0 0
    %3453 = vmatpush2.bf16.msra.mxu0 0
    %3454 = vmatprep.subr.bf16.mxu0 0
    %3455 = vmatpush2.bf16.msra.mxu0 0
    %3456 = vmatprep.subr.bf16.mxu0 0
    %3457 = vmatpush2.bf16.msra.mxu0 0
    %3458 = vmatprep.subr.bf16.mxu0 0
    %3459 = vmatpush2.bf16.msra.mxu0 0
    %3460 = vmatprep.mubr.bf16.mxu0 0
    %3461 = vmatmul.mubr.bf16.gmra.mxu0 %v3344
    %v3462 = vpop.f32.mrf.mxu0
    %v3463 = vadd.f32 0.0, %v3462
    %v3464 = vpop.f32.mrf.mxu0
    %v3465 = vpop.f32.mrf.mxu0
    %v3466 = vadd.f32 0.0, %v3465
    %v3467 = vpop.f32.mrf.mxu0
    %3468 = vmatprep.mubr.bf16.mxu0 0
    %3469 = vmatmul.mubr.bf16.gmra.mxu0 %v3347
    %v3470 = vpop.f32.mrf.mxu0
    %v3471 = vadd.f32 0.0, %v3470
    %v3472 = vpop.f32.mrf.mxu0
    %v3473 = vpop.f32.mrf.mxu0
    %v3474 = vadd.f32 0.0, %v3473
    %v3475 = vpop.f32.mrf.mxu0
    %3476 = vmatprep.mubr.bf16.mxu0 0
    %3477 = vmatmul.mubr.bf16.gmra.mxu0 %v3350
    %v3478 = vpop.f32.mrf.mxu0
    %v3479 = vadd.f32 0.0, %v3478
    %v3480 = vpop.f32.mrf.mxu0
    %v3481 = vpop.f32.mrf.mxu0
    %v3482 = vadd.f32 0.0, %v3481
    %v3483 = vpop.f32.mrf.mxu0
    %3484 = vmatprep.mubr.bf16.mxu0 0
    %3485 = vmatmul.mubr.bf16.gmra.mxu0 %v3353
    %v3486 = vpop.f32.mrf.mxu0
    %v3487 = vadd.f32 0.0, %v3486
    %v3488 = vpop.f32.mrf.mxu0
    %v3489 = vpop.f32.mrf.mxu0
    %v3490 = vadd.f32 0.0, %v3489
    %v3491 = vpop.f32.mrf.mxu0
    %3492 = vdwg.mxu0
    %v3509 = vunpack.c.l.b16 %v2937
    %v3510 = vunpack.c.h.b16 %v2937
    %v3511 = vunpack.c.l.b16 %v2938
    %v3512 = vunpack.c.l.b16 %v2939
    %v3513 = vunpack.c.h.b16 %v2939
    %v3514 = vunpack.c.l.b16 %v2940
    %v3515 = vunpack.c.l.b16 %v2941
    %v3516 = vunpack.c.h.b16 %v2941
    %v3517 = vunpack.c.l.b16 %v2942
    %v3518 = vunpack.c.l.b16 %v2943
    %v3519 = vunpack.c.h.b16 %v2943
    %v3520 = vunpack.c.l.b16 %v2944
    %v3521 = vunpack.c.l.b16 %v2945
    %v3522 = vunpack.c.h.b16 %v2945
    %v3523 = vunpack.c.l.b16 %v2946
    %v3524 = vunpack.c.l.b16 %v2947
    %v3525 = vunpack.c.h.b16 %v2947
    %v3526 = vunpack.c.l.b16 %v2948
    %v3527 = vunpack.c.l.b16 %v2949
    %v3528 = vunpack.c.h.b16 %v2949
    %v3529 = vunpack.c.l.b16 %v2950
    %v3530 = vunpack.c.l.b16 %v2951
    %v3531 = vunpack.c.h.b16 %v2951
    %v3532 = vunpack.c.l.b16 %v2952
    %v3533 = vpack.c.b16 %v3512, %v3509
    %v3534 = vpack.c.b16 %v3513, %v3510
    %v3535 = vpack.c.b16 %v3514, %v3511
    %v3536 = vpack.c.b16 %v3518, %v3515
    %v3537 = vpack.c.b16 %v3519, %v3516
    %v3538 = vpack.c.b16 %v3520, %v3517
    %v3539 = vpack.c.b16 %v3524, %v3521
    %v3540 = vpack.c.b16 %v3525, %v3522
    %v3541 = vpack.c.b16 %v3526, %v3523
    %v3542 = vpack.c.b16 %v3530, %v3527
    %v3543 = vpack.c.b16 %v3531, %v3528
    %v3544 = vpack.c.b16 %v3532, %v3529
    %v3558 = vsel %vm2666, %v2933, 0
    %v3561 = vsel %vm2666, %v2934, 0
    %v3564 = vsel %vm2666, %v2935, 0
    %v3567 = vsel %vm2666, %v2936, 0
    %3569 = vmatprep.subr.bf16.mxu0 0
    %3570 = vmatpush1.bf16.msra.mxu0 0
    %3571 = vmatprep.subr.bf16.mxu0 0
    %3572 = vmatpush1.bf16.msra.mxu0 0
    %3573 = vmatprep.subr.bf16.mxu0 0
    %3574 = vmatpush1.bf16.msra.mxu0 0
    %3575 = vmatprep.subr.bf16.mxu0 0
    %3576 = vmatpush1.bf16.msra.mxu0 0
    %3577 = vmatprep.subr.bf16.mxu0 %v3543
    %3578 = vmatpush1.bf16.msra.mxu0 %v3542
    %3579 = vmatprep.subr.bf16.mxu0 %v3540
    %3580 = vmatpush1.bf16.msra.mxu0 %v3539
    %3581 = vmatprep.subr.bf16.mxu0 %v3537
    %3582 = vmatpush1.bf16.msra.mxu0 %v3536
    %3583 = vmatprep.subr.bf16.mxu0 %v3534
    %3584 = vmatpush1.bf16.msra.mxu0 %v3533
    %3585 = vmatprep.subr.bf16.mxu0 0
    %3586 = vmatpush2.bf16.msra.mxu0 0
    %3587 = vmatprep.subr.bf16.mxu0 0
    %3588 = vmatpush2.bf16.msra.mxu0 0
    %3589 = vmatprep.subr.bf16.mxu0 0
    %3590 = vmatpush2.bf16.msra.mxu0 0
    %3591 = vmatprep.subr.bf16.mxu0 0
    %3592 = vmatpush2.bf16.msra.mxu0 0
    %3593 = vmatprep.subr.bf16.mxu0 0
    %3594 = vmatpush2.bf16.msra.mxu0 0
    %3595 = vmatprep.subr.bf16.mxu0 0
    %3596 = vmatpush2.bf16.msra.mxu0 0
    %3597 = vmatprep.subr.bf16.mxu0 0
    %3598 = vmatpush2.bf16.msra.mxu0 0
    %3599 = vmatprep.subr.bf16.mxu0 0
    %3600 = vmatpush2.bf16.msra.mxu0 0
    %3601 = vmatprep.mubr.bf16.mxu0 0
    %3602 = vmatmul.mubr.bf16.gmra.mxu0 %v3558
    %v3603 = vpop.f32.mrf.mxu0
    %v3604 = vadd.f32 %v3390, %v3603
    %v3605 = vpop.f32.mrf.mxu0
    %v3606 = vadd.f32 %v3392, %v3605
    %v3607 = vpop.f32.mrf.mxu0
    %v3608 = vadd.f32 %v3394, %v3607
    %v3609 = vpop.f32.mrf.mxu0
    %v3610 = vadd.f32 %v3396, %v3609
    %3611 = vmatprep.mubr.bf16.mxu0 0
    %3612 = vmatmul.mubr.bf16.gmra.mxu0 %v3561
    %v3613 = vpop.f32.mrf.mxu0
    %v3614 = vadd.f32 %v3400, %v3613
    %v3615 = vpop.f32.mrf.mxu0
    %v3616 = vadd.f32 %v3402, %v3615
    %v3617 = vpop.f32.mrf.mxu0
    %v3618 = vadd.f32 %v3404, %v3617
    %v3619 = vpop.f32.mrf.mxu0
    %v3620 = vadd.f32 %v3406, %v3619
    %3621 = vmatprep.mubr.bf16.mxu0 0
    %3622 = vmatmul.mubr.bf16.gmra.mxu0 %v3564
    %v3623 = vpop.f32.mrf.mxu0
    %v3624 = vadd.f32 %v3410, %v3623
    %v3625 = vpop.f32.mrf.mxu0
    %v3626 = vadd.f32 %v3412, %v3625
    %v3627 = vpop.f32.mrf.mxu0
    %v3628 = vadd.f32 %v3414, %v3627
    %v3629 = vpop.f32.mrf.mxu0
    %v3630 = vadd.f32 %v3416, %v3629
    %3631 = vmatprep.mubr.bf16.mxu0 0
    %3632 = vmatmul.mubr.bf16.gmra.mxu0 %v3567
    %v3633 = vpop.f32.mrf.mxu0
    %v3634 = vadd.f32 %v3420, %v3633
    %v3635 = vpop.f32.mrf.mxu0
    %v3636 = vadd.f32 %v3422, %v3635
    %v3637 = vpop.f32.mrf.mxu0
    %v3638 = vadd.f32 %v3424, %v3637
    %v3639 = vpop.f32.mrf.mxu0
    %v3640 = vadd.f32 %v3426, %v3639
    %3641 = vdwg.mxu0
    %3642 = vmatprep.subr.bf16.mxu0 0
    %3643 = vmatpush1.bf16.msra.mxu0 0
    %3644 = vmatprep.subr.bf16.mxu0 0
    %3645 = vmatpush1.bf16.msra.mxu0 0
    %3646 = vmatprep.subr.bf16.mxu0 0
    %3647 = vmatpush1.bf16.msra.mxu0 0
    %3648 = vmatprep.subr.bf16.mxu0 0
    %3649 = vmatpush1.bf16.msra.mxu0 0
    %3650 = vmatprep.subr.bf16.mxu0 0
    %3651 = vmatpush1.bf16.msra.mxu0 %v3544
    %3652 = vmatprep.subr.bf16.mxu0 0
    %3653 = vmatpush1.bf16.msra.mxu0 %v3541
    %3654 = vmatprep.subr.bf16.mxu0 0
    %3655 = vmatpush1.bf16.msra.mxu0 %v3538
    %3656 = vmatprep.subr.bf16.mxu0 0
    %3657 = vmatpush1.bf16.msra.mxu0 %v3535
    %3658 = vmatprep.subr.bf16.mxu0 0
    %3659 = vmatpush2.bf16.msra.mxu0 0
    %3660 = vmatprep.subr.bf16.mxu0 0
    %3661 = vmatpush2.bf16.msra.mxu0 0
    %3662 = vmatprep.subr.bf16.mxu0 0
    %3663 = vmatpush2.bf16.msra.mxu0 0
    %3664 = vmatprep.subr.bf16.mxu0 0
    %3665 = vmatpush2.bf16.msra.mxu0 0
    %3666 = vmatprep.subr.bf16.mxu0 0
    %3667 = vmatpush2.bf16.msra.mxu0 0
    %3668 = vmatprep.subr.bf16.mxu0 0
    %3669 = vmatpush2.bf16.msra.mxu0 0
    %3670 = vmatprep.subr.bf16.mxu0 0
    %3671 = vmatpush2.bf16.msra.mxu0 0
    %3672 = vmatprep.subr.bf16.mxu0 0
    %3673 = vmatpush2.bf16.msra.mxu0 0
    %3674 = vmatprep.mubr.bf16.mxu0 0
    %3675 = vmatmul.mubr.bf16.gmra.mxu0 %v3558
    %v3676 = vpop.f32.mrf.mxu0
    %v3677 = vadd.f32 %v3463, %v3676
    %v3678 = vpop.f32.mrf.mxu0
    %v3679 = vpop.f32.mrf.mxu0
    %v3680 = vadd.f32 %v3466, %v3679
    %v3681 = vpop.f32.mrf.mxu0
    %3682 = vmatprep.mubr.bf16.mxu0 0
    %3683 = vmatmul.mubr.bf16.gmra.mxu0 %v3561
    %v3684 = vpop.f32.mrf.mxu0
    %v3685 = vadd.f32 %v3471, %v3684
    %v3686 = vpop.f32.mrf.mxu0
    %v3687 = vpop.f32.mrf.mxu0
    %v3688 = vadd.f32 %v3474, %v3687
    %v3689 = vpop.f32.mrf.mxu0
    %3690 = vmatprep.mubr.bf16.mxu0 0
    %3691 = vmatmul.mubr.bf16.gmra.mxu0 %v3564
    %v3692 = vpop.f32.mrf.mxu0
    %v3693 = vadd.f32 %v3479, %v3692
    %v3694 = vpop.f32.mrf.mxu0
    %v3695 = vpop.f32.mrf.mxu0
    %v3696 = vadd.f32 %v3482, %v3695
    %v3697 = vpop.f32.mrf.mxu0
    %3698 = vmatprep.mubr.bf16.mxu0 0
    %3699 = vmatmul.mubr.bf16.gmra.mxu0 %v3567
    %v3700 = vpop.f32.mrf.mxu0
    %v3701 = vadd.f32 %v3487, %v3700
    %v3702 = vpop.f32.mrf.mxu0
    %v3703 = vpop.f32.mrf.mxu0
    %v3704 = vadd.f32 %v3490, %v3703
    %v3705 = vpop.f32.mrf.mxu0
    %3706 = vdwg.mxu0
    %v3708 = vsel %vm2666, %v2575, 0
    %v3711 = vsel %vm2666, %v2584, 0
    %v3714 = vsel %vm2666, %v2593, 0
    %v3717 = vsel %vm2666, %v2602, 0
    %v3720 = vsel %vm2666, %v2578, 0
    %v3723 = vsel %vm2666, %v2587, 0
    %v3726 = vsel %vm2666, %v2596, 0
    %v3729 = vsel %vm2666, %v2605, 0
    %3731 = vmatprep.subr.bf16.mxu0 0
    %3732 = vmatpush1.bf16.xpose.msra.mxu0 0
    %3733 = vmatprep.subr.bf16.mxu0 0
    %3734 = vmatpush1.bf16.xpose.msra.mxu0 0
    %3735 = vmatprep.subr.bf16.mxu0 0
    %3736 = vmatpush1.bf16.xpose.msra.mxu0 0
    %3737 = vmatprep.subr.bf16.mxu0 0
    %3738 = vmatpush1.bf16.xpose.msra.mxu0 0
    %3739 = vmatprep.subr.bf16.mxu0 0
    %3740 = vmatpush1.bf16.xpose.msra.mxu0 %v3729
    %3741 = vmatprep.subr.bf16.mxu0 0
    %3742 = vmatpush1.bf16.xpose.msra.mxu0 %v3726
    %3743 = vmatprep.subr.bf16.mxu0 0
    %3744 = vmatpush1.bf16.xpose.msra.mxu0 %v3723
    %3745 = vmatprep.subr.bf16.mxu0 0
    %3746 = vmatpush1.bf16.xpose.msra.mxu0 %v3720
    %3747 = vmatprep.subr.bf16.mxu0 0
    %3748 = vmatpush2.bf16.xpose.msra.mxu0 0
    %3749 = vmatprep.subr.bf16.mxu0 0
    %3750 = vmatpush2.bf16.xpose.msra.mxu0 0
    %3751 = vmatprep.subr.bf16.mxu0 0
    %3752 = vmatpush2.bf16.xpose.msra.mxu0 0
    %3753 = vmatprep.subr.bf16.mxu0 0
    %3754 = vmatpush2.bf16.xpose.msra.mxu0 0
    %3755 = vmatprep.subr.bf16.mxu0 0
    %3756 = vmatpush2.bf16.xpose.msra.mxu0 0
    %3757 = vmatprep.subr.bf16.mxu0 0
    %3758 = vmatpush2.bf16.xpose.msra.mxu0 0
    %3759 = vmatprep.subr.bf16.mxu0 0
    %3760 = vmatpush2.bf16.xpose.msra.mxu0 0
    %3761 = vmatprep.subr.bf16.mxu0 0
    %3762 = vmatpush2.bf16.xpose.msra.mxu0 0
    %3763 = vmatprep.mubr.bf16.mxu0 0
    %3764 = vmatmul.mubr.bf16.gmra.mxu0 %v3708
    %v3765 = vpop.f32.mrf.mxu0
    %v3766 = vadd.f32 0.0, %v3765
    %v3767 = vpop.f32.mrf.mxu0
    %v3768 = vpop.f32.mrf.mxu0
    %v3769 = vadd.f32 0.0, %v3768
    %v3770 = vpop.f32.mrf.mxu0
    %3771 = vmatprep.mubr.bf16.mxu0 0
    %3772 = vmatmul.mubr.bf16.gmra.mxu0 %v3711
    %v3773 = vpop.f32.mrf.mxu0
    %v3774 = vadd.f32 0.0, %v3773
    %v3775 = vpop.f32.mrf.mxu0
    %v3776 = vpop.f32.mrf.mxu0
    %v3777 = vadd.f32 0.0, %v3776
    %v3778 = vpop.f32.mrf.mxu0
    %3779 = vmatprep.mubr.bf16.mxu0 0
    %3780 = vmatmul.mubr.bf16.gmra.mxu0 %v3714
    %v3781 = vpop.f32.mrf.mxu0
    %v3782 = vadd.f32 0.0, %v3781
    %v3783 = vpop.f32.mrf.mxu0
    %v3784 = vpop.f32.mrf.mxu0
    %v3785 = vadd.f32 0.0, %v3784
    %v3786 = vpop.f32.mrf.mxu0
    %3787 = vmatprep.mubr.bf16.mxu0 0
    %3788 = vmatmul.mubr.bf16.gmra.mxu0 %v3717
    %v3789 = vpop.f32.mrf.mxu0
    %v3790 = vadd.f32 0.0, %v3789
    %v3791 = vpop.f32.mrf.mxu0
    %v3792 = vpop.f32.mrf.mxu0
    %v3793 = vadd.f32 0.0, %v3792
    %v3794 = vpop.f32.mrf.mxu0
    %3795 = vdwg.mxu0
    %v3796 = vsel %vm2657, %v3766, -inf
    %v3797 = vsel %vm2658, %v3769, -inf
    %v3798 = vsel %vm2659, %v3774, -inf
    %v3799 = vsel %vm2660, %v3777, -inf
    %v3800 = vsel %vm2661, %v3782, -inf
    %v3801 = vsel %vm2662, %v3785, -inf
    %v3802 = vsel %vm2663, %v3790, -inf
    %v3803 = vsel %vm2664, %v3793, -inf
    %v3804 = vsel %vm2666, %v3796, -inf
    %3805 = vmax.xlane.f32.xlu0 %v3804
    %v3806 = vpop.xlane.xlu0 %3805
    %v3807 = vsel %vm2666, %v3797, -inf
    %3808 = vmax.xlane.f32.xlu0 %v3807
    %v3809 = vpop.xlane.xlu0 %3808
    %v3810 = vsel %vm2666, %v3798, -inf
    %3811 = vmax.xlane.f32.xlu0 %v3810
    %v3812 = vpop.xlane.xlu0 %3811
    %v3813 = vsel %vm2666, %v3799, -inf
    %3814 = vmax.xlane.f32.xlu0 %v3813
    %v3815 = vpop.xlane.xlu0 %3814
    %v3816 = vsel %vm2666, %v3800, -inf
    %3817 = vmax.xlane.f32.xlu0 %v3816
    %v3818 = vpop.xlane.xlu0 %3817
    %v3819 = vsel %vm2666, %v3801, -inf
    %3820 = vmax.xlane.f32.xlu0 %v3819
    %v3821 = vpop.xlane.xlu0 %3820
    %v3822 = vsel %vm2666, %v3802, -inf
    %3823 = vmax.xlane.f32.xlu0 %v3822
    %v3824 = vpop.xlane.xlu0 %3823
    %v3825 = vsel %vm2666, %v3803, -inf
    %3826 = vmax.xlane.f32.xlu0 %v3825
    %v3827 = vpop.xlane.xlu0 %3826
    %v3828 = vsub.f32 %v3796, %v3806
    %v3829 = vsub.f32 %v3797, %v3809
    %v3830 = vsub.f32 %v3798, %v3812
    %v3831 = vsub.f32 %v3799, %v3815
    %v3832 = vsub.f32 %v3800, %v3818
    %v3833 = vsub.f32 %v3801, %v3821
    %v3834 = vsub.f32 %v3802, %v3824
    %v3835 = vsub.f32 %v3803, %v3827
    %v3836 = vmul.f32 %v3828, 1.442695
    %v3837 = vpow.pop %v3836
    %v3838 = vmul.f32 %v3829, 1.442695
    %v3839 = vpow.pop %v3838
    %v3840 = vmul.f32 %v3830, 1.442695
    %v3841 = vpow.pop %v3840
    %v3842 = vmul.f32 %v3831, 1.442695
    %v3843 = vpow.pop %v3842
    %v3844 = vmul.f32 %v3832, 1.442695
    %v3845 = vpow.pop %v3844
    %v3846 = vmul.f32 %v3833, 1.442695
    %v3847 = vpow.pop %v3846
    %v3848 = vmul.f32 %v3834, 1.442695
    %v3849 = vpow.pop %v3848
    %v3850 = vmul.f32 %v3835, 1.442695
    %v3851 = vpow.pop %v3850
    %v3852 = vsel %vm2666, %v3837, 0.0
    %3853 = vadd.xlane.f32.xlu0 %v3852
    %v3854 = vpop.xlane.xlu0 %3853
    %v3855 = vsel %vm2666, %v3839, 0.0
    %3856 = vadd.xlane.f32.xlu0 %v3855
    %v3857 = vpop.xlane.xlu0 %3856
    %v3858 = vsel %vm2666, %v3841, 0.0
    %3859 = vadd.xlane.f32.xlu0 %v3858
    %v3860 = vpop.xlane.xlu0 %3859
    %v3861 = vsel %vm2666, %v3843, 0.0
    %3862 = vadd.xlane.f32.xlu0 %v3861
    %v3863 = vpop.xlane.xlu0 %3862
    %v3864 = vsel %vm2666, %v3845, 0.0
    %3865 = vadd.xlane.f32.xlu0 %v3864
    %v3866 = vpop.xlane.xlu0 %3865
    %v3867 = vsel %vm2666, %v3847, 0.0
    %3868 = vadd.xlane.f32.xlu0 %v3867
    %v3869 = vpop.xlane.xlu0 %3868
    %v3870 = vsel %vm2666, %v3849, 0.0
    %3871 = vadd.xlane.f32.xlu0 %v3870
    %v3872 = vpop.xlane.xlu0 %3871
    %v3873 = vsel %vm2666, %v3851, 0.0
    %3874 = vadd.xlane.f32.xlu0 %v3873
    %v3875 = vpop.xlane.xlu0 %3874
    %v3876 = vrcp.pop %v3854
    %v3877 = vrcp.pop %v3857
    %v3878 = vrcp.pop %v3860
    %v3879 = vrcp.pop %v3863
    %v3880 = vrcp.pop %v3866
    %v3881 = vrcp.pop %v3869
    %v3882 = vrcp.pop %v3872
    %v3883 = vrcp.pop %v3875
    %v3884 = vmul.f32 %v3837, %v3876
    %v3885 = vmul.f32 %v3839, %v3877
    %v3886 = vmul.f32 %v3841, %v3878
    %v3887 = vmul.f32 %v3843, %v3879
    %v3888 = vmul.f32 %v3845, %v3880
    %v3889 = vmul.f32 %v3847, %v3881
    %v3890 = vmul.f32 %v3849, %v3882
    %v3891 = vmul.f32 %v3851, %v3883
    %v3892 = vpack.c.bf16 %v3885, %v3884
    %v3893 = vpack.c.bf16 %v3887, %v3886
    %v3894 = vpack.c.bf16 %v3889, %v3888
    %v3895 = vpack.c.bf16 %v3891, %v3890
    %v3897 = vsel %vm2666, %v3892, 0
    %v3900 = vsel %vm2666, %v3893, 0
    %v3903 = vsel %vm2666, %v3894, 0
    %v3906 = vsel %vm2666, %v3895, 0
    %3908 = vmatprep.subr.bf16.mxu0 0
    %3909 = vmatpush1.bf16.msra.mxu0 0
    %3910 = vmatprep.subr.bf16.mxu0 0
    %3911 = vmatpush1.bf16.msra.mxu0 0
    %3912 = vmatprep.subr.bf16.mxu0 0
    %3913 = vmatpush1.bf16.msra.mxu0 0
    %3914 = vmatprep.subr.bf16.mxu0 0
    %3915 = vmatpush1.bf16.msra.mxu0 0
    %3916 = vmatprep.subr.bf16.mxu0 0
    %3917 = vmatpush1.bf16.msra.mxu0 %v2608
    %3918 = vmatprep.subr.bf16.mxu0 0
    %3919 = vmatpush1.bf16.msra.mxu0 %v2599
    %3920 = vmatprep.subr.bf16.mxu0 0
    %3921 = vmatpush1.bf16.msra.mxu0 %v2590
    %3922 = vmatprep.subr.bf16.mxu0 0
    %3923 = vmatpush1.bf16.msra.mxu0 %v2581
    %3924 = vmatprep.subr.bf16.mxu0 0
    %3925 = vmatpush2.bf16.msra.mxu0 0
    %3926 = vmatprep.subr.bf16.mxu0 0
    %3927 = vmatpush2.bf16.msra.mxu0 0
    %3928 = vmatprep.subr.bf16.mxu0 0
    %3929 = vmatpush2.bf16.msra.mxu0 0
    %3930 = vmatprep.subr.bf16.mxu0 0
    %3931 = vmatpush2.bf16.msra.mxu0 0
    %3932 = vmatprep.subr.bf16.mxu0 0
    %3933 = vmatpush2.bf16.msra.mxu0 0
    %3934 = vmatprep.subr.bf16.mxu0 0
    %3935 = vmatpush2.bf16.msra.mxu0 0
    %3936 = vmatprep.subr.bf16.mxu0 0
    %3937 = vmatpush2.bf16.msra.mxu0 0
    %3938 = vmatprep.subr.bf16.mxu0 0
    %3939 = vmatpush2.bf16.msra.mxu0 0
    %3940 = vmatprep.mubr.bf16.mxu0 0
    %3941 = vmatmul.mubr.bf16.gmra.mxu0 %v3897
    %v3942 = vpop.f32.mrf.mxu0
    %v3943 = vadd.f32 0.0, %v3942
    %v3944 = vpop.f32.mrf.mxu0
    %v3945 = vpop.f32.mrf.mxu0
    %v3946 = vadd.f32 0.0, %v3945
    %v3947 = vpop.f32.mrf.mxu0
    %3948 = vmatprep.mubr.bf16.mxu0 0
    %3949 = vmatmul.mubr.bf16.gmra.mxu0 %v3900
    %v3950 = vpop.f32.mrf.mxu0
    %v3951 = vadd.f32 0.0, %v3950
    %v3952 = vpop.f32.mrf.mxu0
    %v3953 = vpop.f32.mrf.mxu0
    %v3954 = vadd.f32 0.0, %v3953
    %v3955 = vpop.f32.mrf.mxu0
    %3956 = vmatprep.mubr.bf16.mxu0 0
    %3957 = vmatmul.mubr.bf16.gmra.mxu0 %v3903
    %v3958 = vpop.f32.mrf.mxu0
    %v3959 = vadd.f32 0.0, %v3958
    %v3960 = vpop.f32.mrf.mxu0
    %v3961 = vpop.f32.mrf.mxu0
    %v3962 = vadd.f32 0.0, %v3961
    %v3963 = vpop.f32.mrf.mxu0
    %3964 = vmatprep.mubr.bf16.mxu0 0
    %3965 = vmatmul.mubr.bf16.gmra.mxu0 %v3906
    %v3966 = vpop.f32.mrf.mxu0
    %v3967 = vadd.f32 0.0, %v3966
    %v3968 = vpop.f32.mrf.mxu0
    %v3969 = vpop.f32.mrf.mxu0
    %v3970 = vadd.f32 0.0, %v3969
    %v3971 = vpop.f32.mrf.mxu0
    %3972 = vdwg.mxu0
    %v3973 = vpack.c.bf16 %v3946, %v3943
    %v3974 = vpack.c.bf16 %v3954, %v3951
    %v3975 = vpack.c.bf16 %v3962, %v3959
    %v3976 = vpack.c.bf16 %v3970, %v3967
    %v3977 = vld [vmem:[#allocation7 + $0xc0] sm:$0xff]
    %v3978 = vld [vmem:[#allocation7 + $0xc8] sm:$0xf]
    %v3979 = vld [vmem:[#allocation7 + $0xcc] sm:$0xff]
    %v3980 = vld [vmem:[#allocation7 + $0xd4] sm:$0xf]
    %v3981 = vld [vmem:[#allocation7 + $0xd8] sm:$0xff]
    %v3982 = vld [vmem:[#allocation7 + $0xe0] sm:$0xf]
    %v3983 = vld [vmem:[#allocation7 + $0xe4] sm:$0xff]
    %v3984 = vld [vmem:[#allocation7 + $0xec] sm:$0xf]
    %v3985 = vld [vmem:[#allocation7 + $0xf0] sm:$0xff]
    %v3986 = vld [vmem:[#allocation7 + $0xf8] sm:$0xf]
    %v3987 = vld [vmem:[#allocation7 + $0xfc] sm:$0xff]
    %v3988 = vld [vmem:[#allocation7 + $0x104] sm:$0xf]
    %v3989 = vld [vmem:[#allocation7 + $0x108] sm:$0xff]
    %v3990 = vld [vmem:[#allocation7 + $0x110] sm:$0xf]
    %v3991 = vld [vmem:[#allocation7 + $0x114] sm:$0xff]
    %v3992 = vld [vmem:[#allocation7 + $0x11c] sm:$0xf]
    %v4009 = vunpack.c.l.b16 %v3977
    %v4010 = vunpack.c.h.b16 %v3977
    %v4011 = vunpack.c.l.b16 %v3978
    %v4012 = vunpack.c.l.b16 %v3979
    %v4013 = vunpack.c.h.b16 %v3979
    %v4014 = vunpack.c.l.b16 %v3980
    %v4015 = vunpack.c.l.b16 %v3981
    %v4016 = vunpack.c.h.b16 %v3981
    %v4017 = vunpack.c.l.b16 %v3982
    %v4018 = vunpack.c.l.b16 %v3983
    %v4019 = vunpack.c.h.b16 %v3983
    %v4020 = vunpack.c.l.b16 %v3984
    %v4021 = vunpack.c.l.b16 %v3985
    %v4022 = vunpack.c.h.b16 %v3985
    %v4023 = vunpack.c.l.b16 %v3986
    %v4024 = vunpack.c.l.b16 %v3987
    %v4025 = vunpack.c.h.b16 %v3987
    %v4026 = vunpack.c.l.b16 %v3988
    %v4027 = vunpack.c.l.b16 %v3989
    %v4028 = vunpack.c.h.b16 %v3989
    %v4029 = vunpack.c.l.b16 %v3990
    %v4030 = vunpack.c.l.b16 %v3991
    %v4031 = vunpack.c.h.b16 %v3991
    %v4032 = vunpack.c.l.b16 %v3992
    %v4033 = vpack.c.b16 %v4012, %v4009
    %v4034 = vpack.c.b16 %v4013, %v4010
    %v4035 = vpack.c.b16 %v4014, %v4011
    %v4036 = vpack.c.b16 %v4018, %v4015
    %v4037 = vpack.c.b16 %v4019, %v4016
    %v4038 = vpack.c.b16 %v4020, %v4017
    %v4039 = vpack.c.b16 %v4024, %v4021
    %v4040 = vpack.c.b16 %v4025, %v4022
    %v4041 = vpack.c.b16 %v4026, %v4023
    %v4042 = vpack.c.b16 %v4030, %v4027
    %v4043 = vpack.c.b16 %v4031, %v4028
    %v4044 = vpack.c.b16 %v4032, %v4029
    %v4058 = vsel %vm2666, %v3973, 0
    %v4061 = vsel %vm2666, %v3974, 0
    %v4064 = vsel %vm2666, %v3975, 0
    %v4067 = vsel %vm2666, %v3976, 0
    %4069 = vmatprep.subr.bf16.mxu0 0
    %4070 = vmatpush1.bf16.msra.mxu0 0
    %4071 = vmatprep.subr.bf16.mxu0 0
    %4072 = vmatpush1.bf16.msra.mxu0 0
    %4073 = vmatprep.subr.bf16.mxu0 0
    %4074 = vmatpush1.bf16.msra.mxu0 0
    %4075 = vmatprep.subr.bf16.mxu0 0
    %4076 = vmatpush1.bf16.msra.mxu0 0
    %4077 = vmatprep.subr.bf16.mxu0 %v4043
    %4078 = vmatpush1.bf16.msra.mxu0 %v4042
    %4079 = vmatprep.subr.bf16.mxu0 %v4040
    %4080 = vmatpush1.bf16.msra.mxu0 %v4039
    %4081 = vmatprep.subr.bf16.mxu0 %v4037
    %4082 = vmatpush1.bf16.msra.mxu0 %v4036
    %4083 = vmatprep.subr.bf16.mxu0 %v4034
    %4084 = vmatpush1.bf16.msra.mxu0 %v4033
    %4085 = vmatprep.subr.bf16.mxu0 0
    %4086 = vmatpush2.bf16.msra.mxu0 0
    %4087 = vmatprep.subr.bf16.mxu0 0
    %4088 = vmatpush2.bf16.msra.mxu0 0
    %4089 = vmatprep.subr.bf16.mxu0 0
    %4090 = vmatpush2.bf16.msra.mxu0 0
    %4091 = vmatprep.subr.bf16.mxu0 0
    %4092 = vmatpush2.bf16.msra.mxu0 0
    %4093 = vmatprep.subr.bf16.mxu0 0
    %4094 = vmatpush2.bf16.msra.mxu0 0
    %4095 = vmatprep.subr.bf16.mxu0 0
    %4096 = vmatpush2.bf16.msra.mxu0 0
    %4097 = vmatprep.subr.bf16.mxu0 0
    %4098 = vmatpush2.bf16.msra.mxu0 0
    %4099 = vmatprep.subr.bf16.mxu0 0
    %4100 = vmatpush2.bf16.msra.mxu0 0
    %4101 = vmatprep.mubr.bf16.mxu0 0
    %4102 = vmatmul.mubr.bf16.gmra.mxu0 %v4058
    %v4103 = vpop.f32.mrf.mxu0
    %v4104 = vadd.f32 0.0, %v4103
    %v4105 = vpop.f32.mrf.mxu0
    %v4106 = vadd.f32 0.0, %v4105
    %v4107 = vpop.f32.mrf.mxu0
    %v4108 = vadd.f32 0.0, %v4107
    %v4109 = vpop.f32.mrf.mxu0
    %v4110 = vadd.f32 0.0, %v4109
    %4111 = vmatprep.mubr.bf16.mxu0 0
    %4112 = vmatmul.mubr.bf16.gmra.mxu0 %v4061
    %v4113 = vpop.f32.mrf.mxu0
    %v4114 = vadd.f32 0.0, %v4113
    %v4115 = vpop.f32.mrf.mxu0
    %v4116 = vadd.f32 0.0, %v4115
    %v4117 = vpop.f32.mrf.mxu0
    %v4118 = vadd.f32 0.0, %v4117
    %v4119 = vpop.f32.mrf.mxu0
    %v4120 = vadd.f32 0.0, %v4119
    %4121 = vmatprep.mubr.bf16.mxu0 0
    %4122 = vmatmul.mubr.bf16.gmra.mxu0 %v4064
    %v4123 = vpop.f32.mrf.mxu0
    %v4124 = vadd.f32 0.0, %v4123
    %v4125 = vpop.f32.mrf.mxu0
    %v4126 = vadd.f32 0.0, %v4125
    %v4127 = vpop.f32.mrf.mxu0
    %v4128 = vadd.f32 0.0, %v4127
    %v4129 = vpop.f32.mrf.mxu0
    %v4130 = vadd.f32 0.0, %v4129
    %4131 = vmatprep.mubr.bf16.mxu0 0
    %4132 = vmatmul.mubr.bf16.gmra.mxu0 %v4067
    %v4133 = vpop.f32.mrf.mxu0
    %v4134 = vadd.f32 0.0, %v4133
    %v4135 = vpop.f32.mrf.mxu0
    %v4136 = vadd.f32 0.0, %v4135
    %v4137 = vpop.f32.mrf.mxu0
    %v4138 = vadd.f32 0.0, %v4137
    %v4139 = vpop.f32.mrf.mxu0
    %v4140 = vadd.f32 0.0, %v4139
    %4141 = vdwg.mxu0
    %4142 = vmatprep.subr.bf16.mxu0 0
    %4143 = vmatpush1.bf16.msra.mxu0 0
    %4144 = vmatprep.subr.bf16.mxu0 0
    %4145 = vmatpush1.bf16.msra.mxu0 0
    %4146 = vmatprep.subr.bf16.mxu0 0
    %4147 = vmatpush1.bf16.msra.mxu0 0
    %4148 = vmatprep.subr.bf16.mxu0 0
    %4149 = vmatpush1.bf16.msra.mxu0 0
    %4150 = vmatprep.subr.bf16.mxu0 0
    %4151 = vmatpush1.bf16.msra.mxu0 %v4044
    %4152 = vmatprep.subr.bf16.mxu0 0
    %4153 = vmatpush1.bf16.msra.mxu0 %v4041
    %4154 = vmatprep.subr.bf16.mxu0 0
    %4155 = vmatpush1.bf16.msra.mxu0 %v4038
    %4156 = vmatprep.subr.bf16.mxu0 0
    %4157 = vmatpush1.bf16.msra.mxu0 %v4035
    %4158 = vmatprep.subr.bf16.mxu0 0
    %4159 = vmatpush2.bf16.msra.mxu0 0
    %4160 = vmatprep.subr.bf16.mxu0 0
    %4161 = vmatpush2.bf16.msra.mxu0 0
    %4162 = vmatprep.subr.bf16.mxu0 0
    %4163 = vmatpush2.bf16.msra.mxu0 0
    %4164 = vmatprep.subr.bf16.mxu0 0
    %4165 = vmatpush2.bf16.msra.mxu0 0
    %4166 = vmatprep.subr.bf16.mxu0 0
    %4167 = vmatpush2.bf16.msra.mxu0 0
    %4168 = vmatprep.subr.bf16.mxu0 0
    %4169 = vmatpush2.bf16.msra.mxu0 0
    %4170 = vmatprep.subr.bf16.mxu0 0
    %4171 = vmatpush2.bf16.msra.mxu0 0
    %4172 = vmatprep.subr.bf16.mxu0 0
    %4173 = vmatpush2.bf16.msra.mxu0 0
    %4174 = vmatprep.mubr.bf16.mxu0 0
    %4175 = vmatmul.mubr.bf16.gmra.mxu0 %v4058
    %v4176 = vpop.f32.mrf.mxu0
    %v4177 = vadd.f32 0.0, %v4176
    %v4178 = vpop.f32.mrf.mxu0
    %v4179 = vpop.f32.mrf.mxu0
    %v4180 = vadd.f32 0.0, %v4179
    %v4181 = vpop.f32.mrf.mxu0
    %4182 = vmatprep.mubr.bf16.mxu0 0
    %4183 = vmatmul.mubr.bf16.gmra.mxu0 %v4061
    %v4184 = vpop.f32.mrf.mxu0
    %v4185 = vadd.f32 0.0, %v4184
    %v4186 = vpop.f32.mrf.mxu0
    %v4187 = vpop.f32.mrf.mxu0
    %v4188 = vadd.f32 0.0, %v4187
    %v4189 = vpop.f32.mrf.mxu0
    %4190 = vmatprep.mubr.bf16.mxu0 0
    %4191 = vmatmul.mubr.bf16.gmra.mxu0 %v4064
    %v4192 = vpop.f32.mrf.mxu0
    %v4193 = vadd.f32 0.0, %v4192
    %v4194 = vpop.f32.mrf.mxu0
    %v4195 = vpop.f32.mrf.mxu0
    %v4196 = vadd.f32 0.0, %v4195
    %v4197 = vpop.f32.mrf.mxu0
    %4198 = vmatprep.mubr.bf16.mxu0 0
    %4199 = vmatmul.mubr.bf16.gmra.mxu0 %v4067
    %v4200 = vpop.f32.mrf.mxu0
    %v4201 = vadd.f32 0.0, %v4200
    %v4202 = vpop.f32.mrf.mxu0
    %v4203 = vpop.f32.mrf.mxu0
    %v4204 = vadd.f32 0.0, %v4203
    %v4205 = vpop.f32.mrf.mxu0
    %4206 = vdwg.mxu0
    %v4207 = vadd.f32 %v3604, %v4104
    %v4208 = vadd.f32 %v3606, %v4106
    %v4209 = vadd.f32 %v3677, %v4177
    %v4210 = vadd.f32 %v3608, %v4108
    %v4211 = vadd.f32 %v3610, %v4110
    %v4212 = vadd.f32 %v3680, %v4180
    %v4213 = vadd.f32 %v3614, %v4114
    %v4214 = vadd.f32 %v3616, %v4116
    %v4215 = vadd.f32 %v3685, %v4185
    %v4216 = vadd.f32 %v3618, %v4118
    %v4217 = vadd.f32 %v3620, %v4120
    %v4218 = vadd.f32 %v3688, %v4188
    %v4219 = vadd.f32 %v3624, %v4124
    %v4220 = vadd.f32 %v3626, %v4126
    %v4221 = vadd.f32 %v3693, %v4193
    %v4222 = vadd.f32 %v3628, %v4128
    %v4223 = vadd.f32 %v3630, %v4130
    %v4224 = vadd.f32 %v3696, %v4196
    %v4225 = vadd.f32 %v3634, %v4134
    %v4226 = vadd.f32 %v3636, %v4136
    %v4227 = vadd.f32 %v3701, %v4201
    %v4228 = vadd.f32 %v3638, %v4138
    %v4229 = vadd.f32 %v3640, %v4140
    %v4230 = vadd.f32 %v3704, %v4204
    %4235 = vrot.lane.b32.xlu0 %v2575, 64
    %v4236 = vpop.permute.xlu0 %4235
    %4237 = vrot.lane.b32.xlu0 %v2584, 64
    %v4238 = vpop.permute.xlu0 %4237
    %4239 = vrot.lane.b32.xlu0 %v2593, 64
    %v4240 = vpop.permute.xlu0 %4239
    %4241 = vrot.lane.b32.xlu0 %v2602, 64
    %v4242 = vpop.permute.xlu0 %4241
    %4247 = vrot.lane.b32.xlu0 %v2578, 64
    %v4248 = vpop.permute.xlu0 %4247
    %4249 = vrot.lane.b32.xlu0 %v2587, 64
    %v4250 = vpop.permute.xlu0 %4249
    %4251 = vrot.lane.b32.xlu0 %v2596, 64
    %v4252 = vpop.permute.xlu0 %4251
    %4253 = vrot.lane.b32.xlu0 %v2605, 64
    %v4254 = vpop.permute.xlu0 %4253
    %v4256 = vsel %vm2666, %v4236, 0
    %v4259 = vsel %vm2666, %v4238, 0
    %v4262 = vsel %vm2666, %v4240, 0
    %v4265 = vsel %vm2666, %v4242, 0
    %v4268 = vsel %vm2666, %v4248, 0
    %v4271 = vsel %vm2666, %v4250, 0
    %v4274 = vsel %vm2666, %v4252, 0
    %v4277 = vsel %vm2666, %v4254, 0
    %4279 = vmatprep.subr.bf16.mxu0 0
    %4280 = vmatpush1.bf16.xpose.msra.mxu0 0
    %4281 = vmatprep.subr.bf16.mxu0 0
    %4282 = vmatpush1.bf16.xpose.msra.mxu0 0
    %4283 = vmatprep.subr.bf16.mxu0 0
    %4284 = vmatpush1.bf16.xpose.msra.mxu0 0
    %4285 = vmatprep.subr.bf16.mxu0 0
    %4286 = vmatpush1.bf16.xpose.msra.mxu0 0
    %4287 = vmatprep.subr.bf16.mxu0 0
    %4288 = vmatpush1.bf16.xpose.msra.mxu0 %v4277
    %4289 = vmatprep.subr.bf16.mxu0 0
    %4290 = vmatpush1.bf16.xpose.msra.mxu0 %v4274
    %4291 = vmatprep.subr.bf16.mxu0 0
    %4292 = vmatpush1.bf16.xpose.msra.mxu0 %v4271
    %4293 = vmatprep.subr.bf16.mxu0 0
    %4294 = vmatpush1.bf16.xpose.msra.mxu0 %v4268
    %4295 = vmatprep.subr.bf16.mxu0 0
    %4296 = vmatpush2.bf16.xpose.msra.mxu0 0
    %4297 = vmatprep.subr.bf16.mxu0 0
    %4298 = vmatpush2.bf16.xpose.msra.mxu0 0
    %4299 = vmatprep.subr.bf16.mxu0 0
    %4300 = vmatpush2.bf16.xpose.msra.mxu0 0
    %4301 = vmatprep.subr.bf16.mxu0 0
    %4302 = vmatpush2.bf16.xpose.msra.mxu0 0
    %4303 = vmatprep.subr.bf16.mxu0 0
    %4304 = vmatpush2.bf16.xpose.msra.mxu0 0
    %4305 = vmatprep.subr.bf16.mxu0 0
    %4306 = vmatpush2.bf16.xpose.msra.mxu0 0
    %4307 = vmatprep.subr.bf16.mxu0 0
    %4308 = vmatpush2.bf16.xpose.msra.mxu0 0
    %4309 = vmatprep.subr.bf16.mxu0 0
    %4310 = vmatpush2.bf16.xpose.msra.mxu0 0
    %4311 = vmatprep.mubr.bf16.mxu0 0
    %4312 = vmatmul.mubr.bf16.gmra.mxu0 %v4256
    %v4313 = vpop.f32.mrf.mxu0
    %v4314 = vadd.f32 0.0, %v4313
    %v4315 = vpop.f32.mrf.mxu0
    %v4316 = vpop.f32.mrf.mxu0
    %v4317 = vadd.f32 0.0, %v4316
    %v4318 = vpop.f32.mrf.mxu0
    %4319 = vmatprep.mubr.bf16.mxu0 0
    %4320 = vmatmul.mubr.bf16.gmra.mxu0 %v4259
    %v4321 = vpop.f32.mrf.mxu0
    %v4322 = vadd.f32 0.0, %v4321
    %v4323 = vpop.f32.mrf.mxu0
    %v4324 = vpop.f32.mrf.mxu0
    %v4325 = vadd.f32 0.0, %v4324
    %v4326 = vpop.f32.mrf.mxu0
    %4327 = vmatprep.mubr.bf16.mxu0 0
    %4328 = vmatmul.mubr.bf16.gmra.mxu0 %v4262
    %v4329 = vpop.f32.mrf.mxu0
    %v4330 = vadd.f32 0.0, %v4329
    %v4331 = vpop.f32.mrf.mxu0
    %v4332 = vpop.f32.mrf.mxu0
    %v4333 = vadd.f32 0.0, %v4332
    %v4334 = vpop.f32.mrf.mxu0
    %4335 = vmatprep.mubr.bf16.mxu0 0
    %4336 = vmatmul.mubr.bf16.gmra.mxu0 %v4265
    %v4337 = vpop.f32.mrf.mxu0
    %v4338 = vadd.f32 0.0, %v4337
    %v4339 = vpop.f32.mrf.mxu0
    %v4340 = vpop.f32.mrf.mxu0
    %v4341 = vadd.f32 0.0, %v4340
    %v4342 = vpop.f32.mrf.mxu0
    %4343 = vdwg.mxu0
    %v4344 = vsel %vm2657, %v4314, -inf
    %v4345 = vsel %vm2658, %v4317, -inf
    %v4346 = vsel %vm2659, %v4322, -inf
    %v4347 = vsel %vm2660, %v4325, -inf
    %v4348 = vsel %vm2661, %v4330, -inf
    %v4349 = vsel %vm2662, %v4333, -inf
    %v4350 = vsel %vm2663, %v4338, -inf
    %v4351 = vsel %vm2664, %v4341, -inf
    %v4352 = vsel %vm2666, %v4344, -inf
    %4353 = vmax.xlane.f32.xlu0 %v4352
    %v4354 = vpop.xlane.xlu0 %4353
    %v4355 = vsel %vm2666, %v4345, -inf
    %4356 = vmax.xlane.f32.xlu0 %v4355
    %v4357 = vpop.xlane.xlu0 %4356
    %v4358 = vsel %vm2666, %v4346, -inf
    %4359 = vmax.xlane.f32.xlu0 %v4358
    %v4360 = vpop.xlane.xlu0 %4359
    %v4361 = vsel %vm2666, %v4347, -inf
    %4362 = vmax.xlane.f32.xlu0 %v4361
    %v4363 = vpop.xlane.xlu0 %4362
    %v4364 = vsel %vm2666, %v4348, -inf
    %4365 = vmax.xlane.f32.xlu0 %v4364
    %v4366 = vpop.xlane.xlu0 %4365
    %v4367 = vsel %vm2666, %v4349, -inf
    %4368 = vmax.xlane.f32.xlu0 %v4367
    %v4369 = vpop.xlane.xlu0 %4368
    %v4370 = vsel %vm2666, %v4350, -inf
    %4371 = vmax.xlane.f32.xlu0 %v4370
    %v4372 = vpop.xlane.xlu0 %4371
    %v4373 = vsel %vm2666, %v4351, -inf
    %4374 = vmax.xlane.f32.xlu0 %v4373
    %v4375 = vpop.xlane.xlu0 %4374
    %v4376 = vsub.f32 %v4344, %v4354
    %v4377 = vsub.f32 %v4345, %v4357
    %v4378 = vsub.f32 %v4346, %v4360
    %v4379 = vsub.f32 %v4347, %v4363
    %v4380 = vsub.f32 %v4348, %v4366
    %v4381 = vsub.f32 %v4349, %v4369
    %v4382 = vsub.f32 %v4350, %v4372
    %v4383 = vsub.f32 %v4351, %v4375
    %v4384 = vmul.f32 %v4376, 1.442695
    %v4385 = vpow.pop %v4384
    %v4386 = vmul.f32 %v4377, 1.442695
    %v4387 = vpow.pop %v4386
    %v4388 = vmul.f32 %v4378, 1.442695
    %v4389 = vpow.pop %v4388
    %v4390 = vmul.f32 %v4379, 1.442695
    %v4391 = vpow.pop %v4390
    %v4392 = vmul.f32 %v4380, 1.442695
    %v4393 = vpow.pop %v4392
    %v4394 = vmul.f32 %v4381, 1.442695
    %v4395 = vpow.pop %v4394
    %v4396 = vmul.f32 %v4382, 1.442695
    %v4397 = vpow.pop %v4396
    %v4398 = vmul.f32 %v4383, 1.442695
    %v4399 = vpow.pop %v4398
    %v4400 = vsel %vm2666, %v4385, 0.0
    %4401 = vadd.xlane.f32.xlu0 %v4400
    %v4402 = vpop.xlane.xlu0 %4401
    %v4403 = vsel %vm2666, %v4387, 0.0
    %4404 = vadd.xlane.f32.xlu0 %v4403
    %v4405 = vpop.xlane.xlu0 %4404
    %v4406 = vsel %vm2666, %v4389, 0.0
    %4407 = vadd.xlane.f32.xlu0 %v4406
    %v4408 = vpop.xlane.xlu0 %4407
    %v4409 = vsel %vm2666, %v4391, 0.0
    %4410 = vadd.xlane.f32.xlu0 %v4409
    %v4411 = vpop.xlane.xlu0 %4410
    %v4412 = vsel %vm2666, %v4393, 0.0
    %4413 = vadd.xlane.f32.xlu0 %v4412
    %v4414 = vpop.xlane.xlu0 %4413
    %v4415 = vsel %vm2666, %v4395, 0.0
    %4416 = vadd.xlane.f32.xlu0 %v4415
    %v4417 = vpop.xlane.xlu0 %4416
    %v4418 = vsel %vm2666, %v4397, 0.0
    %4419 = vadd.xlane.f32.xlu0 %v4418
    %v4420 = vpop.xlane.xlu0 %4419
    %v4421 = vsel %vm2666, %v4399, 0.0
    %4422 = vadd.xlane.f32.xlu0 %v4421
    %v4423 = vpop.xlane.xlu0 %4422
    %v4424 = vrcp.pop %v4402
    %v4425 = vrcp.pop %v4405
    %v4426 = vrcp.pop %v4408
    %v4427 = vrcp.pop %v4411
    %v4428 = vrcp.pop %v4414
    %v4429 = vrcp.pop %v4417
    %v4430 = vrcp.pop %v4420
    %v4431 = vrcp.pop %v4423
    %v4432 = vmul.f32 %v4385, %v4424
    %v4433 = vmul.f32 %v4387, %v4425
    %v4434 = vmul.f32 %v4389, %v4426
    %v4435 = vmul.f32 %v4391, %v4427
    %v4436 = vmul.f32 %v4393, %v4428
    %v4437 = vmul.f32 %v4395, %v4429
    %v4438 = vmul.f32 %v4397, %v4430
    %v4439 = vmul.f32 %v4399, %v4431
    %v4440 = vpack.c.bf16 %v4433, %v4432
    %v4441 = vpack.c.bf16 %v4435, %v4434
    %v4442 = vpack.c.bf16 %v4437, %v4436
    %v4443 = vpack.c.bf16 %v4439, %v4438
    %4448 = vrot.lane.b32.xlu0 %v2581, 64
    %v4449 = vpop.permute.xlu0 %4448
    %4450 = vrot.lane.b32.xlu0 %v2590, 64
    %v4451 = vpop.permute.xlu0 %4450
    %4452 = vrot.lane.b32.xlu0 %v2599, 64
    %v4453 = vpop.permute.xlu0 %4452
    %4454 = vrot.lane.b32.xlu0 %v2608, 64
    %v4455 = vpop.permute.xlu0 %4454
    %v4461 = vsel %vm2666, %v4440, 0
    %v4464 = vsel %vm2666, %v4441, 0
    %v4467 = vsel %vm2666, %v4442, 0
    %v4470 = vsel %vm2666, %v4443, 0
    %4472 = vmatprep.subr.bf16.mxu0 0
    %4473 = vmatpush1.bf16.msra.mxu0 0
    %4474 = vmatprep.subr.bf16.mxu0 0
    %4475 = vmatpush1.bf16.msra.mxu0 0
    %4476 = vmatprep.subr.bf16.mxu0 0
    %4477 = vmatpush1.bf16.msra.mxu0 0
    %4478 = vmatprep.subr.bf16.mxu0 0
    %4479 = vmatpush1.bf16.msra.mxu0 0
    %4480 = vmatprep.subr.bf16.mxu0 0
    %4481 = vmatpush1.bf16.msra.mxu0 %v4455
    %4482 = vmatprep.subr.bf16.mxu0 0
    %4483 = vmatpush1.bf16.msra.mxu0 %v4453
    %4484 = vmatprep.subr.bf16.mxu0 0
    %4485 = vmatpush1.bf16.msra.mxu0 %v4451
    %4486 = vmatprep.subr.bf16.mxu0 0
    %4487 = vmatpush1.bf16.msra.mxu0 %v4449
    %4488 = vmatprep.subr.bf16.mxu0 0
    %4489 = vmatpush2.bf16.msra.mxu0 0
    %4490 = vmatprep.subr.bf16.mxu0 0
    %4491 = vmatpush2.bf16.msra.mxu0 0
    %4492 = vmatprep.subr.bf16.mxu0 0
    %4493 = vmatpush2.bf16.msra.mxu0 0
    %4494 = vmatprep.subr.bf16.mxu0 0
    %4495 = vmatpush2.bf16.msra.mxu0 0
    %4496 = vmatprep.subr.bf16.mxu0 0
    %4497 = vmatpush2.bf16.msra.mxu0 0
    %4498 = vmatprep.subr.bf16.mxu0 0
    %4499 = vmatpush2.bf16.msra.mxu0 0
    %4500 = vmatprep.subr.bf16.mxu0 0
    %4501 = vmatpush2.bf16.msra.mxu0 0
    %4502 = vmatprep.subr.bf16.mxu0 0
    %4503 = vmatpush2.bf16.msra.mxu0 0
    %4504 = vmatprep.mubr.bf16.mxu0 0
    %4505 = vmatmul.mubr.bf16.gmra.mxu0 %v4461
    %v4506 = vpop.f32.mrf.mxu0
    %v4507 = vadd.f32 0.0, %v4506
    %v4508 = vpop.f32.mrf.mxu0
    %v4509 = vpop.f32.mrf.mxu0
    %v4510 = vadd.f32 0.0, %v4509
    %v4511 = vpop.f32.mrf.mxu0
    %4512 = vmatprep.mubr.bf16.mxu0 0
    %4513 = vmatmul.mubr.bf16.gmra.mxu0 %v4464
    %v4514 = vpop.f32.mrf.mxu0
    %v4515 = vadd.f32 0.0, %v4514
    %v4516 = vpop.f32.mrf.mxu0
    %v4517 = vpop.f32.mrf.mxu0
    %v4518 = vadd.f32 0.0, %v4517
    %v4519 = vpop.f32.mrf.mxu0
    %4520 = vmatprep.mubr.bf16.mxu0 0
    %4521 = vmatmul.mubr.bf16.gmra.mxu0 %v4467
    %v4522 = vpop.f32.mrf.mxu0
    %v4523 = vadd.f32 0.0, %v4522
    %v4524 = vpop.f32.mrf.mxu0
    %v4525 = vpop.f32.mrf.mxu0
    %v4526 = vadd.f32 0.0, %v4525
    %v4527 = vpop.f32.mrf.mxu0
    %4528 = vmatprep.mubr.bf16.mxu0 0
    %4529 = vmatmul.mubr.bf16.gmra.mxu0 %v4470
    %v4530 = vpop.f32.mrf.mxu0
    %v4531 = vadd.f32 0.0, %v4530
    %v4532 = vpop.f32.mrf.mxu0
    %v4533 = vpop.f32.mrf.mxu0
    %v4534 = vadd.f32 0.0, %v4533
    %v4535 = vpop.f32.mrf.mxu0
    %4536 = vdwg.mxu0
    %v4537 = vpack.c.bf16 %v4510, %v4507
    %v4538 = vpack.c.bf16 %v4518, %v4515
    %v4539 = vpack.c.bf16 %v4526, %v4523
    %v4540 = vpack.c.bf16 %v4534, %v4531
    %v4541 = vld [vmem:[#allocation7 + $0x120] sm:$0xff]
    %v4542 = vld [vmem:[#allocation7 + $0x128] sm:$0xf]
    %v4543 = vld [vmem:[#allocation7 + $0x12c] sm:$0xff]
    %v4544 = vld [vmem:[#allocation7 + $0x134] sm:$0xf]
    %v4545 = vld [vmem:[#allocation7 + $0x138] sm:$0xff]
    %v4546 = vld [vmem:[#allocation7 + $0x140] sm:$0xf]
    %v4547 = vld [vmem:[#allocation7 + $0x144] sm:$0xff]
    %v4548 = vld [vmem:[#allocation7 + $0x14c] sm:$0xf]
    %v4549 = vld [vmem:[#allocation7 + $0x150] sm:$0xff]
    %v4550 = vld [vmem:[#allocation7 + $0x158] sm:$0xf]
    %v4551 = vld [vmem:[#allocation7 + $0x15c] sm:$0xff]
    %v4552 = vld [vmem:[#allocation7 + $0x164] sm:$0xf]
    %v4553 = vld [vmem:[#allocation7 + $0x168] sm:$0xff]
    %v4554 = vld [vmem:[#allocation7 + $0x170] sm:$0xf]
    %v4555 = vld [vmem:[#allocation7 + $0x174] sm:$0xff]
    %v4556 = vld [vmem:[#allocation7 + $0x17c] sm:$0xf]
    %v4573 = vunpack.c.l.b16 %v4541
    %v4574 = vunpack.c.h.b16 %v4541
    %v4575 = vunpack.c.l.b16 %v4542
    %v4576 = vunpack.c.l.b16 %v4543
    %v4577 = vunpack.c.h.b16 %v4543
    %v4578 = vunpack.c.l.b16 %v4544
    %v4579 = vunpack.c.l.b16 %v4545
    %v4580 = vunpack.c.h.b16 %v4545
    %v4581 = vunpack.c.l.b16 %v4546
    %v4582 = vunpack.c.l.b16 %v4547
    %v4583 = vunpack.c.h.b16 %v4547
    %v4584 = vunpack.c.l.b16 %v4548
    %v4585 = vunpack.c.l.b16 %v4549
    %v4586 = vunpack.c.h.b16 %v4549
    %v4587 = vunpack.c.l.b16 %v4550
    %v4588 = vunpack.c.l.b16 %v4551
    %v4589 = vunpack.c.h.b16 %v4551
    %v4590 = vunpack.c.l.b16 %v4552
    %v4591 = vunpack.c.l.b16 %v4553
    %v4592 = vunpack.c.h.b16 %v4553
    %v4593 = vunpack.c.l.b16 %v4554
    %v4594 = vunpack.c.l.b16 %v4555
    %v4595 = vunpack.c.h.b16 %v4555
    %v4596 = vunpack.c.l.b16 %v4556
    %v4597 = vpack.c.b16 %v4576, %v4573
    %v4598 = vpack.c.b16 %v4577, %v4574
    %v4599 = vpack.c.b16 %v4578, %v4575
    %v4600 = vpack.c.b16 %v4582, %v4579
    %v4601 = vpack.c.b16 %v4583, %v4580
    %v4602 = vpack.c.b16 %v4584, %v4581
    %v4603 = vpack.c.b16 %v4588, %v4585
    %v4604 = vpack.c.b16 %v4589, %v4586
    %v4605 = vpack.c.b16 %v4590, %v4587
    %v4606 = vpack.c.b16 %v4594, %v4591
    %v4607 = vpack.c.b16 %v4595, %v4592
    %v4608 = vpack.c.b16 %v4596, %v4593
    %v4622 = vsel %vm2666, %v4537, 0
    %v4625 = vsel %vm2666, %v4538, 0
    %v4628 = vsel %vm2666, %v4539, 0
    %v4631 = vsel %vm2666, %v4540, 0
    %4633 = vmatprep.subr.bf16.mxu0 0
    %4634 = vmatpush1.bf16.msra.mxu0 0
    %4635 = vmatprep.subr.bf16.mxu0 0
    %4636 = vmatpush1.bf16.msra.mxu0 0
    %4637 = vmatprep.subr.bf16.mxu0 0
    %4638 = vmatpush1.bf16.msra.mxu0 0
    %4639 = vmatprep.subr.bf16.mxu0 0
    %4640 = vmatpush1.bf16.msra.mxu0 0
    %4641 = vmatprep.subr.bf16.mxu0 %v4607
    %4642 = vmatpush1.bf16.msra.mxu0 %v4606
    %4643 = vmatprep.subr.bf16.mxu0 %v4604
    %4644 = vmatpush1.bf16.msra.mxu0 %v4603
    %4645 = vmatprep.subr.bf16.mxu0 %v4601
    %4646 = vmatpush1.bf16.msra.mxu0 %v4600
    %4647 = vmatprep.subr.bf16.mxu0 %v4598
    %4648 = vmatpush1.bf16.msra.mxu0 %v4597
    %4649 = vmatprep.subr.bf16.mxu0 0
    %4650 = vmatpush2.bf16.msra.mxu0 0
    %4651 = vmatprep.subr.bf16.mxu0 0
    %4652 = vmatpush2.bf16.msra.mxu0 0
    %4653 = vmatprep.subr.bf16.mxu0 0
    %4654 = vmatpush2.bf16.msra.mxu0 0
    %4655 = vmatprep.subr.bf16.mxu0 0
    %4656 = vmatpush2.bf16.msra.mxu0 0
    %4657 = vmatprep.subr.bf16.mxu0 0
    %4658 = vmatpush2.bf16.msra.mxu0 0
    %4659 = vmatprep.subr.bf16.mxu0 0
    %4660 = vmatpush2.bf16.msra.mxu0 0
    %4661 = vmatprep.subr.bf16.mxu0 0
    %4662 = vmatpush2.bf16.msra.mxu0 0
    %4663 = vmatprep.subr.bf16.mxu0 0
    %4664 = vmatpush2.bf16.msra.mxu0 0
    %4665 = vmatprep.mubr.bf16.mxu0 0
    %4666 = vmatmul.mubr.bf16.gmra.mxu0 %v4622
    %v4667 = vpop.f32.mrf.mxu0
    %v4668 = vadd.f32 0.0, %v4667
    %v4669 = vpop.f32.mrf.mxu0
    %v4670 = vadd.f32 0.0, %v4669
    %v4671 = vpop.f32.mrf.mxu0
    %v4672 = vadd.f32 0.0, %v4671
    %v4673 = vpop.f32.mrf.mxu0
    %v4674 = vadd.f32 0.0, %v4673
    %4675 = vmatprep.mubr.bf16.mxu0 0
    %4676 = vmatmul.mubr.bf16.gmra.mxu0 %v4625
    %v4677 = vpop.f32.mrf.mxu0
    %v4678 = vadd.f32 0.0, %v4677
    %v4679 = vpop.f32.mrf.mxu0
    %v4680 = vadd.f32 0.0, %v4679
    %v4681 = vpop.f32.mrf.mxu0
    %v4682 = vadd.f32 0.0, %v4681
    %v4683 = vpop.f32.mrf.mxu0
    %v4684 = vadd.f32 0.0, %v4683
    %4685 = vmatprep.mubr.bf16.mxu0 0
    %4686 = vmatmul.mubr.bf16.gmra.mxu0 %v4628
    %v4687 = vpop.f32.mrf.mxu0
    %v4688 = vadd.f32 0.0, %v4687
    %v4689 = vpop.f32.mrf.mxu0
    %v4690 = vadd.f32 0.0, %v4689
    %v4691 = vpop.f32.mrf.mxu0
    %v4692 = vadd.f32 0.0, %v4691
    %v4693 = vpop.f32.mrf.mxu0
    %v4694 = vadd.f32 0.0, %v4693
    %4695 = vmatprep.mubr.bf16.mxu0 0
    %4696 = vmatmul.mubr.bf16.gmra.mxu0 %v4631
    %v4697 = vpop.f32.mrf.mxu0
    %v4698 = vadd.f32 0.0, %v4697
    %v4699 = vpop.f32.mrf.mxu0
    %v4700 = vadd.f32 0.0, %v4699
    %v4701 = vpop.f32.mrf.mxu0
    %v4702 = vadd.f32 0.0, %v4701
    %v4703 = vpop.f32.mrf.mxu0
    %v4704 = vadd.f32 0.0, %v4703
    %4705 = vdwg.mxu0
    %4706 = vmatprep.subr.bf16.mxu0 0
    %4707 = vmatpush1.bf16.msra.mxu0 0
    %4708 = vmatprep.subr.bf16.mxu0 0
    %4709 = vmatpush1.bf16.msra.mxu0 0
    %4710 = vmatprep.subr.bf16.mxu0 0
    %4711 = vmatpush1.bf16.msra.mxu0 0
    %4712 = vmatprep.subr.bf16.mxu0 0
    %4713 = vmatpush1.bf16.msra.mxu0 0
    %4714 = vmatprep.subr.bf16.mxu0 0
    %4715 = vmatpush1.bf16.msra.mxu0 %v4608
    %4716 = vmatprep.subr.bf16.mxu0 0
    %4717 = vmatpush1.bf16.msra.mxu0 %v4605
    %4718 = vmatprep.subr.bf16.mxu0 0
    %4719 = vmatpush1.bf16.msra.mxu0 %v4602
    %4720 = vmatprep.subr.bf16.mxu0 0
    %4721 = vmatpush1.bf16.msra.mxu0 %v4599
    %4722 = vmatprep.subr.bf16.mxu0 0
    %4723 = vmatpush2.bf16.msra.mxu0 0
    %4724 = vmatprep.subr.bf16.mxu0 0
    %4725 = vmatpush2.bf16.msra.mxu0 0
    %4726 = vmatprep.subr.bf16.mxu0 0
    %4727 = vmatpush2.bf16.msra.mxu0 0
    %4728 = vmatprep.subr.bf16.mxu0 0
    %4729 = vmatpush2.bf16.msra.mxu0 0
    %4730 = vmatprep.subr.bf16.mxu0 0
    %4731 = vmatpush2.bf16.msra.mxu0 0
    %4732 = vmatprep.subr.bf16.mxu0 0
    %4733 = vmatpush2.bf16.msra.mxu0 0
    %4734 = vmatprep.subr.bf16.mxu0 0
    %4735 = vmatpush2.bf16.msra.mxu0 0
    %4736 = vmatprep.subr.bf16.mxu0 0
    %4737 = vmatpush2.bf16.msra.mxu0 0
    %4738 = vmatprep.mubr.bf16.mxu0 0
    %4739 = vmatmul.mubr.bf16.gmra.mxu0 %v4622
    %v4740 = vpop.f32.mrf.mxu0
    %v4741 = vadd.f32 0.0, %v4740
    %v4742 = vpop.f32.mrf.mxu0
    %v4743 = vpop.f32.mrf.mxu0
    %v4744 = vadd.f32 0.0, %v4743
    %v4745 = vpop.f32.mrf.mxu0
    %4746 = vmatprep.mubr.bf16.mxu0 0
    %4747 = vmatmul.mubr.bf16.gmra.mxu0 %v4625
    %v4748 = vpop.f32.mrf.mxu0
    %v4749 = vadd.f32 0.0, %v4748
    %v4750 = vpop.f32.mrf.mxu0
    %v4751 = vpop.f32.mrf.mxu0
    %v4752 = vadd.f32 0.0, %v4751
    %v4753 = vpop.f32.mrf.mxu0
    %4754 = vmatprep.mubr.bf16.mxu0 0
    %4755 = vmatmul.mubr.bf16.gmra.mxu0 %v4628
    %v4756 = vpop.f32.mrf.mxu0
    %v4757 = vadd.f32 0.0, %v4756
    %v4758 = vpop.f32.mrf.mxu0
    %v4759 = vpop.f32.mrf.mxu0
    %v4760 = vadd.f32 0.0, %v4759
    %v4761 = vpop.f32.mrf.mxu0
    %4762 = vmatprep.mubr.bf16.mxu0 0
    %4763 = vmatmul.mubr.bf16.gmra.mxu0 %v4631
    %v4764 = vpop.f32.mrf.mxu0
    %v4765 = vadd.f32 0.0, %v4764
    %v4766 = vpop.f32.mrf.mxu0
    %v4767 = vpop.f32.mrf.mxu0
    %v4768 = vadd.f32 0.0, %v4767
    %v4769 = vpop.f32.mrf.mxu0
    %4770 = vdwg.mxu0
    %v4771 = vadd.f32 %v4207, %v4668
    %v4772 = vadd.f32 %v4208, %v4670
    %v4773 = vadd.f32 %v4209, %v4741
    %v4774 = vadd.f32 %v4210, %v4672
    %v4775 = vadd.f32 %v4211, %v4674
    %v4776 = vadd.f32 %v4212, %v4744
    %v4777 = vadd.f32 %v4213, %v4678
    %v4778 = vadd.f32 %v4214, %v4680
    %v4779 = vadd.f32 %v4215, %v4749
    %v4780 = vadd.f32 %v4216, %v4682
    %v4781 = vadd.f32 %v4217, %v4684
    %v4782 = vadd.f32 %v4218, %v4752
    %v4783 = vadd.f32 %v4219, %v4688
    %v4784 = vadd.f32 %v4220, %v4690
    %v4785 = vadd.f32 %v4221, %v4757
    %v4786 = vadd.f32 %v4222, %v4692
    %v4787 = vadd.f32 %v4223, %v4694
    %v4788 = vadd.f32 %v4224, %v4760
    %v4789 = vadd.f32 %v4225, %v4698
    %v4790 = vadd.f32 %v4226, %v4700
    %v4791 = vadd.f32 %v4227, %v4765
    %v4792 = vadd.f32 %v4228, %v4702
    %v4793 = vadd.f32 %v4229, %v4704
    %v4794 = vadd.f32 %v4230, %v4768
    %v4796 = vsel %vm2666, %v2576, 0
    %v4799 = vsel %vm2666, %v2585, 0
    %v4802 = vsel %vm2666, %v2594, 0
    %v4805 = vsel %vm2666, %v2603, 0
    %v4808 = vsel %vm2666, %v2579, 0
    %v4811 = vsel %vm2666, %v2588, 0
    %v4814 = vsel %vm2666, %v2597, 0
    %v4817 = vsel %vm2666, %v2606, 0
    %4819 = vmatprep.subr.bf16.mxu0 0
    %4820 = vmatpush1.bf16.xpose.msra.mxu0 0
    %4821 = vmatprep.subr.bf16.mxu0 0
    %4822 = vmatpush1.bf16.xpose.msra.mxu0 0
    %4823 = vmatprep.subr.bf16.mxu0 0
    %4824 = vmatpush1.bf16.xpose.msra.mxu0 0
    %4825 = vmatprep.subr.bf16.mxu0 0
    %4826 = vmatpush1.bf16.xpose.msra.mxu0 0
    %4827 = vmatprep.subr.bf16.mxu0 0
    %4828 = vmatpush1.bf16.xpose.msra.mxu0 %v4817
    %4829 = vmatprep.subr.bf16.mxu0 0
    %4830 = vmatpush1.bf16.xpose.msra.mxu0 %v4814
    %4831 = vmatprep.subr.bf16.mxu0 0
    %4832 = vmatpush1.bf16.xpose.msra.mxu0 %v4811
    %4833 = vmatprep.subr.bf16.mxu0 0
    %4834 = vmatpush1.bf16.xpose.msra.mxu0 %v4808
    %4835 = vmatprep.subr.bf16.mxu0 0
    %4836 = vmatpush2.bf16.xpose.msra.mxu0 0
    %4837 = vmatprep.subr.bf16.mxu0 0
    %4838 = vmatpush2.bf16.xpose.msra.mxu0 0
    %4839 = vmatprep.subr.bf16.mxu0 0
    %4840 = vmatpush2.bf16.xpose.msra.mxu0 0
    %4841 = vmatprep.subr.bf16.mxu0 0
    %4842 = vmatpush2.bf16.xpose.msra.mxu0 0
    %4843 = vmatprep.subr.bf16.mxu0 0
    %4844 = vmatpush2.bf16.xpose.msra.mxu0 0
    %4845 = vmatprep.subr.bf16.mxu0 0
    %4846 = vmatpush2.bf16.xpose.msra.mxu0 0
    %4847 = vmatprep.subr.bf16.mxu0 0
    %4848 = vmatpush2.bf16.xpose.msra.mxu0 0
    %4849 = vmatprep.subr.bf16.mxu0 0
    %4850 = vmatpush2.bf16.xpose.msra.mxu0 0
    %4851 = vmatprep.mubr.bf16.mxu0 0
    %4852 = vmatmul.mubr.bf16.gmra.mxu0 %v4796
    %v4853 = vpop.f32.mrf.mxu0
    %v4854 = vadd.f32 0.0, %v4853
    %v4855 = vpop.f32.mrf.mxu0
    %v4856 = vpop.f32.mrf.mxu0
    %v4857 = vadd.f32 0.0, %v4856
    %v4858 = vpop.f32.mrf.mxu0
    %4859 = vmatprep.mubr.bf16.mxu0 0
    %4860 = vmatmul.mubr.bf16.gmra.mxu0 %v4799
    %v4861 = vpop.f32.mrf.mxu0
    %v4862 = vadd.f32 0.0, %v4861
    %v4863 = vpop.f32.mrf.mxu0
    %v4864 = vpop.f32.mrf.mxu0
    %v4865 = vadd.f32 0.0, %v4864
    %v4866 = vpop.f32.mrf.mxu0
    %4867 = vmatprep.mubr.bf16.mxu0 0
    %4868 = vmatmul.mubr.bf16.gmra.mxu0 %v4802
    %v4869 = vpop.f32.mrf.mxu0
    %v4870 = vadd.f32 0.0, %v4869
    %v4871 = vpop.f32.mrf.mxu0
    %v4872 = vpop.f32.mrf.mxu0
    %v4873 = vadd.f32 0.0, %v4872
    %v4874 = vpop.f32.mrf.mxu0
    %4875 = vmatprep.mubr.bf16.mxu0 0
    %4876 = vmatmul.mubr.bf16.gmra.mxu0 %v4805
    %v4877 = vpop.f32.mrf.mxu0
    %v4878 = vadd.f32 0.0, %v4877
    %v4879 = vpop.f32.mrf.mxu0
    %v4880 = vpop.f32.mrf.mxu0
    %v4881 = vadd.f32 0.0, %v4880
    %v4882 = vpop.f32.mrf.mxu0
    %4883 = vdwg.mxu0
    %v4884 = vsel %vm2657, %v4854, -inf
    %v4885 = vsel %vm2658, %v4857, -inf
    %v4886 = vsel %vm2659, %v4862, -inf
    %v4887 = vsel %vm2660, %v4865, -inf
    %v4888 = vsel %vm2661, %v4870, -inf
    %v4889 = vsel %vm2662, %v4873, -inf
    %v4890 = vsel %vm2663, %v4878, -inf
    %v4891 = vsel %vm2664, %v4881, -inf
    %v4892 = vsel %vm2666, %v4884, -inf
    %4893 = vmax.xlane.f32.xlu0 %v4892
    %v4894 = vpop.xlane.xlu0 %4893
    %v4895 = vsel %vm2666, %v4885, -inf
    %4896 = vmax.xlane.f32.xlu0 %v4895
    %v4897 = vpop.xlane.xlu0 %4896
    %v4898 = vsel %vm2666, %v4886, -inf
    %4899 = vmax.xlane.f32.xlu0 %v4898
    %v4900 = vpop.xlane.xlu0 %4899
    %v4901 = vsel %vm2666, %v4887, -inf
    %4902 = vmax.xlane.f32.xlu0 %v4901
    %v4903 = vpop.xlane.xlu0 %4902
    %v4904 = vsel %vm2666, %v4888, -inf
    %4905 = vmax.xlane.f32.xlu0 %v4904
    %v4906 = vpop.xlane.xlu0 %4905
    %v4907 = vsel %vm2666, %v4889, -inf
    %4908 = vmax.xlane.f32.xlu0 %v4907
    %v4909 = vpop.xlane.xlu0 %4908
    %v4910 = vsel %vm2666, %v4890, -inf
    %4911 = vmax.xlane.f32.xlu0 %v4910
    %v4912 = vpop.xlane.xlu0 %4911
    %v4913 = vsel %vm2666, %v4891, -inf
    %4914 = vmax.xlane.f32.xlu0 %v4913
    %v4915 = vpop.xlane.xlu0 %4914
    %v4916 = vsub.f32 %v4884, %v4894
    %v4917 = vsub.f32 %v4885, %v4897
    %v4918 = vsub.f32 %v4886, %v4900
    %v4919 = vsub.f32 %v4887, %v4903
    %v4920 = vsub.f32 %v4888, %v4906
    %v4921 = vsub.f32 %v4889, %v4909
    %v4922 = vsub.f32 %v4890, %v4912
    %v4923 = vsub.f32 %v4891, %v4915
    %v4924 = vmul.f32 %v4916, 1.442695
    %v4925 = vpow.pop %v4924
    %v4926 = vmul.f32 %v4917, 1.442695
    %v4927 = vpow.pop %v4926
    %v4928 = vmul.f32 %v4918, 1.442695
    %v4929 = vpow.pop %v4928
    %v4930 = vmul.f32 %v4919, 1.442695
    %v4931 = vpow.pop %v4930
    %v4932 = vmul.f32 %v4920, 1.442695
    %v4933 = vpow.pop %v4932
    %v4934 = vmul.f32 %v4921, 1.442695
    %v4935 = vpow.pop %v4934
    %v4936 = vmul.f32 %v4922, 1.442695
    %v4937 = vpow.pop %v4936
    %v4938 = vmul.f32 %v4923, 1.442695
    %v4939 = vpow.pop %v4938
    %v4940 = vsel %vm2666, %v4925, 0.0
    %4941 = vadd.xlane.f32.xlu0 %v4940
    %v4942 = vpop.xlane.xlu0 %4941
    %v4943 = vsel %vm2666, %v4927, 0.0
    %4944 = vadd.xlane.f32.xlu0 %v4943
    %v4945 = vpop.xlane.xlu0 %4944
    %v4946 = vsel %vm2666, %v4929, 0.0
    %4947 = vadd.xlane.f32.xlu0 %v4946
    %v4948 = vpop.xlane.xlu0 %4947
    %v4949 = vsel %vm2666, %v4931, 0.0
    %4950 = vadd.xlane.f32.xlu0 %v4949
    %v4951 = vpop.xlane.xlu0 %4950
    %v4952 = vsel %vm2666, %v4933, 0.0
    %4953 = vadd.xlane.f32.xlu0 %v4952
    %v4954 = vpop.xlane.xlu0 %4953
    %v4955 = vsel %vm2666, %v4935, 0.0
    %4956 = vadd.xlane.f32.xlu0 %v4955
    %v4957 = vpop.xlane.xlu0 %4956
    %v4958 = vsel %vm2666, %v4937, 0.0
    %4959 = vadd.xlane.f32.xlu0 %v4958
    %v4960 = vpop.xlane.xlu0 %4959
    %v4961 = vsel %vm2666, %v4939, 0.0
    %4962 = vadd.xlane.f32.xlu0 %v4961
    %v4963 = vpop.xlane.xlu0 %4962
    %v4964 = vrcp.pop %v4942
    %v4965 = vrcp.pop %v4945
    %v4966 = vrcp.pop %v4948
    %v4967 = vrcp.pop %v4951
    %v4968 = vrcp.pop %v4954
    %v4969 = vrcp.pop %v4957
    %v4970 = vrcp.pop %v4960
    %v4971 = vrcp.pop %v4963
    %v4972 = vmul.f32 %v4925, %v4964
    %v4973 = vmul.f32 %v4927, %v4965
    %v4974 = vmul.f32 %v4929, %v4966
    %v4975 = vmul.f32 %v4931, %v4967
    %v4976 = vmul.f32 %v4933, %v4968
    %v4977 = vmul.f32 %v4935, %v4969
    %v4978 = vmul.f32 %v4937, %v4970
    %v4979 = vmul.f32 %v4939, %v4971
    %v4980 = vpack.c.bf16 %v4973, %v4972
    %v4981 = vpack.c.bf16 %v4975, %v4974
    %v4982 = vpack.c.bf16 %v4977, %v4976
    %v4983 = vpack.c.bf16 %v4979, %v4978
    %v4985 = vsel %vm2666, %v4980, 0
    %v4988 = vsel %vm2666, %v4981, 0
    %v4991 = vsel %vm2666, %v4982, 0
    %v4994 = vsel %vm2666, %v4983, 0
    %4996 = vmatprep.subr.bf16.mxu0 0
    %4997 = vmatpush1.bf16.msra.mxu0 0
    %4998 = vmatprep.subr.bf16.mxu0 0
    %4999 = vmatpush1.bf16.msra.mxu0 0
    %5000 = vmatprep.subr.bf16.mxu0 0
    %5001 = vmatpush1.bf16.msra.mxu0 0
    %5002 = vmatprep.subr.bf16.mxu0 0
    %5003 = vmatpush1.bf16.msra.mxu0 0
    %5004 = vmatprep.subr.bf16.mxu0 0
    %5005 = vmatpush1.bf16.msra.mxu0 %v2609
    %5006 = vmatprep.subr.bf16.mxu0 0
    %5007 = vmatpush1.bf16.msra.mxu0 %v2600
    %5008 = vmatprep.subr.bf16.mxu0 0
    %5009 = vmatpush1.bf16.msra.mxu0 %v2591
    %5010 = vmatprep.subr.bf16.mxu0 0
    %5011 = vmatpush1.bf16.msra.mxu0 %v2582
    %5012 = vmatprep.subr.bf16.mxu0 0
    %5013 = vmatpush2.bf16.msra.mxu0 0
    %5014 = vmatprep.subr.bf16.mxu0 0
    %5015 = vmatpush2.bf16.msra.mxu0 0
    %5016 = vmatprep.subr.bf16.mxu0 0
    %5017 = vmatpush2.bf16.msra.mxu0 0
    %5018 = vmatprep.subr.bf16.mxu0 0
    %5019 = vmatpush2.bf16.msra.mxu0 0
    %5020 = vmatprep.subr.bf16.mxu0 0
    %5021 = vmatpush2.bf16.msra.mxu0 0
    %5022 = vmatprep.subr.bf16.mxu0 0
    %5023 = vmatpush2.bf16.msra.mxu0 0
    %5024 = vmatprep.subr.bf16.mxu0 0
    %5025 = vmatpush2.bf16.msra.mxu0 0
    %5026 = vmatprep.subr.bf16.mxu0 0
    %5027 = vmatpush2.bf16.msra.mxu0 0
    %5028 = vmatprep.mubr.bf16.mxu0 0
    %5029 = vmatmul.mubr.bf16.gmra.mxu0 %v4985
    %v5030 = vpop.f32.mrf.mxu0
    %v5031 = vadd.f32 0.0, %v5030
    %v5032 = vpop.f32.mrf.mxu0
    %v5033 = vpop.f32.mrf.mxu0
    %v5034 = vadd.f32 0.0, %v5033
    %v5035 = vpop.f32.mrf.mxu0
    %5036 = vmatprep.mubr.bf16.mxu0 0
    %5037 = vmatmul.mubr.bf16.gmra.mxu0 %v4988
    %v5038 = vpop.f32.mrf.mxu0
    %v5039 = vadd.f32 0.0, %v5038
    %v5040 = vpop.f32.mrf.mxu0
    %v5041 = vpop.f32.mrf.mxu0
    %v5042 = vadd.f32 0.0, %v5041
    %v5043 = vpop.f32.mrf.mxu0
    %5044 = vmatprep.mubr.bf16.mxu0 0
    %5045 = vmatmul.mubr.bf16.gmra.mxu0 %v4991
    %v5046 = vpop.f32.mrf.mxu0
    %v5047 = vadd.f32 0.0, %v5046
    %v5048 = vpop.f32.mrf.mxu0
    %v5049 = vpop.f32.mrf.mxu0
    %v5050 = vadd.f32 0.0, %v5049
    %v5051 = vpop.f32.mrf.mxu0
    %5052 = vmatprep.mubr.bf16.mxu0 0
    %5053 = vmatmul.mubr.bf16.gmra.mxu0 %v4994
    %v5054 = vpop.f32.mrf.mxu0
    %v5055 = vadd.f32 0.0, %v5054
    %v5056 = vpop.f32.mrf.mxu0
    %v5057 = vpop.f32.mrf.mxu0
    %v5058 = vadd.f32 0.0, %v5057
    %v5059 = vpop.f32.mrf.mxu0
    %5060 = vdwg.mxu0
    %v5061 = vpack.c.bf16 %v5034, %v5031
    %v5062 = vpack.c.bf16 %v5042, %v5039
    %v5063 = vpack.c.bf16 %v5050, %v5047
    %v5064 = vpack.c.bf16 %v5058, %v5055
    %v5065 = vld [vmem:[#allocation7 + $0x180] sm:$0xff]
    %v5066 = vld [vmem:[#allocation7 + $0x188] sm:$0xf]
    %v5067 = vld [vmem:[#allocation7 + $0x18c] sm:$0xff]
    %v5068 = vld [vmem:[#allocation7 + $0x194] sm:$0xf]
    %v5069 = vld [vmem:[#allocation7 + $0x198] sm:$0xff]
    %v5070 = vld [vmem:[#allocation7 + $0x1a0] sm:$0xf]
    %v5071 = vld [vmem:[#allocation7 + $0x1a4] sm:$0xff]
    %v5072 = vld [vmem:[#allocation7 + $0x1ac] sm:$0xf]
    %v5073 = vld [vmem:[#allocation7 + $0x1b0] sm:$0xff]
    %v5074 = vld [vmem:[#allocation7 + $0x1b8] sm:$0xf]
    %v5075 = vld [vmem:[#allocation7 + $0x1bc] sm:$0xff]
    %v5076 = vld [vmem:[#allocation7 + $0x1c4] sm:$0xf]
    %v5077 = vld [vmem:[#allocation7 + $0x1c8] sm:$0xff]
    %v5078 = vld [vmem:[#allocation7 + $0x1d0] sm:$0xf]
    %v5079 = vld [vmem:[#allocation7 + $0x1d4] sm:$0xff]
    %v5080 = vld [vmem:[#allocation7 + $0x1dc] sm:$0xf]
    %v5097 = vunpack.c.l.b16 %v5065
    %v5098 = vunpack.c.h.b16 %v5065
    %v5099 = vunpack.c.l.b16 %v5066
    %v5100 = vunpack.c.l.b16 %v5067
    %v5101 = vunpack.c.h.b16 %v5067
    %v5102 = vunpack.c.l.b16 %v5068
    %v5103 = vunpack.c.l.b16 %v5069
    %v5104 = vunpack.c.h.b16 %v5069
    %v5105 = vunpack.c.l.b16 %v5070
    %v5106 = vunpack.c.l.b16 %v5071
    %v5107 = vunpack.c.h.b16 %v5071
    %v5108 = vunpack.c.l.b16 %v5072
    %v5109 = vunpack.c.l.b16 %v5073
    %v5110 = vunpack.c.h.b16 %v5073
    %v5111 = vunpack.c.l.b16 %v5074
    %v5112 = vunpack.c.l.b16 %v5075
    %v5113 = vunpack.c.h.b16 %v5075
    %v5114 = vunpack.c.l.b16 %v5076
    %v5115 = vunpack.c.l.b16 %v5077
    %v5116 = vunpack.c.h.b16 %v5077
    %v5117 = vunpack.c.l.b16 %v5078
    %v5118 = vunpack.c.l.b16 %v5079
    %v5119 = vunpack.c.h.b16 %v5079
    %v5120 = vunpack.c.l.b16 %v5080
    %v5121 = vpack.c.b16 %v5100, %v5097
    %v5122 = vpack.c.b16 %v5101, %v5098
    %v5123 = vpack.c.b16 %v5102, %v5099
    %v5124 = vpack.c.b16 %v5106, %v5103
    %v5125 = vpack.c.b16 %v5107, %v5104
    %v5126 = vpack.c.b16 %v5108, %v5105
    %v5127 = vpack.c.b16 %v5112, %v5109
    %v5128 = vpack.c.b16 %v5113, %v5110
    %v5129 = vpack.c.b16 %v5114, %v5111
    %v5130 = vpack.c.b16 %v5118, %v5115
    %v5131 = vpack.c.b16 %v5119, %v5116
    %v5132 = vpack.c.b16 %v5120, %v5117
    %v5146 = vsel %vm2666, %v5061, 0
    %v5149 = vsel %vm2666, %v5062, 0
    %v5152 = vsel %vm2666, %v5063, 0
    %v5155 = vsel %vm2666, %v5064, 0
    %5157 = vmatprep.subr.bf16.mxu0 0
    %5158 = vmatpush1.bf16.msra.mxu0 0
    %5159 = vmatprep.subr.bf16.mxu0 0
    %5160 = vmatpush1.bf16.msra.mxu0 0
    %5161 = vmatprep.subr.bf16.mxu0 0
    %5162 = vmatpush1.bf16.msra.mxu0 0
    %5163 = vmatprep.subr.bf16.mxu0 0
    %5164 = vmatpush1.bf16.msra.mxu0 0
    %5165 = vmatprep.subr.bf16.mxu0 %v5131
    %5166 = vmatpush1.bf16.msra.mxu0 %v5130
    %5167 = vmatprep.subr.bf16.mxu0 %v5128
    %5168 = vmatpush1.bf16.msra.mxu0 %v5127
    %5169 = vmatprep.subr.bf16.mxu0 %v5125
    %5170 = vmatpush1.bf16.msra.mxu0 %v5124
    %5171 = vmatprep.subr.bf16.mxu0 %v5122
    %5172 = vmatpush1.bf16.msra.mxu0 %v5121
    %5173 = vmatprep.subr.bf16.mxu0 0
    %5174 = vmatpush2.bf16.msra.mxu0 0
    %5175 = vmatprep.subr.bf16.mxu0 0
    %5176 = vmatpush2.bf16.msra.mxu0 0
    %5177 = vmatprep.subr.bf16.mxu0 0
    %5178 = vmatpush2.bf16.msra.mxu0 0
    %5179 = vmatprep.subr.bf16.mxu0 0
    %5180 = vmatpush2.bf16.msra.mxu0 0
    %5181 = vmatprep.subr.bf16.mxu0 0
    %5182 = vmatpush2.bf16.msra.mxu0 0
    %5183 = vmatprep.subr.bf16.mxu0 0
    %5184 = vmatpush2.bf16.msra.mxu0 0
    %5185 = vmatprep.subr.bf16.mxu0 0
    %5186 = vmatpush2.bf16.msra.mxu0 0
    %5187 = vmatprep.subr.bf16.mxu0 0
    %5188 = vmatpush2.bf16.msra.mxu0 0
    %5189 = vmatprep.mubr.bf16.mxu0 0
    %5190 = vmatmul.mubr.bf16.gmra.mxu0 %v5146
    %v5191 = vpop.f32.mrf.mxu0
    %v5192 = vadd.f32 0.0, %v5191
    %v5193 = vpop.f32.mrf.mxu0
    %v5194 = vadd.f32 0.0, %v5193
    %v5195 = vpop.f32.mrf.mxu0
    %v5196 = vadd.f32 0.0, %v5195
    %v5197 = vpop.f32.mrf.mxu0
    %v5198 = vadd.f32 0.0, %v5197
    %5199 = vmatprep.mubr.bf16.mxu0 0
    %5200 = vmatmul.mubr.bf16.gmra.mxu0 %v5149
    %v5201 = vpop.f32.mrf.mxu0
    %v5202 = vadd.f32 0.0, %v5201
    %v5203 = vpop.f32.mrf.mxu0
    %v5204 = vadd.f32 0.0, %v5203
    %v5205 = vpop.f32.mrf.mxu0
    %v5206 = vadd.f32 0.0, %v5205
    %v5207 = vpop.f32.mrf.mxu0
    %v5208 = vadd.f32 0.0, %v5207
    %5209 = vmatprep.mubr.bf16.mxu0 0
    %5210 = vmatmul.mubr.bf16.gmra.mxu0 %v5152
    %v5211 = vpop.f32.mrf.mxu0
    %v5212 = vadd.f32 0.0, %v5211
    %v5213 = vpop.f32.mrf.mxu0
    %v5214 = vadd.f32 0.0, %v5213
    %v5215 = vpop.f32.mrf.mxu0
    %v5216 = vadd.f32 0.0, %v5215
    %v5217 = vpop.f32.mrf.mxu0
    %v5218 = vadd.f32 0.0, %v5217
    %5219 = vmatprep.mubr.bf16.mxu0 0
    %5220 = vmatmul.mubr.bf16.gmra.mxu0 %v5155
    %v5221 = vpop.f32.mrf.mxu0
    %v5222 = vadd.f32 0.0, %v5221
    %v5223 = vpop.f32.mrf.mxu0
    %v5224 = vadd.f32 0.0, %v5223
    %v5225 = vpop.f32.mrf.mxu0
    %v5226 = vadd.f32 0.0, %v5225
    %v5227 = vpop.f32.mrf.mxu0
    %v5228 = vadd.f32 0.0, %v5227
    %5229 = vdwg.mxu0
    %5230 = vmatprep.subr.bf16.mxu0 0
    %5231 = vmatpush1.bf16.msra.mxu0 0
    %5232 = vmatprep.subr.bf16.mxu0 0
    %5233 = vmatpush1.bf16.msra.mxu0 0
    %5234 = vmatprep.subr.bf16.mxu0 0
    %5235 = vmatpush1.bf16.msra.mxu0 0
    %5236 = vmatprep.subr.bf16.mxu0 0
    %5237 = vmatpush1.bf16.msra.mxu0 0
    %5238 = vmatprep.subr.bf16.mxu0 0
    %5239 = vmatpush1.bf16.msra.mxu0 %v5132
    %5240 = vmatprep.subr.bf16.mxu0 0
    %5241 = vmatpush1.bf16.msra.mxu0 %v5129
    %5242 = vmatprep.subr.bf16.mxu0 0
    %5243 = vmatpush1.bf16.msra.mxu0 %v5126
    %5244 = vmatprep.subr.bf16.mxu0 0
    %5245 = vmatpush1.bf16.msra.mxu0 %v5123
    %5246 = vmatprep.subr.bf16.mxu0 0
    %5247 = vmatpush2.bf16.msra.mxu0 0
    %5248 = vmatprep.subr.bf16.mxu0 0
    %5249 = vmatpush2.bf16.msra.mxu0 0
    %5250 = vmatprep.subr.bf16.mxu0 0
    %5251 = vmatpush2.bf16.msra.mxu0 0
    %5252 = vmatprep.subr.bf16.mxu0 0
    %5253 = vmatpush2.bf16.msra.mxu0 0
    %5254 = vmatprep.subr.bf16.mxu0 0
    %5255 = vmatpush2.bf16.msra.mxu0 0
    %5256 = vmatprep.subr.bf16.mxu0 0
    %5257 = vmatpush2.bf16.msra.mxu0 0
    %5258 = vmatprep.subr.bf16.mxu0 0
    %5259 = vmatpush2.bf16.msra.mxu0 0
    %5260 = vmatprep.subr.bf16.mxu0 0
    %5261 = vmatpush2.bf16.msra.mxu0 0
    %5262 = vmatprep.mubr.bf16.mxu0 0
    %5263 = vmatmul.mubr.bf16.gmra.mxu0 %v5146
    %v5264 = vpop.f32.mrf.mxu0
    %v5265 = vadd.f32 0.0, %v5264
    %v5266 = vpop.f32.mrf.mxu0
    %v5267 = vpop.f32.mrf.mxu0
    %v5268 = vadd.f32 0.0, %v5267
    %v5269 = vpop.f32.mrf.mxu0
    %5270 = vmatprep.mubr.bf16.mxu0 0
    %5271 = vmatmul.mubr.bf16.gmra.mxu0 %v5149
    %v5272 = vpop.f32.mrf.mxu0
    %v5273 = vadd.f32 0.0, %v5272
    %v5274 = vpop.f32.mrf.mxu0
    %v5275 = vpop.f32.mrf.mxu0
    %v5276 = vadd.f32 0.0, %v5275
    %v5277 = vpop.f32.mrf.mxu0
    %5278 = vmatprep.mubr.bf16.mxu0 0
    %5279 = vmatmul.mubr.bf16.gmra.mxu0 %v5152
    %v5280 = vpop.f32.mrf.mxu0
    %v5281 = vadd.f32 0.0, %v5280
    %v5282 = vpop.f32.mrf.mxu0
    %v5283 = vpop.f32.mrf.mxu0
    %v5284 = vadd.f32 0.0, %v5283
    %v5285 = vpop.f32.mrf.mxu0
    %5286 = vmatprep.mubr.bf16.mxu0 0
    %5287 = vmatmul.mubr.bf16.gmra.mxu0 %v5155
    %v5288 = vpop.f32.mrf.mxu0
    %v5289 = vadd.f32 0.0, %v5288
    %v5290 = vpop.f32.mrf.mxu0
    %v5291 = vpop.f32.mrf.mxu0
    %v5292 = vadd.f32 0.0, %v5291
    %v5293 = vpop.f32.mrf.mxu0
    %5294 = vdwg.mxu0
    %v5295 = vadd.f32 %v4771, %v5192
    %v5296 = vadd.f32 %v4772, %v5194
    %v5297 = vadd.f32 %v4773, %v5265
    %v5298 = vadd.f32 %v4774, %v5196
    %v5299 = vadd.f32 %v4775, %v5198
    %v5300 = vadd.f32 %v4776, %v5268
    %v5301 = vadd.f32 %v4777, %v5202
    %v5302 = vadd.f32 %v4778, %v5204
    %v5303 = vadd.f32 %v4779, %v5273
    %v5304 = vadd.f32 %v4780, %v5206
    %v5305 = vadd.f32 %v4781, %v5208
    %v5306 = vadd.f32 %v4782, %v5276
    %v5307 = vadd.f32 %v4783, %v5212
    %v5308 = vadd.f32 %v4784, %v5214
    %v5309 = vadd.f32 %v4785, %v5281
    %v5310 = vadd.f32 %v4786, %v5216
    %v5311 = vadd.f32 %v4787, %v5218
    %v5312 = vadd.f32 %v4788, %v5284
    %v5313 = vadd.f32 %v4789, %v5222
    %v5314 = vadd.f32 %v4790, %v5224
    %v5315 = vadd.f32 %v4791, %v5289
    %v5316 = vadd.f32 %v4792, %v5226
    %v5317 = vadd.f32 %v4793, %v5228
    %v5318 = vadd.f32 %v4794, %v5292
    %5323 = vrot.lane.b32.xlu0 %v2576, 64
    %v5324 = vpop.permute.xlu0 %5323
    %5325 = vrot.lane.b32.xlu0 %v2585, 64
    %v5326 = vpop.permute.xlu0 %5325
    %5327 = vrot.lane.b32.xlu0 %v2594, 64
    %v5328 = vpop.permute.xlu0 %5327
    %5329 = vrot.lane.b32.xlu0 %v2603, 64
    %v5330 = vpop.permute.xlu0 %5329
    %5335 = vrot.lane.b32.xlu0 %v2579, 64
    %v5336 = vpop.permute.xlu0 %5335
    %5337 = vrot.lane.b32.xlu0 %v2588, 64
    %v5338 = vpop.permute.xlu0 %5337
    %5339 = vrot.lane.b32.xlu0 %v2597, 64
    %v5340 = vpop.permute.xlu0 %5339
    %5341 = vrot.lane.b32.xlu0 %v2606, 64
    %v5342 = vpop.permute.xlu0 %5341
    %v5344 = vsel %vm2666, %v5324, 0
    %v5347 = vsel %vm2666, %v5326, 0
    %v5350 = vsel %vm2666, %v5328, 0
    %v5353 = vsel %vm2666, %v5330, 0
    %v5356 = vsel %vm2666, %v5336, 0
    %v5359 = vsel %vm2666, %v5338, 0
    %v5362 = vsel %vm2666, %v5340, 0
    %v5365 = vsel %vm2666, %v5342, 0
    %5367 = vmatprep.subr.bf16.mxu0 0
    %5368 = vmatpush1.bf16.xpose.msra.mxu0 0
    %5369 = vmatprep.subr.bf16.mxu0 0
    %5370 = vmatpush1.bf16.xpose.msra.mxu0 0
    %5371 = vmatprep.subr.bf16.mxu0 0
    %5372 = vmatpush1.bf16.xpose.msra.mxu0 0
    %5373 = vmatprep.subr.bf16.mxu0 0
    %5374 = vmatpush1.bf16.xpose.msra.mxu0 0
    %5375 = vmatprep.subr.bf16.mxu0 0
    %5376 = vmatpush1.bf16.xpose.msra.mxu0 %v5365
    %5377 = vmatprep.subr.bf16.mxu0 0
    %5378 = vmatpush1.bf16.xpose.msra.mxu0 %v5362
    %5379 = vmatprep.subr.bf16.mxu0 0
    %5380 = vmatpush1.bf16.xpose.msra.mxu0 %v5359
    %5381 = vmatprep.subr.bf16.mxu0 0
    %5382 = vmatpush1.bf16.xpose.msra.mxu0 %v5356
    %5383 = vmatprep.subr.bf16.mxu0 0
    %5384 = vmatpush2.bf16.xpose.msra.mxu0 0
    %5385 = vmatprep.subr.bf16.mxu0 0
    %5386 = vmatpush2.bf16.xpose.msra.mxu0 0
    %5387 = vmatprep.subr.bf16.mxu0 0
    %5388 = vmatpush2.bf16.xpose.msra.mxu0 0
    %5389 = vmatprep.subr.bf16.mxu0 0
    %5390 = vmatpush2.bf16.xpose.msra.mxu0 0
    %5391 = vmatprep.subr.bf16.mxu0 0
    %5392 = vmatpush2.bf16.xpose.msra.mxu0 0
    %5393 = vmatprep.subr.bf16.mxu0 0
    %5394 = vmatpush2.bf16.xpose.msra.mxu0 0
    %5395 = vmatprep.subr.bf16.mxu0 0
    %5396 = vmatpush2.bf16.xpose.msra.mxu0 0
    %5397 = vmatprep.subr.bf16.mxu0 0
    %5398 = vmatpush2.bf16.xpose.msra.mxu0 0
    %5399 = vmatprep.mubr.bf16.mxu0 0
    %5400 = vmatmul.mubr.bf16.gmra.mxu0 %v5344
    %v5401 = vpop.f32.mrf.mxu0
    %v5402 = vadd.f32 0.0, %v5401
    %v5403 = vpop.f32.mrf.mxu0
    %v5404 = vpop.f32.mrf.mxu0
    %v5405 = vadd.f32 0.0, %v5404
    %v5406 = vpop.f32.mrf.mxu0
    %5407 = vmatprep.mubr.bf16.mxu0 0
    %5408 = vmatmul.mubr.bf16.gmra.mxu0 %v5347
    %v5409 = vpop.f32.mrf.mxu0
    %v5410 = vadd.f32 0.0, %v5409
    %v5411 = vpop.f32.mrf.mxu0
    %v5412 = vpop.f32.mrf.mxu0
    %v5413 = vadd.f32 0.0, %v5412
    %v5414 = vpop.f32.mrf.mxu0
    %5415 = vmatprep.mubr.bf16.mxu0 0
    %5416 = vmatmul.mubr.bf16.gmra.mxu0 %v5350
    %v5417 = vpop.f32.mrf.mxu0
    %v5418 = vadd.f32 0.0, %v5417
    %v5419 = vpop.f32.mrf.mxu0
    %v5420 = vpop.f32.mrf.mxu0
    %v5421 = vadd.f32 0.0, %v5420
    %v5422 = vpop.f32.mrf.mxu0
    %5423 = vmatprep.mubr.bf16.mxu0 0
    %5424 = vmatmul.mubr.bf16.gmra.mxu0 %v5353
    %v5425 = vpop.f32.mrf.mxu0
    %v5426 = vadd.f32 0.0, %v5425
    %v5427 = vpop.f32.mrf.mxu0
    %v5428 = vpop.f32.mrf.mxu0
    %v5429 = vadd.f32 0.0, %v5428
    %v5430 = vpop.f32.mrf.mxu0
    %5431 = vdwg.mxu0
    %v5432 = vsel %vm2657, %v5402, -inf
    %v5433 = vsel %vm2658, %v5405, -inf
    %v5434 = vsel %vm2659, %v5410, -inf
    %v5435 = vsel %vm2660, %v5413, -inf
    %v5436 = vsel %vm2661, %v5418, -inf
    %v5437 = vsel %vm2662, %v5421, -inf
    %v5438 = vsel %vm2663, %v5426, -inf
    %v5439 = vsel %vm2664, %v5429, -inf
    %v5440 = vsel %vm2666, %v5432, -inf
    %5441 = vmax.xlane.f32.xlu0 %v5440
    %v5442 = vpop.xlane.xlu0 %5441
    %v5443 = vsel %vm2666, %v5433, -inf
    %5444 = vmax.xlane.f32.xlu0 %v5443
    %v5445 = vpop.xlane.xlu0 %5444
    %v5446 = vsel %vm2666, %v5434, -inf
    %5447 = vmax.xlane.f32.xlu0 %v5446
    %v5448 = vpop.xlane.xlu0 %5447
    %v5449 = vsel %vm2666, %v5435, -inf
    %5450 = vmax.xlane.f32.xlu0 %v5449
    %v5451 = vpop.xlane.xlu0 %5450
    %v5452 = vsel %vm2666, %v5436, -inf
    %5453 = vmax.xlane.f32.xlu0 %v5452
    %v5454 = vpop.xlane.xlu0 %5453
    %v5455 = vsel %vm2666, %v5437, -inf
    %5456 = vmax.xlane.f32.xlu0 %v5455
    %v5457 = vpop.xlane.xlu0 %5456
    %v5458 = vsel %vm2666, %v5438, -inf
    %5459 = vmax.xlane.f32.xlu0 %v5458
    %v5460 = vpop.xlane.xlu0 %5459
    %v5461 = vsel %vm2666, %v5439, -inf
    %5462 = vmax.xlane.f32.xlu0 %v5461
    %v5463 = vpop.xlane.xlu0 %5462
    %v5464 = vsub.f32 %v5432, %v5442
    %v5465 = vsub.f32 %v5433, %v5445
    %v5466 = vsub.f32 %v5434, %v5448
    %v5467 = vsub.f32 %v5435, %v5451
    %v5468 = vsub.f32 %v5436, %v5454
    %v5469 = vsub.f32 %v5437, %v5457
    %v5470 = vsub.f32 %v5438, %v5460
    %v5471 = vsub.f32 %v5439, %v5463
    %v5472 = vmul.f32 %v5464, 1.442695
    %v5473 = vpow.pop %v5472
    %v5474 = vmul.f32 %v5465, 1.442695
    %v5475 = vpow.pop %v5474
    %v5476 = vmul.f32 %v5466, 1.442695
    %v5477 = vpow.pop %v5476
    %v5478 = vmul.f32 %v5467, 1.442695
    %v5479 = vpow.pop %v5478
    %v5480 = vmul.f32 %v5468, 1.442695
    %v5481 = vpow.pop %v5480
    %v5482 = vmul.f32 %v5469, 1.442695
    %v5483 = vpow.pop %v5482
    %v5484 = vmul.f32 %v5470, 1.442695
    %v5485 = vpow.pop %v5484
    %v5486 = vmul.f32 %v5471, 1.442695
    %v5487 = vpow.pop %v5486
    %v5488 = vsel %vm2666, %v5473, 0.0
    %5489 = vadd.xlane.f32.xlu0 %v5488
    %v5490 = vpop.xlane.xlu0 %5489
    %v5491 = vsel %vm2666, %v5475, 0.0
    %5492 = vadd.xlane.f32.xlu0 %v5491
    %v5493 = vpop.xlane.xlu0 %5492
    %v5494 = vsel %vm2666, %v5477, 0.0
    %5495 = vadd.xlane.f32.xlu0 %v5494
    %v5496 = vpop.xlane.xlu0 %5495
    %v5497 = vsel %vm2666, %v5479, 0.0
    %5498 = vadd.xlane.f32.xlu0 %v5497
    %v5499 = vpop.xlane.xlu0 %5498
    %v5500 = vsel %vm2666, %v5481, 0.0
    %5501 = vadd.xlane.f32.xlu0 %v5500
    %v5502 = vpop.xlane.xlu0 %5501
    %v5503 = vsel %vm2666, %v5483, 0.0
    %5504 = vadd.xlane.f32.xlu0 %v5503
    %v5505 = vpop.xlane.xlu0 %5504
    %v5506 = vsel %vm2666, %v5485, 0.0
    %5507 = vadd.xlane.f32.xlu0 %v5506
    %v5508 = vpop.xlane.xlu0 %5507
    %v5509 = vsel %vm2666, %v5487, 0.0
    %5510 = vadd.xlane.f32.xlu0 %v5509
    %v5511 = vpop.xlane.xlu0 %5510
    %v5512 = vrcp.pop %v5490
    %v5513 = vrcp.pop %v5493
    %v5514 = vrcp.pop %v5496
    %v5515 = vrcp.pop %v5499
    %v5516 = vrcp.pop %v5502
    %v5517 = vrcp.pop %v5505
    %v5518 = vrcp.pop %v5508
    %v5519 = vrcp.pop %v5511
    %v5520 = vmul.f32 %v5473, %v5512
    %v5521 = vmul.f32 %v5475, %v5513
    %v5522 = vmul.f32 %v5477, %v5514
    %v5523 = vmul.f32 %v5479, %v5515
    %v5524 = vmul.f32 %v5481, %v5516
    %v5525 = vmul.f32 %v5483, %v5517
    %v5526 = vmul.f32 %v5485, %v5518
    %v5527 = vmul.f32 %v5487, %v5519
    %v5528 = vpack.c.bf16 %v5521, %v5520
    %v5529 = vpack.c.bf16 %v5523, %v5522
    %v5530 = vpack.c.bf16 %v5525, %v5524
    %v5531 = vpack.c.bf16 %v5527, %v5526
    %5536 = vrot.lane.b32.xlu0 %v2582, 64
    %v5537 = vpop.permute.xlu0 %5536
    %5538 = vrot.lane.b32.xlu0 %v2591, 64
    %v5539 = vpop.permute.xlu0 %5538
    %5540 = vrot.lane.b32.xlu0 %v2600, 64
    %v5541 = vpop.permute.xlu0 %5540
    %5542 = vrot.lane.b32.xlu0 %v2609, 64
    %v5543 = vpop.permute.xlu0 %5542
    %v5549 = vsel %vm2666, %v5528, 0
    %v5552 = vsel %vm2666, %v5529, 0
    %v5555 = vsel %vm2666, %v5530, 0
    %v5558 = vsel %vm2666, %v5531, 0
    %5560 = vmatprep.subr.bf16.mxu0 0
    %5561 = vmatpush1.bf16.msra.mxu0 0
    %5562 = vmatprep.subr.bf16.mxu0 0
    %5563 = vmatpush1.bf16.msra.mxu0 0
    %5564 = vmatprep.subr.bf16.mxu0 0
    %5565 = vmatpush1.bf16.msra.mxu0 0
    %5566 = vmatprep.subr.bf16.mxu0 0
    %5567 = vmatpush1.bf16.msra.mxu0 0
    %5568 = vmatprep.subr.bf16.mxu0 0
    %5569 = vmatpush1.bf16.msra.mxu0 %v5543
    %5570 = vmatprep.subr.bf16.mxu0 0
    %5571 = vmatpush1.bf16.msra.mxu0 %v5541
    %5572 = vmatprep.subr.bf16.mxu0 0
    %5573 = vmatpush1.bf16.msra.mxu0 %v5539
    %5574 = vmatprep.subr.bf16.mxu0 0
    %5575 = vmatpush1.bf16.msra.mxu0 %v5537
    %5576 = vmatprep.subr.bf16.mxu0 0
    %5577 = vmatpush2.bf16.msra.mxu0 0
    %5578 = vmatprep.subr.bf16.mxu0 0
    %5579 = vmatpush2.bf16.msra.mxu0 0
    %5580 = vmatprep.subr.bf16.mxu0 0
    %5581 = vmatpush2.bf16.msra.mxu0 0
    %5582 = vmatprep.subr.bf16.mxu0 0
    %5583 = vmatpush2.bf16.msra.mxu0 0
    %5584 = vmatprep.subr.bf16.mxu0 0
    %5585 = vmatpush2.bf16.msra.mxu0 0
    %5586 = vmatprep.subr.bf16.mxu0 0
    %5587 = vmatpush2.bf16.msra.mxu0 0
    %5588 = vmatprep.subr.bf16.mxu0 0
    %5589 = vmatpush2.bf16.msra.mxu0 0
    %5590 = vmatprep.subr.bf16.mxu0 0
    %5591 = vmatpush2.bf16.msra.mxu0 0
    %5592 = vmatprep.mubr.bf16.mxu0 0
    %5593 = vmatmul.mubr.bf16.gmra.mxu0 %v5549
    %v5594 = vpop.f32.mrf.mxu0
    %v5595 = vadd.f32 0.0, %v5594
    %v5596 = vpop.f32.mrf.mxu0
    %v5597 = vpop.f32.mrf.mxu0
    %v5598 = vadd.f32 0.0, %v5597
    %v5599 = vpop.f32.mrf.mxu0
    %5600 = vmatprep.mubr.bf16.mxu0 0
    %5601 = vmatmul.mubr.bf16.gmra.mxu0 %v5552
    %v5602 = vpop.f32.mrf.mxu0
    %v5603 = vadd.f32 0.0, %v5602
    %v5604 = vpop.f32.mrf.mxu0
    %v5605 = vpop.f32.mrf.mxu0
    %v5606 = vadd.f32 0.0, %v5605
    %v5607 = vpop.f32.mrf.mxu0
    %5608 = vmatprep.mubr.bf16.mxu0 0
    %5609 = vmatmul.mubr.bf16.gmra.mxu0 %v5555
    %v5610 = vpop.f32.mrf.mxu0
    %v5611 = vadd.f32 0.0, %v5610
    %v5612 = vpop.f32.mrf.mxu0
    %v5613 = vpop.f32.mrf.mxu0
    %v5614 = vadd.f32 0.0, %v5613
    %v5615 = vpop.f32.mrf.mxu0
    %5616 = vmatprep.mubr.bf16.mxu0 0
    %5617 = vmatmul.mubr.bf16.gmra.mxu0 %v5558
    %v5618 = vpop.f32.mrf.mxu0
    %v5619 = vadd.f32 0.0, %v5618
    %v5620 = vpop.f32.mrf.mxu0
    %v5621 = vpop.f32.mrf.mxu0
    %v5622 = vadd.f32 0.0, %v5621
    %v5623 = vpop.f32.mrf.mxu0
    %5624 = vdwg.mxu0
    %v5625 = vpack.c.bf16 %v5598, %v5595
    %v5626 = vpack.c.bf16 %v5606, %v5603
    %v5627 = vpack.c.bf16 %v5614, %v5611
    %v5628 = vpack.c.bf16 %v5622, %v5619
    %v5629 = vld [vmem:[#allocation7 + $0x1e0] sm:$0xff]
    %v5630 = vld [vmem:[#allocation7 + $0x1e8] sm:$0xf]
    %v5631 = vld [vmem:[#allocation7 + $0x1ec] sm:$0xff]
    %v5632 = vld [vmem:[#allocation7 + $0x1f4] sm:$0xf]
    %v5633 = vld [vmem:[#allocation7 + $0x1f8] sm:$0xff]
    %v5634 = vld [vmem:[#allocation7 + $0x200] sm:$0xf]
    %v5635 = vld [vmem:[#allocation7 + $0x204] sm:$0xff]
    %v5636 = vld [vmem:[#allocation7 + $0x20c] sm:$0xf]
    %v5637 = vld [vmem:[#allocation7 + $0x210] sm:$0xff]
    %v5638 = vld [vmem:[#allocation7 + $0x218] sm:$0xf]
    %v5639 = vld [vmem:[#allocation7 + $0x21c] sm:$0xff]
    %v5640 = vld [vmem:[#allocation7 + $0x224] sm:$0xf]
    %v5641 = vld [vmem:[#allocation7 + $0x228] sm:$0xff]
    %v5642 = vld [vmem:[#allocation7 + $0x230] sm:$0xf]
    %v5643 = vld [vmem:[#allocation7 + $0x234] sm:$0xff]
    %v5644 = vld [vmem:[#allocation7 + $0x23c] sm:$0xf]
    %v5661 = vunpack.c.l.b16 %v5629
    %v5662 = vunpack.c.h.b16 %v5629
    %v5663 = vunpack.c.l.b16 %v5630
    %v5664 = vunpack.c.l.b16 %v5631
    %v5665 = vunpack.c.h.b16 %v5631
    %v5666 = vunpack.c.l.b16 %v5632
    %v5667 = vunpack.c.l.b16 %v5633
    %v5668 = vunpack.c.h.b16 %v5633
    %v5669 = vunpack.c.l.b16 %v5634
    %v5670 = vunpack.c.l.b16 %v5635
    %v5671 = vunpack.c.h.b16 %v5635
    %v5672 = vunpack.c.l.b16 %v5636
    %v5673 = vunpack.c.l.b16 %v5637
    %v5674 = vunpack.c.h.b16 %v5637
    %v5675 = vunpack.c.l.b16 %v5638
    %v5676 = vunpack.c.l.b16 %v5639
    %v5677 = vunpack.c.h.b16 %v5639
    %v5678 = vunpack.c.l.b16 %v5640
    %v5679 = vunpack.c.l.b16 %v5641
    %v5680 = vunpack.c.h.b16 %v5641
    %v5681 = vunpack.c.l.b16 %v5642
    %v5682 = vunpack.c.l.b16 %v5643
    %v5683 = vunpack.c.h.b16 %v5643
    %v5684 = vunpack.c.l.b16 %v5644
    %v5685 = vpack.c.b16 %v5664, %v5661
    %v5686 = vpack.c.b16 %v5665, %v5662
    %v5687 = vpack.c.b16 %v5666, %v5663
    %v5688 = vpack.c.b16 %v5670, %v5667
    %v5689 = vpack.c.b16 %v5671, %v5668
    %v5690 = vpack.c.b16 %v5672, %v5669
    %v5691 = vpack.c.b16 %v5676, %v5673
    %v5692 = vpack.c.b16 %v5677, %v5674
    %v5693 = vpack.c.b16 %v5678, %v5675
    %v5694 = vpack.c.b16 %v5682, %v5679
    %v5695 = vpack.c.b16 %v5683, %v5680
    %v5696 = vpack.c.b16 %v5684, %v5681
    %v5710 = vsel %vm2666, %v5625, 0
    %v5713 = vsel %vm2666, %v5626, 0
    %v5716 = vsel %vm2666, %v5627, 0
    %v5719 = vsel %vm2666, %v5628, 0
    %5721 = vmatprep.subr.bf16.mxu0 0
    %5722 = vmatpush1.bf16.msra.mxu0 0
    %5723 = vmatprep.subr.bf16.mxu0 0
    %5724 = vmatpush1.bf16.msra.mxu0 0
    %5725 = vmatprep.subr.bf16.mxu0 0
    %5726 = vmatpush1.bf16.msra.mxu0 0
    %5727 = vmatprep.subr.bf16.mxu0 0
    %5728 = vmatpush1.bf16.msra.mxu0 0
    %5729 = vmatprep.subr.bf16.mxu0 %v5695
    %5730 = vmatpush1.bf16.msra.mxu0 %v5694
    %5731 = vmatprep.subr.bf16.mxu0 %v5692
    %5732 = vmatpush1.bf16.msra.mxu0 %v5691
    %5733 = vmatprep.subr.bf16.mxu0 %v5689
    %5734 = vmatpush1.bf16.msra.mxu0 %v5688
    %5735 = vmatprep.subr.bf16.mxu0 %v5686
    %5736 = vmatpush1.bf16.msra.mxu0 %v5685
    %5737 = vmatprep.subr.bf16.mxu0 0
    %5738 = vmatpush2.bf16.msra.mxu0 0
    %5739 = vmatprep.subr.bf16.mxu0 0
    %5740 = vmatpush2.bf16.msra.mxu0 0
    %5741 = vmatprep.subr.bf16.mxu0 0
    %5742 = vmatpush2.bf16.msra.mxu0 0
    %5743 = vmatprep.subr.bf16.mxu0 0
    %5744 = vmatpush2.bf16.msra.mxu0 0
    %5745 = vmatprep.subr.bf16.mxu0 0
    %5746 = vmatpush2.bf16.msra.mxu0 0
    %5747 = vmatprep.subr.bf16.mxu0 0
    %5748 = vmatpush2.bf16.msra.mxu0 0
    %5749 = vmatprep.subr.bf16.mxu0 0
    %5750 = vmatpush2.bf16.msra.mxu0 0
    %5751 = vmatprep.subr.bf16.mxu0 0
    %5752 = vmatpush2.bf16.msra.mxu0 0
    %5753 = vmatprep.mubr.bf16.mxu0 0
    %5754 = vmatmul.mubr.bf16.gmra.mxu0 %v5710
    %v5755 = vpop.f32.mrf.mxu0
    %v5756 = vadd.f32 0.0, %v5755
    %v5757 = vpop.f32.mrf.mxu0
    %v5758 = vadd.f32 0.0, %v5757
    %v5759 = vpop.f32.mrf.mxu0
    %v5760 = vadd.f32 0.0, %v5759
    %v5761 = vpop.f32.mrf.mxu0
    %v5762 = vadd.f32 0.0, %v5761
    %5763 = vmatprep.mubr.bf16.mxu0 0
    %5764 = vmatmul.mubr.bf16.gmra.mxu0 %v5713
    %v5765 = vpop.f32.mrf.mxu0
    %v5766 = vadd.f32 0.0, %v5765
    %v5767 = vpop.f32.mrf.mxu0
    %v5768 = vadd.f32 0.0, %v5767
    %v5769 = vpop.f32.mrf.mxu0
    %v5770 = vadd.f32 0.0, %v5769
    %v5771 = vpop.f32.mrf.mxu0
    %v5772 = vadd.f32 0.0, %v5771
    %5773 = vmatprep.mubr.bf16.mxu0 0
    %5774 = vmatmul.mubr.bf16.gmra.mxu0 %v5716
    %v5775 = vpop.f32.mrf.mxu0
    %v5776 = vadd.f32 0.0, %v5775
    %v5777 = vpop.f32.mrf.mxu0
    %v5778 = vadd.f32 0.0, %v5777
    %v5779 = vpop.f32.mrf.mxu0
    %v5780 = vadd.f32 0.0, %v5779
    %v5781 = vpop.f32.mrf.mxu0
    %v5782 = vadd.f32 0.0, %v5781
    %5783 = vmatprep.mubr.bf16.mxu0 0
    %5784 = vmatmul.mubr.bf16.gmra.mxu0 %v5719
    %v5785 = vpop.f32.mrf.mxu0
    %v5786 = vadd.f32 0.0, %v5785
    %v5787 = vpop.f32.mrf.mxu0
    %v5788 = vadd.f32 0.0, %v5787
    %v5789 = vpop.f32.mrf.mxu0
    %v5790 = vadd.f32 0.0, %v5789
    %v5791 = vpop.f32.mrf.mxu0
    %v5792 = vadd.f32 0.0, %v5791
    %5793 = vdwg.mxu0
    %5794 = vmatprep.subr.bf16.mxu0 0
    %5795 = vmatpush1.bf16.msra.mxu0 0
    %5796 = vmatprep.subr.bf16.mxu0 0
    %5797 = vmatpush1.bf16.msra.mxu0 0
    %5798 = vmatprep.subr.bf16.mxu0 0
    %5799 = vmatpush1.bf16.msra.mxu0 0
    %5800 = vmatprep.subr.bf16.mxu0 0
    %5801 = vmatpush1.bf16.msra.mxu0 0
    %5802 = vmatprep.subr.bf16.mxu0 0
    %5803 = vmatpush1.bf16.msra.mxu0 %v5696
    %5804 = vmatprep.subr.bf16.mxu0 0
    %5805 = vmatpush1.bf16.msra.mxu0 %v5693
    %5806 = vmatprep.subr.bf16.mxu0 0
    %5807 = vmatpush1.bf16.msra.mxu0 %v5690
    %5808 = vmatprep.subr.bf16.mxu0 0
    %5809 = vmatpush1.bf16.msra.mxu0 %v5687
    %5810 = vmatprep.subr.bf16.mxu0 0
    %5811 = vmatpush2.bf16.msra.mxu0 0
    %5812 = vmatprep.subr.bf16.mxu0 0
    %5813 = vmatpush2.bf16.msra.mxu0 0
    %5814 = vmatprep.subr.bf16.mxu0 0
    %5815 = vmatpush2.bf16.msra.mxu0 0
    %5816 = vmatprep.subr.bf16.mxu0 0
    %5817 = vmatpush2.bf16.msra.mxu0 0
    %5818 = vmatprep.subr.bf16.mxu0 0
    %5819 = vmatpush2.bf16.msra.mxu0 0
    %5820 = vmatprep.subr.bf16.mxu0 0
    %5821 = vmatpush2.bf16.msra.mxu0 0
    %5822 = vmatprep.subr.bf16.mxu0 0
    %5823 = vmatpush2.bf16.msra.mxu0 0
    %5824 = vmatprep.subr.bf16.mxu0 0
    %5825 = vmatpush2.bf16.msra.mxu0 0
    %5826 = vmatprep.mubr.bf16.mxu0 0
    %5827 = vmatmul.mubr.bf16.gmra.mxu0 %v5710
    %v5828 = vpop.f32.mrf.mxu0
    %v5829 = vadd.f32 0.0, %v5828
    %v5830 = vpop.f32.mrf.mxu0
    %v5831 = vpop.f32.mrf.mxu0
    %v5832 = vadd.f32 0.0, %v5831
    %v5833 = vpop.f32.mrf.mxu0
    %5834 = vmatprep.mubr.bf16.mxu0 0
    %5835 = vmatmul.mubr.bf16.gmra.mxu0 %v5713
    %v5836 = vpop.f32.mrf.mxu0
    %v5837 = vadd.f32 0.0, %v5836
    %v5838 = vpop.f32.mrf.mxu0
    %v5839 = vpop.f32.mrf.mxu0
    %v5840 = vadd.f32 0.0, %v5839
    %v5841 = vpop.f32.mrf.mxu0
    %5842 = vmatprep.mubr.bf16.mxu0 0
    %5843 = vmatmul.mubr.bf16.gmra.mxu0 %v5716
    %v5844 = vpop.f32.mrf.mxu0
    %v5845 = vadd.f32 0.0, %v5844
    %v5846 = vpop.f32.mrf.mxu0
    %v5847 = vpop.f32.mrf.mxu0
    %v5848 = vadd.f32 0.0, %v5847
    %v5849 = vpop.f32.mrf.mxu0
    %5850 = vmatprep.mubr.bf16.mxu0 0
    %5851 = vmatmul.mubr.bf16.gmra.mxu0 %v5719
    %v5852 = vpop.f32.mrf.mxu0
    %v5853 = vadd.f32 0.0, %v5852
    %v5854 = vpop.f32.mrf.mxu0
    %v5855 = vpop.f32.mrf.mxu0
    %v5856 = vadd.f32 0.0, %v5855
    %v5857 = vpop.f32.mrf.mxu0
    %5858 = vdwg.mxu0
    %v5859 = vadd.f32 %v5295, %v5756
    %v5860 = vadd.f32 %v5296, %v5758
    %v5861 = vadd.f32 %v5297, %v5829
    %v5862 = vadd.f32 %v5298, %v5760
    %v5863 = vadd.f32 %v5299, %v5762
    %v5864 = vadd.f32 %v5300, %v5832
    %v5865 = vadd.f32 %v5301, %v5766
    %v5866 = vadd.f32 %v5302, %v5768
    %v5867 = vadd.f32 %v5303, %v5837
    %v5868 = vadd.f32 %v5304, %v5770
    %v5869 = vadd.f32 %v5305, %v5772
    %v5870 = vadd.f32 %v5306, %v5840
    %v5871 = vadd.f32 %v5307, %v5776
    %v5872 = vadd.f32 %v5308, %v5778
    %v5873 = vadd.f32 %v5309, %v5845
    %v5874 = vadd.f32 %v5310, %v5780
    %v5875 = vadd.f32 %v5311, %v5782
    %v5876 = vadd.f32 %v5312, %v5848
    %v5877 = vadd.f32 %v5313, %v5786
    %v5878 = vadd.f32 %v5314, %v5788
    %v5879 = vadd.f32 %v5315, %v5853
    %v5880 = vadd.f32 %v5316, %v5790
    %v5881 = vadd.f32 %v5317, %v5792
    %v5882 = vadd.f32 %v5318, %v5856
    %v5884 = vlaneseq
    %v5885 = vshrl.u32 %v5884, 7
    %v5886 = vsub.s32 0, %v5885
    %v5887 = vrot.slane %v2665, %v5886
    %v5888 = vlaneseq
    %v5889 = vshrl.u32 %v5888, 7
    %v5890 = vsub.s32 1, %v5889
    %v5891 = vrot.slane %v2665, %v5890
    %v5892 = vlaneseq
    %v5893 = vshrl.u32 %v5892, 7
    %v5894 = vsub.s32 2, %v5893
    %v5895 = vrot.slane %v2665, %v5894
    %v5899 = vadd.f32 %v5859, %v5887
    %v5900 = vadd.f32 %v5860, %v5891
    %v5901 = vadd.f32 %v5861, %v5895
    %v5902 = vadd.f32 %v5862, %v5887
    %v5903 = vadd.f32 %v5863, %v5891
    %v5904 = vadd.f32 %v5864, %v5895
    %v5905 = vadd.f32 %v5865, %v5887
    %v5906 = vadd.f32 %v5866, %v5891
    %v5907 = vadd.f32 %v5867, %v5895
    %v5908 = vadd.f32 %v5868, %v5887
    %v5909 = vadd.f32 %v5869, %v5891
    %v5910 = vadd.f32 %v5870, %v5895
    %v5911 = vadd.f32 %v5871, %v5887
    %v5912 = vadd.f32 %v5872, %v5891
    %v5913 = vadd.f32 %v5873, %v5895
    %v5914 = vadd.f32 %v5874, %v5887
    %v5915 = vadd.f32 %v5875, %v5891
    %v5916 = vadd.f32 %v5876, %v5895
    %v5917 = vadd.f32 %v5877, %v5887
    %v5918 = vadd.f32 %v5878, %v5891
    %v5919 = vadd.f32 %v5879, %v5895
    %v5920 = vadd.f32 %v5880, %v5887
    %v5921 = vadd.f32 %v5881, %v5891
    %v5922 = vadd.f32 %v5882, %v5895
    %5923 = vst [vmem:[#allocation8] sm:$0xff] %v5899
    %5924 = vst [vmem:[#allocation8 + $0x8] sm:$0xff] %v5900
    %5925 = vst [vmem:[#allocation8 + $0x10] sm:$0xff] %v5901
    %5926 = vst [vmem:[#allocation8 + $0x18] sm:$0xff] %v5902
    %5927 = vst [vmem:[#allocation8 + $0x20] sm:$0xff] %v5903
    %5928 = vst [vmem:[#allocation8 + $0x28] sm:$0xff] %v5904
    %5929 = vst [vmem:[#allocation8 + $0x30] sm:$0xff] %v5905
    %5930 = vst [vmem:[#allocation8 + $0x38] sm:$0xff] %v5906
    %5931 = vst [vmem:[#allocation8 + $0x40] sm:$0xff] %v5907
    %5932 = vst [vmem:[#allocation8 + $0x48] sm:$0xff] %v5908
    %5933 = vst [vmem:[#allocation8 + $0x50] sm:$0xff] %v5909
    %5934 = vst [vmem:[#allocation8 + $0x58] sm:$0xff] %v5910
    %5935 = vst [vmem:[#allocation8 + $0x60] sm:$0xff] %v5911
    %5936 = vst [vmem:[#allocation8 + $0x68] sm:$0xff] %v5912
    %5937 = vst [vmem:[#allocation8 + $0x70] sm:$0xff] %v5913
    %5938 = vst [vmem:[#allocation8 + $0x78] sm:$0xff] %v5914
    %5939 = vst [vmem:[#allocation8 + $0x80] sm:$0xff] %v5915
    %5940 = vst [vmem:[#allocation8 + $0x88] sm:$0xff] %v5916
    %5941 = vst [vmem:[#allocation8 + $0x90] sm:$0xff] %v5917
    %5942 = vst [vmem:[#allocation8 + $0x98] sm:$0xff] %v5918
    %5943 = vst [vmem:[#allocation8 + $0xa0] sm:$0xff] %v5919
    %5944 = vst [vmem:[#allocation8 + $0xa8] sm:$0xff] %v5920
    %5945 = vst [vmem:[#allocation8 + $0xb0] sm:$0xff] %v5921
    %5946 = vst [vmem:[#allocation8 + $0xb8] sm:$0xff] %v5922
    %v5948 = vsel %vm2666, %v2610, 0
    %v5951 = vsel %vm2666, %v2619, 0
    %v5954 = vsel %vm2666, %v2628, 0
    %v5957 = vsel %vm2666, %v2637, 0
    %v5960 = vsel %vm2666, %v2613, 0
    %v5963 = vsel %vm2666, %v2622, 0
    %v5966 = vsel %vm2666, %v2631, 0
    %v5969 = vsel %vm2666, %v2640, 0
    %5971 = vmatprep.subr.bf16.mxu0 0
    %5972 = vmatpush1.bf16.xpose.msra.mxu0 0
    %5973 = vmatprep.subr.bf16.mxu0 0
    %5974 = vmatpush1.bf16.xpose.msra.mxu0 0
    %5975 = vmatprep.subr.bf16.mxu0 0
    %5976 = vmatpush1.bf16.xpose.msra.mxu0 0
    %5977 = vmatprep.subr.bf16.mxu0 0
    %5978 = vmatpush1.bf16.xpose.msra.mxu0 0
    %5979 = vmatprep.subr.bf16.mxu0 0
    %5980 = vmatpush1.bf16.xpose.msra.mxu0 %v5969
    %5981 = vmatprep.subr.bf16.mxu0 0
    %5982 = vmatpush1.bf16.xpose.msra.mxu0 %v5966
    %5983 = vmatprep.subr.bf16.mxu0 0
    %5984 = vmatpush1.bf16.xpose.msra.mxu0 %v5963
    %5985 = vmatprep.subr.bf16.mxu0 0
    %5986 = vmatpush1.bf16.xpose.msra.mxu0 %v5960
    %5987 = vmatprep.subr.bf16.mxu0 0
    %5988 = vmatpush2.bf16.xpose.msra.mxu0 0
    %5989 = vmatprep.subr.bf16.mxu0 0
    %5990 = vmatpush2.bf16.xpose.msra.mxu0 0
    %5991 = vmatprep.subr.bf16.mxu0 0
    %5992 = vmatpush2.bf16.xpose.msra.mxu0 0
    %5993 = vmatprep.subr.bf16.mxu0 0
    %5994 = vmatpush2.bf16.xpose.msra.mxu0 0
    %5995 = vmatprep.subr.bf16.mxu0 0
    %5996 = vmatpush2.bf16.xpose.msra.mxu0 0
    %5997 = vmatprep.subr.bf16.mxu0 0
    %5998 = vmatpush2.bf16.xpose.msra.mxu0 0
    %5999 = vmatprep.subr.bf16.mxu0 0
    %6000 = vmatpush2.bf16.xpose.msra.mxu0 0
    %6001 = vmatprep.subr.bf16.mxu0 0
    %6002 = vmatpush2.bf16.xpose.msra.mxu0 0
    %6003 = vmatprep.mubr.bf16.mxu0 0
    %6004 = vmatmul.mubr.bf16.gmra.mxu0 %v5948
    %v6005 = vpop.f32.mrf.mxu0
    %v6006 = vadd.f32 0.0, %v6005
    %v6007 = vpop.f32.mrf.mxu0
    %v6008 = vpop.f32.mrf.mxu0
    %v6009 = vadd.f32 0.0, %v6008
    %v6010 = vpop.f32.mrf.mxu0
    %6011 = vmatprep.mubr.bf16.mxu0 0
    %6012 = vmatmul.mubr.bf16.gmra.mxu0 %v5951
    %v6013 = vpop.f32.mrf.mxu0
    %v6014 = vadd.f32 0.0, %v6013
    %v6015 = vpop.f32.mrf.mxu0
    %v6016 = vpop.f32.mrf.mxu0
    %v6017 = vadd.f32 0.0, %v6016
    %v6018 = vpop.f32.mrf.mxu0
    %6019 = vmatprep.mubr.bf16.mxu0 0
    %6020 = vmatmul.mubr.bf16.gmra.mxu0 %v5954
    %v6021 = vpop.f32.mrf.mxu0
    %v6022 = vadd.f32 0.0, %v6021
    %v6023 = vpop.f32.mrf.mxu0
    %v6024 = vpop.f32.mrf.mxu0
    %v6025 = vadd.f32 0.0, %v6024
    %v6026 = vpop.f32.mrf.mxu0
    %6027 = vmatprep.mubr.bf16.mxu0 0
    %6028 = vmatmul.mubr.bf16.gmra.mxu0 %v5957
    %v6029 = vpop.f32.mrf.mxu0
    %v6030 = vadd.f32 0.0, %v6029
    %v6031 = vpop.f32.mrf.mxu0
    %v6032 = vpop.f32.mrf.mxu0
    %v6033 = vadd.f32 0.0, %v6032
    %v6034 = vpop.f32.mrf.mxu0
    %6035 = vdwg.mxu0
    %v6036 = vsel %vm2657, %v6006, -inf
    %v6037 = vsel %vm2658, %v6009, -inf
    %v6038 = vsel %vm2659, %v6014, -inf
    %v6039 = vsel %vm2660, %v6017, -inf
    %v6040 = vsel %vm2661, %v6022, -inf
    %v6041 = vsel %vm2662, %v6025, -inf
    %v6042 = vsel %vm2663, %v6030, -inf
    %v6043 = vsel %vm2664, %v6033, -inf
    %v6044 = vsel %vm2666, %v6036, -inf
    %6045 = vmax.xlane.f32.xlu0 %v6044
    %v6046 = vpop.xlane.xlu0 %6045
    %v6047 = vsel %vm2666, %v6037, -inf
    %6048 = vmax.xlane.f32.xlu0 %v6047
    %v6049 = vpop.xlane.xlu0 %6048
    %v6050 = vsel %vm2666, %v6038, -inf
    %6051 = vmax.xlane.f32.xlu0 %v6050
    %v6052 = vpop.xlane.xlu0 %6051
    %v6053 = vsel %vm2666, %v6039, -inf
    %6054 = vmax.xlane.f32.xlu0 %v6053
    %v6055 = vpop.xlane.xlu0 %6054
    %v6056 = vsel %vm2666, %v6040, -inf
    %6057 = vmax.xlane.f32.xlu0 %v6056
    %v6058 = vpop.xlane.xlu0 %6057
    %v6059 = vsel %vm2666, %v6041, -inf
    %6060 = vmax.xlane.f32.xlu0 %v6059
    %v6061 = vpop.xlane.xlu0 %6060
    %v6062 = vsel %vm2666, %v6042, -inf
    %6063 = vmax.xlane.f32.xlu0 %v6062
    %v6064 = vpop.xlane.xlu0 %6063
    %v6065 = vsel %vm2666, %v6043, -inf
    %6066 = vmax.xlane.f32.xlu0 %v6065
    %v6067 = vpop.xlane.xlu0 %6066
    %v6068 = vsub.f32 %v6036, %v6046
    %v6069 = vsub.f32 %v6037, %v6049
    %v6070 = vsub.f32 %v6038, %v6052
    %v6071 = vsub.f32 %v6039, %v6055
    %v6072 = vsub.f32 %v6040, %v6058
    %v6073 = vsub.f32 %v6041, %v6061
    %v6074 = vsub.f32 %v6042, %v6064
    %v6075 = vsub.f32 %v6043, %v6067
    %v6076 = vmul.f32 %v6068, 1.442695
    %v6077 = vpow.pop %v6076
    %v6078 = vmul.f32 %v6069, 1.442695
    %v6079 = vpow.pop %v6078
    %v6080 = vmul.f32 %v6070, 1.442695
    %v6081 = vpow.pop %v6080
    %v6082 = vmul.f32 %v6071, 1.442695
    %v6083 = vpow.pop %v6082
    %v6084 = vmul.f32 %v6072, 1.442695
    %v6085 = vpow.pop %v6084
    %v6086 = vmul.f32 %v6073, 1.442695
    %v6087 = vpow.pop %v6086
    %v6088 = vmul.f32 %v6074, 1.442695
    %v6089 = vpow.pop %v6088
    %v6090 = vmul.f32 %v6075, 1.442695
    %v6091 = vpow.pop %v6090
    %v6092 = vsel %vm2666, %v6077, 0.0
    %6093 = vadd.xlane.f32.xlu0 %v6092
    %v6094 = vpop.xlane.xlu0 %6093
    %v6095 = vsel %vm2666, %v6079, 0.0
    %6096 = vadd.xlane.f32.xlu0 %v6095
    %v6097 = vpop.xlane.xlu0 %6096
    %v6098 = vsel %vm2666, %v6081, 0.0
    %6099 = vadd.xlane.f32.xlu0 %v6098
    %v6100 = vpop.xlane.xlu0 %6099
    %v6101 = vsel %vm2666, %v6083, 0.0
    %6102 = vadd.xlane.f32.xlu0 %v6101
    %v6103 = vpop.xlane.xlu0 %6102
    %v6104 = vsel %vm2666, %v6085, 0.0
    %6105 = vadd.xlane.f32.xlu0 %v6104
    %v6106 = vpop.xlane.xlu0 %6105
    %v6107 = vsel %vm2666, %v6087, 0.0
    %6108 = vadd.xlane.f32.xlu0 %v6107
    %v6109 = vpop.xlane.xlu0 %6108
    %v6110 = vsel %vm2666, %v6089, 0.0
    %6111 = vadd.xlane.f32.xlu0 %v6110
    %v6112 = vpop.xlane.xlu0 %6111
    %v6113 = vsel %vm2666, %v6091, 0.0
    %6114 = vadd.xlane.f32.xlu0 %v6113
    %v6115 = vpop.xlane.xlu0 %6114
    %v6116 = vrcp.pop %v6094
    %v6117 = vrcp.pop %v6097
    %v6118 = vrcp.pop %v6100
    %v6119 = vrcp.pop %v6103
    %v6120 = vrcp.pop %v6106
    %v6121 = vrcp.pop %v6109
    %v6122 = vrcp.pop %v6112
    %v6123 = vrcp.pop %v6115
    %v6124 = vmul.f32 %v6077, %v6116
    %v6125 = vmul.f32 %v6079, %v6117
    %v6126 = vmul.f32 %v6081, %v6118
    %v6127 = vmul.f32 %v6083, %v6119
    %v6128 = vmul.f32 %v6085, %v6120
    %v6129 = vmul.f32 %v6087, %v6121
    %v6130 = vmul.f32 %v6089, %v6122
    %v6131 = vmul.f32 %v6091, %v6123
    %v6132 = vpack.c.bf16 %v6125, %v6124
    %v6133 = vpack.c.bf16 %v6127, %v6126
    %v6134 = vpack.c.bf16 %v6129, %v6128
    %v6135 = vpack.c.bf16 %v6131, %v6130
    %v6137 = vsel %vm2666, %v6132, 0
    %v6140 = vsel %vm2666, %v6133, 0
    %v6143 = vsel %vm2666, %v6134, 0
    %v6146 = vsel %vm2666, %v6135, 0
    %6148 = vmatprep.subr.bf16.mxu0 0
    %6149 = vmatpush1.bf16.msra.mxu0 0
    %6150 = vmatprep.subr.bf16.mxu0 0
    %6151 = vmatpush1.bf16.msra.mxu0 0
    %6152 = vmatprep.subr.bf16.mxu0 0
    %6153 = vmatpush1.bf16.msra.mxu0 0
    %6154 = vmatprep.subr.bf16.mxu0 0
    %6155 = vmatpush1.bf16.msra.mxu0 0
    %6156 = vmatprep.subr.bf16.mxu0 0
    %6157 = vmatpush1.bf16.msra.mxu0 %v2643
    %6158 = vmatprep.subr.bf16.mxu0 0
    %6159 = vmatpush1.bf16.msra.mxu0 %v2634
    %6160 = vmatprep.subr.bf16.mxu0 0
    %6161 = vmatpush1.bf16.msra.mxu0 %v2625
    %6162 = vmatprep.subr.bf16.mxu0 0
    %6163 = vmatpush1.bf16.msra.mxu0 %v2616
    %6164 = vmatprep.subr.bf16.mxu0 0
    %6165 = vmatpush2.bf16.msra.mxu0 0
    %6166 = vmatprep.subr.bf16.mxu0 0
    %6167 = vmatpush2.bf16.msra.mxu0 0
    %6168 = vmatprep.subr.bf16.mxu0 0
    %6169 = vmatpush2.bf16.msra.mxu0 0
    %6170 = vmatprep.subr.bf16.mxu0 0
    %6171 = vmatpush2.bf16.msra.mxu0 0
    %6172 = vmatprep.subr.bf16.mxu0 0
    %6173 = vmatpush2.bf16.msra.mxu0 0
    %6174 = vmatprep.subr.bf16.mxu0 0
    %6175 = vmatpush2.bf16.msra.mxu0 0
    %6176 = vmatprep.subr.bf16.mxu0 0
    %6177 = vmatpush2.bf16.msra.mxu0 0
    %6178 = vmatprep.subr.bf16.mxu0 0
    %6179 = vmatpush2.bf16.msra.mxu0 0
    %6180 = vmatprep.mubr.bf16.mxu0 0
    %6181 = vmatmul.mubr.bf16.gmra.mxu0 %v6137
    %v6182 = vpop.f32.mrf.mxu0
    %v6183 = vadd.f32 0.0, %v6182
    %v6184 = vpop.f32.mrf.mxu0
    %v6185 = vpop.f32.mrf.mxu0
    %v6186 = vadd.f32 0.0, %v6185
    %v6187 = vpop.f32.mrf.mxu0
    %6188 = vmatprep.mubr.bf16.mxu0 0
    %6189 = vmatmul.mubr.bf16.gmra.mxu0 %v6140
    %v6190 = vpop.f32.mrf.mxu0
    %v6191 = vadd.f32 0.0, %v6190
    %v6192 = vpop.f32.mrf.mxu0
    %v6193 = vpop.f32.mrf.mxu0
    %v6194 = vadd.f32 0.0, %v6193
    %v6195 = vpop.f32.mrf.mxu0
    %6196 = vmatprep.mubr.bf16.mxu0 0
    %6197 = vmatmul.mubr.bf16.gmra.mxu0 %v6143
    %v6198 = vpop.f32.mrf.mxu0
    %v6199 = vadd.f32 0.0, %v6198
    %v6200 = vpop.f32.mrf.mxu0
    %v6201 = vpop.f32.mrf.mxu0
    %v6202 = vadd.f32 0.0, %v6201
    %v6203 = vpop.f32.mrf.mxu0
    %6204 = vmatprep.mubr.bf16.mxu0 0
    %6205 = vmatmul.mubr.bf16.gmra.mxu0 %v6146
    %v6206 = vpop.f32.mrf.mxu0
    %v6207 = vadd.f32 0.0, %v6206
    %v6208 = vpop.f32.mrf.mxu0
    %v6209 = vpop.f32.mrf.mxu0
    %v6210 = vadd.f32 0.0, %v6209
    %v6211 = vpop.f32.mrf.mxu0
    %6212 = vdwg.mxu0
    %v6213 = vpack.c.bf16 %v6186, %v6183
    %v6214 = vpack.c.bf16 %v6194, %v6191
    %v6215 = vpack.c.bf16 %v6202, %v6199
    %v6216 = vpack.c.bf16 %v6210, %v6207
    %v6217 = vld [vmem:[#allocation7] sm:$0xff]
    %v6218 = vld [vmem:[#allocation7 + $0x8] sm:$0xf]
    %v6219 = vld [vmem:[#allocation7 + $0xc] sm:$0xff]
    %v6220 = vld [vmem:[#allocation7 + $0x14] sm:$0xf]
    %v6221 = vld [vmem:[#allocation7 + $0x18] sm:$0xff]
    %v6222 = vld [vmem:[#allocation7 + $0x20] sm:$0xf]
    %v6223 = vld [vmem:[#allocation7 + $0x24] sm:$0xff]
    %v6224 = vld [vmem:[#allocation7 + $0x2c] sm:$0xf]
    %v6225 = vld [vmem:[#allocation7 + $0x30] sm:$0xff]
    %v6226 = vld [vmem:[#allocation7 + $0x38] sm:$0xf]
    %v6227 = vld [vmem:[#allocation7 + $0x3c] sm:$0xff]
    %v6228 = vld [vmem:[#allocation7 + $0x44] sm:$0xf]
    %v6229 = vld [vmem:[#allocation7 + $0x48] sm:$0xff]
    %v6230 = vld [vmem:[#allocation7 + $0x50] sm:$0xf]
    %v6231 = vld [vmem:[#allocation7 + $0x54] sm:$0xff]
    %v6232 = vld [vmem:[#allocation7 + $0x5c] sm:$0xf]
    %6237 = vrot.lane.b32.xlu0 %v2610, 64
    %v6238 = vpop.permute.xlu0 %6237
    %6239 = vrot.lane.b32.xlu0 %v2619, 64
    %v6240 = vpop.permute.xlu0 %6239
    %6241 = vrot.lane.b32.xlu0 %v2628, 64
    %v6242 = vpop.permute.xlu0 %6241
    %6243 = vrot.lane.b32.xlu0 %v2637, 64
    %v6244 = vpop.permute.xlu0 %6243
    %6249 = vrot.lane.b32.xlu0 %v2613, 64
    %v6250 = vpop.permute.xlu0 %6249
    %6251 = vrot.lane.b32.xlu0 %v2622, 64
    %v6252 = vpop.permute.xlu0 %6251
    %6253 = vrot.lane.b32.xlu0 %v2631, 64
    %v6254 = vpop.permute.xlu0 %6253
    %6255 = vrot.lane.b32.xlu0 %v2640, 64
    %v6256 = vpop.permute.xlu0 %6255
    %v6258 = vsel %vm2666, %v6238, 0
    %v6261 = vsel %vm2666, %v6240, 0
    %v6264 = vsel %vm2666, %v6242, 0
    %v6267 = vsel %vm2666, %v6244, 0
    %v6270 = vsel %vm2666, %v6250, 0
    %v6273 = vsel %vm2666, %v6252, 0
    %v6276 = vsel %vm2666, %v6254, 0
    %v6279 = vsel %vm2666, %v6256, 0
    %6281 = vmatprep.subr.bf16.mxu0 0
    %6282 = vmatpush1.bf16.xpose.msra.mxu0 0
    %6283 = vmatprep.subr.bf16.mxu0 0
    %6284 = vmatpush1.bf16.xpose.msra.mxu0 0
    %6285 = vmatprep.subr.bf16.mxu0 0
    %6286 = vmatpush1.bf16.xpose.msra.mxu0 0
    %6287 = vmatprep.subr.bf16.mxu0 0
    %6288 = vmatpush1.bf16.xpose.msra.mxu0 0
    %6289 = vmatprep.subr.bf16.mxu0 0
    %6290 = vmatpush1.bf16.xpose.msra.mxu0 %v6279
    %6291 = vmatprep.subr.bf16.mxu0 0
    %6292 = vmatpush1.bf16.xpose.msra.mxu0 %v6276
    %6293 = vmatprep.subr.bf16.mxu0 0
    %6294 = vmatpush1.bf16.xpose.msra.mxu0 %v6273
    %6295 = vmatprep.subr.bf16.mxu0 0
    %6296 = vmatpush1.bf16.xpose.msra.mxu0 %v6270
    %6297 = vmatprep.subr.bf16.mxu0 0
    %6298 = vmatpush2.bf16.xpose.msra.mxu0 0
    %6299 = vmatprep.subr.bf16.mxu0 0
    %6300 = vmatpush2.bf16.xpose.msra.mxu0 0
    %6301 = vmatprep.subr.bf16.mxu0 0
    %6302 = vmatpush2.bf16.xpose.msra.mxu0 0
    %6303 = vmatprep.subr.bf16.mxu0 0
    %6304 = vmatpush2.bf16.xpose.msra.mxu0 0
    %6305 = vmatprep.subr.bf16.mxu0 0
    %6306 = vmatpush2.bf16.xpose.msra.mxu0 0
    %6307 = vmatprep.subr.bf16.mxu0 0
    %6308 = vmatpush2.bf16.xpose.msra.mxu0 0
    %6309 = vmatprep.subr.bf16.mxu0 0
    %6310 = vmatpush2.bf16.xpose.msra.mxu0 0
    %6311 = vmatprep.subr.bf16.mxu0 0
    %6312 = vmatpush2.bf16.xpose.msra.mxu0 0
    %6313 = vmatprep.mubr.bf16.mxu0 0
    %6314 = vmatmul.mubr.bf16.gmra.mxu0 %v6258
    %v6315 = vpop.f32.mrf.mxu0
    %v6316 = vadd.f32 0.0, %v6315
    %v6317 = vpop.f32.mrf.mxu0
    %v6318 = vpop.f32.mrf.mxu0
    %v6319 = vadd.f32 0.0, %v6318
    %v6320 = vpop.f32.mrf.mxu0
    %6321 = vmatprep.mubr.bf16.mxu0 0
    %6322 = vmatmul.mubr.bf16.gmra.mxu0 %v6261
    %v6323 = vpop.f32.mrf.mxu0
    %v6324 = vadd.f32 0.0, %v6323
    %v6325 = vpop.f32.mrf.mxu0
    %v6326 = vpop.f32.mrf.mxu0
    %v6327 = vadd.f32 0.0, %v6326
    %v6328 = vpop.f32.mrf.mxu0
    %6329 = vmatprep.mubr.bf16.mxu0 0
    %6330 = vmatmul.mubr.bf16.gmra.mxu0 %v6264
    %v6331 = vpop.f32.mrf.mxu0
    %v6332 = vadd.f32 0.0, %v6331
    %v6333 = vpop.f32.mrf.mxu0
    %v6334 = vpop.f32.mrf.mxu0
    %v6335 = vadd.f32 0.0, %v6334
    %v6336 = vpop.f32.mrf.mxu0
    %6337 = vmatprep.mubr.bf16.mxu0 0
    %6338 = vmatmul.mubr.bf16.gmra.mxu0 %v6267
    %v6339 = vpop.f32.mrf.mxu0
    %v6340 = vadd.f32 0.0, %v6339
    %v6341 = vpop.f32.mrf.mxu0
    %v6342 = vpop.f32.mrf.mxu0
    %v6343 = vadd.f32 0.0, %v6342
    %v6344 = vpop.f32.mrf.mxu0
    %6345 = vdwg.mxu0
    %v6346 = vsel %vm2657, %v6316, -inf
    %v6347 = vsel %vm2658, %v6319, -inf
    %v6348 = vsel %vm2659, %v6324, -inf
    %v6349 = vsel %vm2660, %v6327, -inf
    %v6350 = vsel %vm2661, %v6332, -inf
    %v6351 = vsel %vm2662, %v6335, -inf
    %v6352 = vsel %vm2663, %v6340, -inf
    %v6353 = vsel %vm2664, %v6343, -inf
    %v6354 = vsel %vm2666, %v6346, -inf
    %6355 = vmax.xlane.f32.xlu0 %v6354
    %v6356 = vpop.xlane.xlu0 %6355
    %v6357 = vsel %vm2666, %v6347, -inf
    %6358 = vmax.xlane.f32.xlu0 %v6357
    %v6359 = vpop.xlane.xlu0 %6358
    %v6360 = vsel %vm2666, %v6348, -inf
    %6361 = vmax.xlane.f32.xlu0 %v6360
    %v6362 = vpop.xlane.xlu0 %6361
    %v6363 = vsel %vm2666, %v6349, -inf
    %6364 = vmax.xlane.f32.xlu0 %v6363
    %v6365 = vpop.xlane.xlu0 %6364
    %v6366 = vsel %vm2666, %v6350, -inf
    %6367 = vmax.xlane.f32.xlu0 %v6366
    %v6368 = vpop.xlane.xlu0 %6367
    %v6369 = vsel %vm2666, %v6351, -inf
    %6370 = vmax.xlane.f32.xlu0 %v6369
    %v6371 = vpop.xlane.xlu0 %6370
    %v6372 = vsel %vm2666, %v6352, -inf
    %6373 = vmax.xlane.f32.xlu0 %v6372
    %v6374 = vpop.xlane.xlu0 %6373
    %v6375 = vsel %vm2666, %v6353, -inf
    %6376 = vmax.xlane.f32.xlu0 %v6375
    %v6377 = vpop.xlane.xlu0 %6376
    %v6378 = vsub.f32 %v6346, %v6356
    %v6379 = vsub.f32 %v6347, %v6359
    %v6380 = vsub.f32 %v6348, %v6362
    %v6381 = vsub.f32 %v6349, %v6365
    %v6382 = vsub.f32 %v6350, %v6368
    %v6383 = vsub.f32 %v6351, %v6371
    %v6384 = vsub.f32 %v6352, %v6374
    %v6385 = vsub.f32 %v6353, %v6377
    %v6386 = vmul.f32 %v6378, 1.442695
    %v6387 = vpow.pop %v6386
    %v6388 = vmul.f32 %v6379, 1.442695
    %v6389 = vpow.pop %v6388
    %v6390 = vmul.f32 %v6380, 1.442695
    %v6391 = vpow.pop %v6390
    %v6392 = vmul.f32 %v6381, 1.442695
    %v6393 = vpow.pop %v6392
    %v6394 = vmul.f32 %v6382, 1.442695
    %v6395 = vpow.pop %v6394
    %v6396 = vmul.f32 %v6383, 1.442695
    %v6397 = vpow.pop %v6396
    %v6398 = vmul.f32 %v6384, 1.442695
    %v6399 = vpow.pop %v6398
    %v6400 = vmul.f32 %v6385, 1.442695
    %v6401 = vpow.pop %v6400
    %v6402 = vsel %vm2666, %v6387, 0.0
    %6403 = vadd.xlane.f32.xlu0 %v6402
    %v6404 = vpop.xlane.xlu0 %6403
    %v6405 = vsel %vm2666, %v6389, 0.0
    %6406 = vadd.xlane.f32.xlu0 %v6405
    %v6407 = vpop.xlane.xlu0 %6406
    %v6408 = vsel %vm2666, %v6391, 0.0
    %6409 = vadd.xlane.f32.xlu0 %v6408
    %v6410 = vpop.xlane.xlu0 %6409
    %v6411 = vsel %vm2666, %v6393, 0.0
    %6412 = vadd.xlane.f32.xlu0 %v6411
    %v6413 = vpop.xlane.xlu0 %6412
    %v6414 = vsel %vm2666, %v6395, 0.0
    %6415 = vadd.xlane.f32.xlu0 %v6414
    %v6416 = vpop.xlane.xlu0 %6415
    %v6417 = vsel %vm2666, %v6397, 0.0
    %6418 = vadd.xlane.f32.xlu0 %v6417
    %v6419 = vpop.xlane.xlu0 %6418
    %v6420 = vsel %vm2666, %v6399, 0.0
    %6421 = vadd.xlane.f32.xlu0 %v6420
    %v6422 = vpop.xlane.xlu0 %6421
    %v6423 = vsel %vm2666, %v6401, 0.0
    %6424 = vadd.xlane.f32.xlu0 %v6423
    %v6425 = vpop.xlane.xlu0 %6424
    %v6426 = vrcp.pop %v6404
    %v6427 = vrcp.pop %v6407
    %v6428 = vrcp.pop %v6410
    %v6429 = vrcp.pop %v6413
    %v6430 = vrcp.pop %v6416
    %v6431 = vrcp.pop %v6419
    %v6432 = vrcp.pop %v6422
    %v6433 = vrcp.pop %v6425
    %v6434 = vmul.f32 %v6387, %v6426
    %v6435 = vmul.f32 %v6389, %v6427
    %v6436 = vmul.f32 %v6391, %v6428
    %v6437 = vmul.f32 %v6393, %v6429
    %v6438 = vmul.f32 %v6395, %v6430
    %v6439 = vmul.f32 %v6397, %v6431
    %v6440 = vmul.f32 %v6399, %v6432
    %v6441 = vmul.f32 %v6401, %v6433
    %v6442 = vpack.c.bf16 %v6435, %v6434
    %v6443 = vpack.c.bf16 %v6437, %v6436
    %v6444 = vpack.c.bf16 %v6439, %v6438
    %v6445 = vpack.c.bf16 %v6441, %v6440
    %6450 = vrot.lane.b32.xlu0 %v2616, 64
    %v6451 = vpop.permute.xlu0 %6450
    %6452 = vrot.lane.b32.xlu0 %v2625, 64
    %v6453 = vpop.permute.xlu0 %6452
    %6454 = vrot.lane.b32.xlu0 %v2634, 64
    %v6455 = vpop.permute.xlu0 %6454
    %6456 = vrot.lane.b32.xlu0 %v2643, 64
    %v6457 = vpop.permute.xlu0 %6456
    %v6463 = vsel %vm2666, %v6442, 0
    %v6466 = vsel %vm2666, %v6443, 0
    %v6469 = vsel %vm2666, %v6444, 0
    %v6472 = vsel %vm2666, %v6445, 0
    %6474 = vmatprep.subr.bf16.mxu0 0
    %6475 = vmatpush1.bf16.msra.mxu0 0
    %6476 = vmatprep.subr.bf16.mxu0 0
    %6477 = vmatpush1.bf16.msra.mxu0 0
    %6478 = vmatprep.subr.bf16.mxu0 0
    %6479 = vmatpush1.bf16.msra.mxu0 0
    %6480 = vmatprep.subr.bf16.mxu0 0
    %6481 = vmatpush1.bf16.msra.mxu0 0
    %6482 = vmatprep.subr.bf16.mxu0 0
    %6483 = vmatpush1.bf16.msra.mxu0 %v6457
    %6484 = vmatprep.subr.bf16.mxu0 0
    %6485 = vmatpush1.bf16.msra.mxu0 %v6455
    %6486 = vmatprep.subr.bf16.mxu0 0
    %6487 = vmatpush1.bf16.msra.mxu0 %v6453
    %6488 = vmatprep.subr.bf16.mxu0 0
    %6489 = vmatpush1.bf16.msra.mxu0 %v6451
    %6490 = vmatprep.subr.bf16.mxu0 0
    %6491 = vmatpush2.bf16.msra.mxu0 0
    %6492 = vmatprep.subr.bf16.mxu0 0
    %6493 = vmatpush2.bf16.msra.mxu0 0
    %6494 = vmatprep.subr.bf16.mxu0 0
    %6495 = vmatpush2.bf16.msra.mxu0 0
    %6496 = vmatprep.subr.bf16.mxu0 0
    %6497 = vmatpush2.bf16.msra.mxu0 0
    %6498 = vmatprep.subr.bf16.mxu0 0
    %6499 = vmatpush2.bf16.msra.mxu0 0
    %6500 = vmatprep.subr.bf16.mxu0 0
    %6501 = vmatpush2.bf16.msra.mxu0 0
    %6502 = vmatprep.subr.bf16.mxu0 0
    %6503 = vmatpush2.bf16.msra.mxu0 0
    %6504 = vmatprep.subr.bf16.mxu0 0
    %6505 = vmatpush2.bf16.msra.mxu0 0
    %6506 = vmatprep.mubr.bf16.mxu0 0
    %6507 = vmatmul.mubr.bf16.gmra.mxu0 %v6463
    %v6508 = vpop.f32.mrf.mxu0
    %v6509 = vadd.f32 0.0, %v6508
    %v6510 = vpop.f32.mrf.mxu0
    %v6511 = vpop.f32.mrf.mxu0
    %v6512 = vadd.f32 0.0, %v6511
    %v6513 = vpop.f32.mrf.mxu0
    %6514 = vmatprep.mubr.bf16.mxu0 0
    %6515 = vmatmul.mubr.bf16.gmra.mxu0 %v6466
    %v6516 = vpop.f32.mrf.mxu0
    %v6517 = vadd.f32 0.0, %v6516
    %v6518 = vpop.f32.mrf.mxu0
    %v6519 = vpop.f32.mrf.mxu0
    %v6520 = vadd.f32 0.0, %v6519
    %v6521 = vpop.f32.mrf.mxu0
    %6522 = vmatprep.mubr.bf16.mxu0 0
    %6523 = vmatmul.mubr.bf16.gmra.mxu0 %v6469
    %v6524 = vpop.f32.mrf.mxu0
    %v6525 = vadd.f32 0.0, %v6524
    %v6526 = vpop.f32.mrf.mxu0
    %v6527 = vpop.f32.mrf.mxu0
    %v6528 = vadd.f32 0.0, %v6527
    %v6529 = vpop.f32.mrf.mxu0
    %6530 = vmatprep.mubr.bf16.mxu0 0
    %6531 = vmatmul.mubr.bf16.gmra.mxu0 %v6472
    %v6532 = vpop.f32.mrf.mxu0
    %v6533 = vadd.f32 0.0, %v6532
    %v6534 = vpop.f32.mrf.mxu0
    %v6535 = vpop.f32.mrf.mxu0
    %v6536 = vadd.f32 0.0, %v6535
    %v6537 = vpop.f32.mrf.mxu0
    %6538 = vdwg.mxu0
    %v6539 = vpack.c.bf16 %v6512, %v6509
    %v6540 = vpack.c.bf16 %v6520, %v6517
    %v6541 = vpack.c.bf16 %v6528, %v6525
    %v6542 = vpack.c.bf16 %v6536, %v6533
    %v6543 = vld [vmem:[#allocation7 + $0x60] sm:$0xff]
    %v6544 = vld [vmem:[#allocation7 + $0x68] sm:$0xf]
    %v6545 = vld [vmem:[#allocation7 + $0x6c] sm:$0xff]
    %v6546 = vld [vmem:[#allocation7 + $0x74] sm:$0xf]
    %v6547 = vld [vmem:[#allocation7 + $0x78] sm:$0xff]
    %v6548 = vld [vmem:[#allocation7 + $0x80] sm:$0xf]
    %v6549 = vld [vmem:[#allocation7 + $0x84] sm:$0xff]
    %v6550 = vld [vmem:[#allocation7 + $0x8c] sm:$0xf]
    %v6551 = vld [vmem:[#allocation7 + $0x90] sm:$0xff]
    %v6552 = vld [vmem:[#allocation7 + $0x98] sm:$0xf]
    %v6553 = vld [vmem:[#allocation7 + $0x9c] sm:$0xff]
    %v6554 = vld [vmem:[#allocation7 + $0xa4] sm:$0xf]
    %v6555 = vld [vmem:[#allocation7 + $0xa8] sm:$0xff]
    %v6556 = vld [vmem:[#allocation7 + $0xb0] sm:$0xf]
    %v6557 = vld [vmem:[#allocation7 + $0xb4] sm:$0xff]
    %v6558 = vld [vmem:[#allocation7 + $0xbc] sm:$0xf]
    %v6575 = vunpack.c.l.b16 %v6543
    %v6576 = vunpack.c.h.b16 %v6543
    %v6577 = vunpack.c.l.b16 %v6544
    %v6578 = vunpack.c.l.b16 %v6545
    %v6579 = vunpack.c.h.b16 %v6545
    %v6580 = vunpack.c.l.b16 %v6546
    %v6581 = vunpack.c.l.b16 %v6547
    %v6582 = vunpack.c.h.b16 %v6547
    %v6583 = vunpack.c.l.b16 %v6548
    %v6584 = vunpack.c.l.b16 %v6549
    %v6585 = vunpack.c.h.b16 %v6549
    %v6586 = vunpack.c.l.b16 %v6550
    %v6587 = vunpack.c.l.b16 %v6551
    %v6588 = vunpack.c.h.b16 %v6551
    %v6589 = vunpack.c.l.b16 %v6552
    %v6590 = vunpack.c.l.b16 %v6553
    %v6591 = vunpack.c.h.b16 %v6553
    %v6592 = vunpack.c.l.b16 %v6554
    %v6593 = vunpack.c.l.b16 %v6555
    %v6594 = vunpack.c.h.b16 %v6555
    %v6595 = vunpack.c.l.b16 %v6556
    %v6596 = vunpack.c.l.b16 %v6557
    %v6597 = vunpack.c.h.b16 %v6557
    %v6598 = vunpack.c.l.b16 %v6558
    %v6599 = vpack.c.b16 %v6578, %v6575
    %v6600 = vpack.c.b16 %v6579, %v6576
    %v6601 = vpack.c.b16 %v6580, %v6577
    %v6602 = vpack.c.b16 %v6584, %v6581
    %v6603 = vpack.c.b16 %v6585, %v6582
    %v6604 = vpack.c.b16 %v6586, %v6583
    %v6605 = vpack.c.b16 %v6590, %v6587
    %v6606 = vpack.c.b16 %v6591, %v6588
    %v6607 = vpack.c.b16 %v6592, %v6589
    %v6608 = vpack.c.b16 %v6596, %v6593
    %v6609 = vpack.c.b16 %v6597, %v6594
    %v6610 = vpack.c.b16 %v6598, %v6595
    %v6624 = vsel %vm2666, %v6539, 0
    %v6627 = vsel %vm2666, %v6540, 0
    %v6630 = vsel %vm2666, %v6541, 0
    %v6633 = vsel %vm2666, %v6542, 0
    %6635 = vmatprep.subr.bf16.mxu0 0
    %6636 = vmatpush1.bf16.msra.mxu0 0
    %6637 = vmatprep.subr.bf16.mxu0 0
    %6638 = vmatpush1.bf16.msra.mxu0 0
    %6639 = vmatprep.subr.bf16.mxu0 0
    %6640 = vmatpush1.bf16.msra.mxu0 0
    %6641 = vmatprep.subr.bf16.mxu0 0
    %6642 = vmatpush1.bf16.msra.mxu0 0
    %6643 = vmatprep.subr.bf16.mxu0 %v6609
    %6644 = vmatpush1.bf16.msra.mxu0 %v6608
    %6645 = vmatprep.subr.bf16.mxu0 %v6606
    %6646 = vmatpush1.bf16.msra.mxu0 %v6605
    %6647 = vmatprep.subr.bf16.mxu0 %v6603
    %6648 = vmatpush1.bf16.msra.mxu0 %v6602
    %6649 = vmatprep.subr.bf16.mxu0 %v6600
    %6650 = vmatpush1.bf16.msra.mxu0 %v6599
    %6651 = vmatprep.subr.bf16.mxu0 0
    %6652 = vmatpush2.bf16.msra.mxu0 0
    %6653 = vmatprep.subr.bf16.mxu0 0
    %6654 = vmatpush2.bf16.msra.mxu0 0
    %6655 = vmatprep.subr.bf16.mxu0 0
    %6656 = vmatpush2.bf16.msra.mxu0 0
    %6657 = vmatprep.subr.bf16.mxu0 0
    %6658 = vmatpush2.bf16.msra.mxu0 0
    %6659 = vmatprep.subr.bf16.mxu0 0
    %6660 = vmatpush2.bf16.msra.mxu0 0
    %6661 = vmatprep.subr.bf16.mxu0 0
    %6662 = vmatpush2.bf16.msra.mxu0 0
    %6663 = vmatprep.subr.bf16.mxu0 0
    %6664 = vmatpush2.bf16.msra.mxu0 0
    %6665 = vmatprep.subr.bf16.mxu0 0
    %6666 = vmatpush2.bf16.msra.mxu0 0
    %6667 = vmatprep.mubr.bf16.mxu0 0
    %6668 = vmatmul.mubr.bf16.gmra.mxu0 %v6624
    %v6669 = vpop.f32.mrf.mxu0
    %v6670 = vadd.f32 0.0, %v6669
    %v6671 = vpop.f32.mrf.mxu0
    %v6672 = vadd.f32 0.0, %v6671
    %v6673 = vpop.f32.mrf.mxu0
    %v6674 = vadd.f32 0.0, %v6673
    %v6675 = vpop.f32.mrf.mxu0
    %v6676 = vadd.f32 0.0, %v6675
    %6677 = vmatprep.mubr.bf16.mxu0 0
    %6678 = vmatmul.mubr.bf16.gmra.mxu0 %v6627
    %v6679 = vpop.f32.mrf.mxu0
    %v6680 = vadd.f32 0.0, %v6679
    %v6681 = vpop.f32.mrf.mxu0
    %v6682 = vadd.f32 0.0, %v6681
    %v6683 = vpop.f32.mrf.mxu0
    %v6684 = vadd.f32 0.0, %v6683
    %v6685 = vpop.f32.mrf.mxu0
    %v6686 = vadd.f32 0.0, %v6685
    %6687 = vmatprep.mubr.bf16.mxu0 0
    %6688 = vmatmul.mubr.bf16.gmra.mxu0 %v6630
    %v6689 = vpop.f32.mrf.mxu0
    %v6690 = vadd.f32 0.0, %v6689
    %v6691 = vpop.f32.mrf.mxu0
    %v6692 = vadd.f32 0.0, %v6691
    %v6693 = vpop.f32.mrf.mxu0
    %v6694 = vadd.f32 0.0, %v6693
    %v6695 = vpop.f32.mrf.mxu0
    %v6696 = vadd.f32 0.0, %v6695
    %6697 = vmatprep.mubr.bf16.mxu0 0
    %6698 = vmatmul.mubr.bf16.gmra.mxu0 %v6633
    %v6699 = vpop.f32.mrf.mxu0
    %v6700 = vadd.f32 0.0, %v6699
    %v6701 = vpop.f32.mrf.mxu0
    %v6702 = vadd.f32 0.0, %v6701
    %v6703 = vpop.f32.mrf.mxu0
    %v6704 = vadd.f32 0.0, %v6703
    %v6705 = vpop.f32.mrf.mxu0
    %v6706 = vadd.f32 0.0, %v6705
    %6707 = vdwg.mxu0
    %6708 = vmatprep.subr.bf16.mxu0 0
    %6709 = vmatpush1.bf16.msra.mxu0 0
    %6710 = vmatprep.subr.bf16.mxu0 0
    %6711 = vmatpush1.bf16.msra.mxu0 0
    %6712 = vmatprep.subr.bf16.mxu0 0
    %6713 = vmatpush1.bf16.msra.mxu0 0
    %6714 = vmatprep.subr.bf16.mxu0 0
    %6715 = vmatpush1.bf16.msra.mxu0 0
    %6716 = vmatprep.subr.bf16.mxu0 0
    %6717 = vmatpush1.bf16.msra.mxu0 %v6610
    %6718 = vmatprep.subr.bf16.mxu0 0
    %6719 = vmatpush1.bf16.msra.mxu0 %v6607
    %6720 = vmatprep.subr.bf16.mxu0 0
    %6721 = vmatpush1.bf16.msra.mxu0 %v6604
    %6722 = vmatprep.subr.bf16.mxu0 0
    %6723 = vmatpush1.bf16.msra.mxu0 %v6601
    %6724 = vmatprep.subr.bf16.mxu0 0
    %6725 = vmatpush2.bf16.msra.mxu0 0
    %6726 = vmatprep.subr.bf16.mxu0 0
    %6727 = vmatpush2.bf16.msra.mxu0 0
    %6728 = vmatprep.subr.bf16.mxu0 0
    %6729 = vmatpush2.bf16.msra.mxu0 0
    %6730 = vmatprep.subr.bf16.mxu0 0
    %6731 = vmatpush2.bf16.msra.mxu0 0
    %6732 = vmatprep.subr.bf16.mxu0 0
    %6733 = vmatpush2.bf16.msra.mxu0 0
    %6734 = vmatprep.subr.bf16.mxu0 0
    %6735 = vmatpush2.bf16.msra.mxu0 0
    %6736 = vmatprep.subr.bf16.mxu0 0
    %6737 = vmatpush2.bf16.msra.mxu0 0
    %6738 = vmatprep.subr.bf16.mxu0 0
    %6739 = vmatpush2.bf16.msra.mxu0 0
    %6740 = vmatprep.mubr.bf16.mxu0 0
    %6741 = vmatmul.mubr.bf16.gmra.mxu0 %v6624
    %v6742 = vpop.f32.mrf.mxu0
    %v6743 = vadd.f32 0.0, %v6742
    %v6744 = vpop.f32.mrf.mxu0
    %v6745 = vpop.f32.mrf.mxu0
    %v6746 = vadd.f32 0.0, %v6745
    %v6747 = vpop.f32.mrf.mxu0
    %6748 = vmatprep.mubr.bf16.mxu0 0
    %6749 = vmatmul.mubr.bf16.gmra.mxu0 %v6627
    %v6750 = vpop.f32.mrf.mxu0
    %v6751 = vadd.f32 0.0, %v6750
    %v6752 = vpop.f32.mrf.mxu0
    %v6753 = vpop.f32.mrf.mxu0
    %v6754 = vadd.f32 0.0, %v6753
    %v6755 = vpop.f32.mrf.mxu0
    %6756 = vmatprep.mubr.bf16.mxu0 0
    %6757 = vmatmul.mubr.bf16.gmra.mxu0 %v6630
    %v6758 = vpop.f32.mrf.mxu0
    %v6759 = vadd.f32 0.0, %v6758
    %v6760 = vpop.f32.mrf.mxu0
    %v6761 = vpop.f32.mrf.mxu0
    %v6762 = vadd.f32 0.0, %v6761
    %v6763 = vpop.f32.mrf.mxu0
    %6764 = vmatprep.mubr.bf16.mxu0 0
    %6765 = vmatmul.mubr.bf16.gmra.mxu0 %v6633
    %v6766 = vpop.f32.mrf.mxu0
    %v6767 = vadd.f32 0.0, %v6766
    %v6768 = vpop.f32.mrf.mxu0
    %v6769 = vpop.f32.mrf.mxu0
    %v6770 = vadd.f32 0.0, %v6769
    %v6771 = vpop.f32.mrf.mxu0
    %6772 = vdwg.mxu0
    %v6789 = vunpack.c.l.b16 %v6217
    %v6790 = vunpack.c.h.b16 %v6217
    %v6791 = vunpack.c.l.b16 %v6218
    %v6792 = vunpack.c.l.b16 %v6219
    %v6793 = vunpack.c.h.b16 %v6219
    %v6794 = vunpack.c.l.b16 %v6220
    %v6795 = vunpack.c.l.b16 %v6221
    %v6796 = vunpack.c.h.b16 %v6221
    %v6797 = vunpack.c.l.b16 %v6222
    %v6798 = vunpack.c.l.b16 %v6223
    %v6799 = vunpack.c.h.b16 %v6223
    %v6800 = vunpack.c.l.b16 %v6224
    %v6801 = vunpack.c.l.b16 %v6225
    %v6802 = vunpack.c.h.b16 %v6225
    %v6803 = vunpack.c.l.b16 %v6226
    %v6804 = vunpack.c.l.b16 %v6227
    %v6805 = vunpack.c.h.b16 %v6227
    %v6806 = vunpack.c.l.b16 %v6228
    %v6807 = vunpack.c.l.b16 %v6229
    %v6808 = vunpack.c.h.b16 %v6229
    %v6809 = vunpack.c.l.b16 %v6230
    %v6810 = vunpack.c.l.b16 %v6231
    %v6811 = vunpack.c.h.b16 %v6231
    %v6812 = vunpack.c.l.b16 %v6232
    %v6813 = vpack.c.b16 %v6792, %v6789
    %v6814 = vpack.c.b16 %v6793, %v6790
    %v6815 = vpack.c.b16 %v6794, %v6791
    %v6816 = vpack.c.b16 %v6798, %v6795
    %v6817 = vpack.c.b16 %v6799, %v6796
    %v6818 = vpack.c.b16 %v6800, %v6797
    %v6819 = vpack.c.b16 %v6804, %v6801
    %v6820 = vpack.c.b16 %v6805, %v6802
    %v6821 = vpack.c.b16 %v6806, %v6803
    %v6822 = vpack.c.b16 %v6810, %v6807
    %v6823 = vpack.c.b16 %v6811, %v6808
    %v6824 = vpack.c.b16 %v6812, %v6809
    %v6838 = vsel %vm2666, %v6213, 0
    %v6841 = vsel %vm2666, %v6214, 0
    %v6844 = vsel %vm2666, %v6215, 0
    %v6847 = vsel %vm2666, %v6216, 0
    %6849 = vmatprep.subr.bf16.mxu0 0
    %6850 = vmatpush1.bf16.msra.mxu0 0
    %6851 = vmatprep.subr.bf16.mxu0 0
    %6852 = vmatpush1.bf16.msra.mxu0 0
    %6853 = vmatprep.subr.bf16.mxu0 0
    %6854 = vmatpush1.bf16.msra.mxu0 0
    %6855 = vmatprep.subr.bf16.mxu0 0
    %6856 = vmatpush1.bf16.msra.mxu0 0
    %6857 = vmatprep.subr.bf16.mxu0 %v6823
    %6858 = vmatpush1.bf16.msra.mxu0 %v6822
    %6859 = vmatprep.subr.bf16.mxu0 %v6820
    %6860 = vmatpush1.bf16.msra.mxu0 %v6819
    %6861 = vmatprep.subr.bf16.mxu0 %v6817
    %6862 = vmatpush1.bf16.msra.mxu0 %v6816
    %6863 = vmatprep.subr.bf16.mxu0 %v6814
    %6864 = vmatpush1.bf16.msra.mxu0 %v6813
    %6865 = vmatprep.subr.bf16.mxu0 0
    %6866 = vmatpush2.bf16.msra.mxu0 0
    %6867 = vmatprep.subr.bf16.mxu0 0
    %6868 = vmatpush2.bf16.msra.mxu0 0
    %6869 = vmatprep.subr.bf16.mxu0 0
    %6870 = vmatpush2.bf16.msra.mxu0 0
    %6871 = vmatprep.subr.bf16.mxu0 0
    %6872 = vmatpush2.bf16.msra.mxu0 0
    %6873 = vmatprep.subr.bf16.mxu0 0
    %6874 = vmatpush2.bf16.msra.mxu0 0
    %6875 = vmatprep.subr.bf16.mxu0 0
    %6876 = vmatpush2.bf16.msra.mxu0 0
    %6877 = vmatprep.subr.bf16.mxu0 0
    %6878 = vmatpush2.bf16.msra.mxu0 0
    %6879 = vmatprep.subr.bf16.mxu0 0
    %6880 = vmatpush2.bf16.msra.mxu0 0
    %6881 = vmatprep.mubr.bf16.mxu0 0
    %6882 = vmatmul.mubr.bf16.gmra.mxu0 %v6838
    %v6883 = vpop.f32.mrf.mxu0
    %v6884 = vadd.f32 %v6670, %v6883
    %v6885 = vpop.f32.mrf.mxu0
    %v6886 = vadd.f32 %v6672, %v6885
    %v6887 = vpop.f32.mrf.mxu0
    %v6888 = vadd.f32 %v6674, %v6887
    %v6889 = vpop.f32.mrf.mxu0
    %v6890 = vadd.f32 %v6676, %v6889
    %6891 = vmatprep.mubr.bf16.mxu0 0
    %6892 = vmatmul.mubr.bf16.gmra.mxu0 %v6841
    %v6893 = vpop.f32.mrf.mxu0
    %v6894 = vadd.f32 %v6680, %v6893
    %v6895 = vpop.f32.mrf.mxu0
    %v6896 = vadd.f32 %v6682, %v6895
    %v6897 = vpop.f32.mrf.mxu0
    %v6898 = vadd.f32 %v6684, %v6897
    %v6899 = vpop.f32.mrf.mxu0
    %v6900 = vadd.f32 %v6686, %v6899
    %6901 = vmatprep.mubr.bf16.mxu0 0
    %6902 = vmatmul.mubr.bf16.gmra.mxu0 %v6844
    %v6903 = vpop.f32.mrf.mxu0
    %v6904 = vadd.f32 %v6690, %v6903
    %v6905 = vpop.f32.mrf.mxu0
    %v6906 = vadd.f32 %v6692, %v6905
    %v6907 = vpop.f32.mrf.mxu0
    %v6908 = vadd.f32 %v6694, %v6907
    %v6909 = vpop.f32.mrf.mxu0
    %v6910 = vadd.f32 %v6696, %v6909
    %6911 = vmatprep.mubr.bf16.mxu0 0
    %6912 = vmatmul.mubr.bf16.gmra.mxu0 %v6847
    %v6913 = vpop.f32.mrf.mxu0
    %v6914 = vadd.f32 %v6700, %v6913
    %v6915 = vpop.f32.mrf.mxu0
    %v6916 = vadd.f32 %v6702, %v6915
    %v6917 = vpop.f32.mrf.mxu0
    %v6918 = vadd.f32 %v6704, %v6917
    %v6919 = vpop.f32.mrf.mxu0
    %v6920 = vadd.f32 %v6706, %v6919
    %6921 = vdwg.mxu0
    %6922 = vmatprep.subr.bf16.mxu0 0
    %6923 = vmatpush1.bf16.msra.mxu0 0
    %6924 = vmatprep.subr.bf16.mxu0 0
    %6925 = vmatpush1.bf16.msra.mxu0 0
    %6926 = vmatprep.subr.bf16.mxu0 0
    %6927 = vmatpush1.bf16.msra.mxu0 0
    %6928 = vmatprep.subr.bf16.mxu0 0
    %6929 = vmatpush1.bf16.msra.mxu0 0
    %6930 = vmatprep.subr.bf16.mxu0 0
    %6931 = vmatpush1.bf16.msra.mxu0 %v6824
    %6932 = vmatprep.subr.bf16.mxu0 0
    %6933 = vmatpush1.bf16.msra.mxu0 %v6821
    %6934 = vmatprep.subr.bf16.mxu0 0
    %6935 = vmatpush1.bf16.msra.mxu0 %v6818
    %6936 = vmatprep.subr.bf16.mxu0 0
    %6937 = vmatpush1.bf16.msra.mxu0 %v6815
    %6938 = vmatprep.subr.bf16.mxu0 0
    %6939 = vmatpush2.bf16.msra.mxu0 0
    %6940 = vmatprep.subr.bf16.mxu0 0
    %6941 = vmatpush2.bf16.msra.mxu0 0
    %6942 = vmatprep.subr.bf16.mxu0 0
    %6943 = vmatpush2.bf16.msra.mxu0 0
    %6944 = vmatprep.subr.bf16.mxu0 0
    %6945 = vmatpush2.bf16.msra.mxu0 0
    %6946 = vmatprep.subr.bf16.mxu0 0
    %6947 = vmatpush2.bf16.msra.mxu0 0
    %6948 = vmatprep.subr.bf16.mxu0 0
    %6949 = vmatpush2.bf16.msra.mxu0 0
    %6950 = vmatprep.subr.bf16.mxu0 0
    %6951 = vmatpush2.bf16.msra.mxu0 0
    %6952 = vmatprep.subr.bf16.mxu0 0
    %6953 = vmatpush2.bf16.msra.mxu0 0
    %6954 = vmatprep.mubr.bf16.mxu0 0
    %6955 = vmatmul.mubr.bf16.gmra.mxu0 %v6838
    %v6956 = vpop.f32.mrf.mxu0
    %v6957 = vadd.f32 %v6743, %v6956
    %v6958 = vpop.f32.mrf.mxu0
    %v6959 = vpop.f32.mrf.mxu0
    %v6960 = vadd.f32 %v6746, %v6959
    %v6961 = vpop.f32.mrf.mxu0
    %6962 = vmatprep.mubr.bf16.mxu0 0
    %6963 = vmatmul.mubr.bf16.gmra.mxu0 %v6841
    %v6964 = vpop.f32.mrf.mxu0
    %v6965 = vadd.f32 %v6751, %v6964
    %v6966 = vpop.f32.mrf.mxu0
    %v6967 = vpop.f32.mrf.mxu0
    %v6968 = vadd.f32 %v6754, %v6967
    %v6969 = vpop.f32.mrf.mxu0
    %6970 = vmatprep.mubr.bf16.mxu0 0
    %6971 = vmatmul.mubr.bf16.gmra.mxu0 %v6844
    %v6972 = vpop.f32.mrf.mxu0
    %v6973 = vadd.f32 %v6759, %v6972
    %v6974 = vpop.f32.mrf.mxu0
    %v6975 = vpop.f32.mrf.mxu0
    %v6976 = vadd.f32 %v6762, %v6975
    %v6977 = vpop.f32.mrf.mxu0
    %6978 = vmatprep.mubr.bf16.mxu0 0
    %6979 = vmatmul.mubr.bf16.gmra.mxu0 %v6847
    %v6980 = vpop.f32.mrf.mxu0
    %v6981 = vadd.f32 %v6767, %v6980
    %v6982 = vpop.f32.mrf.mxu0
    %v6983 = vpop.f32.mrf.mxu0
    %v6984 = vadd.f32 %v6770, %v6983
    %v6985 = vpop.f32.mrf.mxu0
    %6986 = vdwg.mxu0
    %v6988 = vsel %vm2666, %v2611, 0
    %v6991 = vsel %vm2666, %v2620, 0
    %v6994 = vsel %vm2666, %v2629, 0
    %v6997 = vsel %vm2666, %v2638, 0
    %v7000 = vsel %vm2666, %v2614, 0
    %v7003 = vsel %vm2666, %v2623, 0
    %v7006 = vsel %vm2666, %v2632, 0
    %v7009 = vsel %vm2666, %v2641, 0
    %7011 = vmatprep.subr.bf16.mxu0 0
    %7012 = vmatpush1.bf16.xpose.msra.mxu0 0
    %7013 = vmatprep.subr.bf16.mxu0 0
    %7014 = vmatpush1.bf16.xpose.msra.mxu0 0
    %7015 = vmatprep.subr.bf16.mxu0 0
    %7016 = vmatpush1.bf16.xpose.msra.mxu0 0
    %7017 = vmatprep.subr.bf16.mxu0 0
    %7018 = vmatpush1.bf16.xpose.msra.mxu0 0
    %7019 = vmatprep.subr.bf16.mxu0 0
    %7020 = vmatpush1.bf16.xpose.msra.mxu0 %v7009
    %7021 = vmatprep.subr.bf16.mxu0 0
    %7022 = vmatpush1.bf16.xpose.msra.mxu0 %v7006
    %7023 = vmatprep.subr.bf16.mxu0 0
    %7024 = vmatpush1.bf16.xpose.msra.mxu0 %v7003
    %7025 = vmatprep.subr.bf16.mxu0 0
    %7026 = vmatpush1.bf16.xpose.msra.mxu0 %v7000
    %7027 = vmatprep.subr.bf16.mxu0 0
    %7028 = vmatpush2.bf16.xpose.msra.mxu0 0
    %7029 = vmatprep.subr.bf16.mxu0 0
    %7030 = vmatpush2.bf16.xpose.msra.mxu0 0
    %7031 = vmatprep.subr.bf16.mxu0 0
    %7032 = vmatpush2.bf16.xpose.msra.mxu0 0
    %7033 = vmatprep.subr.bf16.mxu0 0
    %7034 = vmatpush2.bf16.xpose.msra.mxu0 0
    %7035 = vmatprep.subr.bf16.mxu0 0
    %7036 = vmatpush2.bf16.xpose.msra.mxu0 0
    %7037 = vmatprep.subr.bf16.mxu0 0
    %7038 = vmatpush2.bf16.xpose.msra.mxu0 0
    %7039 = vmatprep.subr.bf16.mxu0 0
    %7040 = vmatpush2.bf16.xpose.msra.mxu0 0
    %7041 = vmatprep.subr.bf16.mxu0 0
    %7042 = vmatpush2.bf16.xpose.msra.mxu0 0
    %7043 = vmatprep.mubr.bf16.mxu0 0
    %7044 = vmatmul.mubr.bf16.gmra.mxu0 %v6988
    %v7045 = vpop.f32.mrf.mxu0
    %v7046 = vadd.f32 0.0, %v7045
    %v7047 = vpop.f32.mrf.mxu0
    %v7048 = vpop.f32.mrf.mxu0
    %v7049 = vadd.f32 0.0, %v7048
    %v7050 = vpop.f32.mrf.mxu0
    %7051 = vmatprep.mubr.bf16.mxu0 0
    %7052 = vmatmul.mubr.bf16.gmra.mxu0 %v6991
    %v7053 = vpop.f32.mrf.mxu0
    %v7054 = vadd.f32 0.0, %v7053
    %v7055 = vpop.f32.mrf.mxu0
    %v7056 = vpop.f32.mrf.mxu0
    %v7057 = vadd.f32 0.0, %v7056
    %v7058 = vpop.f32.mrf.mxu0
    %7059 = vmatprep.mubr.bf16.mxu0 0
    %7060 = vmatmul.mubr.bf16.gmra.mxu0 %v6994
    %v7061 = vpop.f32.mrf.mxu0
    %v7062 = vadd.f32 0.0, %v7061
    %v7063 = vpop.f32.mrf.mxu0
    %v7064 = vpop.f32.mrf.mxu0
    %v7065 = vadd.f32 0.0, %v7064
    %v7066 = vpop.f32.mrf.mxu0
    %7067 = vmatprep.mubr.bf16.mxu0 0
    %7068 = vmatmul.mubr.bf16.gmra.mxu0 %v6997
    %v7069 = vpop.f32.mrf.mxu0
    %v7070 = vadd.f32 0.0, %v7069
    %v7071 = vpop.f32.mrf.mxu0
    %v7072 = vpop.f32.mrf.mxu0
    %v7073 = vadd.f32 0.0, %v7072
    %v7074 = vpop.f32.mrf.mxu0
    %7075 = vdwg.mxu0
    %v7076 = vsel %vm2657, %v7046, -inf
    %v7077 = vsel %vm2658, %v7049, -inf
    %v7078 = vsel %vm2659, %v7054, -inf
    %v7079 = vsel %vm2660, %v7057, -inf
    %v7080 = vsel %vm2661, %v7062, -inf
    %v7081 = vsel %vm2662, %v7065, -inf
    %v7082 = vsel %vm2663, %v7070, -inf
    %v7083 = vsel %vm2664, %v7073, -inf
    %v7084 = vsel %vm2666, %v7076, -inf
    %7085 = vmax.xlane.f32.xlu0 %v7084
    %v7086 = vpop.xlane.xlu0 %7085
    %v7087 = vsel %vm2666, %v7077, -inf
    %7088 = vmax.xlane.f32.xlu0 %v7087
    %v7089 = vpop.xlane.xlu0 %7088
    %v7090 = vsel %vm2666, %v7078, -inf
    %7091 = vmax.xlane.f32.xlu0 %v7090
    %v7092 = vpop.xlane.xlu0 %7091
    %v7093 = vsel %vm2666, %v7079, -inf
    %7094 = vmax.xlane.f32.xlu0 %v7093
    %v7095 = vpop.xlane.xlu0 %7094
    %v7096 = vsel %vm2666, %v7080, -inf
    %7097 = vmax.xlane.f32.xlu0 %v7096
    %v7098 = vpop.xlane.xlu0 %7097
    %v7099 = vsel %vm2666, %v7081, -inf
    %7100 = vmax.xlane.f32.xlu0 %v7099
    %v7101 = vpop.xlane.xlu0 %7100
    %v7102 = vsel %vm2666, %v7082, -inf
    %7103 = vmax.xlane.f32.xlu0 %v7102
    %v7104 = vpop.xlane.xlu0 %7103
    %v7105 = vsel %vm2666, %v7083, -inf
    %7106 = vmax.xlane.f32.xlu0 %v7105
    %v7107 = vpop.xlane.xlu0 %7106
    %v7108 = vsub.f32 %v7076, %v7086
    %v7109 = vsub.f32 %v7077, %v7089
    %v7110 = vsub.f32 %v7078, %v7092
    %v7111 = vsub.f32 %v7079, %v7095
    %v7112 = vsub.f32 %v7080, %v7098
    %v7113 = vsub.f32 %v7081, %v7101
    %v7114 = vsub.f32 %v7082, %v7104
    %v7115 = vsub.f32 %v7083, %v7107
    %v7116 = vmul.f32 %v7108, 1.442695
    %v7117 = vpow.pop %v7116
    %v7118 = vmul.f32 %v7109, 1.442695
    %v7119 = vpow.pop %v7118
    %v7120 = vmul.f32 %v7110, 1.442695
    %v7121 = vpow.pop %v7120
    %v7122 = vmul.f32 %v7111, 1.442695
    %v7123 = vpow.pop %v7122
    %v7124 = vmul.f32 %v7112, 1.442695
    %v7125 = vpow.pop %v7124
    %v7126 = vmul.f32 %v7113, 1.442695
    %v7127 = vpow.pop %v7126
    %v7128 = vmul.f32 %v7114, 1.442695
    %v7129 = vpow.pop %v7128
    %v7130 = vmul.f32 %v7115, 1.442695
    %v7131 = vpow.pop %v7130
    %v7132 = vsel %vm2666, %v7117, 0.0
    %7133 = vadd.xlane.f32.xlu0 %v7132
    %v7134 = vpop.xlane.xlu0 %7133
    %v7135 = vsel %vm2666, %v7119, 0.0
    %7136 = vadd.xlane.f32.xlu0 %v7135
    %v7137 = vpop.xlane.xlu0 %7136
    %v7138 = vsel %vm2666, %v7121, 0.0
    %7139 = vadd.xlane.f32.xlu0 %v7138
    %v7140 = vpop.xlane.xlu0 %7139
    %v7141 = vsel %vm2666, %v7123, 0.0
    %7142 = vadd.xlane.f32.xlu0 %v7141
    %v7143 = vpop.xlane.xlu0 %7142
    %v7144 = vsel %vm2666, %v7125, 0.0
    %7145 = vadd.xlane.f32.xlu0 %v7144
    %v7146 = vpop.xlane.xlu0 %7145
    %v7147 = vsel %vm2666, %v7127, 0.0
    %7148 = vadd.xlane.f32.xlu0 %v7147
    %v7149 = vpop.xlane.xlu0 %7148
    %v7150 = vsel %vm2666, %v7129, 0.0
    %7151 = vadd.xlane.f32.xlu0 %v7150
    %v7152 = vpop.xlane.xlu0 %7151
    %v7153 = vsel %vm2666, %v7131, 0.0
    %7154 = vadd.xlane.f32.xlu0 %v7153
    %v7155 = vpop.xlane.xlu0 %7154
    %v7156 = vrcp.pop %v7134
    %v7157 = vrcp.pop %v7137
    %v7158 = vrcp.pop %v7140
    %v7159 = vrcp.pop %v7143
    %v7160 = vrcp.pop %v7146
    %v7161 = vrcp.pop %v7149
    %v7162 = vrcp.pop %v7152
    %v7163 = vrcp.pop %v7155
    %v7164 = vmul.f32 %v7117, %v7156
    %v7165 = vmul.f32 %v7119, %v7157
    %v7166 = vmul.f32 %v7121, %v7158
    %v7167 = vmul.f32 %v7123, %v7159
    %v7168 = vmul.f32 %v7125, %v7160
    %v7169 = vmul.f32 %v7127, %v7161
    %v7170 = vmul.f32 %v7129, %v7162
    %v7171 = vmul.f32 %v7131, %v7163
    %v7172 = vpack.c.bf16 %v7165, %v7164
    %v7173 = vpack.c.bf16 %v7167, %v7166
    %v7174 = vpack.c.bf16 %v7169, %v7168
    %v7175 = vpack.c.bf16 %v7171, %v7170
    %v7177 = vsel %vm2666, %v7172, 0
    %v7180 = vsel %vm2666, %v7173, 0
    %v7183 = vsel %vm2666, %v7174, 0
    %v7186 = vsel %vm2666, %v7175, 0
    %7188 = vmatprep.subr.bf16.mxu0 0
    %7189 = vmatpush1.bf16.msra.mxu0 0
    %7190 = vmatprep.subr.bf16.mxu0 0
    %7191 = vmatpush1.bf16.msra.mxu0 0
    %7192 = vmatprep.subr.bf16.mxu0 0
    %7193 = vmatpush1.bf16.msra.mxu0 0
    %7194 = vmatprep.subr.bf16.mxu0 0
    %7195 = vmatpush1.bf16.msra.mxu0 0
    %7196 = vmatprep.subr.bf16.mxu0 0
    %7197 = vmatpush1.bf16.msra.mxu0 %v2644
    %7198 = vmatprep.subr.bf16.mxu0 0
    %7199 = vmatpush1.bf16.msra.mxu0 %v2635
    %7200 = vmatprep.subr.bf16.mxu0 0
    %7201 = vmatpush1.bf16.msra.mxu0 %v2626
    %7202 = vmatprep.subr.bf16.mxu0 0
    %7203 = vmatpush1.bf16.msra.mxu0 %v2617
    %7204 = vmatprep.subr.bf16.mxu0 0
    %7205 = vmatpush2.bf16.msra.mxu0 0
    %7206 = vmatprep.subr.bf16.mxu0 0
    %7207 = vmatpush2.bf16.msra.mxu0 0
    %7208 = vmatprep.subr.bf16.mxu0 0
    %7209 = vmatpush2.bf16.msra.mxu0 0
    %7210 = vmatprep.subr.bf16.mxu0 0
    %7211 = vmatpush2.bf16.msra.mxu0 0
    %7212 = vmatprep.subr.bf16.mxu0 0
    %7213 = vmatpush2.bf16.msra.mxu0 0
    %7214 = vmatprep.subr.bf16.mxu0 0
    %7215 = vmatpush2.bf16.msra.mxu0 0
    %7216 = vmatprep.subr.bf16.mxu0 0
    %7217 = vmatpush2.bf16.msra.mxu0 0
    %7218 = vmatprep.subr.bf16.mxu0 0
    %7219 = vmatpush2.bf16.msra.mxu0 0
    %7220 = vmatprep.mubr.bf16.mxu0 0
    %7221 = vmatmul.mubr.bf16.gmra.mxu0 %v7177
    %v7222 = vpop.f32.mrf.mxu0
    %v7223 = vadd.f32 0.0, %v7222
    %v7224 = vpop.f32.mrf.mxu0
    %v7225 = vpop.f32.mrf.mxu0
    %v7226 = vadd.f32 0.0, %v7225
    %v7227 = vpop.f32.mrf.mxu0
    %7228 = vmatprep.mubr.bf16.mxu0 0
    %7229 = vmatmul.mubr.bf16.gmra.mxu0 %v7180
    %v7230 = vpop.f32.mrf.mxu0
    %v7231 = vadd.f32 0.0, %v7230
    %v7232 = vpop.f32.mrf.mxu0
    %v7233 = vpop.f32.mrf.mxu0
    %v7234 = vadd.f32 0.0, %v7233
    %v7235 = vpop.f32.mrf.mxu0
    %7236 = vmatprep.mubr.bf16.mxu0 0
    %7237 = vmatmul.mubr.bf16.gmra.mxu0 %v7183
    %v7238 = vpop.f32.mrf.mxu0
    %v7239 = vadd.f32 0.0, %v7238
    %v7240 = vpop.f32.mrf.mxu0
    %v7241 = vpop.f32.mrf.mxu0
    %v7242 = vadd.f32 0.0, %v7241
    %v7243 = vpop.f32.mrf.mxu0
    %7244 = vmatprep.mubr.bf16.mxu0 0
    %7245 = vmatmul.mubr.bf16.gmra.mxu0 %v7186
    %v7246 = vpop.f32.mrf.mxu0
    %v7247 = vadd.f32 0.0, %v7246
    %v7248 = vpop.f32.mrf.mxu0
    %v7249 = vpop.f32.mrf.mxu0
    %v7250 = vadd.f32 0.0, %v7249
    %v7251 = vpop.f32.mrf.mxu0
    %7252 = vdwg.mxu0
    %v7253 = vpack.c.bf16 %v7226, %v7223
    %v7254 = vpack.c.bf16 %v7234, %v7231
    %v7255 = vpack.c.bf16 %v7242, %v7239
    %v7256 = vpack.c.bf16 %v7250, %v7247
    %v7257 = vld [vmem:[#allocation7 + $0xc0] sm:$0xff]
    %v7258 = vld [vmem:[#allocation7 + $0xc8] sm:$0xf]
    %v7259 = vld [vmem:[#allocation7 + $0xcc] sm:$0xff]
    %v7260 = vld [vmem:[#allocation7 + $0xd4] sm:$0xf]
    %v7261 = vld [vmem:[#allocation7 + $0xd8] sm:$0xff]
    %v7262 = vld [vmem:[#allocation7 + $0xe0] sm:$0xf]
    %v7263 = vld [vmem:[#allocation7 + $0xe4] sm:$0xff]
    %v7264 = vld [vmem:[#allocation7 + $0xec] sm:$0xf]
    %v7265 = vld [vmem:[#allocation7 + $0xf0] sm:$0xff]
    %v7266 = vld [vmem:[#allocation7 + $0xf8] sm:$0xf]
    %v7267 = vld [vmem:[#allocation7 + $0xfc] sm:$0xff]
    %v7268 = vld [vmem:[#allocation7 + $0x104] sm:$0xf]
    %v7269 = vld [vmem:[#allocation7 + $0x108] sm:$0xff]
    %v7270 = vld [vmem:[#allocation7 + $0x110] sm:$0xf]
    %v7271 = vld [vmem:[#allocation7 + $0x114] sm:$0xff]
    %v7272 = vld [vmem:[#allocation7 + $0x11c] sm:$0xf]
    %v7289 = vunpack.c.l.b16 %v7257
    %v7290 = vunpack.c.h.b16 %v7257
    %v7291 = vunpack.c.l.b16 %v7258
    %v7292 = vunpack.c.l.b16 %v7259
    %v7293 = vunpack.c.h.b16 %v7259
    %v7294 = vunpack.c.l.b16 %v7260
    %v7295 = vunpack.c.l.b16 %v7261
    %v7296 = vunpack.c.h.b16 %v7261
    %v7297 = vunpack.c.l.b16 %v7262
    %v7298 = vunpack.c.l.b16 %v7263
    %v7299 = vunpack.c.h.b16 %v7263
    %v7300 = vunpack.c.l.b16 %v7264
    %v7301 = vunpack.c.l.b16 %v7265
    %v7302 = vunpack.c.h.b16 %v7265
    %v7303 = vunpack.c.l.b16 %v7266
    %v7304 = vunpack.c.l.b16 %v7267
    %v7305 = vunpack.c.h.b16 %v7267
    %v7306 = vunpack.c.l.b16 %v7268
    %v7307 = vunpack.c.l.b16 %v7269
    %v7308 = vunpack.c.h.b16 %v7269
    %v7309 = vunpack.c.l.b16 %v7270
    %v7310 = vunpack.c.l.b16 %v7271
    %v7311 = vunpack.c.h.b16 %v7271
    %v7312 = vunpack.c.l.b16 %v7272
    %v7313 = vpack.c.b16 %v7292, %v7289
    %v7314 = vpack.c.b16 %v7293, %v7290
    %v7315 = vpack.c.b16 %v7294, %v7291
    %v7316 = vpack.c.b16 %v7298, %v7295
    %v7317 = vpack.c.b16 %v7299, %v7296
    %v7318 = vpack.c.b16 %v7300, %v7297
    %v7319 = vpack.c.b16 %v7304, %v7301
    %v7320 = vpack.c.b16 %v7305, %v7302
    %v7321 = vpack.c.b16 %v7306, %v7303
    %v7322 = vpack.c.b16 %v7310, %v7307
    %v7323 = vpack.c.b16 %v7311, %v7308
    %v7324 = vpack.c.b16 %v7312, %v7309
    %v7338 = vsel %vm2666, %v7253, 0
    %v7341 = vsel %vm2666, %v7254, 0
    %v7344 = vsel %vm2666, %v7255, 0
    %v7347 = vsel %vm2666, %v7256, 0
    %7349 = vmatprep.subr.bf16.mxu0 0
    %7350 = vmatpush1.bf16.msra.mxu0 0
    %7351 = vmatprep.subr.bf16.mxu0 0
    %7352 = vmatpush1.bf16.msra.mxu0 0
    %7353 = vmatprep.subr.bf16.mxu0 0
    %7354 = vmatpush1.bf16.msra.mxu0 0
    %7355 = vmatprep.subr.bf16.mxu0 0
    %7356 = vmatpush1.bf16.msra.mxu0 0
    %7357 = vmatprep.subr.bf16.mxu0 %v7323
    %7358 = vmatpush1.bf16.msra.mxu0 %v7322
    %7359 = vmatprep.subr.bf16.mxu0 %v7320
    %7360 = vmatpush1.bf16.msra.mxu0 %v7319
    %7361 = vmatprep.subr.bf16.mxu0 %v7317
    %7362 = vmatpush1.bf16.msra.mxu0 %v7316
    %7363 = vmatprep.subr.bf16.mxu0 %v7314
    %7364 = vmatpush1.bf16.msra.mxu0 %v7313
    %7365 = vmatprep.subr.bf16.mxu0 0
    %7366 = vmatpush2.bf16.msra.mxu0 0
    %7367 = vmatprep.subr.bf16.mxu0 0
    %7368 = vmatpush2.bf16.msra.mxu0 0
    %7369 = vmatprep.subr.bf16.mxu0 0
    %7370 = vmatpush2.bf16.msra.mxu0 0
    %7371 = vmatprep.subr.bf16.mxu0 0
    %7372 = vmatpush2.bf16.msra.mxu0 0
    %7373 = vmatprep.subr.bf16.mxu0 0
    %7374 = vmatpush2.bf16.msra.mxu0 0
    %7375 = vmatprep.subr.bf16.mxu0 0
    %7376 = vmatpush2.bf16.msra.mxu0 0
    %7377 = vmatprep.subr.bf16.mxu0 0
    %7378 = vmatpush2.bf16.msra.mxu0 0
    %7379 = vmatprep.subr.bf16.mxu0 0
    %7380 = vmatpush2.bf16.msra.mxu0 0
    %7381 = vmatprep.mubr.bf16.mxu0 0
    %7382 = vmatmul.mubr.bf16.gmra.mxu0 %v7338
    %v7383 = vpop.f32.mrf.mxu0
    %v7384 = vadd.f32 0.0, %v7383
    %v7385 = vpop.f32.mrf.mxu0
    %v7386 = vadd.f32 0.0, %v7385
    %v7387 = vpop.f32.mrf.mxu0
    %v7388 = vadd.f32 0.0, %v7387
    %v7389 = vpop.f32.mrf.mxu0
    %v7390 = vadd.f32 0.0, %v7389
    %7391 = vmatprep.mubr.bf16.mxu0 0
    %7392 = vmatmul.mubr.bf16.gmra.mxu0 %v7341
    %v7393 = vpop.f32.mrf.mxu0
    %v7394 = vadd.f32 0.0, %v7393
    %v7395 = vpop.f32.mrf.mxu0
    %v7396 = vadd.f32 0.0, %v7395
    %v7397 = vpop.f32.mrf.mxu0
    %v7398 = vadd.f32 0.0, %v7397
    %v7399 = vpop.f32.mrf.mxu0
    %v7400 = vadd.f32 0.0, %v7399
    %7401 = vmatprep.mubr.bf16.mxu0 0
    %7402 = vmatmul.mubr.bf16.gmra.mxu0 %v7344
    %v7403 = vpop.f32.mrf.mxu0
    %v7404 = vadd.f32 0.0, %v7403
    %v7405 = vpop.f32.mrf.mxu0
    %v7406 = vadd.f32 0.0, %v7405
    %v7407 = vpop.f32.mrf.mxu0
    %v7408 = vadd.f32 0.0, %v7407
    %v7409 = vpop.f32.mrf.mxu0
    %v7410 = vadd.f32 0.0, %v7409
    %7411 = vmatprep.mubr.bf16.mxu0 0
    %7412 = vmatmul.mubr.bf16.gmra.mxu0 %v7347
    %v7413 = vpop.f32.mrf.mxu0
    %v7414 = vadd.f32 0.0, %v7413
    %v7415 = vpop.f32.mrf.mxu0
    %v7416 = vadd.f32 0.0, %v7415
    %v7417 = vpop.f32.mrf.mxu0
    %v7418 = vadd.f32 0.0, %v7417
    %v7419 = vpop.f32.mrf.mxu0
    %v7420 = vadd.f32 0.0, %v7419
    %7421 = vdwg.mxu0
    %7422 = vmatprep.subr.bf16.mxu0 0
    %7423 = vmatpush1.bf16.msra.mxu0 0
    %7424 = vmatprep.subr.bf16.mxu0 0
    %7425 = vmatpush1.bf16.msra.mxu0 0
    %7426 = vmatprep.subr.bf16.mxu0 0
    %7427 = vmatpush1.bf16.msra.mxu0 0
    %7428 = vmatprep.subr.bf16.mxu0 0
    %7429 = vmatpush1.bf16.msra.mxu0 0
    %7430 = vmatprep.subr.bf16.mxu0 0
    %7431 = vmatpush1.bf16.msra.mxu0 %v7324
    %7432 = vmatprep.subr.bf16.mxu0 0
    %7433 = vmatpush1.bf16.msra.mxu0 %v7321
    %7434 = vmatprep.subr.bf16.mxu0 0
    %7435 = vmatpush1.bf16.msra.mxu0 %v7318
    %7436 = vmatprep.subr.bf16.mxu0 0
    %7437 = vmatpush1.bf16.msra.mxu0 %v7315
    %7438 = vmatprep.subr.bf16.mxu0 0
    %7439 = vmatpush2.bf16.msra.mxu0 0
    %7440 = vmatprep.subr.bf16.mxu0 0
    %7441 = vmatpush2.bf16.msra.mxu0 0
    %7442 = vmatprep.subr.bf16.mxu0 0
    %7443 = vmatpush2.bf16.msra.mxu0 0
    %7444 = vmatprep.subr.bf16.mxu0 0
    %7445 = vmatpush2.bf16.msra.mxu0 0
    %7446 = vmatprep.subr.bf16.mxu0 0
    %7447 = vmatpush2.bf16.msra.mxu0 0
    %7448 = vmatprep.subr.bf16.mxu0 0
    %7449 = vmatpush2.bf16.msra.mxu0 0
    %7450 = vmatprep.subr.bf16.mxu0 0
    %7451 = vmatpush2.bf16.msra.mxu0 0
    %7452 = vmatprep.subr.bf16.mxu0 0
    %7453 = vmatpush2.bf16.msra.mxu0 0
    %7454 = vmatprep.mubr.bf16.mxu0 0
    %7455 = vmatmul.mubr.bf16.gmra.mxu0 %v7338
    %v7456 = vpop.f32.mrf.mxu0
    %v7457 = vadd.f32 0.0, %v7456
    %v7458 = vpop.f32.mrf.mxu0
    %v7459 = vpop.f32.mrf.mxu0
    %v7460 = vadd.f32 0.0, %v7459
    %v7461 = vpop.f32.mrf.mxu0
    %7462 = vmatprep.mubr.bf16.mxu0 0
    %7463 = vmatmul.mubr.bf16.gmra.mxu0 %v7341
    %v7464 = vpop.f32.mrf.mxu0
    %v7465 = vadd.f32 0.0, %v7464
    %v7466 = vpop.f32.mrf.mxu0
    %v7467 = vpop.f32.mrf.mxu0
    %v7468 = vadd.f32 0.0, %v7467
    %v7469 = vpop.f32.mrf.mxu0
    %7470 = vmatprep.mubr.bf16.mxu0 0
    %7471 = vmatmul.mubr.bf16.gmra.mxu0 %v7344
    %v7472 = vpop.f32.mrf.mxu0
    %v7473 = vadd.f32 0.0, %v7472
    %v7474 = vpop.f32.mrf.mxu0
    %v7475 = vpop.f32.mrf.mxu0
    %v7476 = vadd.f32 0.0, %v7475
    %v7477 = vpop.f32.mrf.mxu0
    %7478 = vmatprep.mubr.bf16.mxu0 0
    %7479 = vmatmul.mubr.bf16.gmra.mxu0 %v7347
    %v7480 = vpop.f32.mrf.mxu0
    %v7481 = vadd.f32 0.0, %v7480
    %v7482 = vpop.f32.mrf.mxu0
    %v7483 = vpop.f32.mrf.mxu0
    %v7484 = vadd.f32 0.0, %v7483
    %v7485 = vpop.f32.mrf.mxu0
    %7486 = vdwg.mxu0
    %v7487 = vadd.f32 %v6884, %v7384
    %v7488 = vadd.f32 %v6886, %v7386
    %v7489 = vadd.f32 %v6957, %v7457
    %v7490 = vadd.f32 %v6888, %v7388
    %v7491 = vadd.f32 %v6890, %v7390
    %v7492 = vadd.f32 %v6960, %v7460
    %v7493 = vadd.f32 %v6894, %v7394
    %v7494 = vadd.f32 %v6896, %v7396
    %v7495 = vadd.f32 %v6965, %v7465
    %v7496 = vadd.f32 %v6898, %v7398
    %v7497 = vadd.f32 %v6900, %v7400
    %v7498 = vadd.f32 %v6968, %v7468
    %v7499 = vadd.f32 %v6904, %v7404
    %v7500 = vadd.f32 %v6906, %v7406
    %v7501 = vadd.f32 %v6973, %v7473
    %v7502 = vadd.f32 %v6908, %v7408
    %v7503 = vadd.f32 %v6910, %v7410
    %v7504 = vadd.f32 %v6976, %v7476
    %v7505 = vadd.f32 %v6914, %v7414
    %v7506 = vadd.f32 %v6916, %v7416
    %v7507 = vadd.f32 %v6981, %v7481
    %v7508 = vadd.f32 %v6918, %v7418
    %v7509 = vadd.f32 %v6920, %v7420
    %v7510 = vadd.f32 %v6984, %v7484
    %7515 = vrot.lane.b32.xlu0 %v2611, 64
    %v7516 = vpop.permute.xlu0 %7515
    %7517 = vrot.lane.b32.xlu0 %v2620, 64
    %v7518 = vpop.permute.xlu0 %7517
    %7519 = vrot.lane.b32.xlu0 %v2629, 64
    %v7520 = vpop.permute.xlu0 %7519
    %7521 = vrot.lane.b32.xlu0 %v2638, 64
    %v7522 = vpop.permute.xlu0 %7521
    %7527 = vrot.lane.b32.xlu0 %v2614, 64
    %v7528 = vpop.permute.xlu0 %7527
    %7529 = vrot.lane.b32.xlu0 %v2623, 64
    %v7530 = vpop.permute.xlu0 %7529
    %7531 = vrot.lane.b32.xlu0 %v2632, 64
    %v7532 = vpop.permute.xlu0 %7531
    %7533 = vrot.lane.b32.xlu0 %v2641, 64
    %v7534 = vpop.permute.xlu0 %7533
    %v7536 = vsel %vm2666, %v7516, 0
    %v7539 = vsel %vm2666, %v7518, 0
    %v7542 = vsel %vm2666, %v7520, 0
    %v7545 = vsel %vm2666, %v7522, 0
    %v7548 = vsel %vm2666, %v7528, 0
    %v7551 = vsel %vm2666, %v7530, 0
    %v7554 = vsel %vm2666, %v7532, 0
    %v7557 = vsel %vm2666, %v7534, 0
    %7559 = vmatprep.subr.bf16.mxu0 0
    %7560 = vmatpush1.bf16.xpose.msra.mxu0 0
    %7561 = vmatprep.subr.bf16.mxu0 0
    %7562 = vmatpush1.bf16.xpose.msra.mxu0 0
    %7563 = vmatprep.subr.bf16.mxu0 0
    %7564 = vmatpush1.bf16.xpose.msra.mxu0 0
    %7565 = vmatprep.subr.bf16.mxu0 0
    %7566 = vmatpush1.bf16.xpose.msra.mxu0 0
    %7567 = vmatprep.subr.bf16.mxu0 0
    %7568 = vmatpush1.bf16.xpose.msra.mxu0 %v7557
    %7569 = vmatprep.subr.bf16.mxu0 0
    %7570 = vmatpush1.bf16.xpose.msra.mxu0 %v7554
    %7571 = vmatprep.subr.bf16.mxu0 0
    %7572 = vmatpush1.bf16.xpose.msra.mxu0 %v7551
    %7573 = vmatprep.subr.bf16.mxu0 0
    %7574 = vmatpush1.bf16.xpose.msra.mxu0 %v7548
    %7575 = vmatprep.subr.bf16.mxu0 0
    %7576 = vmatpush2.bf16.xpose.msra.mxu0 0
    %7577 = vmatprep.subr.bf16.mxu0 0
    %7578 = vmatpush2.bf16.xpose.msra.mxu0 0
    %7579 = vmatprep.subr.bf16.mxu0 0
    %7580 = vmatpush2.bf16.xpose.msra.mxu0 0
    %7581 = vmatprep.subr.bf16.mxu0 0
    %7582 = vmatpush2.bf16.xpose.msra.mxu0 0
    %7583 = vmatprep.subr.bf16.mxu0 0
    %7584 = vmatpush2.bf16.xpose.msra.mxu0 0
    %7585 = vmatprep.subr.bf16.mxu0 0
    %7586 = vmatpush2.bf16.xpose.msra.mxu0 0
    %7587 = vmatprep.subr.bf16.mxu0 0
    %7588 = vmatpush2.bf16.xpose.msra.mxu0 0
    %7589 = vmatprep.subr.bf16.mxu0 0
    %7590 = vmatpush2.bf16.xpose.msra.mxu0 0
    %7591 = vmatprep.mubr.bf16.mxu0 0
    %7592 = vmatmul.mubr.bf16.gmra.mxu0 %v7536
    %v7593 = vpop.f32.mrf.mxu0
    %v7594 = vadd.f32 0.0, %v7593
    %v7595 = vpop.f32.mrf.mxu0
    %v7596 = vpop.f32.mrf.mxu0
    %v7597 = vadd.f32 0.0, %v7596
    %v7598 = vpop.f32.mrf.mxu0
    %7599 = vmatprep.mubr.bf16.mxu0 0
    %7600 = vmatmul.mubr.bf16.gmra.mxu0 %v7539
    %v7601 = vpop.f32.mrf.mxu0
    %v7602 = vadd.f32 0.0, %v7601
    %v7603 = vpop.f32.mrf.mxu0
    %v7604 = vpop.f32.mrf.mxu0
    %v7605 = vadd.f32 0.0, %v7604
    %v7606 = vpop.f32.mrf.mxu0
    %7607 = vmatprep.mubr.bf16.mxu0 0
    %7608 = vmatmul.mubr.bf16.gmra.mxu0 %v7542
    %v7609 = vpop.f32.mrf.mxu0
    %v7610 = vadd.f32 0.0, %v7609
    %v7611 = vpop.f32.mrf.mxu0
    %v7612 = vpop.f32.mrf.mxu0
    %v7613 = vadd.f32 0.0, %v7612
    %v7614 = vpop.f32.mrf.mxu0
    %7615 = vmatprep.mubr.bf16.mxu0 0
    %7616 = vmatmul.mubr.bf16.gmra.mxu0 %v7545
    %v7617 = vpop.f32.mrf.mxu0
    %v7618 = vadd.f32 0.0, %v7617
    %v7619 = vpop.f32.mrf.mxu0
    %v7620 = vpop.f32.mrf.mxu0
    %v7621 = vadd.f32 0.0, %v7620
    %v7622 = vpop.f32.mrf.mxu0
    %7623 = vdwg.mxu0
    %v7624 = vsel %vm2657, %v7594, -inf
    %v7625 = vsel %vm2658, %v7597, -inf
    %v7626 = vsel %vm2659, %v7602, -inf
    %v7627 = vsel %vm2660, %v7605, -inf
    %v7628 = vsel %vm2661, %v7610, -inf
    %v7629 = vsel %vm2662, %v7613, -inf
    %v7630 = vsel %vm2663, %v7618, -inf
    %v7631 = vsel %vm2664, %v7621, -inf
    %v7632 = vsel %vm2666, %v7624, -inf
    %7633 = vmax.xlane.f32.xlu0 %v7632
    %v7634 = vpop.xlane.xlu0 %7633
    %v7635 = vsel %vm2666, %v7625, -inf
    %7636 = vmax.xlane.f32.xlu0 %v7635
    %v7637 = vpop.xlane.xlu0 %7636
    %v7638 = vsel %vm2666, %v7626, -inf
    %7639 = vmax.xlane.f32.xlu0 %v7638
    %v7640 = vpop.xlane.xlu0 %7639
    %v7641 = vsel %vm2666, %v7627, -inf
    %7642 = vmax.xlane.f32.xlu0 %v7641
    %v7643 = vpop.xlane.xlu0 %7642
    %v7644 = vsel %vm2666, %v7628, -inf
    %7645 = vmax.xlane.f32.xlu0 %v7644
    %v7646 = vpop.xlane.xlu0 %7645
    %v7647 = vsel %vm2666, %v7629, -inf
    %7648 = vmax.xlane.f32.xlu0 %v7647
    %v7649 = vpop.xlane.xlu0 %7648
    %v7650 = vsel %vm2666, %v7630, -inf
    %7651 = vmax.xlane.f32.xlu0 %v7650
    %v7652 = vpop.xlane.xlu0 %7651
    %v7653 = vsel %vm2666, %v7631, -inf
    %7654 = vmax.xlane.f32.xlu0 %v7653
    %v7655 = vpop.xlane.xlu0 %7654
    %v7656 = vsub.f32 %v7624, %v7634
    %v7657 = vsub.f32 %v7625, %v7637
    %v7658 = vsub.f32 %v7626, %v7640
    %v7659 = vsub.f32 %v7627, %v7643
    %v7660 = vsub.f32 %v7628, %v7646
    %v7661 = vsub.f32 %v7629, %v7649
    %v7662 = vsub.f32 %v7630, %v7652
    %v7663 = vsub.f32 %v7631, %v7655
    %v7664 = vmul.f32 %v7656, 1.442695
    %v7665 = vpow.pop %v7664
    %v7666 = vmul.f32 %v7657, 1.442695
    %v7667 = vpow.pop %v7666
    %v7668 = vmul.f32 %v7658, 1.442695
    %v7669 = vpow.pop %v7668
    %v7670 = vmul.f32 %v7659, 1.442695
    %v7671 = vpow.pop %v7670
    %v7672 = vmul.f32 %v7660, 1.442695
    %v7673 = vpow.pop %v7672
    %v7674 = vmul.f32 %v7661, 1.442695
    %v7675 = vpow.pop %v7674
    %v7676 = vmul.f32 %v7662, 1.442695
    %v7677 = vpow.pop %v7676
    %v7678 = vmul.f32 %v7663, 1.442695
    %v7679 = vpow.pop %v7678
    %v7680 = vsel %vm2666, %v7665, 0.0
    %7681 = vadd.xlane.f32.xlu0 %v7680
    %v7682 = vpop.xlane.xlu0 %7681
    %v7683 = vsel %vm2666, %v7667, 0.0
    %7684 = vadd.xlane.f32.xlu0 %v7683
    %v7685 = vpop.xlane.xlu0 %7684
    %v7686 = vsel %vm2666, %v7669, 0.0
    %7687 = vadd.xlane.f32.xlu0 %v7686
    %v7688 = vpop.xlane.xlu0 %7687
    %v7689 = vsel %vm2666, %v7671, 0.0
    %7690 = vadd.xlane.f32.xlu0 %v7689
    %v7691 = vpop.xlane.xlu0 %7690
    %v7692 = vsel %vm2666, %v7673, 0.0
    %7693 = vadd.xlane.f32.xlu0 %v7692
    %v7694 = vpop.xlane.xlu0 %7693
    %v7695 = vsel %vm2666, %v7675, 0.0
    %7696 = vadd.xlane.f32.xlu0 %v7695
    %v7697 = vpop.xlane.xlu0 %7696
    %v7698 = vsel %vm2666, %v7677, 0.0
    %7699 = vadd.xlane.f32.xlu0 %v7698
    %v7700 = vpop.xlane.xlu0 %7699
    %v7701 = vsel %vm2666, %v7679, 0.0
    %7702 = vadd.xlane.f32.xlu0 %v7701
    %v7703 = vpop.xlane.xlu0 %7702
    %v7704 = vrcp.pop %v7682
    %v7705 = vrcp.pop %v7685
    %v7706 = vrcp.pop %v7688
    %v7707 = vrcp.pop %v7691
    %v7708 = vrcp.pop %v7694
    %v7709 = vrcp.pop %v7697
    %v7710 = vrcp.pop %v7700
    %v7711 = vrcp.pop %v7703
    %v7712 = vmul.f32 %v7665, %v7704
    %v7713 = vmul.f32 %v7667, %v7705
    %v7714 = vmul.f32 %v7669, %v7706
    %v7715 = vmul.f32 %v7671, %v7707
    %v7716 = vmul.f32 %v7673, %v7708
    %v7717 = vmul.f32 %v7675, %v7709
    %v7718 = vmul.f32 %v7677, %v7710
    %v7719 = vmul.f32 %v7679, %v7711
    %v7720 = vpack.c.bf16 %v7713, %v7712
    %v7721 = vpack.c.bf16 %v7715, %v7714
    %v7722 = vpack.c.bf16 %v7717, %v7716
    %v7723 = vpack.c.bf16 %v7719, %v7718
    %7728 = vrot.lane.b32.xlu0 %v2617, 64
    %v7729 = vpop.permute.xlu0 %7728
    %7730 = vrot.lane.b32.xlu0 %v2626, 64
    %v7731 = vpop.permute.xlu0 %7730
    %7732 = vrot.lane.b32.xlu0 %v2635, 64
    %v7733 = vpop.permute.xlu0 %7732
    %7734 = vrot.lane.b32.xlu0 %v2644, 64
    %v7735 = vpop.permute.xlu0 %7734
    %v7741 = vsel %vm2666, %v7720, 0
    %v7744 = vsel %vm2666, %v7721, 0
    %v7747 = vsel %vm2666, %v7722, 0
    %v7750 = vsel %vm2666, %v7723, 0
    %7752 = vmatprep.subr.bf16.mxu0 0
    %7753 = vmatpush1.bf16.msra.mxu0 0
    %7754 = vmatprep.subr.bf16.mxu0 0
    %7755 = vmatpush1.bf16.msra.mxu0 0
    %7756 = vmatprep.subr.bf16.mxu0 0
    %7757 = vmatpush1.bf16.msra.mxu0 0
    %7758 = vmatprep.subr.bf16.mxu0 0
    %7759 = vmatpush1.bf16.msra.mxu0 0
    %7760 = vmatprep.subr.bf16.mxu0 0
    %7761 = vmatpush1.bf16.msra.mxu0 %v7735
    %7762 = vmatprep.subr.bf16.mxu0 0
    %7763 = vmatpush1.bf16.msra.mxu0 %v7733
    %7764 = vmatprep.subr.bf16.mxu0 0
    %7765 = vmatpush1.bf16.msra.mxu0 %v7731
    %7766 = vmatprep.subr.bf16.mxu0 0
    %7767 = vmatpush1.bf16.msra.mxu0 %v7729
    %7768 = vmatprep.subr.bf16.mxu0 0
    %7769 = vmatpush2.bf16.msra.mxu0 0
    %7770 = vmatprep.subr.bf16.mxu0 0
    %7771 = vmatpush2.bf16.msra.mxu0 0
    %7772 = vmatprep.subr.bf16.mxu0 0
    %7773 = vmatpush2.bf16.msra.mxu0 0
    %7774 = vmatprep.subr.bf16.mxu0 0
    %7775 = vmatpush2.bf16.msra.mxu0 0
    %7776 = vmatprep.subr.bf16.mxu0 0
    %7777 = vmatpush2.bf16.msra.mxu0 0
    %7778 = vmatprep.subr.bf16.mxu0 0
    %7779 = vmatpush2.bf16.msra.mxu0 0
    %7780 = vmatprep.subr.bf16.mxu0 0
    %7781 = vmatpush2.bf16.msra.mxu0 0
    %7782 = vmatprep.subr.bf16.mxu0 0
    %7783 = vmatpush2.bf16.msra.mxu0 0
    %7784 = vmatprep.mubr.bf16.mxu0 0
    %7785 = vmatmul.mubr.bf16.gmra.mxu0 %v7741
    %v7786 = vpop.f32.mrf.mxu0
    %v7787 = vadd.f32 0.0, %v7786
    %v7788 = vpop.f32.mrf.mxu0
    %v7789 = vpop.f32.mrf.mxu0
    %v7790 = vadd.f32 0.0, %v7789
    %v7791 = vpop.f32.mrf.mxu0
    %7792 = vmatprep.mubr.bf16.mxu0 0
    %7793 = vmatmul.mubr.bf16.gmra.mxu0 %v7744
    %v7794 = vpop.f32.mrf.mxu0
    %v7795 = vadd.f32 0.0, %v7794
    %v7796 = vpop.f32.mrf.mxu0
    %v7797 = vpop.f32.mrf.mxu0
    %v7798 = vadd.f32 0.0, %v7797
    %v7799 = vpop.f32.mrf.mxu0
    %7800 = vmatprep.mubr.bf16.mxu0 0
    %7801 = vmatmul.mubr.bf16.gmra.mxu0 %v7747
    %v7802 = vpop.f32.mrf.mxu0
    %v7803 = vadd.f32 0.0, %v7802
    %v7804 = vpop.f32.mrf.mxu0
    %v7805 = vpop.f32.mrf.mxu0
    %v7806 = vadd.f32 0.0, %v7805
    %v7807 = vpop.f32.mrf.mxu0
    %7808 = vmatprep.mubr.bf16.mxu0 0
    %7809 = vmatmul.mubr.bf16.gmra.mxu0 %v7750
    %v7810 = vpop.f32.mrf.mxu0
    %v7811 = vadd.f32 0.0, %v7810
    %v7812 = vpop.f32.mrf.mxu0
    %v7813 = vpop.f32.mrf.mxu0
    %v7814 = vadd.f32 0.0, %v7813
    %v7815 = vpop.f32.mrf.mxu0
    %7816 = vdwg.mxu0
    %v7817 = vpack.c.bf16 %v7790, %v7787
    %v7818 = vpack.c.bf16 %v7798, %v7795
    %v7819 = vpack.c.bf16 %v7806, %v7803
    %v7820 = vpack.c.bf16 %v7814, %v7811
    %v7821 = vld [vmem:[#allocation7 + $0x120] sm:$0xff]
    %v7822 = vld [vmem:[#allocation7 + $0x128] sm:$0xf]
    %v7823 = vld [vmem:[#allocation7 + $0x12c] sm:$0xff]
    %v7824 = vld [vmem:[#allocation7 + $0x134] sm:$0xf]
    %v7825 = vld [vmem:[#allocation7 + $0x138] sm:$0xff]
    %v7826 = vld [vmem:[#allocation7 + $0x140] sm:$0xf]
    %v7827 = vld [vmem:[#allocation7 + $0x144] sm:$0xff]
    %v7828 = vld [vmem:[#allocation7 + $0x14c] sm:$0xf]
    %v7829 = vld [vmem:[#allocation7 + $0x150] sm:$0xff]
    %v7830 = vld [vmem:[#allocation7 + $0x158] sm:$0xf]
    %v7831 = vld [vmem:[#allocation7 + $0x15c] sm:$0xff]
    %v7832 = vld [vmem:[#allocation7 + $0x164] sm:$0xf]
    %v7833 = vld [vmem:[#allocation7 + $0x168] sm:$0xff]
    %v7834 = vld [vmem:[#allocation7 + $0x170] sm:$0xf]
    %v7835 = vld [vmem:[#allocation7 + $0x174] sm:$0xff]
    %v7836 = vld [vmem:[#allocation7 + $0x17c] sm:$0xf]
    %v7853 = vunpack.c.l.b16 %v7821
    %v7854 = vunpack.c.h.b16 %v7821
    %v7855 = vunpack.c.l.b16 %v7822
    %v7856 = vunpack.c.l.b16 %v7823
    %v7857 = vunpack.c.h.b16 %v7823
    %v7858 = vunpack.c.l.b16 %v7824
    %v7859 = vunpack.c.l.b16 %v7825
    %v7860 = vunpack.c.h.b16 %v7825
    %v7861 = vunpack.c.l.b16 %v7826
    %v7862 = vunpack.c.l.b16 %v7827
    %v7863 = vunpack.c.h.b16 %v7827
    %v7864 = vunpack.c.l.b16 %v7828
    %v7865 = vunpack.c.l.b16 %v7829
    %v7866 = vunpack.c.h.b16 %v7829
    %v7867 = vunpack.c.l.b16 %v7830
    %v7868 = vunpack.c.l.b16 %v7831
    %v7869 = vunpack.c.h.b16 %v7831
    %v7870 = vunpack.c.l.b16 %v7832
    %v7871 = vunpack.c.l.b16 %v7833
    %v7872 = vunpack.c.h.b16 %v7833
    %v7873 = vunpack.c.l.b16 %v7834
    %v7874 = vunpack.c.l.b16 %v7835
    %v7875 = vunpack.c.h.b16 %v7835
    %v7876 = vunpack.c.l.b16 %v7836
    %v7877 = vpack.c.b16 %v7856, %v7853
    %v7878 = vpack.c.b16 %v7857, %v7854
    %v7879 = vpack.c.b16 %v7858, %v7855
    %v7880 = vpack.c.b16 %v7862, %v7859
    %v7881 = vpack.c.b16 %v7863, %v7860
    %v7882 = vpack.c.b16 %v7864, %v7861
    %v7883 = vpack.c.b16 %v7868, %v7865
    %v7884 = vpack.c.b16 %v7869, %v7866
    %v7885 = vpack.c.b16 %v7870, %v7867
    %v7886 = vpack.c.b16 %v7874, %v7871
    %v7887 = vpack.c.b16 %v7875, %v7872
    %v7888 = vpack.c.b16 %v7876, %v7873
    %v7902 = vsel %vm2666, %v7817, 0
    %v7905 = vsel %vm2666, %v7818, 0
    %v7908 = vsel %vm2666, %v7819, 0
    %v7911 = vsel %vm2666, %v7820, 0
    %7913 = vmatprep.subr.bf16.mxu0 0
    %7914 = vmatpush1.bf16.msra.mxu0 0
    %7915 = vmatprep.subr.bf16.mxu0 0
    %7916 = vmatpush1.bf16.msra.mxu0 0
    %7917 = vmatprep.subr.bf16.mxu0 0
    %7918 = vmatpush1.bf16.msra.mxu0 0
    %7919 = vmatprep.subr.bf16.mxu0 0
    %7920 = vmatpush1.bf16.msra.mxu0 0
    %7921 = vmatprep.subr.bf16.mxu0 %v7887
    %7922 = vmatpush1.bf16.msra.mxu0 %v7886
    %7923 = vmatprep.subr.bf16.mxu0 %v7884
    %7924 = vmatpush1.bf16.msra.mxu0 %v7883
    %7925 = vmatprep.subr.bf16.mxu0 %v7881
    %7926 = vmatpush1.bf16.msra.mxu0 %v7880
    %7927 = vmatprep.subr.bf16.mxu0 %v7878
    %7928 = vmatpush1.bf16.msra.mxu0 %v7877
    %7929 = vmatprep.subr.bf16.mxu0 0
    %7930 = vmatpush2.bf16.msra.mxu0 0
    %7931 = vmatprep.subr.bf16.mxu0 0
    %7932 = vmatpush2.bf16.msra.mxu0 0
    %7933 = vmatprep.subr.bf16.mxu0 0
    %7934 = vmatpush2.bf16.msra.mxu0 0
    %7935 = vmatprep.subr.bf16.mxu0 0
    %7936 = vmatpush2.bf16.msra.mxu0 0
    %7937 = vmatprep.subr.bf16.mxu0 0
    %7938 = vmatpush2.bf16.msra.mxu0 0
    %7939 = vmatprep.subr.bf16.mxu0 0
    %7940 = vmatpush2.bf16.msra.mxu0 0
    %7941 = vmatprep.subr.bf16.mxu0 0
    %7942 = vmatpush2.bf16.msra.mxu0 0
    %7943 = vmatprep.subr.bf16.mxu0 0
    %7944 = vmatpush2.bf16.msra.mxu0 0
    %7945 = vmatprep.mubr.bf16.mxu0 0
    %7946 = vmatmul.mubr.bf16.gmra.mxu0 %v7902
    %v7947 = vpop.f32.mrf.mxu0
    %v7948 = vadd.f32 0.0, %v7947
    %v7949 = vpop.f32.mrf.mxu0
    %v7950 = vadd.f32 0.0, %v7949
    %v7951 = vpop.f32.mrf.mxu0
    %v7952 = vadd.f32 0.0, %v7951
    %v7953 = vpop.f32.mrf.mxu0
    %v7954 = vadd.f32 0.0, %v7953
    %7955 = vmatprep.mubr.bf16.mxu0 0
    %7956 = vmatmul.mubr.bf16.gmra.mxu0 %v7905
    %v7957 = vpop.f32.mrf.mxu0
    %v7958 = vadd.f32 0.0, %v7957
    %v7959 = vpop.f32.mrf.mxu0
    %v7960 = vadd.f32 0.0, %v7959
    %v7961 = vpop.f32.mrf.mxu0
    %v7962 = vadd.f32 0.0, %v7961
    %v7963 = vpop.f32.mrf.mxu0
    %v7964 = vadd.f32 0.0, %v7963
    %7965 = vmatprep.mubr.bf16.mxu0 0
    %7966 = vmatmul.mubr.bf16.gmra.mxu0 %v7908
    %v7967 = vpop.f32.mrf.mxu0
    %v7968 = vadd.f32 0.0, %v7967
    %v7969 = vpop.f32.mrf.mxu0
    %v7970 = vadd.f32 0.0, %v7969
    %v7971 = vpop.f32.mrf.mxu0
    %v7972 = vadd.f32 0.0, %v7971
    %v7973 = vpop.f32.mrf.mxu0
    %v7974 = vadd.f32 0.0, %v7973
    %7975 = vmatprep.mubr.bf16.mxu0 0
    %7976 = vmatmul.mubr.bf16.gmra.mxu0 %v7911
    %v7977 = vpop.f32.mrf.mxu0
    %v7978 = vadd.f32 0.0, %v7977
    %v7979 = vpop.f32.mrf.mxu0
    %v7980 = vadd.f32 0.0, %v7979
    %v7981 = vpop.f32.mrf.mxu0
    %v7982 = vadd.f32 0.0, %v7981
    %v7983 = vpop.f32.mrf.mxu0
    %v7984 = vadd.f32 0.0, %v7983
    %7985 = vdwg.mxu0
    %7986 = vmatprep.subr.bf16.mxu0 0
    %7987 = vmatpush1.bf16.msra.mxu0 0
    %7988 = vmatprep.subr.bf16.mxu0 0
    %7989 = vmatpush1.bf16.msra.mxu0 0
    %7990 = vmatprep.subr.bf16.mxu0 0
    %7991 = vmatpush1.bf16.msra.mxu0 0
    %7992 = vmatprep.subr.bf16.mxu0 0
    %7993 = vmatpush1.bf16.msra.mxu0 0
    %7994 = vmatprep.subr.bf16.mxu0 0
    %7995 = vmatpush1.bf16.msra.mxu0 %v7888
    %7996 = vmatprep.subr.bf16.mxu0 0
    %7997 = vmatpush1.bf16.msra.mxu0 %v7885
    %7998 = vmatprep.subr.bf16.mxu0 0
    %7999 = vmatpush1.bf16.msra.mxu0 %v7882
    %8000 = vmatprep.subr.bf16.mxu0 0
    %8001 = vmatpush1.bf16.msra.mxu0 %v7879
    %8002 = vmatprep.subr.bf16.mxu0 0
    %8003 = vmatpush2.bf16.msra.mxu0 0
    %8004 = vmatprep.subr.bf16.mxu0 0
    %8005 = vmatpush2.bf16.msra.mxu0 0
    %8006 = vmatprep.subr.bf16.mxu0 0
    %8007 = vmatpush2.bf16.msra.mxu0 0
    %8008 = vmatprep.subr.bf16.mxu0 0
    %8009 = vmatpush2.bf16.msra.mxu0 0
    %8010 = vmatprep.subr.bf16.mxu0 0
    %8011 = vmatpush2.bf16.msra.mxu0 0
    %8012 = vmatprep.subr.bf16.mxu0 0
    %8013 = vmatpush2.bf16.msra.mxu0 0
    %8014 = vmatprep.subr.bf16.mxu0 0
    %8015 = vmatpush2.bf16.msra.mxu0 0
    %8016 = vmatprep.subr.bf16.mxu0 0
    %8017 = vmatpush2.bf16.msra.mxu0 0
    %8018 = vmatprep.mubr.bf16.mxu0 0
    %8019 = vmatmul.mubr.bf16.gmra.mxu0 %v7902
    %v8020 = vpop.f32.mrf.mxu0
    %v8021 = vadd.f32 0.0, %v8020
    %v8022 = vpop.f32.mrf.mxu0
    %v8023 = vpop.f32.mrf.mxu0
    %v8024 = vadd.f32 0.0, %v8023
    %v8025 = vpop.f32.mrf.mxu0
    %8026 = vmatprep.mubr.bf16.mxu0 0
    %8027 = vmatmul.mubr.bf16.gmra.mxu0 %v7905
    %v8028 = vpop.f32.mrf.mxu0
    %v8029 = vadd.f32 0.0, %v8028
    %v8030 = vpop.f32.mrf.mxu0
    %v8031 = vpop.f32.mrf.mxu0
    %v8032 = vadd.f32 0.0, %v8031
    %v8033 = vpop.f32.mrf.mxu0
    %8034 = vmatprep.mubr.bf16.mxu0 0
    %8035 = vmatmul.mubr.bf16.gmra.mxu0 %v7908
    %v8036 = vpop.f32.mrf.mxu0
    %v8037 = vadd.f32 0.0, %v8036
    %v8038 = vpop.f32.mrf.mxu0
    %v8039 = vpop.f32.mrf.mxu0
    %v8040 = vadd.f32 0.0, %v8039
    %v8041 = vpop.f32.mrf.mxu0
    %8042 = vmatprep.mubr.bf16.mxu0 0
    %8043 = vmatmul.mubr.bf16.gmra.mxu0 %v7911
    %v8044 = vpop.f32.mrf.mxu0
    %v8045 = vadd.f32 0.0, %v8044
    %v8046 = vpop.f32.mrf.mxu0
    %v8047 = vpop.f32.mrf.mxu0
    %v8048 = vadd.f32 0.0, %v8047
    %v8049 = vpop.f32.mrf.mxu0
    %8050 = vdwg.mxu0
    %v8051 = vadd.f32 %v7487, %v7948
    %v8052 = vadd.f32 %v7488, %v7950
    %v8053 = vadd.f32 %v7489, %v8021
    %v8054 = vadd.f32 %v7490, %v7952
    %v8055 = vadd.f32 %v7491, %v7954
    %v8056 = vadd.f32 %v7492, %v8024
    %v8057 = vadd.f32 %v7493, %v7958
    %v8058 = vadd.f32 %v7494, %v7960
    %v8059 = vadd.f32 %v7495, %v8029
    %v8060 = vadd.f32 %v7496, %v7962
    %v8061 = vadd.f32 %v7497, %v7964
    %v8062 = vadd.f32 %v7498, %v8032
    %v8063 = vadd.f32 %v7499, %v7968
    %v8064 = vadd.f32 %v7500, %v7970
    %v8065 = vadd.f32 %v7501, %v8037
    %v8066 = vadd.f32 %v7502, %v7972
    %v8067 = vadd.f32 %v7503, %v7974
    %v8068 = vadd.f32 %v7504, %v8040
    %v8069 = vadd.f32 %v7505, %v7978
    %v8070 = vadd.f32 %v7506, %v7980
    %v8071 = vadd.f32 %v7507, %v8045
    %v8072 = vadd.f32 %v7508, %v7982
    %v8073 = vadd.f32 %v7509, %v7984
    %v8074 = vadd.f32 %v7510, %v8048
    %v8076 = vsel %vm2666, %v2612, 0
    %v8079 = vsel %vm2666, %v2621, 0
    %v8082 = vsel %vm2666, %v2630, 0
    %v8085 = vsel %vm2666, %v2639, 0
    %v8088 = vsel %vm2666, %v2615, 0
    %v8091 = vsel %vm2666, %v2624, 0
    %v8094 = vsel %vm2666, %v2633, 0
    %v8097 = vsel %vm2666, %v2642, 0
    %8099 = vmatprep.subr.bf16.mxu0 0
    %8100 = vmatpush1.bf16.xpose.msra.mxu0 0
    %8101 = vmatprep.subr.bf16.mxu0 0
    %8102 = vmatpush1.bf16.xpose.msra.mxu0 0
    %8103 = vmatprep.subr.bf16.mxu0 0
    %8104 = vmatpush1.bf16.xpose.msra.mxu0 0
    %8105 = vmatprep.subr.bf16.mxu0 0
    %8106 = vmatpush1.bf16.xpose.msra.mxu0 0
    %8107 = vmatprep.subr.bf16.mxu0 0
    %8108 = vmatpush1.bf16.xpose.msra.mxu0 %v8097
    %8109 = vmatprep.subr.bf16.mxu0 0
    %8110 = vmatpush1.bf16.xpose.msra.mxu0 %v8094
    %8111 = vmatprep.subr.bf16.mxu0 0
    %8112 = vmatpush1.bf16.xpose.msra.mxu0 %v8091
    %8113 = vmatprep.subr.bf16.mxu0 0
    %8114 = vmatpush1.bf16.xpose.msra.mxu0 %v8088
    %8115 = vmatprep.subr.bf16.mxu0 0
    %8116 = vmatpush2.bf16.xpose.msra.mxu0 0
    %8117 = vmatprep.subr.bf16.mxu0 0
    %8118 = vmatpush2.bf16.xpose.msra.mxu0 0
    %8119 = vmatprep.subr.bf16.mxu0 0
    %8120 = vmatpush2.bf16.xpose.msra.mxu0 0
    %8121 = vmatprep.subr.bf16.mxu0 0
    %8122 = vmatpush2.bf16.xpose.msra.mxu0 0
    %8123 = vmatprep.subr.bf16.mxu0 0
    %8124 = vmatpush2.bf16.xpose.msra.mxu0 0
    %8125 = vmatprep.subr.bf16.mxu0 0
    %8126 = vmatpush2.bf16.xpose.msra.mxu0 0
    %8127 = vmatprep.subr.bf16.mxu0 0
    %8128 = vmatpush2.bf16.xpose.msra.mxu0 0
    %8129 = vmatprep.subr.bf16.mxu0 0
    %8130 = vmatpush2.bf16.xpose.msra.mxu0 0
    %8131 = vmatprep.mubr.bf16.mxu0 0
    %8132 = vmatmul.mubr.bf16.gmra.mxu0 %v8076
    %v8133 = vpop.f32.mrf.mxu0
    %v8134 = vadd.f32 0.0, %v8133
    %v8135 = vpop.f32.mrf.mxu0
    %v8136 = vpop.f32.mrf.mxu0
    %v8137 = vadd.f32 0.0, %v8136
    %v8138 = vpop.f32.mrf.mxu0
    %8139 = vmatprep.mubr.bf16.mxu0 0
    %8140 = vmatmul.mubr.bf16.gmra.mxu0 %v8079
    %v8141 = vpop.f32.mrf.mxu0
    %v8142 = vadd.f32 0.0, %v8141
    %v8143 = vpop.f32.mrf.mxu0
    %v8144 = vpop.f32.mrf.mxu0
    %v8145 = vadd.f32 0.0, %v8144
    %v8146 = vpop.f32.mrf.mxu0
    %8147 = vmatprep.mubr.bf16.mxu0 0
    %8148 = vmatmul.mubr.bf16.gmra.mxu0 %v8082
    %v8149 = vpop.f32.mrf.mxu0
    %v8150 = vadd.f32 0.0, %v8149
    %v8151 = vpop.f32.mrf.mxu0
    %v8152 = vpop.f32.mrf.mxu0
    %v8153 = vadd.f32 0.0, %v8152
    %v8154 = vpop.f32.mrf.mxu0
    %8155 = vmatprep.mubr.bf16.mxu0 0
    %8156 = vmatmul.mubr.bf16.gmra.mxu0 %v8085
    %v8157 = vpop.f32.mrf.mxu0
    %v8158 = vadd.f32 0.0, %v8157
    %v8159 = vpop.f32.mrf.mxu0
    %v8160 = vpop.f32.mrf.mxu0
    %v8161 = vadd.f32 0.0, %v8160
    %v8162 = vpop.f32.mrf.mxu0
    %8163 = vdwg.mxu0
    %v8164 = vsel %vm2657, %v8134, -inf
    %v8165 = vsel %vm2658, %v8137, -inf
    %v8166 = vsel %vm2659, %v8142, -inf
    %v8167 = vsel %vm2660, %v8145, -inf
    %v8168 = vsel %vm2661, %v8150, -inf
    %v8169 = vsel %vm2662, %v8153, -inf
    %v8170 = vsel %vm2663, %v8158, -inf
    %v8171 = vsel %vm2664, %v8161, -inf
    %v8172 = vsel %vm2666, %v8164, -inf
    %8173 = vmax.xlane.f32.xlu0 %v8172
    %v8174 = vpop.xlane.xlu0 %8173
    %v8175 = vsel %vm2666, %v8165, -inf
    %8176 = vmax.xlane.f32.xlu0 %v8175
    %v8177 = vpop.xlane.xlu0 %8176
    %v8178 = vsel %vm2666, %v8166, -inf
    %8179 = vmax.xlane.f32.xlu0 %v8178
    %v8180 = vpop.xlane.xlu0 %8179
    %v8181 = vsel %vm2666, %v8167, -inf
    %8182 = vmax.xlane.f32.xlu0 %v8181
    %v8183 = vpop.xlane.xlu0 %8182
    %v8184 = vsel %vm2666, %v8168, -inf
    %8185 = vmax.xlane.f32.xlu0 %v8184
    %v8186 = vpop.xlane.xlu0 %8185
    %v8187 = vsel %vm2666, %v8169, -inf
    %8188 = vmax.xlane.f32.xlu0 %v8187
    %v8189 = vpop.xlane.xlu0 %8188
    %v8190 = vsel %vm2666, %v8170, -inf
    %8191 = vmax.xlane.f32.xlu0 %v8190
    %v8192 = vpop.xlane.xlu0 %8191
    %v8193 = vsel %vm2666, %v8171, -inf
    %8194 = vmax.xlane.f32.xlu0 %v8193
    %v8195 = vpop.xlane.xlu0 %8194
    %v8196 = vsub.f32 %v8164, %v8174
    %v8197 = vsub.f32 %v8165, %v8177
    %v8198 = vsub.f32 %v8166, %v8180
    %v8199 = vsub.f32 %v8167, %v8183
    %v8200 = vsub.f32 %v8168, %v8186
    %v8201 = vsub.f32 %v8169, %v8189
    %v8202 = vsub.f32 %v8170, %v8192
    %v8203 = vsub.f32 %v8171, %v8195
    %v8204 = vmul.f32 %v8196, 1.442695
    %v8205 = vpow.pop %v8204
    %v8206 = vmul.f32 %v8197, 1.442695
    %v8207 = vpow.pop %v8206
    %v8208 = vmul.f32 %v8198, 1.442695
    %v8209 = vpow.pop %v8208
    %v8210 = vmul.f32 %v8199, 1.442695
    %v8211 = vpow.pop %v8210
    %v8212 = vmul.f32 %v8200, 1.442695
    %v8213 = vpow.pop %v8212
    %v8214 = vmul.f32 %v8201, 1.442695
    %v8215 = vpow.pop %v8214
    %v8216 = vmul.f32 %v8202, 1.442695
    %v8217 = vpow.pop %v8216
    %v8218 = vmul.f32 %v8203, 1.442695
    %v8219 = vpow.pop %v8218
    %v8220 = vsel %vm2666, %v8205, 0.0
    %8221 = vadd.xlane.f32.xlu0 %v8220
    %v8222 = vpop.xlane.xlu0 %8221
    %v8223 = vsel %vm2666, %v8207, 0.0
    %8224 = vadd.xlane.f32.xlu0 %v8223
    %v8225 = vpop.xlane.xlu0 %8224
    %v8226 = vsel %vm2666, %v8209, 0.0
    %8227 = vadd.xlane.f32.xlu0 %v8226
    %v8228 = vpop.xlane.xlu0 %8227
    %v8229 = vsel %vm2666, %v8211, 0.0
    %8230 = vadd.xlane.f32.xlu0 %v8229
    %v8231 = vpop.xlane.xlu0 %8230
    %v8232 = vsel %vm2666, %v8213, 0.0
    %8233 = vadd.xlane.f32.xlu0 %v8232
    %v8234 = vpop.xlane.xlu0 %8233
    %v8235 = vsel %vm2666, %v8215, 0.0
    %8236 = vadd.xlane.f32.xlu0 %v8235
    %v8237 = vpop.xlane.xlu0 %8236
    %v8238 = vsel %vm2666, %v8217, 0.0
    %8239 = vadd.xlane.f32.xlu0 %v8238
    %v8240 = vpop.xlane.xlu0 %8239
    %v8241 = vsel %vm2666, %v8219, 0.0
    %8242 = vadd.xlane.f32.xlu0 %v8241
    %v8243 = vpop.xlane.xlu0 %8242
    %v8244 = vrcp.pop %v8222
    %v8245 = vrcp.pop %v8225
    %v8246 = vrcp.pop %v8228
    %v8247 = vrcp.pop %v8231
    %v8248 = vrcp.pop %v8234
    %v8249 = vrcp.pop %v8237
    %v8250 = vrcp.pop %v8240
    %v8251 = vrcp.pop %v8243
    %v8252 = vmul.f32 %v8205, %v8244
    %v8253 = vmul.f32 %v8207, %v8245
    %v8254 = vmul.f32 %v8209, %v8246
    %v8255 = vmul.f32 %v8211, %v8247
    %v8256 = vmul.f32 %v8213, %v8248
    %v8257 = vmul.f32 %v8215, %v8249
    %v8258 = vmul.f32 %v8217, %v8250
    %v8259 = vmul.f32 %v8219, %v8251
    %v8260 = vpack.c.bf16 %v8253, %v8252
    %v8261 = vpack.c.bf16 %v8255, %v8254
    %v8262 = vpack.c.bf16 %v8257, %v8256
    %v8263 = vpack.c.bf16 %v8259, %v8258
    %v8265 = vsel %vm2666, %v8260, 0
    %v8268 = vsel %vm2666, %v8261, 0
    %v8271 = vsel %vm2666, %v8262, 0
    %v8274 = vsel %vm2666, %v8263, 0
    %8276 = vmatprep.subr.bf16.mxu0 0
    %8277 = vmatpush1.bf16.msra.mxu0 0
    %8278 = vmatprep.subr.bf16.mxu0 0
    %8279 = vmatpush1.bf16.msra.mxu0 0
    %8280 = vmatprep.subr.bf16.mxu0 0
    %8281 = vmatpush1.bf16.msra.mxu0 0
    %8282 = vmatprep.subr.bf16.mxu0 0
    %8283 = vmatpush1.bf16.msra.mxu0 0
    %8284 = vmatprep.subr.bf16.mxu0 0
    %8285 = vmatpush1.bf16.msra.mxu0 %v2645
    %8286 = vmatprep.subr.bf16.mxu0 0
    %8287 = vmatpush1.bf16.msra.mxu0 %v2636
    %8288 = vmatprep.subr.bf16.mxu0 0
    %8289 = vmatpush1.bf16.msra.mxu0 %v2627
    %8290 = vmatprep.subr.bf16.mxu0 0
    %8291 = vmatpush1.bf16.msra.mxu0 %v2618
    %8292 = vmatprep.subr.bf16.mxu0 0
    %8293 = vmatpush2.bf16.msra.mxu0 0
    %8294 = vmatprep.subr.bf16.mxu0 0
    %8295 = vmatpush2.bf16.msra.mxu0 0
    %8296 = vmatprep.subr.bf16.mxu0 0
    %8297 = vmatpush2.bf16.msra.mxu0 0
    %8298 = vmatprep.subr.bf16.mxu0 0
    %8299 = vmatpush2.bf16.msra.mxu0 0
    %8300 = vmatprep.subr.bf16.mxu0 0
    %8301 = vmatpush2.bf16.msra.mxu0 0
    %8302 = vmatprep.subr.bf16.mxu0 0
    %8303 = vmatpush2.bf16.msra.mxu0 0
    %8304 = vmatprep.subr.bf16.mxu0 0
    %8305 = vmatpush2.bf16.msra.mxu0 0
    %8306 = vmatprep.subr.bf16.mxu0 0
    %8307 = vmatpush2.bf16.msra.mxu0 0
    %8308 = vmatprep.mubr.bf16.mxu0 0
    %8309 = vmatmul.mubr.bf16.gmra.mxu0 %v8265
    %v8310 = vpop.f32.mrf.mxu0
    %v8311 = vadd.f32 0.0, %v8310
    %v8312 = vpop.f32.mrf.mxu0
    %v8313 = vpop.f32.mrf.mxu0
    %v8314 = vadd.f32 0.0, %v8313
    %v8315 = vpop.f32.mrf.mxu0
    %8316 = vmatprep.mubr.bf16.mxu0 0
    %8317 = vmatmul.mubr.bf16.gmra.mxu0 %v8268
    %v8318 = vpop.f32.mrf.mxu0
    %v8319 = vadd.f32 0.0, %v8318
    %v8320 = vpop.f32.mrf.mxu0
    %v8321 = vpop.f32.mrf.mxu0
    %v8322 = vadd.f32 0.0, %v8321
    %v8323 = vpop.f32.mrf.mxu0
    %8324 = vmatprep.mubr.bf16.mxu0 0
    %8325 = vmatmul.mubr.bf16.gmra.mxu0 %v8271
    %v8326 = vpop.f32.mrf.mxu0
    %v8327 = vadd.f32 0.0, %v8326
    %v8328 = vpop.f32.mrf.mxu0
    %v8329 = vpop.f32.mrf.mxu0
    %v8330 = vadd.f32 0.0, %v8329
    %v8331 = vpop.f32.mrf.mxu0
    %8332 = vmatprep.mubr.bf16.mxu0 0
    %8333 = vmatmul.mubr.bf16.gmra.mxu0 %v8274
    %v8334 = vpop.f32.mrf.mxu0
    %v8335 = vadd.f32 0.0, %v8334
    %v8336 = vpop.f32.mrf.mxu0
    %v8337 = vpop.f32.mrf.mxu0
    %v8338 = vadd.f32 0.0, %v8337
    %v8339 = vpop.f32.mrf.mxu0
    %8340 = vdwg.mxu0
    %v8341 = vpack.c.bf16 %v8314, %v8311
    %v8342 = vpack.c.bf16 %v8322, %v8319
    %v8343 = vpack.c.bf16 %v8330, %v8327
    %v8344 = vpack.c.bf16 %v8338, %v8335
    %v8345 = vld [vmem:[#allocation7 + $0x180] sm:$0xff]
    %v8346 = vld [vmem:[#allocation7 + $0x188] sm:$0xf]
    %v8347 = vld [vmem:[#allocation7 + $0x18c] sm:$0xff]
    %v8348 = vld [vmem:[#allocation7 + $0x194] sm:$0xf]
    %v8349 = vld [vmem:[#allocation7 + $0x198] sm:$0xff]
    %v8350 = vld [vmem:[#allocation7 + $0x1a0] sm:$0xf]
    %v8351 = vld [vmem:[#allocation7 + $0x1a4] sm:$0xff]
    %v8352 = vld [vmem:[#allocation7 + $0x1ac] sm:$0xf]
    %v8353 = vld [vmem:[#allocation7 + $0x1b0] sm:$0xff]
    %v8354 = vld [vmem:[#allocation7 + $0x1b8] sm:$0xf]
    %v8355 = vld [vmem:[#allocation7 + $0x1bc] sm:$0xff]
    %v8356 = vld [vmem:[#allocation7 + $0x1c4] sm:$0xf]
    %v8357 = vld [vmem:[#allocation7 + $0x1c8] sm:$0xff]
    %v8358 = vld [vmem:[#allocation7 + $0x1d0] sm:$0xf]
    %v8359 = vld [vmem:[#allocation7 + $0x1d4] sm:$0xff]
    %v8360 = vld [vmem:[#allocation7 + $0x1dc] sm:$0xf]
    %v8377 = vunpack.c.l.b16 %v8345
    %v8378 = vunpack.c.h.b16 %v8345
    %v8379 = vunpack.c.l.b16 %v8346
    %v8380 = vunpack.c.l.b16 %v8347
    %v8381 = vunpack.c.h.b16 %v8347
    %v8382 = vunpack.c.l.b16 %v8348
    %v8383 = vunpack.c.l.b16 %v8349
    %v8384 = vunpack.c.h.b16 %v8349
    %v8385 = vunpack.c.l.b16 %v8350
    %v8386 = vunpack.c.l.b16 %v8351
    %v8387 = vunpack.c.h.b16 %v8351
    %v8388 = vunpack.c.l.b16 %v8352
    %v8389 = vunpack.c.l.b16 %v8353
    %v8390 = vunpack.c.h.b16 %v8353
    %v8391 = vunpack.c.l.b16 %v8354
    %v8392 = vunpack.c.l.b16 %v8355
    %v8393 = vunpack.c.h.b16 %v8355
    %v8394 = vunpack.c.l.b16 %v8356
    %v8395 = vunpack.c.l.b16 %v8357
    %v8396 = vunpack.c.h.b16 %v8357
    %v8397 = vunpack.c.l.b16 %v8358
    %v8398 = vunpack.c.l.b16 %v8359
    %v8399 = vunpack.c.h.b16 %v8359
    %v8400 = vunpack.c.l.b16 %v8360
    %v8401 = vpack.c.b16 %v8380, %v8377
    %v8402 = vpack.c.b16 %v8381, %v8378
    %v8403 = vpack.c.b16 %v8382, %v8379
    %v8404 = vpack.c.b16 %v8386, %v8383
    %v8405 = vpack.c.b16 %v8387, %v8384
    %v8406 = vpack.c.b16 %v8388, %v8385
    %v8407 = vpack.c.b16 %v8392, %v8389
    %v8408 = vpack.c.b16 %v8393, %v8390
    %v8409 = vpack.c.b16 %v8394, %v8391
    %v8410 = vpack.c.b16 %v8398, %v8395
    %v8411 = vpack.c.b16 %v8399, %v8396
    %v8412 = vpack.c.b16 %v8400, %v8397
    %v8426 = vsel %vm2666, %v8341, 0
    %v8429 = vsel %vm2666, %v8342, 0
    %v8432 = vsel %vm2666, %v8343, 0
    %v8435 = vsel %vm2666, %v8344, 0
    %8437 = vmatprep.subr.bf16.mxu0 0
    %8438 = vmatpush1.bf16.msra.mxu0 0
    %8439 = vmatprep.subr.bf16.mxu0 0
    %8440 = vmatpush1.bf16.msra.mxu0 0
    %8441 = vmatprep.subr.bf16.mxu0 0
    %8442 = vmatpush1.bf16.msra.mxu0 0
    %8443 = vmatprep.subr.bf16.mxu0 0
    %8444 = vmatpush1.bf16.msra.mxu0 0
    %8445 = vmatprep.subr.bf16.mxu0 %v8411
    %8446 = vmatpush1.bf16.msra.mxu0 %v8410
    %8447 = vmatprep.subr.bf16.mxu0 %v8408
    %8448 = vmatpush1.bf16.msra.mxu0 %v8407
    %8449 = vmatprep.subr.bf16.mxu0 %v8405
    %8450 = vmatpush1.bf16.msra.mxu0 %v8404
    %8451 = vmatprep.subr.bf16.mxu0 %v8402
    %8452 = vmatpush1.bf16.msra.mxu0 %v8401
    %8453 = vmatprep.subr.bf16.mxu0 0
    %8454 = vmatpush2.bf16.msra.mxu0 0
    %8455 = vmatprep.subr.bf16.mxu0 0
    %8456 = vmatpush2.bf16.msra.mxu0 0
    %8457 = vmatprep.subr.bf16.mxu0 0
    %8458 = vmatpush2.bf16.msra.mxu0 0
    %8459 = vmatprep.subr.bf16.mxu0 0
    %8460 = vmatpush2.bf16.msra.mxu0 0
    %8461 = vmatprep.subr.bf16.mxu0 0
    %8462 = vmatpush2.bf16.msra.mxu0 0
    %8463 = vmatprep.subr.bf16.mxu0 0
    %8464 = vmatpush2.bf16.msra.mxu0 0
    %8465 = vmatprep.subr.bf16.mxu0 0
    %8466 = vmatpush2.bf16.msra.mxu0 0
    %8467 = vmatprep.subr.bf16.mxu0 0
    %8468 = vmatpush2.bf16.msra.mxu0 0
    %8469 = vmatprep.mubr.bf16.mxu0 0
    %8470 = vmatmul.mubr.bf16.gmra.mxu0 %v8426
    %v8471 = vpop.f32.mrf.mxu0
    %v8472 = vadd.f32 0.0, %v8471
    %v8473 = vpop.f32.mrf.mxu0
    %v8474 = vadd.f32 0.0, %v8473
    %v8475 = vpop.f32.mrf.mxu0
    %v8476 = vadd.f32 0.0, %v8475
    %v8477 = vpop.f32.mrf.mxu0
    %v8478 = vadd.f32 0.0, %v8477
    %8479 = vmatprep.mubr.bf16.mxu0 0
    %8480 = vmatmul.mubr.bf16.gmra.mxu0 %v8429
    %v8481 = vpop.f32.mrf.mxu0
    %v8482 = vadd.f32 0.0, %v8481
    %v8483 = vpop.f32.mrf.mxu0
    %v8484 = vadd.f32 0.0, %v8483
    %v8485 = vpop.f32.mrf.mxu0
    %v8486 = vadd.f32 0.0, %v8485
    %v8487 = vpop.f32.mrf.mxu0
    %v8488 = vadd.f32 0.0, %v8487
    %8489 = vmatprep.mubr.bf16.mxu0 0
    %8490 = vmatmul.mubr.bf16.gmra.mxu0 %v8432
    %v8491 = vpop.f32.mrf.mxu0
    %v8492 = vadd.f32 0.0, %v8491
    %v8493 = vpop.f32.mrf.mxu0
    %v8494 = vadd.f32 0.0, %v8493
    %v8495 = vpop.f32.mrf.mxu0
    %v8496 = vadd.f32 0.0, %v8495
    %v8497 = vpop.f32.mrf.mxu0
    %v8498 = vadd.f32 0.0, %v8497
    %8499 = vmatprep.mubr.bf16.mxu0 0
    %8500 = vmatmul.mubr.bf16.gmra.mxu0 %v8435
    %v8501 = vpop.f32.mrf.mxu0
    %v8502 = vadd.f32 0.0, %v8501
    %v8503 = vpop.f32.mrf.mxu0
    %v8504 = vadd.f32 0.0, %v8503
    %v8505 = vpop.f32.mrf.mxu0
    %v8506 = vadd.f32 0.0, %v8505
    %v8507 = vpop.f32.mrf.mxu0
    %v8508 = vadd.f32 0.0, %v8507
    %8509 = vdwg.mxu0
    %8510 = vmatprep.subr.bf16.mxu0 0
    %8511 = vmatpush1.bf16.msra.mxu0 0
    %8512 = vmatprep.subr.bf16.mxu0 0
    %8513 = vmatpush1.bf16.msra.mxu0 0
    %8514 = vmatprep.subr.bf16.mxu0 0
    %8515 = vmatpush1.bf16.msra.mxu0 0
    %8516 = vmatprep.subr.bf16.mxu0 0
    %8517 = vmatpush1.bf16.msra.mxu0 0
    %8518 = vmatprep.subr.bf16.mxu0 0
    %8519 = vmatpush1.bf16.msra.mxu0 %v8412
    %8520 = vmatprep.subr.bf16.mxu0 0
    %8521 = vmatpush1.bf16.msra.mxu0 %v8409
    %8522 = vmatprep.subr.bf16.mxu0 0
    %8523 = vmatpush1.bf16.msra.mxu0 %v8406
    %8524 = vmatprep.subr.bf16.mxu0 0
    %8525 = vmatpush1.bf16.msra.mxu0 %v8403
    %8526 = vmatprep.subr.bf16.mxu0 0
    %8527 = vmatpush2.bf16.msra.mxu0 0
    %8528 = vmatprep.subr.bf16.mxu0 0
    %8529 = vmatpush2.bf16.msra.mxu0 0
    %8530 = vmatprep.subr.bf16.mxu0 0
    %8531 = vmatpush2.bf16.msra.mxu0 0
    %8532 = vmatprep.subr.bf16.mxu0 0
    %8533 = vmatpush2.bf16.msra.mxu0 0
    %8534 = vmatprep.subr.bf16.mxu0 0
    %8535 = vmatpush2.bf16.msra.mxu0 0
    %8536 = vmatprep.subr.bf16.mxu0 0
    %8537 = vmatpush2.bf16.msra.mxu0 0
    %8538 = vmatprep.subr.bf16.mxu0 0
    %8539 = vmatpush2.bf16.msra.mxu0 0
    %8540 = vmatprep.subr.bf16.mxu0 0
    %8541 = vmatpush2.bf16.msra.mxu0 0
    %8542 = vmatprep.mubr.bf16.mxu0 0
    %8543 = vmatmul.mubr.bf16.gmra.mxu0 %v8426
    %v8544 = vpop.f32.mrf.mxu0
    %v8545 = vadd.f32 0.0, %v8544
    %v8546 = vpop.f32.mrf.mxu0
    %v8547 = vpop.f32.mrf.mxu0
    %v8548 = vadd.f32 0.0, %v8547
    %v8549 = vpop.f32.mrf.mxu0
    %8550 = vmatprep.mubr.bf16.mxu0 0
    %8551 = vmatmul.mubr.bf16.gmra.mxu0 %v8429
    %v8552 = vpop.f32.mrf.mxu0
    %v8553 = vadd.f32 0.0, %v8552
    %v8554 = vpop.f32.mrf.mxu0
    %v8555 = vpop.f32.mrf.mxu0
    %v8556 = vadd.f32 0.0, %v8555
    %v8557 = vpop.f32.mrf.mxu0
    %8558 = vmatprep.mubr.bf16.mxu0 0
    %8559 = vmatmul.mubr.bf16.gmra.mxu0 %v8432
    %v8560 = vpop.f32.mrf.mxu0
    %v8561 = vadd.f32 0.0, %v8560
    %v8562 = vpop.f32.mrf.mxu0
    %v8563 = vpop.f32.mrf.mxu0
    %v8564 = vadd.f32 0.0, %v8563
    %v8565 = vpop.f32.mrf.mxu0
    %8566 = vmatprep.mubr.bf16.mxu0 0
    %8567 = vmatmul.mubr.bf16.gmra.mxu0 %v8435
    %v8568 = vpop.f32.mrf.mxu0
    %v8569 = vadd.f32 0.0, %v8568
    %v8570 = vpop.f32.mrf.mxu0
    %v8571 = vpop.f32.mrf.mxu0
    %v8572 = vadd.f32 0.0, %v8571
    %v8573 = vpop.f32.mrf.mxu0
    %8574 = vdwg.mxu0
    %v8575 = vadd.f32 %v8051, %v8472
    %v8576 = vadd.f32 %v8052, %v8474
    %v8577 = vadd.f32 %v8053, %v8545
    %v8578 = vadd.f32 %v8054, %v8476
    %v8579 = vadd.f32 %v8055, %v8478
    %v8580 = vadd.f32 %v8056, %v8548
    %v8581 = vadd.f32 %v8057, %v8482
    %v8582 = vadd.f32 %v8058, %v8484
    %v8583 = vadd.f32 %v8059, %v8553
    %v8584 = vadd.f32 %v8060, %v8486
    %v8585 = vadd.f32 %v8061, %v8488
    %v8586 = vadd.f32 %v8062, %v8556
    %v8587 = vadd.f32 %v8063, %v8492
    %v8588 = vadd.f32 %v8064, %v8494
    %v8589 = vadd.f32 %v8065, %v8561
    %v8590 = vadd.f32 %v8066, %v8496
    %v8591 = vadd.f32 %v8067, %v8498
    %v8592 = vadd.f32 %v8068, %v8564
    %v8593 = vadd.f32 %v8069, %v8502
    %v8594 = vadd.f32 %v8070, %v8504
    %v8595 = vadd.f32 %v8071, %v8569
    %v8596 = vadd.f32 %v8072, %v8506
    %v8597 = vadd.f32 %v8073, %v8508
    %v8598 = vadd.f32 %v8074, %v8572
    %8603 = vrot.lane.b32.xlu0 %v2612, 64
    %v8604 = vpop.permute.xlu0 %8603
    %8605 = vrot.lane.b32.xlu0 %v2621, 64
    %v8606 = vpop.permute.xlu0 %8605
    %8607 = vrot.lane.b32.xlu0 %v2630, 64
    %v8608 = vpop.permute.xlu0 %8607
    %8609 = vrot.lane.b32.xlu0 %v2639, 64
    %v8610 = vpop.permute.xlu0 %8609
    %8615 = vrot.lane.b32.xlu0 %v2615, 64
    %v8616 = vpop.permute.xlu0 %8615
    %8617 = vrot.lane.b32.xlu0 %v2624, 64
    %v8618 = vpop.permute.xlu0 %8617
    %8619 = vrot.lane.b32.xlu0 %v2633, 64
    %v8620 = vpop.permute.xlu0 %8619
    %8621 = vrot.lane.b32.xlu0 %v2642, 64
    %v8622 = vpop.permute.xlu0 %8621
    %v8624 = vsel %vm2666, %v8604, 0
    %v8627 = vsel %vm2666, %v8606, 0
    %v8630 = vsel %vm2666, %v8608, 0
    %v8633 = vsel %vm2666, %v8610, 0
    %v8636 = vsel %vm2666, %v8616, 0
    %v8639 = vsel %vm2666, %v8618, 0
    %v8642 = vsel %vm2666, %v8620, 0
    %v8645 = vsel %vm2666, %v8622, 0
    %8647 = vmatprep.subr.bf16.mxu0 0
    %8648 = vmatpush1.bf16.xpose.msra.mxu0 0
    %8649 = vmatprep.subr.bf16.mxu0 0
    %8650 = vmatpush1.bf16.xpose.msra.mxu0 0
    %8651 = vmatprep.subr.bf16.mxu0 0
    %8652 = vmatpush1.bf16.xpose.msra.mxu0 0
    %8653 = vmatprep.subr.bf16.mxu0 0
    %8654 = vmatpush1.bf16.xpose.msra.mxu0 0
    %8655 = vmatprep.subr.bf16.mxu0 0
    %8656 = vmatpush1.bf16.xpose.msra.mxu0 %v8645
    %8657 = vmatprep.subr.bf16.mxu0 0
    %8658 = vmatpush1.bf16.xpose.msra.mxu0 %v8642
    %8659 = vmatprep.subr.bf16.mxu0 0
    %8660 = vmatpush1.bf16.xpose.msra.mxu0 %v8639
    %8661 = vmatprep.subr.bf16.mxu0 0
    %8662 = vmatpush1.bf16.xpose.msra.mxu0 %v8636
    %8663 = vmatprep.subr.bf16.mxu0 0
    %8664 = vmatpush2.bf16.xpose.msra.mxu0 0
    %8665 = vmatprep.subr.bf16.mxu0 0
    %8666 = vmatpush2.bf16.xpose.msra.mxu0 0
    %8667 = vmatprep.subr.bf16.mxu0 0
    %8668 = vmatpush2.bf16.xpose.msra.mxu0 0
    %8669 = vmatprep.subr.bf16.mxu0 0
    %8670 = vmatpush2.bf16.xpose.msra.mxu0 0
    %8671 = vmatprep.subr.bf16.mxu0 0
    %8672 = vmatpush2.bf16.xpose.msra.mxu0 0
    %8673 = vmatprep.subr.bf16.mxu0 0
    %8674 = vmatpush2.bf16.xpose.msra.mxu0 0
    %8675 = vmatprep.subr.bf16.mxu0 0
    %8676 = vmatpush2.bf16.xpose.msra.mxu0 0
    %8677 = vmatprep.subr.bf16.mxu0 0
    %8678 = vmatpush2.bf16.xpose.msra.mxu0 0
    %8679 = vmatprep.mubr.bf16.mxu0 0
    %8680 = vmatmul.mubr.bf16.gmra.mxu0 %v8624
    %v8681 = vpop.f32.mrf.mxu0
    %v8682 = vadd.f32 0.0, %v8681
    %v8683 = vpop.f32.mrf.mxu0
    %v8684 = vpop.f32.mrf.mxu0
    %v8685 = vadd.f32 0.0, %v8684
    %v8686 = vpop.f32.mrf.mxu0
    %8687 = vmatprep.mubr.bf16.mxu0 0
    %8688 = vmatmul.mubr.bf16.gmra.mxu0 %v8627
    %v8689 = vpop.f32.mrf.mxu0
    %v8690 = vadd.f32 0.0, %v8689
    %v8691 = vpop.f32.mrf.mxu0
    %v8692 = vpop.f32.mrf.mxu0
    %v8693 = vadd.f32 0.0, %v8692
    %v8694 = vpop.f32.mrf.mxu0
    %8695 = vmatprep.mubr.bf16.mxu0 0
    %8696 = vmatmul.mubr.bf16.gmra.mxu0 %v8630
    %v8697 = vpop.f32.mrf.mxu0
    %v8698 = vadd.f32 0.0, %v8697
    %v8699 = vpop.f32.mrf.mxu0
    %v8700 = vpop.f32.mrf.mxu0
    %v8701 = vadd.f32 0.0, %v8700
    %v8702 = vpop.f32.mrf.mxu0
    %8703 = vmatprep.mubr.bf16.mxu0 0
    %8704 = vmatmul.mubr.bf16.gmra.mxu0 %v8633
    %v8705 = vpop.f32.mrf.mxu0
    %v8706 = vadd.f32 0.0, %v8705
    %v8707 = vpop.f32.mrf.mxu0
    %v8708 = vpop.f32.mrf.mxu0
    %v8709 = vadd.f32 0.0, %v8708
    %v8710 = vpop.f32.mrf.mxu0
    %8711 = vdwg.mxu0
    %v8712 = vsel %vm2657, %v8682, -inf
    %v8713 = vsel %vm2658, %v8685, -inf
    %v8714 = vsel %vm2659, %v8690, -inf
    %v8715 = vsel %vm2660, %v8693, -inf
    %v8716 = vsel %vm2661, %v8698, -inf
    %v8717 = vsel %vm2662, %v8701, -inf
    %v8718 = vsel %vm2663, %v8706, -inf
    %v8719 = vsel %vm2664, %v8709, -inf
    %v8720 = vsel %vm2666, %v8712, -inf
    %8721 = vmax.xlane.f32.xlu0 %v8720
    %v8722 = vpop.xlane.xlu0 %8721
    %v8723 = vsel %vm2666, %v8713, -inf
    %8724 = vmax.xlane.f32.xlu0 %v8723
    %v8725 = vpop.xlane.xlu0 %8724
    %v8726 = vsel %vm2666, %v8714, -inf
    %8727 = vmax.xlane.f32.xlu0 %v8726
    %v8728 = vpop.xlane.xlu0 %8727
    %v8729 = vsel %vm2666, %v8715, -inf
    %8730 = vmax.xlane.f32.xlu0 %v8729
    %v8731 = vpop.xlane.xlu0 %8730
    %v8732 = vsel %vm2666, %v8716, -inf
    %8733 = vmax.xlane.f32.xlu0 %v8732
    %v8734 = vpop.xlane.xlu0 %8733
    %v8735 = vsel %vm2666, %v8717, -inf
    %8736 = vmax.xlane.f32.xlu0 %v8735
    %v8737 = vpop.xlane.xlu0 %8736
    %v8738 = vsel %vm2666, %v8718, -inf
    %8739 = vmax.xlane.f32.xlu0 %v8738
    %v8740 = vpop.xlane.xlu0 %8739
    %v8741 = vsel %vm2666, %v8719, -inf
    %8742 = vmax.xlane.f32.xlu0 %v8741
    %v8743 = vpop.xlane.xlu0 %8742
    %v8744 = vsub.f32 %v8712, %v8722
    %v8745 = vsub.f32 %v8713, %v8725
    %v8746 = vsub.f32 %v8714, %v8728
    %v8747 = vsub.f32 %v8715, %v8731
    %v8748 = vsub.f32 %v8716, %v8734
    %v8749 = vsub.f32 %v8717, %v8737
    %v8750 = vsub.f32 %v8718, %v8740
    %v8751 = vsub.f32 %v8719, %v8743
    %v8752 = vmul.f32 %v8744, 1.442695
    %v8753 = vpow.pop %v8752
    %v8754 = vmul.f32 %v8745, 1.442695
    %v8755 = vpow.pop %v8754
    %v8756 = vmul.f32 %v8746, 1.442695
    %v8757 = vpow.pop %v8756
    %v8758 = vmul.f32 %v8747, 1.442695
    %v8759 = vpow.pop %v8758
    %v8760 = vmul.f32 %v8748, 1.442695
    %v8761 = vpow.pop %v8760
    %v8762 = vmul.f32 %v8749, 1.442695
    %v8763 = vpow.pop %v8762
    %v8764 = vmul.f32 %v8750, 1.442695
    %v8765 = vpow.pop %v8764
    %v8766 = vmul.f32 %v8751, 1.442695
    %v8767 = vpow.pop %v8766
    %v8768 = vsel %vm2666, %v8753, 0.0
    %8769 = vadd.xlane.f32.xlu0 %v8768
    %v8770 = vpop.xlane.xlu0 %8769
    %v8771 = vsel %vm2666, %v8755, 0.0
    %8772 = vadd.xlane.f32.xlu0 %v8771
    %v8773 = vpop.xlane.xlu0 %8772
    %v8774 = vsel %vm2666, %v8757, 0.0
    %8775 = vadd.xlane.f32.xlu0 %v8774
    %v8776 = vpop.xlane.xlu0 %8775
    %v8777 = vsel %vm2666, %v8759, 0.0
    %8778 = vadd.xlane.f32.xlu0 %v8777
    %v8779 = vpop.xlane.xlu0 %8778
    %v8780 = vsel %vm2666, %v8761, 0.0
    %8781 = vadd.xlane.f32.xlu0 %v8780
    %v8782 = vpop.xlane.xlu0 %8781
    %v8783 = vsel %vm2666, %v8763, 0.0
    %8784 = vadd.xlane.f32.xlu0 %v8783
    %v8785 = vpop.xlane.xlu0 %8784
    %v8786 = vsel %vm2666, %v8765, 0.0
    %8787 = vadd.xlane.f32.xlu0 %v8786
    %v8788 = vpop.xlane.xlu0 %8787
    %v8789 = vsel %vm2666, %v8767, 0.0
    %8790 = vadd.xlane.f32.xlu0 %v8789
    %v8791 = vpop.xlane.xlu0 %8790
    %v8792 = vrcp.pop %v8770
    %v8793 = vrcp.pop %v8773
    %v8794 = vrcp.pop %v8776
    %v8795 = vrcp.pop %v8779
    %v8796 = vrcp.pop %v8782
    %v8797 = vrcp.pop %v8785
    %v8798 = vrcp.pop %v8788
    %v8799 = vrcp.pop %v8791
    %v8800 = vmul.f32 %v8753, %v8792
    %v8801 = vmul.f32 %v8755, %v8793
    %v8802 = vmul.f32 %v8757, %v8794
    %v8803 = vmul.f32 %v8759, %v8795
    %v8804 = vmul.f32 %v8761, %v8796
    %v8805 = vmul.f32 %v8763, %v8797
    %v8806 = vmul.f32 %v8765, %v8798
    %v8807 = vmul.f32 %v8767, %v8799
    %v8808 = vpack.c.bf16 %v8801, %v8800
    %v8809 = vpack.c.bf16 %v8803, %v8802
    %v8810 = vpack.c.bf16 %v8805, %v8804
    %v8811 = vpack.c.bf16 %v8807, %v8806
    %8816 = vrot.lane.b32.xlu0 %v2618, 64
    %v8817 = vpop.permute.xlu0 %8816
    %8818 = vrot.lane.b32.xlu0 %v2627, 64
    %v8819 = vpop.permute.xlu0 %8818
    %8820 = vrot.lane.b32.xlu0 %v2636, 64
    %v8821 = vpop.permute.xlu0 %8820
    %8822 = vrot.lane.b32.xlu0 %v2645, 64
    %v8823 = vpop.permute.xlu0 %8822
    %v8829 = vsel %vm2666, %v8808, 0
    %v8832 = vsel %vm2666, %v8809, 0
    %v8835 = vsel %vm2666, %v8810, 0
    %v8838 = vsel %vm2666, %v8811, 0
    %8840 = vmatprep.subr.bf16.mxu0 0
    %8841 = vmatpush1.bf16.msra.mxu0 0
    %8842 = vmatprep.subr.bf16.mxu0 0
    %8843 = vmatpush1.bf16.msra.mxu0 0
    %8844 = vmatprep.subr.bf16.mxu0 0
    %8845 = vmatpush1.bf16.msra.mxu0 0
    %8846 = vmatprep.subr.bf16.mxu0 0
    %8847 = vmatpush1.bf16.msra.mxu0 0
    %8848 = vmatprep.subr.bf16.mxu0 0
    %8849 = vmatpush1.bf16.msra.mxu0 %v8823
    %8850 = vmatprep.subr.bf16.mxu0 0
    %8851 = vmatpush1.bf16.msra.mxu0 %v8821
    %8852 = vmatprep.subr.bf16.mxu0 0
    %8853 = vmatpush1.bf16.msra.mxu0 %v8819
    %8854 = vmatprep.subr.bf16.mxu0 0
    %8855 = vmatpush1.bf16.msra.mxu0 %v8817
    %8856 = vmatprep.subr.bf16.mxu0 0
    %8857 = vmatpush2.bf16.msra.mxu0 0
    %8858 = vmatprep.subr.bf16.mxu0 0
    %8859 = vmatpush2.bf16.msra.mxu0 0
    %8860 = vmatprep.subr.bf16.mxu0 0
    %8861 = vmatpush2.bf16.msra.mxu0 0
    %8862 = vmatprep.subr.bf16.mxu0 0
    %8863 = vmatpush2.bf16.msra.mxu0 0
    %8864 = vmatprep.subr.bf16.mxu0 0
    %8865 = vmatpush2.bf16.msra.mxu0 0
    %8866 = vmatprep.subr.bf16.mxu0 0
    %8867 = vmatpush2.bf16.msra.mxu0 0
    %8868 = vmatprep.subr.bf16.mxu0 0
    %8869 = vmatpush2.bf16.msra.mxu0 0
    %8870 = vmatprep.subr.bf16.mxu0 0
    %8871 = vmatpush2.bf16.msra.mxu0 0
    %8872 = vmatprep.mubr.bf16.mxu0 0
    %8873 = vmatmul.mubr.bf16.gmra.mxu0 %v8829
    %v8874 = vpop.f32.mrf.mxu0
    %v8875 = vadd.f32 0.0, %v8874
    %v8876 = vpop.f32.mrf.mxu0
    %v8877 = vpop.f32.mrf.mxu0
    %v8878 = vadd.f32 0.0, %v8877
    %v8879 = vpop.f32.mrf.mxu0
    %8880 = vmatprep.mubr.bf16.mxu0 0
    %8881 = vmatmul.mubr.bf16.gmra.mxu0 %v8832
    %v8882 = vpop.f32.mrf.mxu0
    %v8883 = vadd.f32 0.0, %v8882
    %v8884 = vpop.f32.mrf.mxu0
    %v8885 = vpop.f32.mrf.mxu0
    %v8886 = vadd.f32 0.0, %v8885
    %v8887 = vpop.f32.mrf.mxu0
    %8888 = vmatprep.mubr.bf16.mxu0 0
    %8889 = vmatmul.mubr.bf16.gmra.mxu0 %v8835
    %v8890 = vpop.f32.mrf.mxu0
    %v8891 = vadd.f32 0.0, %v8890
    %v8892 = vpop.f32.mrf.mxu0
    %v8893 = vpop.f32.mrf.mxu0
    %v8894 = vadd.f32 0.0, %v8893
    %v8895 = vpop.f32.mrf.mxu0
    %8896 = vmatprep.mubr.bf16.mxu0 0
    %8897 = vmatmul.mubr.bf16.gmra.mxu0 %v8838
    %v8898 = vpop.f32.mrf.mxu0
    %v8899 = vadd.f32 0.0, %v8898
    %v8900 = vpop.f32.mrf.mxu0
    %v8901 = vpop.f32.mrf.mxu0
    %v8902 = vadd.f32 0.0, %v8901
    %v8903 = vpop.f32.mrf.mxu0
    %8904 = vdwg.mxu0
    %v8905 = vpack.c.bf16 %v8878, %v8875
    %v8906 = vpack.c.bf16 %v8886, %v8883
    %v8907 = vpack.c.bf16 %v8894, %v8891
    %v8908 = vpack.c.bf16 %v8902, %v8899
    %v8909 = vld [vmem:[#allocation7 + $0x1e0] sm:$0xff]
    %v8910 = vld [vmem:[#allocation7 + $0x1e8] sm:$0xf]
    %v8911 = vld [vmem:[#allocation7 + $0x1ec] sm:$0xff]
    %v8912 = vld [vmem:[#allocation7 + $0x1f4] sm:$0xf]
    %v8913 = vld [vmem:[#allocation7 + $0x1f8] sm:$0xff]
    %v8914 = vld [vmem:[#allocation7 + $0x200] sm:$0xf]
    %v8915 = vld [vmem:[#allocation7 + $0x204] sm:$0xff]
    %v8916 = vld [vmem:[#allocation7 + $0x20c] sm:$0xf]
    %v8917 = vld [vmem:[#allocation7 + $0x210] sm:$0xff]
    %v8918 = vld [vmem:[#allocation7 + $0x218] sm:$0xf]
    %v8919 = vld [vmem:[#allocation7 + $0x21c] sm:$0xff]
    %v8920 = vld [vmem:[#allocation7 + $0x224] sm:$0xf]
    %v8921 = vld [vmem:[#allocation7 + $0x228] sm:$0xff]
    %v8922 = vld [vmem:[#allocation7 + $0x230] sm:$0xf]
    %v8923 = vld [vmem:[#allocation7 + $0x234] sm:$0xff]
    %v8924 = vld [vmem:[#allocation7 + $0x23c] sm:$0xf]
    %v8941 = vunpack.c.l.b16 %v8909
    %v8942 = vunpack.c.h.b16 %v8909
    %v8943 = vunpack.c.l.b16 %v8910
    %v8944 = vunpack.c.l.b16 %v8911
    %v8945 = vunpack.c.h.b16 %v8911
    %v8946 = vunpack.c.l.b16 %v8912
    %v8947 = vunpack.c.l.b16 %v8913
    %v8948 = vunpack.c.h.b16 %v8913
    %v8949 = vunpack.c.l.b16 %v8914
    %v8950 = vunpack.c.l.b16 %v8915
    %v8951 = vunpack.c.h.b16 %v8915
    %v8952 = vunpack.c.l.b16 %v8916
    %v8953 = vunpack.c.l.b16 %v8917
    %v8954 = vunpack.c.h.b16 %v8917
    %v8955 = vunpack.c.l.b16 %v8918
    %v8956 = vunpack.c.l.b16 %v8919
    %v8957 = vunpack.c.h.b16 %v8919
    %v8958 = vunpack.c.l.b16 %v8920
    %v8959 = vunpack.c.l.b16 %v8921
    %v8960 = vunpack.c.h.b16 %v8921
    %v8961 = vunpack.c.l.b16 %v8922
    %v8962 = vunpack.c.l.b16 %v8923
    %v8963 = vunpack.c.h.b16 %v8923
    %v8964 = vunpack.c.l.b16 %v8924
    %v8965 = vpack.c.b16 %v8944, %v8941
    %v8966 = vpack.c.b16 %v8945, %v8942
    %v8967 = vpack.c.b16 %v8946, %v8943
    %v8968 = vpack.c.b16 %v8950, %v8947
    %v8969 = vpack.c.b16 %v8951, %v8948
    %v8970 = vpack.c.b16 %v8952, %v8949
    %v8971 = vpack.c.b16 %v8956, %v8953
    %v8972 = vpack.c.b16 %v8957, %v8954
    %v8973 = vpack.c.b16 %v8958, %v8955
    %v8974 = vpack.c.b16 %v8962, %v8959
    %v8975 = vpack.c.b16 %v8963, %v8960
    %v8976 = vpack.c.b16 %v8964, %v8961
    %v8990 = vsel %vm2666, %v8905, 0
    %v8993 = vsel %vm2666, %v8906, 0
    %v8996 = vsel %vm2666, %v8907, 0
    %v8999 = vsel %vm2666, %v8908, 0
    %9001 = vmatprep.subr.bf16.mxu0 0
    %9002 = vmatpush1.bf16.msra.mxu0 0
    %9003 = vmatprep.subr.bf16.mxu0 0
    %9004 = vmatpush1.bf16.msra.mxu0 0
    %9005 = vmatprep.subr.bf16.mxu0 0
    %9006 = vmatpush1.bf16.msra.mxu0 0
    %9007 = vmatprep.subr.bf16.mxu0 0
    %9008 = vmatpush1.bf16.msra.mxu0 0
    %9009 = vmatprep.subr.bf16.mxu0 %v8975
    %9010 = vmatpush1.bf16.msra.mxu0 %v8974
    %9011 = vmatprep.subr.bf16.mxu0 %v8972
    %9012 = vmatpush1.bf16.msra.mxu0 %v8971
    %9013 = vmatprep.subr.bf16.mxu0 %v8969
    %9014 = vmatpush1.bf16.msra.mxu0 %v8968
    %9015 = vmatprep.subr.bf16.mxu0 %v8966
    %9016 = vmatpush1.bf16.msra.mxu0 %v8965
    %9017 = vmatprep.subr.bf16.mxu0 0
    %9018 = vmatpush2.bf16.msra.mxu0 0
    %9019 = vmatprep.subr.bf16.mxu0 0
    %9020 = vmatpush2.bf16.msra.mxu0 0
    %9021 = vmatprep.subr.bf16.mxu0 0
    %9022 = vmatpush2.bf16.msra.mxu0 0
    %9023 = vmatprep.subr.bf16.mxu0 0
    %9024 = vmatpush2.bf16.msra.mxu0 0
    %9025 = vmatprep.subr.bf16.mxu0 0
    %9026 = vmatpush2.bf16.msra.mxu0 0
    %9027 = vmatprep.subr.bf16.mxu0 0
    %9028 = vmatpush2.bf16.msra.mxu0 0
    %9029 = vmatprep.subr.bf16.mxu0 0
    %9030 = vmatpush2.bf16.msra.mxu0 0
    %9031 = vmatprep.subr.bf16.mxu0 0
    %9032 = vmatpush2.bf16.msra.mxu0 0
    %9033 = vmatprep.mubr.bf16.mxu0 0
    %9034 = vmatmul.mubr.bf16.gmra.mxu0 %v8990
    %v9035 = vpop.f32.mrf.mxu0
    %v9036 = vadd.f32 0.0, %v9035
    %v9037 = vpop.f32.mrf.mxu0
    %v9038 = vadd.f32 0.0, %v9037
    %v9039 = vpop.f32.mrf.mxu0
    %v9040 = vadd.f32 0.0, %v9039
    %v9041 = vpop.f32.mrf.mxu0
    %v9042 = vadd.f32 0.0, %v9041
    %9043 = vmatprep.mubr.bf16.mxu0 0
    %9044 = vmatmul.mubr.bf16.gmra.mxu0 %v8993
    %v9045 = vpop.f32.mrf.mxu0
    %v9046 = vadd.f32 0.0, %v9045
    %v9047 = vpop.f32.mrf.mxu0
    %v9048 = vadd.f32 0.0, %v9047
    %v9049 = vpop.f32.mrf.mxu0
    %v9050 = vadd.f32 0.0, %v9049
    %v9051 = vpop.f32.mrf.mxu0
    %v9052 = vadd.f32 0.0, %v9051
    %9053 = vmatprep.mubr.bf16.mxu0 0
    %9054 = vmatmul.mubr.bf16.gmra.mxu0 %v8996
    %v9055 = vpop.f32.mrf.mxu0
    %v9056 = vadd.f32 0.0, %v9055
    %v9057 = vpop.f32.mrf.mxu0
    %v9058 = vadd.f32 0.0, %v9057
    %v9059 = vpop.f32.mrf.mxu0
    %v9060 = vadd.f32 0.0, %v9059
    %v9061 = vpop.f32.mrf.mxu0
    %v9062 = vadd.f32 0.0, %v9061
    %9063 = vmatprep.mubr.bf16.mxu0 0
    %9064 = vmatmul.mubr.bf16.gmra.mxu0 %v8999
    %v9065 = vpop.f32.mrf.mxu0
    %v9066 = vadd.f32 0.0, %v9065
    %v9067 = vpop.f32.mrf.mxu0
    %v9068 = vadd.f32 0.0, %v9067
    %v9069 = vpop.f32.mrf.mxu0
    %v9070 = vadd.f32 0.0, %v9069
    %v9071 = vpop.f32.mrf.mxu0
    %v9072 = vadd.f32 0.0, %v9071
    %9073 = vdwg.mxu0
    %9074 = vmatprep.subr.bf16.mxu0 0
    %9075 = vmatpush1.bf16.msra.mxu0 0
    %9076 = vmatprep.subr.bf16.mxu0 0
    %9077 = vmatpush1.bf16.msra.mxu0 0
    %9078 = vmatprep.subr.bf16.mxu0 0
    %9079 = vmatpush1.bf16.msra.mxu0 0
    %9080 = vmatprep.subr.bf16.mxu0 0
    %9081 = vmatpush1.bf16.msra.mxu0 0
    %9082 = vmatprep.subr.bf16.mxu0 0
    %9083 = vmatpush1.bf16.msra.mxu0 %v8976
    %9084 = vmatprep.subr.bf16.mxu0 0
    %9085 = vmatpush1.bf16.msra.mxu0 %v8973
    %9086 = vmatprep.subr.bf16.mxu0 0
    %9087 = vmatpush1.bf16.msra.mxu0 %v8970
    %9088 = vmatprep.subr.bf16.mxu0 0
    %9089 = vmatpush1.bf16.msra.mxu0 %v8967
    %9090 = vmatprep.subr.bf16.mxu0 0
    %9091 = vmatpush2.bf16.msra.mxu0 0
    %9092 = vmatprep.subr.bf16.mxu0 0
    %9093 = vmatpush2.bf16.msra.mxu0 0
    %9094 = vmatprep.subr.bf16.mxu0 0
    %9095 = vmatpush2.bf16.msra.mxu0 0
    %9096 = vmatprep.subr.bf16.mxu0 0
    %9097 = vmatpush2.bf16.msra.mxu0 0
    %9098 = vmatprep.subr.bf16.mxu0 0
    %9099 = vmatpush2.bf16.msra.mxu0 0
    %9100 = vmatprep.subr.bf16.mxu0 0
    %9101 = vmatpush2.bf16.msra.mxu0 0
    %9102 = vmatprep.subr.bf16.mxu0 0
    %9103 = vmatpush2.bf16.msra.mxu0 0
    %9104 = vmatprep.subr.bf16.mxu0 0
    %9105 = vmatpush2.bf16.msra.mxu0 0
    %9106 = vmatprep.mubr.bf16.mxu0 0
    %9107 = vmatmul.mubr.bf16.gmra.mxu0 %v8990
    %v9108 = vpop.f32.mrf.mxu0
    %v9109 = vadd.f32 0.0, %v9108
    %v9110 = vpop.f32.mrf.mxu0
    %v9111 = vpop.f32.mrf.mxu0
    %v9112 = vadd.f32 0.0, %v9111
    %v9113 = vpop.f32.mrf.mxu0
    %9114 = vmatprep.mubr.bf16.mxu0 0
    %9115 = vmatmul.mubr.bf16.gmra.mxu0 %v8993
    %v9116 = vpop.f32.mrf.mxu0
    %v9117 = vadd.f32 0.0, %v9116
    %v9118 = vpop.f32.mrf.mxu0
    %v9119 = vpop.f32.mrf.mxu0
    %v9120 = vadd.f32 0.0, %v9119
    %v9121 = vpop.f32.mrf.mxu0
    %9122 = vmatprep.mubr.bf16.mxu0 0
    %9123 = vmatmul.mubr.bf16.gmra.mxu0 %v8996
    %v9124 = vpop.f32.mrf.mxu0
    %v9125 = vadd.f32 0.0, %v9124
    %v9126 = vpop.f32.mrf.mxu0
    %v9127 = vpop.f32.mrf.mxu0
    %v9128 = vadd.f32 0.0, %v9127
    %v9129 = vpop.f32.mrf.mxu0
    %9130 = vmatprep.mubr.bf16.mxu0 0
    %9131 = vmatmul.mubr.bf16.gmra.mxu0 %v8999
    %v9132 = vpop.f32.mrf.mxu0
    %v9133 = vadd.f32 0.0, %v9132
    %v9134 = vpop.f32.mrf.mxu0
    %v9135 = vpop.f32.mrf.mxu0
    %v9136 = vadd.f32 0.0, %v9135
    %v9137 = vpop.f32.mrf.mxu0
    %9138 = vdwg.mxu0
    %v9139 = vadd.f32 %v8575, %v9036
    %v9140 = vadd.f32 %v8576, %v9038
    %v9141 = vadd.f32 %v8577, %v9109
    %v9142 = vadd.f32 %v8578, %v9040
    %v9143 = vadd.f32 %v8579, %v9042
    %v9144 = vadd.f32 %v8580, %v9112
    %v9145 = vadd.f32 %v8581, %v9046
    %v9146 = vadd.f32 %v8582, %v9048
    %v9147 = vadd.f32 %v8583, %v9117
    %v9148 = vadd.f32 %v8584, %v9050
    %v9149 = vadd.f32 %v8585, %v9052
    %v9150 = vadd.f32 %v8586, %v9120
    %v9151 = vadd.f32 %v8587, %v9056
    %v9152 = vadd.f32 %v8588, %v9058
    %v9153 = vadd.f32 %v8589, %v9125
    %v9154 = vadd.f32 %v8590, %v9060
    %v9155 = vadd.f32 %v8591, %v9062
    %v9156 = vadd.f32 %v8592, %v9128
    %v9157 = vadd.f32 %v8593, %v9066
    %v9158 = vadd.f32 %v8594, %v9068
    %v9159 = vadd.f32 %v8595, %v9133
    %v9160 = vadd.f32 %v8596, %v9070
    %v9161 = vadd.f32 %v8597, %v9072
    %v9162 = vadd.f32 %v8598, %v9136
    %v9163 = vadd.f32 %v9139, %v5887
    %v9164 = vadd.f32 %v9140, %v5891
    %v9165 = vadd.f32 %v9141, %v5895
    %v9166 = vadd.f32 %v9142, %v5887
    %v9167 = vadd.f32 %v9143, %v5891
    %v9168 = vadd.f32 %v9144, %v5895
    %v9169 = vadd.f32 %v9145, %v5887
    %v9170 = vadd.f32 %v9146, %v5891
    %v9171 = vadd.f32 %v9147, %v5895
    %v9172 = vadd.f32 %v9148, %v5887
    %v9173 = vadd.f32 %v9149, %v5891
    %v9174 = vadd.f32 %v9150, %v5895
    %v9175 = vadd.f32 %v9151, %v5887
    %v9176 = vadd.f32 %v9152, %v5891
    %v9177 = vadd.f32 %v9153, %v5895
    %v9178 = vadd.f32 %v9154, %v5887
    %v9179 = vadd.f32 %v9155, %v5891
    %v9180 = vadd.f32 %v9156, %v5895
    %v9181 = vadd.f32 %v9157, %v5887
    %v9182 = vadd.f32 %v9158, %v5891
    %v9183 = vadd.f32 %v9159, %v5895
    %v9184 = vadd.f32 %v9160, %v5887
    %v9185 = vadd.f32 %v9161, %v5891
    %v9186 = vadd.f32 %v9162, %v5895
    %s9187 = scalar_lea.vmem [#allocation8], 192
    %9188 = vst [vmem:[%s9187] sm:$0xff] %v9163
    %9189 = vst [vmem:[%s9187 + $0x8] sm:$0xff] %v9164
    %9190 = vst [vmem:[%s9187 + $0x10] sm:$0xff] %v9165
    %9191 = vst [vmem:[%s9187 + $0x18] sm:$0xff] %v9166
    %9192 = vst [vmem:[%s9187 + $0x20] sm:$0xff] %v9167
    %9193 = vst [vmem:[%s9187 + $0x28] sm:$0xff] %v9168
    %9194 = vst [vmem:[%s9187 + $0x30] sm:$0xff] %v9169
    %9195 = vst [vmem:[%s9187 + $0x38] sm:$0xff] %v9170
    %9196 = vst [vmem:[%s9187 + $0x40] sm:$0xff] %v9171
    %9197 = vst [vmem:[%s9187 + $0x48] sm:$0xff] %v9172
    %9198 = vst [vmem:[%s9187 + $0x50] sm:$0xff] %v9173
    %9199 = vst [vmem:[%s9187 + $0x58] sm:$0xff] %v9174
    %9200 = vst [vmem:[%s9187 + $0x60] sm:$0xff] %v9175
    %9201 = vst [vmem:[%s9187 + $0x68] sm:$0xff] %v9176
    %9202 = vst [vmem:[%s9187 + $0x70] sm:$0xff] %v9177
    %9203 = vst [vmem:[%s9187 + $0x78] sm:$0xff] %v9178
    %9204 = vst [vmem:[%s9187 + $0x80] sm:$0xff] %v9179
    %9205 = vst [vmem:[%s9187 + $0x88] sm:$0xff] %v9180
    %9206 = vst [vmem:[%s9187 + $0x90] sm:$0xff] %v9181
    %9207 = vst [vmem:[%s9187 + $0x98] sm:$0xff] %v9182
    %9208 = vst [vmem:[%s9187 + $0xa0] sm:$0xff] %v9183
    %9209 = vst [vmem:[%s9187 + $0xa8] sm:$0xff] %v9184
    %9210 = vst [vmem:[%s9187 + $0xb0] sm:$0xff] %v9185
    %9211 = vst [vmem:[%s9187 + $0xb8] sm:$0xff] %v9186
    // Predicated region
    $region30: #{multi_head_attention.1} parent=1 // pred_check
      _
    $region31: #{multi_head_attention.1} parent=1 // pred_check_branch
      %9213 = sbr.rel (0) target = $region33
    $region32: #{multi_head_attention.1} parent=1 // pred_region
      %s9215 = ssub.s32 6144, 6144
      %9216 = vsyncadd [#allocation4], %s9215
      %s9217 = sshll.u32 [#allocation8], 4
      %s9218 = int_to_ptr.vmem [resolvable:$true] %s9217
      %9223 = dma.vmem_to_hbm [thread:$0]  %s9218, 6144, %s4, [#allocation4], 384, 384, 24
    $region33: #{multi_head_attention.1} parent=1 // pred_fallthru
      _
    // Predicated region
    $region34: #{multi_head_attention.1} parent=1 // pred_check
      _
    $region35: #{multi_head_attention.1} parent=1 // pred_check_branch
      %9225 = sbr.rel (0) target = $region37
    $region36: #{multi_head_attention.1} parent=1 // pred_region
      %9226 = dma.done [#allocation4], 6144
    $region37: #{multi_head_attention.1} parent=1 // pred_fallthru
      _
    %9227 = vsyncpa [#allocation3], 1
    %9228 = vsyncpa [#allocation6], 1
    %9229 = vsyncpa [#allocation4], 1

</llo_original>
